<compile_context>
chip_gen: v6e
topology: v6e:2x2x1
jax: 0.10.0
libtpu: 0.0.40
codegen_flags: <defaults>
</compile_context>

<pallas_src>
import jax
import jax.numpy as jnp
from jax import lax
from jax.experimental import pallas as pl
from jax.experimental.pallas import tpu as pltpu

# ----- model hyper-parameters (small, consistent with nn.Transformer ctor) -----
D_MODEL = 32
NHEAD = 4
HEAD_DIM = D_MODEL // NHEAD
DIM_FF = 64
NUM_ENC_LAYERS = 2
NUM_DEC_LAYERS = 2
EPS = 1e-5
NEG_INF = -1e30

# Fixed flattening order of the stacked per-layer parameter tensors.
ENC_KEYS = ("wqkv", "bqkv", "wo", "bo",
            "w1", "b1", "w2", "b2",
            "ln1g", "ln1b", "ln2g", "ln2b")
DEC_KEYS = ("sa_wqkv", "sa_bqkv", "sa_wo", "sa_bo",
            "ca_wqkv", "ca_bqkv", "ca_wo", "ca_bo",
            "w1", "b1", "w2", "b2",
            "ln1g", "ln1b", "ln2g", "ln2b", "ln3g", "ln3b")
FINAL_KEYS = ("enc_ng", "enc_nb", "dec_ng", "dec_nb")


# ========================= in-kernel helper functions =========================
# (pure jnp on values; traced inside the single fused kernel)

def _layer_norm(x, g, b):
    """LayerNorm over the last dim (d_model), eps=1e-5 (PyTorch semantics)."""
    mu = jnp.mean(x, axis=-1, keepdims=True)
    xc = x - mu
    var = jnp.mean(xc * xc, axis=-1, keepdims=True)
    return xc * lax.rsqrt(var + EPS) * g + b


def _mha(xq, xkv, bias, wqkv, bqkv, wo, bo):
    """Multi-head attention on flat (rows, E) activations.

    `bias` is an additive (rows_q, rows_k) mask: 0 where the two flat rows
    belong to the same batch element, -1e30 otherwise, so batch elements never
    attend to each other even though the whole batch lives in one flat slab.
    wqkv: (E, 3E) fused in-projection, wo: (E, E) out-projection, (in,out) layout.
    """
    E = D_MODEL
    if xq is xkv:   # self-attention: one fused QKV matmul
        qkv = jnp.dot(xq, wqkv, preferred_element_type=jnp.float32) + bqkv
        q, k, v = qkv[:, :E], qkv[:, E:2 * E], qkv[:, 2 * E:]
    else:           # cross-attention: q from xq, k/v from xkv (memory)
        q = jnp.dot(xq, wqkv[:, :E], preferred_element_type=jnp.float32) + bqkv[:, :E]
        kv = jnp.dot(xkv, wqkv[:, E:], preferred_element_type=jnp.float32) + bqkv[:, E:]
        k, v = kv[:, :E], kv[:, E:]
    q = q * (1.0 / (HEAD_DIM ** 0.5))   # fold scale into q (equivalent to /sqrt(d))

    out = jnp.zeros((xq.shape[0], E), jnp.float32)
    for h in range(NHEAD):              # static unrolled loop over heads
        cs = slice(h * HEAD_DIM, (h + 1) * HEAD_DIM)
        s = jnp.dot(q[:, cs], k[:, cs].T,
                    preferred_element_type=jnp.float32) + bias       # (Rq, Rk)
        s = s - jnp.max(s, axis=-1, keepdims=True)
        p = jnp.exp(s)
        p = p * pl.reciprocal(jnp.sum(p, axis=-1, keepdims=True), approx=True)
        o_h = jnp.dot(p, v[:, cs], preferred_element_type=jnp.float32)
        # Accumulate through the sublane-aligned row block of the out-projection
        # (no lane-dim concat of head outputs).
        out = out + jnp.dot(o_h, wo[cs, :], preferred_element_type=jnp.float32)
    return out + bo


def _ffn(x, w1, b1, w2, b2):
    """linear1 -> ReLU -> linear2."""
    h = jnp.dot(x, w1, preferred_element_type=jnp.float32) + b1
    h = jnp.maximum(h, 0.0)
    return jnp.dot(h, w2, preferred_element_type=jnp.float32) + b2


# ============================ the single fused kernel =========================

def _transformer_kernel(*refs):
    """refs = (src2d, tgt2d, m_enc, m_dec, m_cross, *stacked_weights, out2d)."""
    src_ref, tgt_ref, m_enc_ref, m_dec_ref, m_cross_ref = refs[:5]
    out_ref = refs[-1]
    wrefs = refs[5:-1]

    ne, nd = len(ENC_KEYS), len(DEC_KEYS)
    enc = dict(zip(ENC_KEYS, wrefs[:ne]))
    dec = dict(zip(DEC_KEYS, wrefs[ne:ne + nd]))
    fin = dict(zip(FINAL_KEYS, wrefs[ne + nd:]))

    m_enc = m_enc_ref[...]       # (S*N, S*N)
    m_dec = m_dec_ref[...]       # (T*N, T*N)
    m_cross = m_cross_ref[...]   # (T*N, S*N)

    # -------- encoder (post-norm layers) --------
    x = src_ref[...]             # (S*N, E), row = s*N + b
    for l in range(NUM_ENC_LAYERS):
        x = _layer_norm(
            x + _mha(x, x, m_enc, enc["wqkv"][l], enc["bqkv"][l],
                     enc["wo"][l], enc["bo"][l]),
            enc["ln1g"][l], enc["ln1b"][l])
        x = _layer_norm(
            x + _ffn(x, enc["w1"][l], enc["b1"][l], enc["w2"][l], enc["b2"][l]),
            enc["ln2g"][l], enc["ln2b"][l])
    memory = _layer_norm(x, fin["enc_ng"][...], fin["enc_nb"][...])

    # -------- decoder (post-norm layers) --------
    y = tgt_ref[...]             # (T*N, E), row = t*N + b
    for l in range(NUM_DEC_LAYERS):
        y = _layer_norm(
            y + _mha(y, y, m_dec, dec["sa_wqkv"][l], dec["sa_bqkv"][l],
                     dec["sa_wo"][l], dec["sa_bo"][l]),
            dec["ln1g"][l], dec["ln1b"][l])
        y = _layer_norm(
            y + _mha(y, memory, m_cross, dec["ca_wqkv"][l], dec["ca_bqkv"][l],
                     dec["ca_wo"][l], dec["ca_bo"][l]),
            dec["ln2g"][l], dec["ln2b"][l])
        y = _layer_norm(
            y + _ffn(y, dec["w1"][l], dec["b1"][l], dec["w2"][l], dec["b2"][l]),
            dec["ln3g"][l], dec["ln3b"][l])
    y = _layer_norm(y, fin["dec_ng"][...], fin["dec_nb"][...])

    out_ref[...] = y             # (T*N, E), same row order as tgt2d


# ================================ JAX wrapper =================================

def _batch_block_bias(rows_q, rows_k, n):
    """Additive attention bias: 0 where flat rows share a batch element
    (row % n equal), -1e30 otherwise.  Data-independent => XLA constant-folds it."""
    bq = jnp.arange(rows_q, dtype=jnp.int32) % n
    bk = jnp.arange(rows_k, dtype=jnp.int32) % n
    return jnp.where(bq[:, None] == bk[None, :], 0.0, NEG_INF).astype(jnp.float32)


def transformer_forward(src, tgt, params):
    """src: (S, N, E), tgt: (T, N, E)  ->  (T, N, E)   (batch_first=False)."""
    S, N, E = src.shape
    T = tgt.shape[0]
    assert E == D_MODEL and tgt.shape[-1] == D_MODEL and tgt.shape[1] == N

    # Free row-major views (no transpose, no data movement): row = seq*N + batch.
    src2d = src.reshape(S * N, E)
    tgt2d = tgt.reshape(T * N, E)
    m_enc = _batch_block_bias(S * N, S * N, N)
    m_dec = _batch_block_bias(T * N, T * N, N)
    m_cross = _batch_block_bias(T * N, S * N, N)

    flat_w = ([params["enc"][k] for k in ENC_KEYS]
              + [params["dec"][k] for k in DEC_KEYS]
              + [params[k] for k in FINAL_KEYS])
    n_in = 5 + len(flat_w)

    out2d = pl.pallas_call(
        _transformer_kernel,
        out_shape=jax.ShapeDtypeStruct((T * N, E), jnp.float32),
        in_specs=[pl.BlockSpec(memory_space=pltpu.MemorySpace.VMEM)
                  for _ in range(n_in)],
        out_specs=pl.BlockSpec(memory_space=pltpu.MemorySpace.VMEM),
    )(src2d, tgt2d, m_enc, m_dec, m_cross, *flat_w)

    return out2d.reshape(T, N, E)   # free reshape back to (T, N, E)


# ============================ deterministic params ============================

def _xavier(key, shape):
    fan_in, fan_out = shape
    bound = (6.0 / (fan_in + fan_out)) ** 0.5
    return jax.random.uniform(key, shape, jnp.float32, -bound, bound)


def _init_attn(key, prefix=""):
    k1, k2 = jax.random.split(key)
    return {prefix + "wqkv": _xavier(k1, (D_MODEL, 3 * D_MODEL)),
            prefix + "bqkv": jnp.zeros((1, 3 * D_MODEL), jnp.float32),
            prefix + "wo": _xavier(k2, (D_MODEL, D_MODEL)),
            prefix + "bo": jnp.zeros((1, D_MODEL), jnp.float32)}


def _init_ffn(key):
    k1, k2 = jax.random.split(key)
    return {"w1": _xavier(k1, (D_MODEL, DIM_FF)),
            "b1": jnp.zeros((1, DIM_FF), jnp.float32),
            "w2": _xavier(k2, (DIM_FF, D_MODEL)),
            "b2": jnp.zeros((1, D_MODEL), jnp.float32)}


def _init_ln(prefix):
    return {prefix + "g": jnp.ones((1, D_MODEL), jnp.float32),
            prefix + "b": jnp.zeros((1, D_MODEL), jnp.float32)}


def _init_enc_layer(key):
    k1, k2 = jax.random.split(key)
    p = {}
    p.update(_init_attn(k1))
    p.update(_init_ffn(k2))
    p.update(_init_ln("ln1"))
    p.update(_init_ln("ln2"))
    return p


def _init_dec_layer(key):
    k1, k2, k3 = jax.random.split(key, 3)
    p = {}
    p.update(_init_attn(k1, "sa_"))
    p.update(_init_attn(k2, "ca_"))
    p.update(_init_ffn(k3))
    p.update(_init_ln("ln1"))
    p.update(_init_ln("ln2"))
    p.update(_init_ln("ln3"))
    return p


def init_params(key):
    ke, kd = jax.random.split(key)
    enc_layers = [_init_enc_layer(k) for k in jax.random.split(ke, NUM_ENC_LAYERS)]
    dec_layers = [_init_dec_layer(k) for k in jax.random.split(kd, NUM_DEC_LAYERS)]
    return {
        "enc": {k: jnp.stack([lp[k] for lp in enc_layers]) for k in ENC_KEYS},
        "dec": {k: jnp.stack([lp[k] for lp in dec_layers]) for k in DEC_KEYS},
        "enc_ng": jnp.ones((1, D_MODEL), jnp.float32),
        "enc_nb": jnp.zeros((1, D_MODEL), jnp.float32),
        "dec_ng": jnp.ones((1, D_MODEL), jnp.float32),
        "dec_nb": jnp.zeros((1, D_MODEL), jnp.float32),
    }


# ==================================== main ====================================

if __name__ == "__main__":
    key = jax.random.PRNGKey(0)
    k_param, k_src, k_tgt = jax.random.split(key, 3)

    params = init_params(k_param)

    S, T, N = 8, 8, 2  # source length, target length, batch
    src = jax.random.normal(k_src, (S, N, D_MODEL), jnp.float32)
    tgt = jax.random.normal(k_tgt, (T, N, D_MODEL), jnp.float32)

    fwd = jax.jit(transformer_forward)
    out = jax.block_until_ready(fwd(src, tgt, params))

    assert out.shape == (T, N, D_MODEL), out.shape
    assert bool(jnp.all(jnp.isfinite(out)))
    print("KERNEL_OK")
</pallas_src>

<mosaic_0001>
module attributes {stable_mosaic.version = 11 : i64} {
  func.func @_transformer_kernel(%arg0: memref<16x32xf32, #tpu.memory_space<vmem>>, %arg1: memref<16x32xf32, #tpu.memory_space<vmem>>, %arg2: memref<16x16xf32, #tpu.memory_space<vmem>>, %arg3: memref<16x16xf32, #tpu.memory_space<vmem>>, %arg4: memref<16x16xf32, #tpu.memory_space<vmem>>, %arg5: memref<2x32x96xf32, #tpu.memory_space<vmem>>, %arg6: memref<2x1x96xf32, #tpu.memory_space<vmem>>, %arg7: memref<2x32x32xf32, #tpu.memory_space<vmem>>, %arg8: memref<2x1x32xf32, #tpu.memory_space<vmem>>, %arg9: memref<2x32x64xf32, #tpu.memory_space<vmem>>, %arg10: memref<2x1x64xf32, #tpu.memory_space<vmem>>, %arg11: memref<2x64x32xf32, #tpu.memory_space<vmem>>, %arg12: memref<2x1x32xf32, #tpu.memory_space<vmem>>, %arg13: memref<2x1x32xf32, #tpu.memory_space<vmem>>, %arg14: memref<2x1x32xf32, #tpu.memory_space<vmem>>, %arg15: memref<2x1x32xf32, #tpu.memory_space<vmem>>, %arg16: memref<2x1x32xf32, #tpu.memory_space<vmem>>, %arg17: memref<2x32x96xf32, #tpu.memory_space<vmem>>, %arg18: memref<2x1x96xf32, #tpu.memory_space<vmem>>, %arg19: memref<2x32x32xf32, #tpu.memory_space<vmem>>, %arg20: memref<2x1x32xf32, #tpu.memory_space<vmem>>, %arg21: memref<2x32x96xf32, #tpu.memory_space<vmem>>, %arg22: memref<2x1x96xf32, #tpu.memory_space<vmem>>, %arg23: memref<2x32x32xf32, #tpu.memory_space<vmem>>, %arg24: memref<2x1x32xf32, #tpu.memory_space<vmem>>, %arg25: memref<2x32x64xf32, #tpu.memory_space<vmem>>, %arg26: memref<2x1x64xf32, #tpu.memory_space<vmem>>, %arg27: memref<2x64x32xf32, #tpu.memory_space<vmem>>, %arg28: memref<2x1x32xf32, #tpu.memory_space<vmem>>, %arg29: memref<2x1x32xf32, #tpu.memory_space<vmem>>, %arg30: memref<2x1x32xf32, #tpu.memory_space<vmem>>, %arg31: memref<2x1x32xf32, #tpu.memory_space<vmem>>, %arg32: memref<2x1x32xf32, #tpu.memory_space<vmem>>, %arg33: memref<2x1x32xf32, #tpu.memory_space<vmem>>, %arg34: memref<2x1x32xf32, #tpu.memory_space<vmem>>, %arg35: memref<1x32xf32, #tpu.memory_space<vmem>>, %arg36: memref<1x32xf32, #tpu.memory_space<vmem>>, %arg37: memref<1x32xf32, #tpu.memory_space<vmem>>, %arg38: memref<1x32xf32, #tpu.memory_space<vmem>>, %arg39: memref<16x32xf32, #tpu.memory_space<vmem>>) attributes {dimension_semantics = [], scalar_prefetch = 0 : i64, scratch_operands = 0 : i64, tpu.core_type = #tpu.core_type<tc>} {
    %c0 = arith.constant 0 : index
    %c0_0 = arith.constant 0 : index
    %0 = vector.load %arg2[%c0, %c0_0] : memref<16x16xf32, #tpu.memory_space<vmem>>, vector<16x16xf32>
    %c0_1 = arith.constant 0 : index
    %c0_2 = arith.constant 0 : index
    %1 = vector.load %arg3[%c0_1, %c0_2] : memref<16x16xf32, #tpu.memory_space<vmem>>, vector<16x16xf32>
    %c0_3 = arith.constant 0 : index
    %c0_4 = arith.constant 0 : index
    %2 = vector.load %arg4[%c0_3, %c0_4] : memref<16x16xf32, #tpu.memory_space<vmem>>, vector<16x16xf32>
    %c0_5 = arith.constant 0 : index
    %c0_6 = arith.constant 0 : index
    %3 = vector.load %arg0[%c0_5, %c0_6] : memref<16x32xf32, #tpu.memory_space<vmem>>, vector<16x32xf32>
    %c0_7 = arith.constant 0 : index
    %c0_8 = arith.constant 0 : index
    %c0_9 = arith.constant 0 : index
    %4 = vector.load %arg5[%c0_7, %c0_8, %c0_9] : memref<2x32x96xf32, #tpu.memory_space<vmem>>, vector<1x32x96xf32>
    %5 = vector.shape_cast %4 : vector<1x32x96xf32> to vector<32x96xf32>
    %c0_10 = arith.constant 0 : index
    %c0_11 = arith.constant 0 : index
    %c0_12 = arith.constant 0 : index
    %6 = vector.load %arg6[%c0_10, %c0_11, %c0_12] : memref<2x1x96xf32, #tpu.memory_space<vmem>>, vector<1x1x96xf32>
    %7 = vector.shape_cast %6 : vector<1x1x96xf32> to vector<1x96xf32>
    %c0_13 = arith.constant 0 : index
    %c0_14 = arith.constant 0 : index
    %c0_15 = arith.constant 0 : index
    %8 = vector.load %arg7[%c0_13, %c0_14, %c0_15] : memref<2x32x32xf32, #tpu.memory_space<vmem>>, vector<1x32x32xf32>
    %9 = vector.shape_cast %8 : vector<1x32x32xf32> to vector<32x32xf32>
    %c0_16 = arith.constant 0 : index
    %c0_17 = arith.constant 0 : index
    %c0_18 = arith.constant 0 : index
    %10 = vector.load %arg8[%c0_16, %c0_17, %c0_18] : memref<2x1x32xf32, #tpu.memory_space<vmem>>, vector<1x1x32xf32>
    %11 = vector.shape_cast %10 : vector<1x1x32xf32> to vector<1x32xf32>
    %cst = arith.constant dense<0.000000e+00> : vector<16x96xf32>
    %12 = tpu.matmul %3, %5, %cst {dimension_numbers = #tpu.dot_dimension_numbers<[1], [0], [0], [1], [0, 0, 1, 1], [], []>} : vector<16x32xf32>, vector<32x96xf32>, vector<16x96xf32> -> vector<16x96xf32>
    %13 = vector.broadcast %7 : vector<1x96xf32> to vector<16x96xf32>
    %14 = arith.addf %12, %13 : vector<16x96xf32>
    %15 = vector.extract_strided_slice %14 {offsets = [0, 0], sizes = [16, 32], strides = [1, 1]} : vector<16x96xf32> to vector<16x32xf32>
    %16 = vector.extract_strided_slice %14 {offsets = [0, 32], sizes = [16, 32], strides = [1, 1]} : vector<16x96xf32> to vector<16x32xf32>
    %17 = vector.extract_strided_slice %14 {offsets = [0, 64], sizes = [16, 32], strides = [1, 1]} : vector<16x96xf32> to vector<16x32xf32>
    %cst_19 = arith.constant 0.353553385 : f32
    %18 = vector.broadcast %cst_19 : f32 to vector<16x32xf32>
    %19 = arith.mulf %15, %18 : vector<16x32xf32>
    %cst_20 = arith.constant 0.000000e+00 : f32
    %20 = vector.broadcast %cst_20 : f32 to vector<16x32xf32>
    %21 = vector.extract_strided_slice %19 {offsets = [0, 0], sizes = [16, 8], strides = [1, 1]} : vector<16x32xf32> to vector<16x8xf32>
    %22 = vector.extract_strided_slice %16 {offsets = [0, 0], sizes = [16, 8], strides = [1, 1]} : vector<16x32xf32> to vector<16x8xf32>
    %23 = tpu.transpose %22, [1, 0] : vector<16x8xf32> -> vector<8x16xf32>
    %cst_21 = arith.constant dense<0.000000e+00> : vector<16x16xf32>
    %24 = tpu.matmul %21, %23, %cst_21 {dimension_numbers = #tpu.dot_dimension_numbers<[1], [0], [0], [1], [0, 0, 1, 1], [], []>} : vector<16x8xf32>, vector<8x16xf32>, vector<16x16xf32> -> vector<16x16xf32>
    %25 = arith.addf %24, %0 : vector<16x16xf32>
    %cst_22 = arith.constant dense<0xFF800000> : vector<16xf32>
    %26 = vector.multi_reduction <maximumf>, %25, %cst_22 [1] : vector<16x16xf32> to vector<16xf32>
    %27 = vector.shape_cast %26 : vector<16xf32> to vector<16x1xf32>
    %28 = vector.broadcast %27 : vector<16x1xf32> to vector<16x16xf32>
    %29 = arith.subf %25, %28 : vector<16x16xf32>
    %30 = math.exp %29 : vector<16x16xf32>
    %cst_23 = arith.constant dense<0.000000e+00> : vector<16xf32>
    %31 = vector.multi_reduction <add>, %30, %cst_23 [1] : vector<16x16xf32> to vector<16xf32>
    %32 = vector.shape_cast %31 : vector<16xf32> to vector<16x1xf32>
    %33 = tpu.reciprocal %32 {approx = true} : vector<16x1xf32> -> vector<16x1xf32>
    %34 = vector.broadcast %33 : vector<16x1xf32> to vector<16x16xf32>
    %35 = arith.mulf %30, %34 : vector<16x16xf32>
    %36 = vector.extract_strided_slice %17 {offsets = [0, 0], sizes = [16, 8], strides = [1, 1]} : vector<16x32xf32> to vector<16x8xf32>
    %cst_24 = arith.constant dense<0.000000e+00> : vector<16x8xf32>
    %37 = tpu.matmul %35, %36, %cst_24 {dimension_numbers = #tpu.dot_dimension_numbers<[1], [0], [0], [1], [0, 0, 1, 1], [], []>} : vector<16x16xf32>, vector<16x8xf32>, vector<16x8xf32> -> vector<16x8xf32>
    %38 = vector.extract_strided_slice %9 {offsets = [0, 0], sizes = [8, 32], strides = [1, 1]} : vector<32x32xf32> to vector<8x32xf32>
    %cst_25 = arith.constant dense<0.000000e+00> : vector<16x32xf32>
    %39 = tpu.matmul %37, %38, %cst_25 {dimension_numbers = #tpu.dot_dimension_numbers<[1], [0], [0], [1], [0, 0, 1, 1], [], []>} : vector<16x8xf32>, vector<8x32xf32>, vector<16x32xf32> -> vector<16x32xf32>
    %40 = arith.addf %20, %39 : vector<16x32xf32>
    %41 = vector.extract_strided_slice %19 {offsets = [0, 8], sizes = [16, 8], strides = [1, 1]} : vector<16x32xf32> to vector<16x8xf32>
    %42 = vector.extract_strided_slice %16 {offsets = [0, 8], sizes = [16, 8], strides = [1, 1]} : vector<16x32xf32> to vector<16x8xf32>
    %43 = tpu.transpose %42, [1, 0] : vector<16x8xf32> -> vector<8x16xf32>
    %cst_26 = arith.constant dense<0.000000e+00> : vector<16x16xf32>
    %44 = tpu.matmul %41, %43, %cst_26 {dimension_numbers = #tpu.dot_dimension_numbers<[1], [0], [0], [1], [0, 0, 1, 1], [], []>} : vector<16x8xf32>, vector<8x16xf32>, vector<16x16xf32> -> vector<16x16xf32>
    %45 = arith.addf %44, %0 : vector<16x16xf32>
    %cst_27 = arith.constant dense<0xFF800000> : vector<16xf32>
    %46 = vector.multi_reduction <maximumf>, %45, %cst_27 [1] : vector<16x16xf32> to vector<16xf32>
    %47 = vector.shape_cast %46 : vector<16xf32> to vector<16x1xf32>
    %48 = vector.broadcast %47 : vector<16x1xf32> to vector<16x16xf32>
    %49 = arith.subf %45, %48 : vector<16x16xf32>
    %50 = math.exp %49 : vector<16x16xf32>
    %cst_28 = arith.constant dense<0.000000e+00> : vector<16xf32>
    %51 = vector.multi_reduction <add>, %50, %cst_28 [1] : vector<16x16xf32> to vector<16xf32>
    %52 = vector.shape_cast %51 : vector<16xf32> to vector<16x1xf32>
    %53 = tpu.reciprocal %52 {approx = true} : vector<16x1xf32> -> vector<16x1xf32>
    %54 = vector.broadcast %53 : vector<16x1xf32> to vector<16x16xf32>
    %55 = arith.mulf %50, %54 : vector<16x16xf32>
    %56 = vector.extract_strided_slice %17 {offsets = [0, 8], sizes = [16, 8], strides = [1, 1]} : vector<16x32xf32> to vector<16x8xf32>
    %cst_29 = arith.constant dense<0.000000e+00> : vector<16x8xf32>
    %57 = tpu.matmul %55, %56, %cst_29 {dimension_numbers = #tpu.dot_dimension_numbers<[1], [0], [0], [1], [0, 0, 1, 1], [], []>} : vector<16x16xf32>, vector<16x8xf32>, vector<16x8xf32> -> vector<16x8xf32>
    %58 = vector.extract_strided_slice %9 {offsets = [8, 0], sizes = [8, 32], strides = [1, 1]} : vector<32x32xf32> to vector<8x32xf32>
    %cst_30 = arith.constant dense<0.000000e+00> : vector<16x32xf32>
    %59 = tpu.matmul %57, %58, %cst_30 {dimension_numbers = #tpu.dot_dimension_numbers<[1], [0], [0], [1], [0, 0, 1, 1], [], []>} : vector<16x8xf32>, vector<8x32xf32>, vector<16x32xf32> -> vector<16x32xf32>
    %60 = arith.addf %40, %59 : vector<16x32xf32>
    %61 = vector.extract_strided_slice %19 {offsets = [0, 16], sizes = [16, 8], strides = [1, 1]} : vector<16x32xf32> to vector<16x8xf32>
    %62 = vector.extract_strided_slice %16 {offsets = [0, 16], sizes = [16, 8], strides = [1, 1]} : vector<16x32xf32> to vector<16x8xf32>
    %63 = tpu.transpose %62, [1, 0] : vector<16x8xf32> -> vector<8x16xf32>
    %cst_31 = arith.constant dense<0.000000e+00> : vector<16x16xf32>
    %64 = tpu.matmul %61, %63, %cst_31 {dimension_numbers = #tpu.dot_dimension_numbers<[1], [0], [0], [1], [0, 0, 1, 1], [], []>} : vector<16x8xf32>, vector<8x16xf32>, vector<16x16xf32> -> vector<16x16xf32>
    %65 = arith.addf %64, %0 : vector<16x16xf32>
    %cst_32 = arith.constant dense<0xFF800000> : vector<16xf32>
    %66 = vector.multi_reduction <maximumf>, %65, %cst_32 [1] : vector<16x16xf32> to vector<16xf32>
    %67 = vector.shape_cast %66 : vector<16xf32> to vector<16x1xf32>
    %68 = vector.broadcast %67 : vector<16x1xf32> to vector<16x16xf32>
    %69 = arith.subf %65, %68 : vector<16x16xf32>
    %70 = math.exp %69 : vector<16x16xf32>
    %cst_33 = arith.constant dense<0.000000e+00> : vector<16xf32>
    %71 = vector.multi_reduction <add>, %70, %cst_33 [1] : vector<16x16xf32> to vector<16xf32>
    %72 = vector.shape_cast %71 : vector<16xf32> to vector<16x1xf32>
    %73 = tpu.reciprocal %72 {approx = true} : vector<16x1xf32> -> vector<16x1xf32>
    %74 = vector.broadcast %73 : vector<16x1xf32> to vector<16x16xf32>
    %75 = arith.mulf %70, %74 : vector<16x16xf32>
    %76 = vector.extract_strided_slice %17 {offsets = [0, 16], sizes = [16, 8], strides = [1, 1]} : vector<16x32xf32> to vector<16x8xf32>
    %cst_34 = arith.constant dense<0.000000e+00> : vector<16x8xf32>
    %77 = tpu.matmul %75, %76, %cst_34 {dimension_numbers = #tpu.dot_dimension_numbers<[1], [0], [0], [1], [0, 0, 1, 1], [], []>} : vector<16x16xf32>, vector<16x8xf32>, vector<16x8xf32> -> vector<16x8xf32>
    %78 = vector.extract_strided_slice %9 {offsets = [16, 0], sizes = [8, 32], strides = [1, 1]} : vector<32x32xf32> to vector<8x32xf32>
    %cst_35 = arith.constant dense<0.000000e+00> : vector<16x32xf32>
    %79 = tpu.matmul %77, %78, %cst_35 {dimension_numbers = #tpu.dot_dimension_numbers<[1], [0], [0], [1], [0, 0, 1, 1], [], []>} : vector<16x8xf32>, vector<8x32xf32>, vector<16x32xf32> -> vector<16x32xf32>
    %80 = arith.addf %60, %79 : vector<16x32xf32>
    %81 = vector.extract_strided_slice %19 {offsets = [0, 24], sizes = [16, 8], strides = [1, 1]} : vector<16x32xf32> to vector<16x8xf32>
    %82 = vector.extract_strided_slice %16 {offsets = [0, 24], sizes = [16, 8], strides = [1, 1]} : vector<16x32xf32> to vector<16x8xf32>
    %83 = tpu.transpose %82, [1, 0] : vector<16x8xf32> -> vector<8x16xf32>
    %cst_36 = arith.constant dense<0.000000e+00> : vector<16x16xf32>
    %84 = tpu.matmul %81, %83, %cst_36 {dimension_numbers = #tpu.dot_dimension_numbers<[1], [0], [0], [1], [0, 0, 1, 1], [], []>} : vector<16x8xf32>, vector<8x16xf32>, vector<16x16xf32> -> vector<16x16xf32>
    %85 = arith.addf %84, %0 : vector<16x16xf32>
    %cst_37 = arith.constant dense<0xFF800000> : vector<16xf32>
    %86 = vector.multi_reduction <maximumf>, %85, %cst_37 [1] : vector<16x16xf32> to vector<16xf32>
    %87 = vector.shape_cast %86 : vector<16xf32> to vector<16x1xf32>
    %88 = vector.broadcast %87 : vector<16x1xf32> to vector<16x16xf32>
    %89 = arith.subf %85, %88 : vector<16x16xf32>
    %90 = math.exp %89 : vector<16x16xf32>
    %cst_38 = arith.constant dense<0.000000e+00> : vector<16xf32>
    %91 = vector.multi_reduction <add>, %90, %cst_38 [1] : vector<16x16xf32> to vector<16xf32>
    %92 = vector.shape_cast %91 : vector<16xf32> to vector<16x1xf32>
    %93 = tpu.reciprocal %92 {approx = true} : vector<16x1xf32> -> vector<16x1xf32>
    %94 = vector.broadcast %93 : vector<16x1xf32> to vector<16x16xf32>
    %95 = arith.mulf %90, %94 : vector<16x16xf32>
    %96 = vector.extract_strided_slice %17 {offsets = [0, 24], sizes = [16, 8], strides = [1, 1]} : vector<16x32xf32> to vector<16x8xf32>
    %cst_39 = arith.constant dense<0.000000e+00> : vector<16x8xf32>
    %97 = tpu.matmul %95, %96, %cst_39 {dimension_numbers = #tpu.dot_dimension_numbers<[1], [0], [0], [1], [0, 0, 1, 1], [], []>} : vector<16x16xf32>, vector<16x8xf32>, vector<16x8xf32> -> vector<16x8xf32>
    %98 = vector.extract_strided_slice %9 {offsets = [24, 0], sizes = [8, 32], strides = [1, 1]} : vector<32x32xf32> to vector<8x32xf32>
    %cst_40 = arith.constant dense<0.000000e+00> : vector<16x32xf32>
    %99 = tpu.matmul %97, %98, %cst_40 {dimension_numbers = #tpu.dot_dimension_numbers<[1], [0], [0], [1], [0, 0, 1, 1], [], []>} : vector<16x8xf32>, vector<8x32xf32>, vector<16x32xf32> -> vector<16x32xf32>
    %100 = arith.addf %80, %99 : vector<16x32xf32>
    %101 = vector.broadcast %11 : vector<1x32xf32> to vector<16x32xf32>
    %102 = arith.addf %100, %101 : vector<16x32xf32>
    %103 = arith.addf %3, %102 : vector<16x32xf32>
    %c0_41 = arith.constant 0 : index
    %c0_42 = arith.constant 0 : index
    %c0_43 = arith.constant 0 : index
    %104 = vector.load %arg13[%c0_41, %c0_42, %c0_43] : memref<2x1x32xf32, #tpu.memory_space<vmem>>, vector<1x1x32xf32>
    %105 = vector.shape_cast %104 : vector<1x1x32xf32> to vector<1x32xf32>
    %c0_44 = arith.constant 0 : index
    %c0_45 = arith.constant 0 : index
    %c0_46 = arith.constant 0 : index
    %106 = vector.load %arg14[%c0_44, %c0_45, %c0_46] : memref<2x1x32xf32, #tpu.memory_space<vmem>>, vector<1x1x32xf32>
    %107 = vector.shape_cast %106 : vector<1x1x32xf32> to vector<1x32xf32>
    %cst_47 = arith.constant dense<0.000000e+00> : vector<16xf32>
    %108 = vector.multi_reduction <add>, %103, %cst_47 [1] : vector<16x32xf32> to vector<16xf32>
    %109 = vector.shape_cast %108 : vector<16xf32> to vector<16x1xf32>
    %cst_48 = arith.constant 3.200000e+01 : f32
    %110 = vector.broadcast %cst_48 : f32 to vector<16x1xf32>
    %111 = arith.divf %109, %110 : vector<16x1xf32>
    %112 = vector.broadcast %111 : vector<16x1xf32> to vector<16x32xf32>
    %113 = arith.subf %103, %112 : vector<16x32xf32>
    %114 = arith.mulf %113, %113 : vector<16x32xf32>
    %cst_49 = arith.constant dense<0.000000e+00> : vector<16xf32>
    %115 = vector.multi_reduction <add>, %114, %cst_49 [1] : vector<16x32xf32> to vector<16xf32>
    %116 = vector.shape_cast %115 : vector<16xf32> to vector<16x1xf32>
    %cst_50 = arith.constant 3.200000e+01 : f32
    %117 = vector.broadcast %cst_50 : f32 to vector<16x1xf32>
    %118 = arith.divf %116, %117 : vector<16x1xf32>
    %cst_51 = arith.constant 9.99999974E-6 : f32
    %119 = vector.broadcast %cst_51 : f32 to vector<16x1xf32>
    %120 = arith.addf %118, %119 : vector<16x1xf32>
    %121 = math.rsqrt %120 : vector<16x1xf32>
    %122 = vector.broadcast %121 : vector<16x1xf32> to vector<16x32xf32>
    %123 = arith.mulf %113, %122 : vector<16x32xf32>
    %124 = vector.broadcast %105 : vector<1x32xf32> to vector<16x32xf32>
    %125 = arith.mulf %123, %124 : vector<16x32xf32>
    %126 = vector.broadcast %107 : vector<1x32xf32> to vector<16x32xf32>
    %127 = arith.addf %125, %126 : vector<16x32xf32>
    %c0_52 = arith.constant 0 : index
    %c0_53 = arith.constant 0 : index
    %c0_54 = arith.constant 0 : index
    %128 = vector.load %arg9[%c0_52, %c0_53, %c0_54] : memref<2x32x64xf32, #tpu.memory_space<vmem>>, vector<1x32x64xf32>
    %129 = vector.shape_cast %128 : vector<1x32x64xf32> to vector<32x64xf32>
    %c0_55 = arith.constant 0 : index
    %c0_56 = arith.constant 0 : index
    %c0_57 = arith.constant 0 : index
    %130 = vector.load %arg10[%c0_55, %c0_56, %c0_57] : memref<2x1x64xf32, #tpu.memory_space<vmem>>, vector<1x1x64xf32>
    %131 = vector.shape_cast %130 : vector<1x1x64xf32> to vector<1x64xf32>
    %c0_58 = arith.constant 0 : index
    %c0_59 = arith.constant 0 : index
    %c0_60 = arith.constant 0 : index
    %132 = vector.load %arg11[%c0_58, %c0_59, %c0_60] : memref<2x64x32xf32, #tpu.memory_space<vmem>>, vector<1x64x32xf32>
    %133 = vector.shape_cast %132 : vector<1x64x32xf32> to vector<64x32xf32>
    %c0_61 = arith.constant 0 : index
    %c0_62 = arith.constant 0 : index
    %c0_63 = arith.constant 0 : index
    %134 = vector.load %arg12[%c0_61, %c0_62, %c0_63] : memref<2x1x32xf32, #tpu.memory_space<vmem>>, vector<1x1x32xf32>
    %135 = vector.shape_cast %134 : vector<1x1x32xf32> to vector<1x32xf32>
    %cst_64 = arith.constant dense<0.000000e+00> : vector<16x64xf32>
    %136 = tpu.matmul %127, %129, %cst_64 {dimension_numbers = #tpu.dot_dimension_numbers<[1], [0], [0], [1], [0, 0, 1, 1], [], []>} : vector<16x32xf32>, vector<32x64xf32>, vector<16x64xf32> -> vector<16x64xf32>
    %137 = vector.broadcast %131 : vector<1x64xf32> to vector<16x64xf32>
    %138 = arith.addf %136, %137 : vector<16x64xf32>
    %cst_65 = arith.constant 0.000000e+00 : f32
    %139 = vector.broadcast %cst_65 : f32 to vector<16x64xf32>
    %140 = arith.maximumf %138, %139 : vector<16x64xf32>
    %cst_66 = arith.constant dense<0.000000e+00> : vector<16x32xf32>
    %141 = tpu.matmul %140, %133, %cst_66 {dimension_numbers = #tpu.dot_dimension_numbers<[1], [0], [0], [1], [0, 0, 1, 1], [], []>} : vector<16x64xf32>, vector<64x32xf32>, vector<16x32xf32> -> vector<16x32xf32>
    %142 = vector.broadcast %135 : vector<1x32xf32> to vector<16x32xf32>
    %143 = arith.addf %141, %142 : vector<16x32xf32>
    %144 = arith.addf %127, %143 : vector<16x32xf32>
    %c0_67 = arith.constant 0 : index
    %c0_68 = arith.constant 0 : index
    %c0_69 = arith.constant 0 : index
    %145 = vector.load %arg15[%c0_67, %c0_68, %c0_69] : memref<2x1x32xf32, #tpu.memory_space<vmem>>, vector<1x1x32xf32>
    %146 = vector.shape_cast %145 : vector<1x1x32xf32> to vector<1x32xf32>
    %c0_70 = arith.constant 0 : index
    %c0_71 = arith.constant 0 : index
    %c0_72 = arith.constant 0 : index
    %147 = vector.load %arg16[%c0_70, %c0_71, %c0_72] : memref<2x1x32xf32, #tpu.memory_space<vmem>>, vector<1x1x32xf32>
    %148 = vector.shape_cast %147 : vector<1x1x32xf32> to vector<1x32xf32>
    %cst_73 = arith.constant dense<0.000000e+00> : vector<16xf32>
    %149 = vector.multi_reduction <add>, %144, %cst_73 [1] : vector<16x32xf32> to vector<16xf32>
    %150 = vector.shape_cast %149 : vector<16xf32> to vector<16x1xf32>
    %cst_74 = arith.constant 3.200000e+01 : f32
    %151 = vector.broadcast %cst_74 : f32 to vector<16x1xf32>
    %152 = arith.divf %150, %151 : vector<16x1xf32>
    %153 = vector.broadcast %152 : vector<16x1xf32> to vector<16x32xf32>
    %154 = arith.subf %144, %153 : vector<16x32xf32>
    %155 = arith.mulf %154, %154 : vector<16x32xf32>
    %cst_75 = arith.constant dense<0.000000e+00> : vector<16xf32>
    %156 = vector.multi_reduction <add>, %155, %cst_75 [1] : vector<16x32xf32> to vector<16xf32>
    %157 = vector.shape_cast %156 : vector<16xf32> to vector<16x1xf32>
    %cst_76 = arith.constant 3.200000e+01 : f32
    %158 = vector.broadcast %cst_76 : f32 to vector<16x1xf32>
    %159 = arith.divf %157, %158 : vector<16x1xf32>
    %cst_77 = arith.constant 9.99999974E-6 : f32
    %160 = vector.broadcast %cst_77 : f32 to vector<16x1xf32>
    %161 = arith.addf %159, %160 : vector<16x1xf32>
    %162 = math.rsqrt %161 : vector<16x1xf32>
    %163 = vector.broadcast %162 : vector<16x1xf32> to vector<16x32xf32>
    %164 = arith.mulf %154, %163 : vector<16x32xf32>
    %165 = vector.broadcast %146 : vector<1x32xf32> to vector<16x32xf32>
    %166 = arith.mulf %164, %165 : vector<16x32xf32>
    %167 = vector.broadcast %148 : vector<1x32xf32> to vector<16x32xf32>
    %168 = arith.addf %166, %167 : vector<16x32xf32>
    %c1 = arith.constant 1 : index
    %c0_78 = arith.constant 0 : index
    %c0_79 = arith.constant 0 : index
    %169 = vector.load %arg5[%c1, %c0_78, %c0_79] : memref<2x32x96xf32, #tpu.memory_space<vmem>>, vector<1x32x96xf32>
    %170 = vector.shape_cast %169 : vector<1x32x96xf32> to vector<32x96xf32>
    %c1_80 = arith.constant 1 : index
    %c0_81 = arith.constant 0 : index
    %c0_82 = arith.constant 0 : index
    %171 = vector.load %arg6[%c1_80, %c0_81, %c0_82] : memref<2x1x96xf32, #tpu.memory_space<vmem>>, vector<1x1x96xf32>
    %172 = vector.shape_cast %171 : vector<1x1x96xf32> to vector<1x96xf32>
    %c1_83 = arith.constant 1 : index
    %c0_84 = arith.constant 0 : index
    %c0_85 = arith.constant 0 : index
    %173 = vector.load %arg7[%c1_83, %c0_84, %c0_85] : memref<2x32x32xf32, #tpu.memory_space<vmem>>, vector<1x32x32xf32>
    %174 = vector.shape_cast %173 : vector<1x32x32xf32> to vector<32x32xf32>
    %c1_86 = arith.constant 1 : index
    %c0_87 = arith.constant 0 : index
    %c0_88 = arith.constant 0 : index
    %175 = vector.load %arg8[%c1_86, %c0_87, %c0_88] : memref<2x1x32xf32, #tpu.memory_space<vmem>>, vector<1x1x32xf32>
    %176 = vector.shape_cast %175 : vector<1x1x32xf32> to vector<1x32xf32>
    %cst_89 = arith.constant dense<0.000000e+00> : vector<16x96xf32>
    %177 = tpu.matmul %168, %170, %cst_89 {dimension_numbers = #tpu.dot_dimension_numbers<[1], [0], [0], [1], [0, 0, 1, 1], [], []>} : vector<16x32xf32>, vector<32x96xf32>, vector<16x96xf32> -> vector<16x96xf32>
    %178 = vector.broadcast %172 : vector<1x96xf32> to vector<16x96xf32>
    %179 = arith.addf %177, %178 : vector<16x96xf32>
    %180 = vector.extract_strided_slice %179 {offsets = [0, 0], sizes = [16, 32], strides = [1, 1]} : vector<16x96xf32> to vector<16x32xf32>
    %181 = vector.extract_strided_slice %179 {offsets = [0, 32], sizes = [16, 32], strides = [1, 1]} : vector<16x96xf32> to vector<16x32xf32>
    %182 = vector.extract_strided_slice %179 {offsets = [0, 64], sizes = [16, 32], strides = [1, 1]} : vector<16x96xf32> to vector<16x32xf32>
    %cst_90 = arith.constant 0.353553385 : f32
    %183 = vector.broadcast %cst_90 : f32 to vector<16x32xf32>
    %184 = arith.mulf %180, %183 : vector<16x32xf32>
    %cst_91 = arith.constant 0.000000e+00 : f32
    %185 = vector.broadcast %cst_91 : f32 to vector<16x32xf32>
    %186 = vector.extract_strided_slice %184 {offsets = [0, 0], sizes = [16, 8], strides = [1, 1]} : vector<16x32xf32> to vector<16x8xf32>
    %187 = vector.extract_strided_slice %181 {offsets = [0, 0], sizes = [16, 8], strides = [1, 1]} : vector<16x32xf32> to vector<16x8xf32>
    %188 = tpu.transpose %187, [1, 0] : vector<16x8xf32> -> vector<8x16xf32>
    %cst_92 = arith.constant dense<0.000000e+00> : vector<16x16xf32>
    %189 = tpu.matmul %186, %188, %cst_92 {dimension_numbers = #tpu.dot_dimension_numbers<[1], [0], [0], [1], [0, 0, 1, 1], [], []>} : vector<16x8xf32>, vector<8x16xf32>, vector<16x16xf32> -> vector<16x16xf32>
    %190 = arith.addf %189, %0 : vector<16x16xf32>
    %cst_93 = arith.constant dense<0xFF800000> : vector<16xf32>
    %191 = vector.multi_reduction <maximumf>, %190, %cst_93 [1] : vector<16x16xf32> to vector<16xf32>
    %192 = vector.shape_cast %191 : vector<16xf32> to vector<16x1xf32>
    %193 = vector.broadcast %192 : vector<16x1xf32> to vector<16x16xf32>
    %194 = arith.subf %190, %193 : vector<16x16xf32>
    %195 = math.exp %194 : vector<16x16xf32>
    %cst_94 = arith.constant dense<0.000000e+00> : vector<16xf32>
    %196 = vector.multi_reduction <add>, %195, %cst_94 [1] : vector<16x16xf32> to vector<16xf32>
    %197 = vector.shape_cast %196 : vector<16xf32> to vector<16x1xf32>
    %198 = tpu.reciprocal %197 {approx = true} : vector<16x1xf32> -> vector<16x1xf32>
    %199 = vector.broadcast %198 : vector<16x1xf32> to vector<16x16xf32>
    %200 = arith.mulf %195, %199 : vector<16x16xf32>
    %201 = vector.extract_strided_slice %182 {offsets = [0, 0], sizes = [16, 8], strides = [1, 1]} : vector<16x32xf32> to vector<16x8xf32>
    %cst_95 = arith.constant dense<0.000000e+00> : vector<16x8xf32>
    %202 = tpu.matmul %200, %201, %cst_95 {dimension_numbers = #tpu.dot_dimension_numbers<[1], [0], [0], [1], [0, 0, 1, 1], [], []>} : vector<16x16xf32>, vector<16x8xf32>, vector<16x8xf32> -> vector<16x8xf32>
    %203 = vector.extract_strided_slice %174 {offsets = [0, 0], sizes = [8, 32], strides = [1, 1]} : vector<32x32xf32> to vector<8x32xf32>
    %cst_96 = arith.constant dense<0.000000e+00> : vector<16x32xf32>
    %204 = tpu.matmul %202, %203, %cst_96 {dimension_numbers = #tpu.dot_dimension_numbers<[1], [0], [0], [1], [0, 0, 1, 1], [], []>} : vector<16x8xf32>, vector<8x32xf32>, vector<16x32xf32> -> vector<16x32xf32>
    %205 = arith.addf %185, %204 : vector<16x32xf32>
    %206 = vector.extract_strided_slice %184 {offsets = [0, 8], sizes = [16, 8], strides = [1, 1]} : vector<16x32xf32> to vector<16x8xf32>
    %207 = vector.extract_strided_slice %181 {offsets = [0, 8], sizes = [16, 8], strides = [1, 1]} : vector<16x32xf32> to vector<16x8xf32>
    %208 = tpu.transpose %207, [1, 0] : vector<16x8xf32> -> vector<8x16xf32>
    %cst_97 = arith.constant dense<0.000000e+00> : vector<16x16xf32>
    %209 = tpu.matmul %206, %208, %cst_97 {dimension_numbers = #tpu.dot_dimension_numbers<[1], [0], [0], [1], [0, 0, 1, 1], [], []>} : vector<16x8xf32>, vector<8x16xf32>, vector<16x16xf32> -> vector<16x16xf32>
    %210 = arith.addf %209, %0 : vector<16x16xf32>
    %cst_98 = arith.constant dense<0xFF800000> : vector<16xf32>
    %211 = vector.multi_reduction <maximumf>, %210, %cst_98 [1] : vector<16x16xf32> to vector<16xf32>
    %212 = vector.shape_cast %211 : vector<16xf32> to vector<16x1xf32>
    %213 = vector.broadcast %212 : vector<16x1xf32> to vector<16x16xf32>
    %214 = arith.subf %210, %213 : vector<16x16xf32>
    %215 = math.exp %214 : vector<16x16xf32>
    %cst_99 = arith.constant dense<0.000000e+00> : vector<16xf32>
    %216 = vector.multi_reduction <add>, %215, %cst_99 [1] : vector<16x16xf32> to vector<16xf32>
    %217 = vector.shape_cast %216 : vector<16xf32> to vector<16x1xf32>
    %218 = tpu.reciprocal %217 {approx = true} : vector<16x1xf32> -> vector<16x1xf32>
    %219 = vector.broadcast %218 : vector<16x1xf32> to vector<16x16xf32>
    %220 = arith.mulf %215, %219 : vector<16x16xf32>
    %221 = vector.extract_strided_slice %182 {offsets = [0, 8], sizes = [16, 8], strides = [1, 1]} : vector<16x32xf32> to vector<16x8xf32>
    %cst_100 = arith.constant dense<0.000000e+00> : vector<16x8xf32>
    %222 = tpu.matmul %220, %221, %cst_100 {dimension_numbers = #tpu.dot_dimension_numbers<[1], [0], [0], [1], [0, 0, 1, 1], [], []>} : vector<16x16xf32>, vector<16x8xf32>, vector<16x8xf32> -> vector<16x8xf32>
    %223 = vector.extract_strided_slice %174 {offsets = [8, 0], sizes = [8, 32], strides = [1, 1]} : vector<32x32xf32> to vector<8x32xf32>
    %cst_101 = arith.constant dense<0.000000e+00> : vector<16x32xf32>
    %224 = tpu.matmul %222, %223, %cst_101 {dimension_numbers = #tpu.dot_dimension_numbers<[1], [0], [0], [1], [0, 0, 1, 1], [], []>} : vector<16x8xf32>, vector<8x32xf32>, vector<16x32xf32> -> vector<16x32xf32>
    %225 = arith.addf %205, %224 : vector<16x32xf32>
    %226 = vector.extract_strided_slice %184 {offsets = [0, 16], sizes = [16, 8], strides = [1, 1]} : vector<16x32xf32> to vector<16x8xf32>
    %227 = vector.extract_strided_slice %181 {offsets = [0, 16], sizes = [16, 8], strides = [1, 1]} : vector<16x32xf32> to vector<16x8xf32>
    %228 = tpu.transpose %227, [1, 0] : vector<16x8xf32> -> vector<8x16xf32>
    %cst_102 = arith.constant dense<0.000000e+00> : vector<16x16xf32>
    %229 = tpu.matmul %226, %228, %cst_102 {dimension_numbers = #tpu.dot_dimension_numbers<[1], [0], [0], [1], [0, 0, 1, 1], [], []>} : vector<16x8xf32>, vector<8x16xf32>, vector<16x16xf32> -> vector<16x16xf32>
    %230 = arith.addf %229, %0 : vector<16x16xf32>
    %cst_103 = arith.constant dense<0xFF800000> : vector<16xf32>
    %231 = vector.multi_reduction <maximumf>, %230, %cst_103 [1] : vector<16x16xf32> to vector<16xf32>
    %232 = vector.shape_cast %231 : vector<16xf32> to vector<16x1xf32>
    %233 = vector.broadcast %232 : vector<16x1xf32> to vector<16x16xf32>
    %234 = arith.subf %230, %233 : vector<16x16xf32>
    %235 = math.exp %234 : vector<16x16xf32>
    %cst_104 = arith.constant dense<0.000000e+00> : vector<16xf32>
    %236 = vector.multi_reduction <add>, %235, %cst_104 [1] : vector<16x16xf32> to vector<16xf32>
    %237 = vector.shape_cast %236 : vector<16xf32> to vector<16x1xf32>
    %238 = tpu.reciprocal %237 {approx = true} : vector<16x1xf32> -> vector<16x1xf32>
    %239 = vector.broadcast %238 : vector<16x1xf32> to vector<16x16xf32>
    %240 = arith.mulf %235, %239 : vector<16x16xf32>
    %241 = vector.extract_strided_slice %182 {offsets = [0, 16], sizes = [16, 8], strides = [1, 1]} : vector<16x32xf32> to vector<16x8xf32>
    %cst_105 = arith.constant dense<0.000000e+00> : vector<16x8xf32>
    %242 = tpu.matmul %240, %241, %cst_105 {dimension_numbers = #tpu.dot_dimension_numbers<[1], [0], [0], [1], [0, 0, 1, 1], [], []>} : vector<16x16xf32>, vector<16x8xf32>, vector<16x8xf32> -> vector<16x8xf32>
    %243 = vector.extract_strided_slice %174 {offsets = [16, 0], sizes = [8, 32], strides = [1, 1]} : vector<32x32xf32> to vector<8x32xf32>
    %cst_106 = arith.constant dense<0.000000e+00> : vector<16x32xf32>
    %244 = tpu.matmul %242, %243, %cst_106 {dimension_numbers = #tpu.dot_dimension_numbers<[1], [0], [0], [1], [0, 0, 1, 1], [], []>} : vector<16x8xf32>, vector<8x32xf32>, vector<16x32xf32> -> vector<16x32xf32>
    %245 = arith.addf %225, %244 : vector<16x32xf32>
    %246 = vector.extract_strided_slice %184 {offsets = [0, 24], sizes = [16, 8], strides = [1, 1]} : vector<16x32xf32> to vector<16x8xf32>
    %247 = vector.extract_strided_slice %181 {offsets = [0, 24], sizes = [16, 8], strides = [1, 1]} : vector<16x32xf32> to vector<16x8xf32>
    %248 = tpu.transpose %247, [1, 0] : vector<16x8xf32> -> vector<8x16xf32>
    %cst_107 = arith.constant dense<0.000000e+00> : vector<16x16xf32>
    %249 = tpu.matmul %246, %248, %cst_107 {dimension_numbers = #tpu.dot_dimension_numbers<[1], [0], [0], [1], [0, 0, 1, 1], [], []>} : vector<16x8xf32>, vector<8x16xf32>, vector<16x16xf32> -> vector<16x16xf32>
    %250 = arith.addf %249, %0 : vector<16x16xf32>
    %cst_108 = arith.constant dense<0xFF800000> : vector<16xf32>
    %251 = vector.multi_reduction <maximumf>, %250, %cst_108 [1] : vector<16x16xf32> to vector<16xf32>
    %252 = vector.shape_cast %251 : vector<16xf32> to vector<16x1xf32>
    %253 = vector.broadcast %252 : vector<16x1xf32> to vector<16x16xf32>
    %254 = arith.subf %250, %253 : vector<16x16xf32>
    %255 = math.exp %254 : vector<16x16xf32>
    %cst_109 = arith.constant dense<0.000000e+00> : vector<16xf32>
    %256 = vector.multi_reduction <add>, %255, %cst_109 [1] : vector<16x16xf32> to vector<16xf32>
    %257 = vector.shape_cast %256 : vector<16xf32> to vector<16x1xf32>
    %258 = tpu.reciprocal %257 {approx = true} : vector<16x1xf32> -> vector<16x1xf32>
    %259 = vector.broadcast %258 : vector<16x1xf32> to vector<16x16xf32>
    %260 = arith.mulf %255, %259 : vector<16x16xf32>
    %261 = vector.extract_strided_slice %182 {offsets = [0, 24], sizes = [16, 8], strides = [1, 1]} : vector<16x32xf32> to vector<16x8xf32>
    %cst_110 = arith.constant dense<0.000000e+00> : vector<16x8xf32>
    %262 = tpu.matmul %260, %261, %cst_110 {dimension_numbers = #tpu.dot_dimension_numbers<[1], [0], [0], [1], [0, 0, 1, 1], [], []>} : vector<16x16xf32>, vector<16x8xf32>, vector<16x8xf32> -> vector<16x8xf32>
    %263 = vector.extract_strided_slice %174 {offsets = [24, 0], sizes = [8, 32], strides = [1, 1]} : vector<32x32xf32> to vector<8x32xf32>
    %cst_111 = arith.constant dense<0.000000e+00> : vector<16x32xf32>
    %264 = tpu.matmul %262, %263, %cst_111 {dimension_numbers = #tpu.dot_dimension_numbers<[1], [0], [0], [1], [0, 0, 1, 1], [], []>} : vector<16x8xf32>, vector<8x32xf32>, vector<16x32xf32> -> vector<16x32xf32>
    %265 = arith.addf %245, %264 : vector<16x32xf32>
    %266 = vector.broadcast %176 : vector<1x32xf32> to vector<16x32xf32>
    %267 = arith.addf %265, %266 : vector<16x32xf32>
    %268 = arith.addf %168, %267 : vector<16x32xf32>
    %c1_112 = arith.constant 1 : index
    %c0_113 = arith.constant 0 : index
    %c0_114 = arith.constant 0 : index
    %269 = vector.load %arg13[%c1_112, %c0_113, %c0_114] : memref<2x1x32xf32, #tpu.memory_space<vmem>>, vector<1x1x32xf32>
    %270 = vector.shape_cast %269 : vector<1x1x32xf32> to vector<1x32xf32>
    %c1_115 = arith.constant 1 : index
    %c0_116 = arith.constant 0 : index
    %c0_117 = arith.constant 0 : index
    %271 = vector.load %arg14[%c1_115, %c0_116, %c0_117] : memref<2x1x32xf32, #tpu.memory_space<vmem>>, vector<1x1x32xf32>
    %272 = vector.shape_cast %271 : vector<1x1x32xf32> to vector<1x32xf32>
    %cst_118 = arith.constant dense<0.000000e+00> : vector<16xf32>
    %273 = vector.multi_reduction <add>, %268, %cst_118 [1] : vector<16x32xf32> to vector<16xf32>
    %274 = vector.shape_cast %273 : vector<16xf32> to vector<16x1xf32>
    %cst_119 = arith.constant 3.200000e+01 : f32
    %275 = vector.broadcast %cst_119 : f32 to vector<16x1xf32>
    %276 = arith.divf %274, %275 : vector<16x1xf32>
    %277 = vector.broadcast %276 : vector<16x1xf32> to vector<16x32xf32>
    %278 = arith.subf %268, %277 : vector<16x32xf32>
    %279 = arith.mulf %278, %278 : vector<16x32xf32>
    %cst_120 = arith.constant dense<0.000000e+00> : vector<16xf32>
    %280 = vector.multi_reduction <add>, %279, %cst_120 [1] : vector<16x32xf32> to vector<16xf32>
    %281 = vector.shape_cast %280 : vector<16xf32> to vector<16x1xf32>
    %cst_121 = arith.constant 3.200000e+01 : f32
    %282 = vector.broadcast %cst_121 : f32 to vector<16x1xf32>
    %283 = arith.divf %281, %282 : vector<16x1xf32>
    %cst_122 = arith.constant 9.99999974E-6 : f32
    %284 = vector.broadcast %cst_122 : f32 to vector<16x1xf32>
    %285 = arith.addf %283, %284 : vector<16x1xf32>
    %286 = math.rsqrt %285 : vector<16x1xf32>
    %287 = vector.broadcast %286 : vector<16x1xf32> to vector<16x32xf32>
    %288 = arith.mulf %278, %287 : vector<16x32xf32>
    %289 = vector.broadcast %270 : vector<1x32xf32> to vector<16x32xf32>
    %290 = arith.mulf %288, %289 : vector<16x32xf32>
    %291 = vector.broadcast %272 : vector<1x32xf32> to vector<16x32xf32>
    %292 = arith.addf %290, %291 : vector<16x32xf32>
    %c1_123 = arith.constant 1 : index
    %c0_124 = arith.constant 0 : index
    %c0_125 = arith.constant 0 : index
    %293 = vector.load %arg9[%c1_123, %c0_124, %c0_125] : memref<2x32x64xf32, #tpu.memory_space<vmem>>, vector<1x32x64xf32>
    %294 = vector.shape_cast %293 : vector<1x32x64xf32> to vector<32x64xf32>
    %c1_126 = arith.constant 1 : index
    %c0_127 = arith.constant 0 : index
    %c0_128 = arith.constant 0 : index
    %295 = vector.load %arg10[%c1_126, %c0_127, %c0_128] : memref<2x1x64xf32, #tpu.memory_space<vmem>>, vector<1x1x64xf32>
    %296 = vector.shape_cast %295 : vector<1x1x64xf32> to vector<1x64xf32>
    %c1_129 = arith.constant 1 : index
    %c0_130 = arith.constant 0 : index
    %c0_131 = arith.constant 0 : index
    %297 = vector.load %arg11[%c1_129, %c0_130, %c0_131] : memref<2x64x32xf32, #tpu.memory_space<vmem>>, vector<1x64x32xf32>
    %298 = vector.shape_cast %297 : vector<1x64x32xf32> to vector<64x32xf32>
    %c1_132 = arith.constant 1 : index
    %c0_133 = arith.constant 0 : index
    %c0_134 = arith.constant 0 : index
    %299 = vector.load %arg12[%c1_132, %c0_133, %c0_134] : memref<2x1x32xf32, #tpu.memory_space<vmem>>, vector<1x1x32xf32>
    %300 = vector.shape_cast %299 : vector<1x1x32xf32> to vector<1x32xf32>
    %cst_135 = arith.constant dense<0.000000e+00> : vector<16x64xf32>
    %301 = tpu.matmul %292, %294, %cst_135 {dimension_numbers = #tpu.dot_dimension_numbers<[1], [0], [0], [1], [0, 0, 1, 1], [], []>} : vector<16x32xf32>, vector<32x64xf32>, vector<16x64xf32> -> vector<16x64xf32>
    %302 = vector.broadcast %296 : vector<1x64xf32> to vector<16x64xf32>
    %303 = arith.addf %301, %302 : vector<16x64xf32>
    %cst_136 = arith.constant 0.000000e+00 : f32
    %304 = vector.broadcast %cst_136 : f32 to vector<16x64xf32>
    %305 = arith.maximumf %303, %304 : vector<16x64xf32>
    %cst_137 = arith.constant dense<0.000000e+00> : vector<16x32xf32>
    %306 = tpu.matmul %305, %298, %cst_137 {dimension_numbers = #tpu.dot_dimension_numbers<[1], [0], [0], [1], [0, 0, 1, 1], [], []>} : vector<16x64xf32>, vector<64x32xf32>, vector<16x32xf32> -> vector<16x32xf32>
    %307 = vector.broadcast %300 : vector<1x32xf32> to vector<16x32xf32>
    %308 = arith.addf %306, %307 : vector<16x32xf32>
    %309 = arith.addf %292, %308 : vector<16x32xf32>
    %c1_138 = arith.constant 1 : index
    %c0_139 = arith.constant 0 : index
    %c0_140 = arith.constant 0 : index
    %310 = vector.load %arg15[%c1_138, %c0_139, %c0_140] : memref<2x1x32xf32, #tpu.memory_space<vmem>>, vector<1x1x32xf32>
    %311 = vector.shape_cast %310 : vector<1x1x32xf32> to vector<1x32xf32>
    %c1_141 = arith.constant 1 : index
    %c0_142 = arith.constant 0 : index
    %c0_143 = arith.constant 0 : index
    %312 = vector.load %arg16[%c1_141, %c0_142, %c0_143] : memref<2x1x32xf32, #tpu.memory_space<vmem>>, vector<1x1x32xf32>
    %313 = vector.shape_cast %312 : vector<1x1x32xf32> to vector<1x32xf32>
    %cst_144 = arith.constant dense<0.000000e+00> : vector<16xf32>
    %314 = vector.multi_reduction <add>, %309, %cst_144 [1] : vector<16x32xf32> to vector<16xf32>
    %315 = vector.shape_cast %314 : vector<16xf32> to vector<16x1xf32>
    %cst_145 = arith.constant 3.200000e+01 : f32
    %316 = vector.broadcast %cst_145 : f32 to vector<16x1xf32>
    %317 = arith.divf %315, %316 : vector<16x1xf32>
    %318 = vector.broadcast %317 : vector<16x1xf32> to vector<16x32xf32>
    %319 = arith.subf %309, %318 : vector<16x32xf32>
    %320 = arith.mulf %319, %319 : vector<16x32xf32>
    %cst_146 = arith.constant dense<0.000000e+00> : vector<16xf32>
    %321 = vector.multi_reduction <add>, %320, %cst_146 [1] : vector<16x32xf32> to vector<16xf32>
    %322 = vector.shape_cast %321 : vector<16xf32> to vector<16x1xf32>
    %cst_147 = arith.constant 3.200000e+01 : f32
    %323 = vector.broadcast %cst_147 : f32 to vector<16x1xf32>
    %324 = arith.divf %322, %323 : vector<16x1xf32>
    %cst_148 = arith.constant 9.99999974E-6 : f32
    %325 = vector.broadcast %cst_148 : f32 to vector<16x1xf32>
    %326 = arith.addf %324, %325 : vector<16x1xf32>
    %327 = math.rsqrt %326 : vector<16x1xf32>
    %328 = vector.broadcast %327 : vector<16x1xf32> to vector<16x32xf32>
    %329 = arith.mulf %319, %328 : vector<16x32xf32>
    %330 = vector.broadcast %311 : vector<1x32xf32> to vector<16x32xf32>
    %331 = arith.mulf %329, %330 : vector<16x32xf32>
    %332 = vector.broadcast %313 : vector<1x32xf32> to vector<16x32xf32>
    %333 = arith.addf %331, %332 : vector<16x32xf32>
    %c0_149 = arith.constant 0 : index
    %c0_150 = arith.constant 0 : index
    %334 = vector.load %arg35[%c0_149, %c0_150] : memref<1x32xf32, #tpu.memory_space<vmem>>, vector<1x32xf32>
    %c0_151 = arith.constant 0 : index
    %c0_152 = arith.constant 0 : index
    %335 = vector.load %arg36[%c0_151, %c0_152] : memref<1x32xf32, #tpu.memory_space<vmem>>, vector<1x32xf32>
    %cst_153 = arith.constant dense<0.000000e+00> : vector<16xf32>
    %336 = vector.multi_reduction <add>, %333, %cst_153 [1] : vector<16x32xf32> to vector<16xf32>
    %337 = vector.shape_cast %336 : vector<16xf32> to vector<16x1xf32>
    %cst_154 = arith.constant 3.200000e+01 : f32
    %338 = vector.broadcast %cst_154 : f32 to vector<16x1xf32>
    %339 = arith.divf %337, %338 : vector<16x1xf32>
    %340 = vector.broadcast %339 : vector<16x1xf32> to vector<16x32xf32>
    %341 = arith.subf %333, %340 : vector<16x32xf32>
    %342 = arith.mulf %341, %341 : vector<16x32xf32>
    %cst_155 = arith.constant dense<0.000000e+00> : vector<16xf32>
    %343 = vector.multi_reduction <add>, %342, %cst_155 [1] : vector<16x32xf32> to vector<16xf32>
    %344 = vector.shape_cast %343 : vector<16xf32> to vector<16x1xf32>
    %cst_156 = arith.constant 3.200000e+01 : f32
    %345 = vector.broadcast %cst_156 : f32 to vector<16x1xf32>
    %346 = arith.divf %344, %345 : vector<16x1xf32>
    %cst_157 = arith.constant 9.99999974E-6 : f32
    %347 = vector.broadcast %cst_157 : f32 to vector<16x1xf32>
    %348 = arith.addf %346, %347 : vector<16x1xf32>
    %349 = math.rsqrt %348 : vector<16x1xf32>
    %350 = vector.broadcast %349 : vector<16x1xf32> to vector<16x32xf32>
    %351 = arith.mulf %341, %350 : vector<16x32xf32>
    %352 = vector.broadcast %334 : vector<1x32xf32> to vector<16x32xf32>
    %353 = arith.mulf %351, %352 : vector<16x32xf32>
    %354 = vector.broadcast %335 : vector<1x32xf32> to vector<16x32xf32>
    %355 = arith.addf %353, %354 : vector<16x32xf32>
    %c0_158 = arith.constant 0 : index
    %c0_159 = arith.constant 0 : index
    %356 = vector.load %arg1[%c0_158, %c0_159] : memref<16x32xf32, #tpu.memory_space<vmem>>, vector<16x32xf32>
    %c0_160 = arith.constant 0 : index
    %c0_161 = arith.constant 0 : index
    %c0_162 = arith.constant 0 : index
    %357 = vector.load %arg17[%c0_160, %c0_161, %c0_162] : memref<2x32x96xf32, #tpu.memory_space<vmem>>, vector<1x32x96xf32>
    %358 = vector.shape_cast %357 : vector<1x32x96xf32> to vector<32x96xf32>
    %c0_163 = arith.constant 0 : index
    %c0_164 = arith.constant 0 : index
    %c0_165 = arith.constant 0 : index
    %359 = vector.load %arg18[%c0_163, %c0_164, %c0_165] : memref<2x1x96xf32, #tpu.memory_space<vmem>>, vector<1x1x96xf32>
    %360 = vector.shape_cast %359 : vector<1x1x96xf32> to vector<1x96xf32>
    %c0_166 = arith.constant 0 : index
    %c0_167 = arith.constant 0 : index
    %c0_168 = arith.constant 0 : index
    %361 = vector.load %arg19[%c0_166, %c0_167, %c0_168] : memref<2x32x32xf32, #tpu.memory_space<vmem>>, vector<1x32x32xf32>
    %362 = vector.shape_cast %361 : vector<1x32x32xf32> to vector<32x32xf32>
    %c0_169 = arith.constant 0 : index
    %c0_170 = arith.constant 0 : index
    %c0_171 = arith.constant 0 : index
    %363 = vector.load %arg20[%c0_169, %c0_170, %c0_171] : memref<2x1x32xf32, #tpu.memory_space<vmem>>, vector<1x1x32xf32>
    %364 = vector.shape_cast %363 : vector<1x1x32xf32> to vector<1x32xf32>
    %cst_172 = arith.constant dense<0.000000e+00> : vector<16x96xf32>
    %365 = tpu.matmul %356, %358, %cst_172 {dimension_numbers = #tpu.dot_dimension_numbers<[1], [0], [0], [1], [0, 0, 1, 1], [], []>} : vector<16x32xf32>, vector<32x96xf32>, vector<16x96xf32> -> vector<16x96xf32>
    %366 = vector.broadcast %360 : vector<1x96xf32> to vector<16x96xf32>
    %367 = arith.addf %365, %366 : vector<16x96xf32>
    %368 = vector.extract_strided_slice %367 {offsets = [0, 0], sizes = [16, 32], strides = [1, 1]} : vector<16x96xf32> to vector<16x32xf32>
    %369 = vector.extract_strided_slice %367 {offsets = [0, 32], sizes = [16, 32], strides = [1, 1]} : vector<16x96xf32> to vector<16x32xf32>
    %370 = vector.extract_strided_slice %367 {offsets = [0, 64], sizes = [16, 32], strides = [1, 1]} : vector<16x96xf32> to vector<16x32xf32>
    %cst_173 = arith.constant 0.353553385 : f32
    %371 = vector.broadcast %cst_173 : f32 to vector<16x32xf32>
    %372 = arith.mulf %368, %371 : vector<16x32xf32>
    %cst_174 = arith.constant 0.000000e+00 : f32
    %373 = vector.broadcast %cst_174 : f32 to vector<16x32xf32>
    %374 = vector.extract_strided_slice %372 {offsets = [0, 0], sizes = [16, 8], strides = [1, 1]} : vector<16x32xf32> to vector<16x8xf32>
    %375 = vector.extract_strided_slice %369 {offsets = [0, 0], sizes = [16, 8], strides = [1, 1]} : vector<16x32xf32> to vector<16x8xf32>
    %376 = tpu.transpose %375, [1, 0] : vector<16x8xf32> -> vector<8x16xf32>
    %cst_175 = arith.constant dense<0.000000e+00> : vector<16x16xf32>
    %377 = tpu.matmul %374, %376, %cst_175 {dimension_numbers = #tpu.dot_dimension_numbers<[1], [0], [0], [1], [0, 0, 1, 1], [], []>} : vector<16x8xf32>, vector<8x16xf32>, vector<16x16xf32> -> vector<16x16xf32>
    %378 = arith.addf %377, %1 : vector<16x16xf32>
    %cst_176 = arith.constant dense<0xFF800000> : vector<16xf32>
    %379 = vector.multi_reduction <maximumf>, %378, %cst_176 [1] : vector<16x16xf32> to vector<16xf32>
    %380 = vector.shape_cast %379 : vector<16xf32> to vector<16x1xf32>
    %381 = vector.broadcast %380 : vector<16x1xf32> to vector<16x16xf32>
    %382 = arith.subf %378, %381 : vector<16x16xf32>
    %383 = math.exp %382 : vector<16x16xf32>
    %cst_177 = arith.constant dense<0.000000e+00> : vector<16xf32>
    %384 = vector.multi_reduction <add>, %383, %cst_177 [1] : vector<16x16xf32> to vector<16xf32>
    %385 = vector.shape_cast %384 : vector<16xf32> to vector<16x1xf32>
    %386 = tpu.reciprocal %385 {approx = true} : vector<16x1xf32> -> vector<16x1xf32>
    %387 = vector.broadcast %386 : vector<16x1xf32> to vector<16x16xf32>
    %388 = arith.mulf %383, %387 : vector<16x16xf32>
    %389 = vector.extract_strided_slice %370 {offsets = [0, 0], sizes = [16, 8], strides = [1, 1]} : vector<16x32xf32> to vector<16x8xf32>
    %cst_178 = arith.constant dense<0.000000e+00> : vector<16x8xf32>
    %390 = tpu.matmul %388, %389, %cst_178 {dimension_numbers = #tpu.dot_dimension_numbers<[1], [0], [0], [1], [0, 0, 1, 1], [], []>} : vector<16x16xf32>, vector<16x8xf32>, vector<16x8xf32> -> vector<16x8xf32>
    %391 = vector.extract_strided_slice %362 {offsets = [0, 0], sizes = [8, 32], strides = [1, 1]} : vector<32x32xf32> to vector<8x32xf32>
    %cst_179 = arith.constant dense<0.000000e+00> : vector<16x32xf32>
    %392 = tpu.matmul %390, %391, %cst_179 {dimension_numbers = #tpu.dot_dimension_numbers<[1], [0], [0], [1], [0, 0, 1, 1], [], []>} : vector<16x8xf32>, vector<8x32xf32>, vector<16x32xf32> -> vector<16x32xf32>
    %393 = arith.addf %373, %392 : vector<16x32xf32>
    %394 = vector.extract_strided_slice %372 {offsets = [0, 8], sizes = [16, 8], strides = [1, 1]} : vector<16x32xf32> to vector<16x8xf32>
    %395 = vector.extract_strided_slice %369 {offsets = [0, 8], sizes = [16, 8], strides = [1, 1]} : vector<16x32xf32> to vector<16x8xf32>
    %396 = tpu.transpose %395, [1, 0] : vector<16x8xf32> -> vector<8x16xf32>
    %cst_180 = arith.constant dense<0.000000e+00> : vector<16x16xf32>
    %397 = tpu.matmul %394, %396, %cst_180 {dimension_numbers = #tpu.dot_dimension_numbers<[1], [0], [0], [1], [0, 0, 1, 1], [], []>} : vector<16x8xf32>, vector<8x16xf32>, vector<16x16xf32> -> vector<16x16xf32>
    %398 = arith.addf %397, %1 : vector<16x16xf32>
    %cst_181 = arith.constant dense<0xFF800000> : vector<16xf32>
    %399 = vector.multi_reduction <maximumf>, %398, %cst_181 [1] : vector<16x16xf32> to vector<16xf32>
    %400 = vector.shape_cast %399 : vector<16xf32> to vector<16x1xf32>
    %401 = vector.broadcast %400 : vector<16x1xf32> to vector<16x16xf32>
    %402 = arith.subf %398, %401 : vector<16x16xf32>
    %403 = math.exp %402 : vector<16x16xf32>
    %cst_182 = arith.constant dense<0.000000e+00> : vector<16xf32>
    %404 = vector.multi_reduction <add>, %403, %cst_182 [1] : vector<16x16xf32> to vector<16xf32>
    %405 = vector.shape_cast %404 : vector<16xf32> to vector<16x1xf32>
    %406 = tpu.reciprocal %405 {approx = true} : vector<16x1xf32> -> vector<16x1xf32>
    %407 = vector.broadcast %406 : vector<16x1xf32> to vector<16x16xf32>
    %408 = arith.mulf %403, %407 : vector<16x16xf32>
    %409 = vector.extract_strided_slice %370 {offsets = [0, 8], sizes = [16, 8], strides = [1, 1]} : vector<16x32xf32> to vector<16x8xf32>
    %cst_183 = arith.constant dense<0.000000e+00> : vector<16x8xf32>
    %410 = tpu.matmul %408, %409, %cst_183 {dimension_numbers = #tpu.dot_dimension_numbers<[1], [0], [0], [1], [0, 0, 1, 1], [], []>} : vector<16x16xf32>, vector<16x8xf32>, vector<16x8xf32> -> vector<16x8xf32>
    %411 = vector.extract_strided_slice %362 {offsets = [8, 0], sizes = [8, 32], strides = [1, 1]} : vector<32x32xf32> to vector<8x32xf32>
    %cst_184 = arith.constant dense<0.000000e+00> : vector<16x32xf32>
    %412 = tpu.matmul %410, %411, %cst_184 {dimension_numbers = #tpu.dot_dimension_numbers<[1], [0], [0], [1], [0, 0, 1, 1], [], []>} : vector<16x8xf32>, vector<8x32xf32>, vector<16x32xf32> -> vector<16x32xf32>
    %413 = arith.addf %393, %412 : vector<16x32xf32>
    %414 = vector.extract_strided_slice %372 {offsets = [0, 16], sizes = [16, 8], strides = [1, 1]} : vector<16x32xf32> to vector<16x8xf32>
    %415 = vector.extract_strided_slice %369 {offsets = [0, 16], sizes = [16, 8], strides = [1, 1]} : vector<16x32xf32> to vector<16x8xf32>
    %416 = tpu.transpose %415, [1, 0] : vector<16x8xf32> -> vector<8x16xf32>
    %cst_185 = arith.constant dense<0.000000e+00> : vector<16x16xf32>
    %417 = tpu.matmul %414, %416, %cst_185 {dimension_numbers = #tpu.dot_dimension_numbers<[1], [0], [0], [1], [0, 0, 1, 1], [], []>} : vector<16x8xf32>, vector<8x16xf32>, vector<16x16xf32> -> vector<16x16xf32>
    %418 = arith.addf %417, %1 : vector<16x16xf32>
    %cst_186 = arith.constant dense<0xFF800000> : vector<16xf32>
    %419 = vector.multi_reduction <maximumf>, %418, %cst_186 [1] : vector<16x16xf32> to vector<16xf32>
    %420 = vector.shape_cast %419 : vector<16xf32> to vector<16x1xf32>
    %421 = vector.broadcast %420 : vector<16x1xf32> to vector<16x16xf32>
    %422 = arith.subf %418, %421 : vector<16x16xf32>
    %423 = math.exp %422 : vector<16x16xf32>
    %cst_187 = arith.constant dense<0.000000e+00> : vector<16xf32>
    %424 = vector.multi_reduction <add>, %423, %cst_187 [1] : vector<16x16xf32> to vector<16xf32>
    %425 = vector.shape_cast %424 : vector<16xf32> to vector<16x1xf32>
    %426 = tpu.reciprocal %425 {approx = true} : vector<16x1xf32> -> vector<16x1xf32>
    %427 = vector.broadcast %426 : vector<16x1xf32> to vector<16x16xf32>
    %428 = arith.mulf %423, %427 : vector<16x16xf32>
    %429 = vector.extract_strided_slice %370 {offsets = [0, 16], sizes = [16, 8], strides = [1, 1]} : vector<16x32xf32> to vector<16x8xf32>
    %cst_188 = arith.constant dense<0.000000e+00> : vector<16x8xf32>
    %430 = tpu.matmul %428, %429, %cst_188 {dimension_numbers = #tpu.dot_dimension_numbers<[1], [0], [0], [1], [0, 0, 1, 1], [], []>} : vector<16x16xf32>, vector<16x8xf32>, vector<16x8xf32> -> vector<16x8xf32>
    %431 = vector.extract_strided_slice %362 {offsets = [16, 0], sizes = [8, 32], strides = [1, 1]} : vector<32x32xf32> to vector<8x32xf32>
    %cst_189 = arith.constant dense<0.000000e+00> : vector<16x32xf32>
    %432 = tpu.matmul %430, %431, %cst_189 {dimension_numbers = #tpu.dot_dimension_numbers<[1], [0], [0], [1], [0, 0, 1, 1], [], []>} : vector<16x8xf32>, vector<8x32xf32>, vector<16x32xf32> -> vector<16x32xf32>
    %433 = arith.addf %413, %432 : vector<16x32xf32>
    %434 = vector.extract_strided_slice %372 {offsets = [0, 24], sizes = [16, 8], strides = [1, 1]} : vector<16x32xf32> to vector<16x8xf32>
    %435 = vector.extract_strided_slice %369 {offsets = [0, 24], sizes = [16, 8], strides = [1, 1]} : vector<16x32xf32> to vector<16x8xf32>
    %436 = tpu.transpose %435, [1, 0] : vector<16x8xf32> -> vector<8x16xf32>
    %cst_190 = arith.constant dense<0.000000e+00> : vector<16x16xf32>
    %437 = tpu.matmul %434, %436, %cst_190 {dimension_numbers = #tpu.dot_dimension_numbers<[1], [0], [0], [1], [0, 0, 1, 1], [], []>} : vector<16x8xf32>, vector<8x16xf32>, vector<16x16xf32> -> vector<16x16xf32>
    %438 = arith.addf %437, %1 : vector<16x16xf32>
    %cst_191 = arith.constant dense<0xFF800000> : vector<16xf32>
    %439 = vector.multi_reduction <maximumf>, %438, %cst_191 [1] : vector<16x16xf32> to vector<16xf32>
    %440 = vector.shape_cast %439 : vector<16xf32> to vector<16x1xf32>
    %441 = vector.broadcast %440 : vector<16x1xf32> to vector<16x16xf32>
    %442 = arith.subf %438, %441 : vector<16x16xf32>
    %443 = math.exp %442 : vector<16x16xf32>
    %cst_192 = arith.constant dense<0.000000e+00> : vector<16xf32>
    %444 = vector.multi_reduction <add>, %443, %cst_192 [1] : vector<16x16xf32> to vector<16xf32>
    %445 = vector.shape_cast %444 : vector<16xf32> to vector<16x1xf32>
    %446 = tpu.reciprocal %445 {approx = true} : vector<16x1xf32> -> vector<16x1xf32>
    %447 = vector.broadcast %446 : vector<16x1xf32> to vector<16x16xf32>
    %448 = arith.mulf %443, %447 : vector<16x16xf32>
    %449 = vector.extract_strided_slice %370 {offsets = [0, 24], sizes = [16, 8], strides = [1, 1]} : vector<16x32xf32> to vector<16x8xf32>
    %cst_193 = arith.constant dense<0.000000e+00> : vector<16x8xf32>
    %450 = tpu.matmul %448, %449, %cst_193 {dimension_numbers = #tpu.dot_dimension_numbers<[1], [0], [0], [1], [0, 0, 1, 1], [], []>} : vector<16x16xf32>, vector<16x8xf32>, vector<16x8xf32> -> vector<16x8xf32>
    %451 = vector.extract_strided_slice %362 {offsets = [24, 0], sizes = [8, 32], strides = [1, 1]} : vector<32x32xf32> to vector<8x32xf32>
    %cst_194 = arith.constant dense<0.000000e+00> : vector<16x32xf32>
    %452 = tpu.matmul %450, %451, %cst_194 {dimension_numbers = #tpu.dot_dimension_numbers<[1], [0], [0], [1], [0, 0, 1, 1], [], []>} : vector<16x8xf32>, vector<8x32xf32>, vector<16x32xf32> -> vector<16x32xf32>
    %453 = arith.addf %433, %452 : vector<16x32xf32>
    %454 = vector.broadcast %364 : vector<1x32xf32> to vector<16x32xf32>
    %455 = arith.addf %453, %454 : vector<16x32xf32>
    %456 = arith.addf %356, %455 : vector<16x32xf32>
    %c0_195 = arith.constant 0 : index
    %c0_196 = arith.constant 0 : index
    %c0_197 = arith.constant 0 : index
    %457 = vector.load %arg29[%c0_195, %c0_196, %c0_197] : memref<2x1x32xf32, #tpu.memory_space<vmem>>, vector<1x1x32xf32>
    %458 = vector.shape_cast %457 : vector<1x1x32xf32> to vector<1x32xf32>
    %c0_198 = arith.constant 0 : index
    %c0_199 = arith.constant 0 : index
    %c0_200 = arith.constant 0 : index
    %459 = vector.load %arg30[%c0_198, %c0_199, %c0_200] : memref<2x1x32xf32, #tpu.memory_space<vmem>>, vector<1x1x32xf32>
    %460 = vector.shape_cast %459 : vector<1x1x32xf32> to vector<1x32xf32>
    %cst_201 = arith.constant dense<0.000000e+00> : vector<16xf32>
    %461 = vector.multi_reduction <add>, %456, %cst_201 [1] : vector<16x32xf32> to vector<16xf32>
    %462 = vector.shape_cast %461 : vector<16xf32> to vector<16x1xf32>
    %cst_202 = arith.constant 3.200000e+01 : f32
    %463 = vector.broadcast %cst_202 : f32 to vector<16x1xf32>
    %464 = arith.divf %462, %463 : vector<16x1xf32>
    %465 = vector.broadcast %464 : vector<16x1xf32> to vector<16x32xf32>
    %466 = arith.subf %456, %465 : vector<16x32xf32>
    %467 = arith.mulf %466, %466 : vector<16x32xf32>
    %cst_203 = arith.constant dense<0.000000e+00> : vector<16xf32>
    %468 = vector.multi_reduction <add>, %467, %cst_203 [1] : vector<16x32xf32> to vector<16xf32>
    %469 = vector.shape_cast %468 : vector<16xf32> to vector<16x1xf32>
    %cst_204 = arith.constant 3.200000e+01 : f32
    %470 = vector.broadcast %cst_204 : f32 to vector<16x1xf32>
    %471 = arith.divf %469, %470 : vector<16x1xf32>
    %cst_205 = arith.constant 9.99999974E-6 : f32
    %472 = vector.broadcast %cst_205 : f32 to vector<16x1xf32>
    %473 = arith.addf %471, %472 : vector<16x1xf32>
    %474 = math.rsqrt %473 : vector<16x1xf32>
    %475 = vector.broadcast %474 : vector<16x1xf32> to vector<16x32xf32>
    %476 = arith.mulf %466, %475 : vector<16x32xf32>
    %477 = vector.broadcast %458 : vector<1x32xf32> to vector<16x32xf32>
    %478 = arith.mulf %476, %477 : vector<16x32xf32>
    %479 = vector.broadcast %460 : vector<1x32xf32> to vector<16x32xf32>
    %480 = arith.addf %478, %479 : vector<16x32xf32>
    %c0_206 = arith.constant 0 : index
    %c0_207 = arith.constant 0 : index
    %c0_208 = arith.constant 0 : index
    %481 = vector.load %arg21[%c0_206, %c0_207, %c0_208] : memref<2x32x96xf32, #tpu.memory_space<vmem>>, vector<1x32x96xf32>
    %482 = vector.shape_cast %481 : vector<1x32x96xf32> to vector<32x96xf32>
    %c0_209 = arith.constant 0 : index
    %c0_210 = arith.constant 0 : index
    %c0_211 = arith.constant 0 : index
    %483 = vector.load %arg22[%c0_209, %c0_210, %c0_211] : memref<2x1x96xf32, #tpu.memory_space<vmem>>, vector<1x1x96xf32>
    %484 = vector.shape_cast %483 : vector<1x1x96xf32> to vector<1x96xf32>
    %c0_212 = arith.constant 0 : index
    %c0_213 = arith.constant 0 : index
    %c0_214 = arith.constant 0 : index
    %485 = vector.load %arg23[%c0_212, %c0_213, %c0_214] : memref<2x32x32xf32, #tpu.memory_space<vmem>>, vector<1x32x32xf32>
    %486 = vector.shape_cast %485 : vector<1x32x32xf32> to vector<32x32xf32>
    %c0_215 = arith.constant 0 : index
    %c0_216 = arith.constant 0 : index
    %c0_217 = arith.constant 0 : index
    %487 = vector.load %arg24[%c0_215, %c0_216, %c0_217] : memref<2x1x32xf32, #tpu.memory_space<vmem>>, vector<1x1x32xf32>
    %488 = vector.shape_cast %487 : vector<1x1x32xf32> to vector<1x32xf32>
    %489 = vector.extract_strided_slice %482 {offsets = [0, 0], sizes = [32, 32], strides = [1, 1]} : vector<32x96xf32> to vector<32x32xf32>
    %cst_218 = arith.constant dense<0.000000e+00> : vector<16x32xf32>
    %490 = tpu.matmul %480, %489, %cst_218 {dimension_numbers = #tpu.dot_dimension_numbers<[1], [0], [0], [1], [0, 0, 1, 1], [], []>} : vector<16x32xf32>, vector<32x32xf32>, vector<16x32xf32> -> vector<16x32xf32>
    %491 = vector.extract_strided_slice %484 {offsets = [0, 0], sizes = [1, 32], strides = [1, 1]} : vector<1x96xf32> to vector<1x32xf32>
    %492 = vector.broadcast %491 : vector<1x32xf32> to vector<16x32xf32>
    %493 = arith.addf %490, %492 : vector<16x32xf32>
    %494 = vector.extract_strided_slice %482 {offsets = [0, 32], sizes = [32, 64], strides = [1, 1]} : vector<32x96xf32> to vector<32x64xf32>
    %cst_219 = arith.constant dense<0.000000e+00> : vector<16x64xf32>
    %495 = tpu.matmul %355, %494, %cst_219 {dimension_numbers = #tpu.dot_dimension_numbers<[1], [0], [0], [1], [0, 0, 1, 1], [], []>} : vector<16x32xf32>, vector<32x64xf32>, vector<16x64xf32> -> vector<16x64xf32>
    %496 = vector.extract_strided_slice %484 {offsets = [0, 32], sizes = [1, 64], strides = [1, 1]} : vector<1x96xf32> to vector<1x64xf32>
    %497 = vector.broadcast %496 : vector<1x64xf32> to vector<16x64xf32>
    %498 = arith.addf %495, %497 : vector<16x64xf32>
    %499 = vector.extract_strided_slice %498 {offsets = [0, 0], sizes = [16, 32], strides = [1, 1]} : vector<16x64xf32> to vector<16x32xf32>
    %500 = vector.extract_strided_slice %498 {offsets = [0, 32], sizes = [16, 32], strides = [1, 1]} : vector<16x64xf32> to vector<16x32xf32>
    %cst_220 = arith.constant 0.353553385 : f32
    %501 = vector.broadcast %cst_220 : f32 to vector<16x32xf32>
    %502 = arith.mulf %493, %501 : vector<16x32xf32>
    %cst_221 = arith.constant 0.000000e+00 : f32
    %503 = vector.broadcast %cst_221 : f32 to vector<16x32xf32>
    %504 = vector.extract_strided_slice %502 {offsets = [0, 0], sizes = [16, 8], strides = [1, 1]} : vector<16x32xf32> to vector<16x8xf32>
    %505 = vector.extract_strided_slice %499 {offsets = [0, 0], sizes = [16, 8], strides = [1, 1]} : vector<16x32xf32> to vector<16x8xf32>
    %506 = tpu.transpose %505, [1, 0] : vector<16x8xf32> -> vector<8x16xf32>
    %cst_222 = arith.constant dense<0.000000e+00> : vector<16x16xf32>
    %507 = tpu.matmul %504, %506, %cst_222 {dimension_numbers = #tpu.dot_dimension_numbers<[1], [0], [0], [1], [0, 0, 1, 1], [], []>} : vector<16x8xf32>, vector<8x16xf32>, vector<16x16xf32> -> vector<16x16xf32>
    %508 = arith.addf %507, %2 : vector<16x16xf32>
    %cst_223 = arith.constant dense<0xFF800000> : vector<16xf32>
    %509 = vector.multi_reduction <maximumf>, %508, %cst_223 [1] : vector<16x16xf32> to vector<16xf32>
    %510 = vector.shape_cast %509 : vector<16xf32> to vector<16x1xf32>
    %511 = vector.broadcast %510 : vector<16x1xf32> to vector<16x16xf32>
    %512 = arith.subf %508, %511 : vector<16x16xf32>
    %513 = math.exp %512 : vector<16x16xf32>
    %cst_224 = arith.constant dense<0.000000e+00> : vector<16xf32>
    %514 = vector.multi_reduction <add>, %513, %cst_224 [1] : vector<16x16xf32> to vector<16xf32>
    %515 = vector.shape_cast %514 : vector<16xf32> to vector<16x1xf32>
    %516 = tpu.reciprocal %515 {approx = true} : vector<16x1xf32> -> vector<16x1xf32>
    %517 = vector.broadcast %516 : vector<16x1xf32> to vector<16x16xf32>
    %518 = arith.mulf %513, %517 : vector<16x16xf32>
    %519 = vector.extract_strided_slice %500 {offsets = [0, 0], sizes = [16, 8], strides = [1, 1]} : vector<16x32xf32> to vector<16x8xf32>
    %cst_225 = arith.constant dense<0.000000e+00> : vector<16x8xf32>
    %520 = tpu.matmul %518, %519, %cst_225 {dimension_numbers = #tpu.dot_dimension_numbers<[1], [0], [0], [1], [0, 0, 1, 1], [], []>} : vector<16x16xf32>, vector<16x8xf32>, vector<16x8xf32> -> vector<16x8xf32>
    %521 = vector.extract_strided_slice %486 {offsets = [0, 0], sizes = [8, 32], strides = [1, 1]} : vector<32x32xf32> to vector<8x32xf32>
    %cst_226 = arith.constant dense<0.000000e+00> : vector<16x32xf32>
    %522 = tpu.matmul %520, %521, %cst_226 {dimension_numbers = #tpu.dot_dimension_numbers<[1], [0], [0], [1], [0, 0, 1, 1], [], []>} : vector<16x8xf32>, vector<8x32xf32>, vector<16x32xf32> -> vector<16x32xf32>
    %523 = arith.addf %503, %522 : vector<16x32xf32>
    %524 = vector.extract_strided_slice %502 {offsets = [0, 8], sizes = [16, 8], strides = [1, 1]} : vector<16x32xf32> to vector<16x8xf32>
    %525 = vector.extract_strided_slice %499 {offsets = [0, 8], sizes = [16, 8], strides = [1, 1]} : vector<16x32xf32> to vector<16x8xf32>
    %526 = tpu.transpose %525, [1, 0] : vector<16x8xf32> -> vector<8x16xf32>
    %cst_227 = arith.constant dense<0.000000e+00> : vector<16x16xf32>
    %527 = tpu.matmul %524, %526, %cst_227 {dimension_numbers = #tpu.dot_dimension_numbers<[1], [0], [0], [1], [0, 0, 1, 1], [], []>} : vector<16x8xf32>, vector<8x16xf32>, vector<16x16xf32> -> vector<16x16xf32>
    %528 = arith.addf %527, %2 : vector<16x16xf32>
    %cst_228 = arith.constant dense<0xFF800000> : vector<16xf32>
    %529 = vector.multi_reduction <maximumf>, %528, %cst_228 [1] : vector<16x16xf32> to vector<16xf32>
    %530 = vector.shape_cast %529 : vector<16xf32> to vector<16x1xf32>
    %531 = vector.broadcast %530 : vector<16x1xf32> to vector<16x16xf32>
    %532 = arith.subf %528, %531 : vector<16x16xf32>
    %533 = math.exp %532 : vector<16x16xf32>
    %cst_229 = arith.constant dense<0.000000e+00> : vector<16xf32>
    %534 = vector.multi_reduction <add>, %533, %cst_229 [1] : vector<16x16xf32> to vector<16xf32>
    %535 = vector.shape_cast %534 : vector<16xf32> to vector<16x1xf32>
    %536 = tpu.reciprocal %535 {approx = true} : vector<16x1xf32> -> vector<16x1xf32>
    %537 = vector.broadcast %536 : vector<16x1xf32> to vector<16x16xf32>
    %538 = arith.mulf %533, %537 : vector<16x16xf32>
    %539 = vector.extract_strided_slice %500 {offsets = [0, 8], sizes = [16, 8], strides = [1, 1]} : vector<16x32xf32> to vector<16x8xf32>
    %cst_230 = arith.constant dense<0.000000e+00> : vector<16x8xf32>
    %540 = tpu.matmul %538, %539, %cst_230 {dimension_numbers = #tpu.dot_dimension_numbers<[1], [0], [0], [1], [0, 0, 1, 1], [], []>} : vector<16x16xf32>, vector<16x8xf32>, vector<16x8xf32> -> vector<16x8xf32>
    %541 = vector.extract_strided_slice %486 {offsets = [8, 0], sizes = [8, 32], strides = [1, 1]} : vector<32x32xf32> to vector<8x32xf32>
    %cst_231 = arith.constant dense<0.000000e+00> : vector<16x32xf32>
    %542 = tpu.matmul %540, %541, %cst_231 {dimension_numbers = #tpu.dot_dimension_numbers<[1], [0], [0], [1], [0, 0, 1, 1], [], []>} : vector<16x8xf32>, vector<8x32xf32>, vector<16x32xf32> -> vector<16x32xf32>
    %543 = arith.addf %523, %542 : vector<16x32xf32>
    %544 = vector.extract_strided_slice %502 {offsets = [0, 16], sizes = [16, 8], strides = [1, 1]} : vector<16x32xf32> to vector<16x8xf32>
    %545 = vector.extract_strided_slice %499 {offsets = [0, 16], sizes = [16, 8], strides = [1, 1]} : vector<16x32xf32> to vector<16x8xf32>
    %546 = tpu.transpose %545, [1, 0] : vector<16x8xf32> -> vector<8x16xf32>
    %cst_232 = arith.constant dense<0.000000e+00> : vector<16x16xf32>
    %547 = tpu.matmul %544, %546, %cst_232 {dimension_numbers = #tpu.dot_dimension_numbers<[1], [0], [0], [1], [0, 0, 1, 1], [], []>} : vector<16x8xf32>, vector<8x16xf32>, vector<16x16xf32> -> vector<16x16xf32>
    %548 = arith.addf %547, %2 : vector<16x16xf32>
    %cst_233 = arith.constant dense<0xFF800000> : vector<16xf32>
    %549 = vector.multi_reduction <maximumf>, %548, %cst_233 [1] : vector<16x16xf32> to vector<16xf32>
    %550 = vector.shape_cast %549 : vector<16xf32> to vector<16x1xf32>
    %551 = vector.broadcast %550 : vector<16x1xf32> to vector<16x16xf32>
    %552 = arith.subf %548, %551 : vector<16x16xf32>
    %553 = math.exp %552 : vector<16x16xf32>
    %cst_234 = arith.constant dense<0.000000e+00> : vector<16xf32>
    %554 = vector.multi_reduction <add>, %553, %cst_234 [1] : vector<16x16xf32> to vector<16xf32>
    %555 = vector.shape_cast %554 : vector<16xf32> to vector<16x1xf32>
    %556 = tpu.reciprocal %555 {approx = true} : vector<16x1xf32> -> vector<16x1xf32>
    %557 = vector.broadcast %556 : vector<16x1xf32> to vector<16x16xf32>
    %558 = arith.mulf %553, %557 : vector<16x16xf32>
    %559 = vector.extract_strided_slice %500 {offsets = [0, 16], sizes = [16, 8], strides = [1, 1]} : vector<16x32xf32> to vector<16x8xf32>
    %cst_235 = arith.constant dense<0.000000e+00> : vector<16x8xf32>
    %560 = tpu.matmul %558, %559, %cst_235 {dimension_numbers = #tpu.dot_dimension_numbers<[1], [0], [0], [1], [0, 0, 1, 1], [], []>} : vector<16x16xf32>, vector<16x8xf32>, vector<16x8xf32> -> vector<16x8xf32>
    %561 = vector.extract_strided_slice %486 {offsets = [16, 0], sizes = [8, 32], strides = [1, 1]} : vector<32x32xf32> to vector<8x32xf32>
    %cst_236 = arith.constant dense<0.000000e+00> : vector<16x32xf32>
    %562 = tpu.matmul %560, %561, %cst_236 {dimension_numbers = #tpu.dot_dimension_numbers<[1], [0], [0], [1], [0, 0, 1, 1], [], []>} : vector<16x8xf32>, vector<8x32xf32>, vector<16x32xf32> -> vector<16x32xf32>
    %563 = arith.addf %543, %562 : vector<16x32xf32>
    %564 = vector.extract_strided_slice %502 {offsets = [0, 24], sizes = [16, 8], strides = [1, 1]} : vector<16x32xf32> to vector<16x8xf32>
    %565 = vector.extract_strided_slice %499 {offsets = [0, 24], sizes = [16, 8], strides = [1, 1]} : vector<16x32xf32> to vector<16x8xf32>
    %566 = tpu.transpose %565, [1, 0] : vector<16x8xf32> -> vector<8x16xf32>
    %cst_237 = arith.constant dense<0.000000e+00> : vector<16x16xf32>
    %567 = tpu.matmul %564, %566, %cst_237 {dimension_numbers = #tpu.dot_dimension_numbers<[1], [0], [0], [1], [0, 0, 1, 1], [], []>} : vector<16x8xf32>, vector<8x16xf32>, vector<16x16xf32> -> vector<16x16xf32>
    %568 = arith.addf %567, %2 : vector<16x16xf32>
    %cst_238 = arith.constant dense<0xFF800000> : vector<16xf32>
    %569 = vector.multi_reduction <maximumf>, %568, %cst_238 [1] : vector<16x16xf32> to vector<16xf32>
    %570 = vector.shape_cast %569 : vector<16xf32> to vector<16x1xf32>
    %571 = vector.broadcast %570 : vector<16x1xf32> to vector<16x16xf32>
    %572 = arith.subf %568, %571 : vector<16x16xf32>
    %573 = math.exp %572 : vector<16x16xf32>
    %cst_239 = arith.constant dense<0.000000e+00> : vector<16xf32>
    %574 = vector.multi_reduction <add>, %573, %cst_239 [1] : vector<16x16xf32> to vector<16xf32>
    %575 = vector.shape_cast %574 : vector<16xf32> to vector<16x1xf32>
    %576 = tpu.reciprocal %575 {approx = true} : vector<16x1xf32> -> vector<16x1xf32>
    %577 = vector.broadcast %576 : vector<16x1xf32> to vector<16x16xf32>
    %578 = arith.mulf %573, %577 : vector<16x16xf32>
    %579 = vector.extract_strided_slice %500 {offsets = [0, 24], sizes = [16, 8], strides = [1, 1]} : vector<16x32xf32> to vector<16x8xf32>
    %cst_240 = arith.constant dense<0.000000e+00> : vector<16x8xf32>
    %580 = tpu.matmul %578, %579, %cst_240 {dimension_numbers = #tpu.dot_dimension_numbers<[1], [0], [0], [1], [0, 0, 1, 1], [], []>} : vector<16x16xf32>, vector<16x8xf32>, vector<16x8xf32> -> vector<16x8xf32>
    %581 = vector.extract_strided_slice %486 {offsets = [24, 0], sizes = [8, 32], strides = [1, 1]} : vector<32x32xf32> to vector<8x32xf32>
    %cst_241 = arith.constant dense<0.000000e+00> : vector<16x32xf32>
    %582 = tpu.matmul %580, %581, %cst_241 {dimension_numbers = #tpu.dot_dimension_numbers<[1], [0], [0], [1], [0, 0, 1, 1], [], []>} : vector<16x8xf32>, vector<8x32xf32>, vector<16x32xf32> -> vector<16x32xf32>
    %583 = arith.addf %563, %582 : vector<16x32xf32>
    %584 = vector.broadcast %488 : vector<1x32xf32> to vector<16x32xf32>
    %585 = arith.addf %583, %584 : vector<16x32xf32>
    %586 = arith.addf %480, %585 : vector<16x32xf32>
    %c0_242 = arith.constant 0 : index
    %c0_243 = arith.constant 0 : index
    %c0_244 = arith.constant 0 : index
    %587 = vector.load %arg31[%c0_242, %c0_243, %c0_244] : memref<2x1x32xf32, #tpu.memory_space<vmem>>, vector<1x1x32xf32>
    %588 = vector.shape_cast %587 : vector<1x1x32xf32> to vector<1x32xf32>
    %c0_245 = arith.constant 0 : index
    %c0_246 = arith.constant 0 : index
    %c0_247 = arith.constant 0 : index
    %589 = vector.load %arg32[%c0_245, %c0_246, %c0_247] : memref<2x1x32xf32, #tpu.memory_space<vmem>>, vector<1x1x32xf32>
    %590 = vector.shape_cast %589 : vector<1x1x32xf32> to vector<1x32xf32>
    %cst_248 = arith.constant dense<0.000000e+00> : vector<16xf32>
    %591 = vector.multi_reduction <add>, %586, %cst_248 [1] : vector<16x32xf32> to vector<16xf32>
    %592 = vector.shape_cast %591 : vector<16xf32> to vector<16x1xf32>
    %cst_249 = arith.constant 3.200000e+01 : f32
    %593 = vector.broadcast %cst_249 : f32 to vector<16x1xf32>
    %594 = arith.divf %592, %593 : vector<16x1xf32>
    %595 = vector.broadcast %594 : vector<16x1xf32> to vector<16x32xf32>
    %596 = arith.subf %586, %595 : vector<16x32xf32>
    %597 = arith.mulf %596, %596 : vector<16x32xf32>
    %cst_250 = arith.constant dense<0.000000e+00> : vector<16xf32>
    %598 = vector.multi_reduction <add>, %597, %cst_250 [1] : vector<16x32xf32> to vector<16xf32>
    %599 = vector.shape_cast %598 : vector<16xf32> to vector<16x1xf32>
    %cst_251 = arith.constant 3.200000e+01 : f32
    %600 = vector.broadcast %cst_251 : f32 to vector<16x1xf32>
    %601 = arith.divf %599, %600 : vector<16x1xf32>
    %cst_252 = arith.constant 9.99999974E-6 : f32
    %602 = vector.broadcast %cst_252 : f32 to vector<16x1xf32>
    %603 = arith.addf %601, %602 : vector<16x1xf32>
    %604 = math.rsqrt %603 : vector<16x1xf32>
    %605 = vector.broadcast %604 : vector<16x1xf32> to vector<16x32xf32>
    %606 = arith.mulf %596, %605 : vector<16x32xf32>
    %607 = vector.broadcast %588 : vector<1x32xf32> to vector<16x32xf32>
    %608 = arith.mulf %606, %607 : vector<16x32xf32>
    %609 = vector.broadcast %590 : vector<1x32xf32> to vector<16x32xf32>
    %610 = arith.addf %608, %609 : vector<16x32xf32>
    %c0_253 = arith.constant 0 : index
    %c0_254 = arith.constant 0 : index
    %c0_255 = arith.constant 0 : index
    %611 = vector.load %arg25[%c0_253, %c0_254, %c0_255] : memref<2x32x64xf32, #tpu.memory_space<vmem>>, vector<1x32x64xf32>
    %612 = vector.shape_cast %611 : vector<1x32x64xf32> to vector<32x64xf32>
    %c0_256 = arith.constant 0 : index
    %c0_257 = arith.constant 0 : index
    %c0_258 = arith.constant 0 : index
    %613 = vector.load %arg26[%c0_256, %c0_257, %c0_258] : memref<2x1x64xf32, #tpu.memory_space<vmem>>, vector<1x1x64xf32>
    %614 = vector.shape_cast %613 : vector<1x1x64xf32> to vector<1x64xf32>
    %c0_259 = arith.constant 0 : index
    %c0_260 = arith.constant 0 : index
    %c0_261 = arith.constant 0 : index
    %615 = vector.load %arg27[%c0_259, %c0_260, %c0_261] : memref<2x64x32xf32, #tpu.memory_space<vmem>>, vector<1x64x32xf32>
    %616 = vector.shape_cast %615 : vector<1x64x32xf32> to vector<64x32xf32>
    %c0_262 = arith.constant 0 : index
    %c0_263 = arith.constant 0 : index
    %c0_264 = arith.constant 0 : index
    %617 = vector.load %arg28[%c0_262, %c0_263, %c0_264] : memref<2x1x32xf32, #tpu.memory_space<vmem>>, vector<1x1x32xf32>
    %618 = vector.shape_cast %617 : vector<1x1x32xf32> to vector<1x32xf32>
    %cst_265 = arith.constant dense<0.000000e+00> : vector<16x64xf32>
    %619 = tpu.matmul %610, %612, %cst_265 {dimension_numbers = #tpu.dot_dimension_numbers<[1], [0], [0], [1], [0, 0, 1, 1], [], []>} : vector<16x32xf32>, vector<32x64xf32>, vector<16x64xf32> -> vector<16x64xf32>
    %620 = vector.broadcast %614 : vector<1x64xf32> to vector<16x64xf32>
    %621 = arith.addf %619, %620 : vector<16x64xf32>
    %cst_266 = arith.constant 0.000000e+00 : f32
    %622 = vector.broadcast %cst_266 : f32 to vector<16x64xf32>
    %623 = arith.maximumf %621, %622 : vector<16x64xf32>
    %cst_267 = arith.constant dense<0.000000e+00> : vector<16x32xf32>
    %624 = tpu.matmul %623, %616, %cst_267 {dimension_numbers = #tpu.dot_dimension_numbers<[1], [0], [0], [1], [0, 0, 1, 1], [], []>} : vector<16x64xf32>, vector<64x32xf32>, vector<16x32xf32> -> vector<16x32xf32>
    %625 = vector.broadcast %618 : vector<1x32xf32> to vector<16x32xf32>
    %626 = arith.addf %624, %625 : vector<16x32xf32>
    %627 = arith.addf %610, %626 : vector<16x32xf32>
    %c0_268 = arith.constant 0 : index
    %c0_269 = arith.constant 0 : index
    %c0_270 = arith.constant 0 : index
    %628 = vector.load %arg33[%c0_268, %c0_269, %c0_270] : memref<2x1x32xf32, #tpu.memory_space<vmem>>, vector<1x1x32xf32>
    %629 = vector.shape_cast %628 : vector<1x1x32xf32> to vector<1x32xf32>
    %c0_271 = arith.constant 0 : index
    %c0_272 = arith.constant 0 : index
    %c0_273 = arith.constant 0 : index
    %630 = vector.load %arg34[%c0_271, %c0_272, %c0_273] : memref<2x1x32xf32, #tpu.memory_space<vmem>>, vector<1x1x32xf32>
    %631 = vector.shape_cast %630 : vector<1x1x32xf32> to vector<1x32xf32>
    %cst_274 = arith.constant dense<0.000000e+00> : vector<16xf32>
    %632 = vector.multi_reduction <add>, %627, %cst_274 [1] : vector<16x32xf32> to vector<16xf32>
    %633 = vector.shape_cast %632 : vector<16xf32> to vector<16x1xf32>
    %cst_275 = arith.constant 3.200000e+01 : f32
    %634 = vector.broadcast %cst_275 : f32 to vector<16x1xf32>
    %635 = arith.divf %633, %634 : vector<16x1xf32>
    %636 = vector.broadcast %635 : vector<16x1xf32> to vector<16x32xf32>
    %637 = arith.subf %627, %636 : vector<16x32xf32>
    %638 = arith.mulf %637, %637 : vector<16x32xf32>
    %cst_276 = arith.constant dense<0.000000e+00> : vector<16xf32>
    %639 = vector.multi_reduction <add>, %638, %cst_276 [1] : vector<16x32xf32> to vector<16xf32>
    %640 = vector.shape_cast %639 : vector<16xf32> to vector<16x1xf32>
    %cst_277 = arith.constant 3.200000e+01 : f32
    %641 = vector.broadcast %cst_277 : f32 to vector<16x1xf32>
    %642 = arith.divf %640, %641 : vector<16x1xf32>
    %cst_278 = arith.constant 9.99999974E-6 : f32
    %643 = vector.broadcast %cst_278 : f32 to vector<16x1xf32>
    %644 = arith.addf %642, %643 : vector<16x1xf32>
    %645 = math.rsqrt %644 : vector<16x1xf32>
    %646 = vector.broadcast %645 : vector<16x1xf32> to vector<16x32xf32>
    %647 = arith.mulf %637, %646 : vector<16x32xf32>
    %648 = vector.broadcast %629 : vector<1x32xf32> to vector<16x32xf32>
    %649 = arith.mulf %647, %648 : vector<16x32xf32>
    %650 = vector.broadcast %631 : vector<1x32xf32> to vector<16x32xf32>
    %651 = arith.addf %649, %650 : vector<16x32xf32>
    %c1_279 = arith.constant 1 : index
    %c0_280 = arith.constant 0 : index
    %c0_281 = arith.constant 0 : index
    %652 = vector.load %arg17[%c1_279, %c0_280, %c0_281] : memref<2x32x96xf32, #tpu.memory_space<vmem>>, vector<1x32x96xf32>
    %653 = vector.shape_cast %652 : vector<1x32x96xf32> to vector<32x96xf32>
    %c1_282 = arith.constant 1 : index
    %c0_283 = arith.constant 0 : index
    %c0_284 = arith.constant 0 : index
    %654 = vector.load %arg18[%c1_282, %c0_283, %c0_284] : memref<2x1x96xf32, #tpu.memory_space<vmem>>, vector<1x1x96xf32>
    %655 = vector.shape_cast %654 : vector<1x1x96xf32> to vector<1x96xf32>
    %c1_285 = arith.constant 1 : index
    %c0_286 = arith.constant 0 : index
    %c0_287 = arith.constant 0 : index
    %656 = vector.load %arg19[%c1_285, %c0_286, %c0_287] : memref<2x32x32xf32, #tpu.memory_space<vmem>>, vector<1x32x32xf32>
    %657 = vector.shape_cast %656 : vector<1x32x32xf32> to vector<32x32xf32>
    %c1_288 = arith.constant 1 : index
    %c0_289 = arith.constant 0 : index
    %c0_290 = arith.constant 0 : index
    %658 = vector.load %arg20[%c1_288, %c0_289, %c0_290] : memref<2x1x32xf32, #tpu.memory_space<vmem>>, vector<1x1x32xf32>
    %659 = vector.shape_cast %658 : vector<1x1x32xf32> to vector<1x32xf32>
    %cst_291 = arith.constant dense<0.000000e+00> : vector<16x96xf32>
    %660 = tpu.matmul %651, %653, %cst_291 {dimension_numbers = #tpu.dot_dimension_numbers<[1], [0], [0], [1], [0, 0, 1, 1], [], []>} : vector<16x32xf32>, vector<32x96xf32>, vector<16x96xf32> -> vector<16x96xf32>
    %661 = vector.broadcast %655 : vector<1x96xf32> to vector<16x96xf32>
    %662 = arith.addf %660, %661 : vector<16x96xf32>
    %663 = vector.extract_strided_slice %662 {offsets = [0, 0], sizes = [16, 32], strides = [1, 1]} : vector<16x96xf32> to vector<16x32xf32>
    %664 = vector.extract_strided_slice %662 {offsets = [0, 32], sizes = [16, 32], strides = [1, 1]} : vector<16x96xf32> to vector<16x32xf32>
    %665 = vector.extract_strided_slice %662 {offsets = [0, 64], sizes = [16, 32], strides = [1, 1]} : vector<16x96xf32> to vector<16x32xf32>
    %cst_292 = arith.constant 0.353553385 : f32
    %666 = vector.broadcast %cst_292 : f32 to vector<16x32xf32>
    %667 = arith.mulf %663, %666 : vector<16x32xf32>
    %cst_293 = arith.constant 0.000000e+00 : f32
    %668 = vector.broadcast %cst_293 : f32 to vector<16x32xf32>
    %669 = vector.extract_strided_slice %667 {offsets = [0, 0], sizes = [16, 8], strides = [1, 1]} : vector<16x32xf32> to vector<16x8xf32>
    %670 = vector.extract_strided_slice %664 {offsets = [0, 0], sizes = [16, 8], strides = [1, 1]} : vector<16x32xf32> to vector<16x8xf32>
    %671 = tpu.transpose %670, [1, 0] : vector<16x8xf32> -> vector<8x16xf32>
    %cst_294 = arith.constant dense<0.000000e+00> : vector<16x16xf32>
    %672 = tpu.matmul %669, %671, %cst_294 {dimension_numbers = #tpu.dot_dimension_numbers<[1], [0], [0], [1], [0, 0, 1, 1], [], []>} : vector<16x8xf32>, vector<8x16xf32>, vector<16x16xf32> -> vector<16x16xf32>
    %673 = arith.addf %672, %1 : vector<16x16xf32>
    %cst_295 = arith.constant dense<0xFF800000> : vector<16xf32>
    %674 = vector.multi_reduction <maximumf>, %673, %cst_295 [1] : vector<16x16xf32> to vector<16xf32>
    %675 = vector.shape_cast %674 : vector<16xf32> to vector<16x1xf32>
    %676 = vector.broadcast %675 : vector<16x1xf32> to vector<16x16xf32>
    %677 = arith.subf %673, %676 : vector<16x16xf32>
    %678 = math.exp %677 : vector<16x16xf32>
    %cst_296 = arith.constant dense<0.000000e+00> : vector<16xf32>
    %679 = vector.multi_reduction <add>, %678, %cst_296 [1] : vector<16x16xf32> to vector<16xf32>
    %680 = vector.shape_cast %679 : vector<16xf32> to vector<16x1xf32>
    %681 = tpu.reciprocal %680 {approx = true} : vector<16x1xf32> -> vector<16x1xf32>
    %682 = vector.broadcast %681 : vector<16x1xf32> to vector<16x16xf32>
    %683 = arith.mulf %678, %682 : vector<16x16xf32>
    %684 = vector.extract_strided_slice %665 {offsets = [0, 0], sizes = [16, 8], strides = [1, 1]} : vector<16x32xf32> to vector<16x8xf32>
    %cst_297 = arith.constant dense<0.000000e+00> : vector<16x8xf32>
    %685 = tpu.matmul %683, %684, %cst_297 {dimension_numbers = #tpu.dot_dimension_numbers<[1], [0], [0], [1], [0, 0, 1, 1], [], []>} : vector<16x16xf32>, vector<16x8xf32>, vector<16x8xf32> -> vector<16x8xf32>
    %686 = vector.extract_strided_slice %657 {offsets = [0, 0], sizes = [8, 32], strides = [1, 1]} : vector<32x32xf32> to vector<8x32xf32>
    %cst_298 = arith.constant dense<0.000000e+00> : vector<16x32xf32>
    %687 = tpu.matmul %685, %686, %cst_298 {dimension_numbers = #tpu.dot_dimension_numbers<[1], [0], [0], [1], [0, 0, 1, 1], [], []>} : vector<16x8xf32>, vector<8x32xf32>, vector<16x32xf32> -> vector<16x32xf32>
    %688 = arith.addf %668, %687 : vector<16x32xf32>
    %689 = vector.extract_strided_slice %667 {offsets = [0, 8], sizes = [16, 8], strides = [1, 1]} : vector<16x32xf32> to vector<16x8xf32>
    %690 = vector.extract_strided_slice %664 {offsets = [0, 8], sizes = [16, 8], strides = [1, 1]} : vector<16x32xf32> to vector<16x8xf32>
    %691 = tpu.transpose %690, [1, 0] : vector<16x8xf32> -> vector<8x16xf32>
    %cst_299 = arith.constant dense<0.000000e+00> : vector<16x16xf32>
    %692 = tpu.matmul %689, %691, %cst_299 {dimension_numbers = #tpu.dot_dimension_numbers<[1], [0], [0], [1], [0, 0, 1, 1], [], []>} : vector<16x8xf32>, vector<8x16xf32>, vector<16x16xf32> -> vector<16x16xf32>
    %693 = arith.addf %692, %1 : vector<16x16xf32>
    %cst_300 = arith.constant dense<0xFF800000> : vector<16xf32>
    %694 = vector.multi_reduction <maximumf>, %693, %cst_300 [1] : vector<16x16xf32> to vector<16xf32>
    %695 = vector.shape_cast %694 : vector<16xf32> to vector<16x1xf32>
    %696 = vector.broadcast %695 : vector<16x1xf32> to vector<16x16xf32>
    %697 = arith.subf %693, %696 : vector<16x16xf32>
    %698 = math.exp %697 : vector<16x16xf32>
    %cst_301 = arith.constant dense<0.000000e+00> : vector<16xf32>
    %699 = vector.multi_reduction <add>, %698, %cst_301 [1] : vector<16x16xf32> to vector<16xf32>
    %700 = vector.shape_cast %699 : vector<16xf32> to vector<16x1xf32>
    %701 = tpu.reciprocal %700 {approx = true} : vector<16x1xf32> -> vector<16x1xf32>
    %702 = vector.broadcast %701 : vector<16x1xf32> to vector<16x16xf32>
    %703 = arith.mulf %698, %702 : vector<16x16xf32>
    %704 = vector.extract_strided_slice %665 {offsets = [0, 8], sizes = [16, 8], strides = [1, 1]} : vector<16x32xf32> to vector<16x8xf32>
    %cst_302 = arith.constant dense<0.000000e+00> : vector<16x8xf32>
    %705 = tpu.matmul %703, %704, %cst_302 {dimension_numbers = #tpu.dot_dimension_numbers<[1], [0], [0], [1], [0, 0, 1, 1], [], []>} : vector<16x16xf32>, vector<16x8xf32>, vector<16x8xf32> -> vector<16x8xf32>
    %706 = vector.extract_strided_slice %657 {offsets = [8, 0], sizes = [8, 32], strides = [1, 1]} : vector<32x32xf32> to vector<8x32xf32>
    %cst_303 = arith.constant dense<0.000000e+00> : vector<16x32xf32>
    %707 = tpu.matmul %705, %706, %cst_303 {dimension_numbers = #tpu.dot_dimension_numbers<[1], [0], [0], [1], [0, 0, 1, 1], [], []>} : vector<16x8xf32>, vector<8x32xf32>, vector<16x32xf32> -> vector<16x32xf32>
    %708 = arith.addf %688, %707 : vector<16x32xf32>
    %709 = vector.extract_strided_slice %667 {offsets = [0, 16], sizes = [16, 8], strides = [1, 1]} : vector<16x32xf32> to vector<16x8xf32>
    %710 = vector.extract_strided_slice %664 {offsets = [0, 16], sizes = [16, 8], strides = [1, 1]} : vector<16x32xf32> to vector<16x8xf32>
    %711 = tpu.transpose %710, [1, 0] : vector<16x8xf32> -> vector<8x16xf32>
    %cst_304 = arith.constant dense<0.000000e+00> : vector<16x16xf32>
    %712 = tpu.matmul %709, %711, %cst_304 {dimension_numbers = #tpu.dot_dimension_numbers<[1], [0], [0], [1], [0, 0, 1, 1], [], []>} : vector<16x8xf32>, vector<8x16xf32>, vector<16x16xf32> -> vector<16x16xf32>
    %713 = arith.addf %712, %1 : vector<16x16xf32>
    %cst_305 = arith.constant dense<0xFF800000> : vector<16xf32>
    %714 = vector.multi_reduction <maximumf>, %713, %cst_305 [1] : vector<16x16xf32> to vector<16xf32>
    %715 = vector.shape_cast %714 : vector<16xf32> to vector<16x1xf32>
    %716 = vector.broadcast %715 : vector<16x1xf32> to vector<16x16xf32>
    %717 = arith.subf %713, %716 : vector<16x16xf32>
    %718 = math.exp %717 : vector<16x16xf32>
    %cst_306 = arith.constant dense<0.000000e+00> : vector<16xf32>
    %719 = vector.multi_reduction <add>, %718, %cst_306 [1] : vector<16x16xf32> to vector<16xf32>
    %720 = vector.shape_cast %719 : vector<16xf32> to vector<16x1xf32>
    %721 = tpu.reciprocal %720 {approx = true} : vector<16x1xf32> -> vector<16x1xf32>
    %722 = vector.broadcast %721 : vector<16x1xf32> to vector<16x16xf32>
    %723 = arith.mulf %718, %722 : vector<16x16xf32>
    %724 = vector.extract_strided_slice %665 {offsets = [0, 16], sizes = [16, 8], strides = [1, 1]} : vector<16x32xf32> to vector<16x8xf32>
    %cst_307 = arith.constant dense<0.000000e+00> : vector<16x8xf32>
    %725 = tpu.matmul %723, %724, %cst_307 {dimension_numbers = #tpu.dot_dimension_numbers<[1], [0], [0], [1], [0, 0, 1, 1], [], []>} : vector<16x16xf32>, vector<16x8xf32>, vector<16x8xf32> -> vector<16x8xf32>
    %726 = vector.extract_strided_slice %657 {offsets = [16, 0], sizes = [8, 32], strides = [1, 1]} : vector<32x32xf32> to vector<8x32xf32>
    %cst_308 = arith.constant dense<0.000000e+00> : vector<16x32xf32>
    %727 = tpu.matmul %725, %726, %cst_308 {dimension_numbers = #tpu.dot_dimension_numbers<[1], [0], [0], [1], [0, 0, 1, 1], [], []>} : vector<16x8xf32>, vector<8x32xf32>, vector<16x32xf32> -> vector<16x32xf32>
    %728 = arith.addf %708, %727 : vector<16x32xf32>
    %729 = vector.extract_strided_slice %667 {offsets = [0, 24], sizes = [16, 8], strides = [1, 1]} : vector<16x32xf32> to vector<16x8xf32>
    %730 = vector.extract_strided_slice %664 {offsets = [0, 24], sizes = [16, 8], strides = [1, 1]} : vector<16x32xf32> to vector<16x8xf32>
    %731 = tpu.transpose %730, [1, 0] : vector<16x8xf32> -> vector<8x16xf32>
    %cst_309 = arith.constant dense<0.000000e+00> : vector<16x16xf32>
    %732 = tpu.matmul %729, %731, %cst_309 {dimension_numbers = #tpu.dot_dimension_numbers<[1], [0], [0], [1], [0, 0, 1, 1], [], []>} : vector<16x8xf32>, vector<8x16xf32>, vector<16x16xf32> -> vector<16x16xf32>
    %733 = arith.addf %732, %1 : vector<16x16xf32>
    %cst_310 = arith.constant dense<0xFF800000> : vector<16xf32>
    %734 = vector.multi_reduction <maximumf>, %733, %cst_310 [1] : vector<16x16xf32> to vector<16xf32>
    %735 = vector.shape_cast %734 : vector<16xf32> to vector<16x1xf32>
    %736 = vector.broadcast %735 : vector<16x1xf32> to vector<16x16xf32>
    %737 = arith.subf %733, %736 : vector<16x16xf32>
    %738 = math.exp %737 : vector<16x16xf32>
    %cst_311 = arith.constant dense<0.000000e+00> : vector<16xf32>
    %739 = vector.multi_reduction <add>, %738, %cst_311 [1] : vector<16x16xf32> to vector<16xf32>
    %740 = vector.shape_cast %739 : vector<16xf32> to vector<16x1xf32>
    %741 = tpu.reciprocal %740 {approx = true} : vector<16x1xf32> -> vector<16x1xf32>
    %742 = vector.broadcast %741 : vector<16x1xf32> to vector<16x16xf32>
    %743 = arith.mulf %738, %742 : vector<16x16xf32>
    %744 = vector.extract_strided_slice %665 {offsets = [0, 24], sizes = [16, 8], strides = [1, 1]} : vector<16x32xf32> to vector<16x8xf32>
    %cst_312 = arith.constant dense<0.000000e+00> : vector<16x8xf32>
    %745 = tpu.matmul %743, %744, %cst_312 {dimension_numbers = #tpu.dot_dimension_numbers<[1], [0], [0], [1], [0, 0, 1, 1], [], []>} : vector<16x16xf32>, vector<16x8xf32>, vector<16x8xf32> -> vector<16x8xf32>
    %746 = vector.extract_strided_slice %657 {offsets = [24, 0], sizes = [8, 32], strides = [1, 1]} : vector<32x32xf32> to vector<8x32xf32>
    %cst_313 = arith.constant dense<0.000000e+00> : vector<16x32xf32>
    %747 = tpu.matmul %745, %746, %cst_313 {dimension_numbers = #tpu.dot_dimension_numbers<[1], [0], [0], [1], [0, 0, 1, 1], [], []>} : vector<16x8xf32>, vector<8x32xf32>, vector<16x32xf32> -> vector<16x32xf32>
    %748 = arith.addf %728, %747 : vector<16x32xf32>
    %749 = vector.broadcast %659 : vector<1x32xf32> to vector<16x32xf32>
    %750 = arith.addf %748, %749 : vector<16x32xf32>
    %751 = arith.addf %651, %750 : vector<16x32xf32>
    %c1_314 = arith.constant 1 : index
    %c0_315 = arith.constant 0 : index
    %c0_316 = arith.constant 0 : index
    %752 = vector.load %arg29[%c1_314, %c0_315, %c0_316] : memref<2x1x32xf32, #tpu.memory_space<vmem>>, vector<1x1x32xf32>
    %753 = vector.shape_cast %752 : vector<1x1x32xf32> to vector<1x32xf32>
    %c1_317 = arith.constant 1 : index
    %c0_318 = arith.constant 0 : index
    %c0_319 = arith.constant 0 : index
    %754 = vector.load %arg30[%c1_317, %c0_318, %c0_319] : memref<2x1x32xf32, #tpu.memory_space<vmem>>, vector<1x1x32xf32>
    %755 = vector.shape_cast %754 : vector<1x1x32xf32> to vector<1x32xf32>
    %cst_320 = arith.constant dense<0.000000e+00> : vector<16xf32>
    %756 = vector.multi_reduction <add>, %751, %cst_320 [1] : vector<16x32xf32> to vector<16xf32>
    %757 = vector.shape_cast %756 : vector<16xf32> to vector<16x1xf32>
    %cst_321 = arith.constant 3.200000e+01 : f32
    %758 = vector.broadcast %cst_321 : f32 to vector<16x1xf32>
    %759 = arith.divf %757, %758 : vector<16x1xf32>
    %760 = vector.broadcast %759 : vector<16x1xf32> to vector<16x32xf32>
    %761 = arith.subf %751, %760 : vector<16x32xf32>
    %762 = arith.mulf %761, %761 : vector<16x32xf32>
    %cst_322 = arith.constant dense<0.000000e+00> : vector<16xf32>
    %763 = vector.multi_reduction <add>, %762, %cst_322 [1] : vector<16x32xf32> to vector<16xf32>
    %764 = vector.shape_cast %763 : vector<16xf32> to vector<16x1xf32>
    %cst_323 = arith.constant 3.200000e+01 : f32
    %765 = vector.broadcast %cst_323 : f32 to vector<16x1xf32>
    %766 = arith.divf %764, %765 : vector<16x1xf32>
    %cst_324 = arith.constant 9.99999974E-6 : f32
    %767 = vector.broadcast %cst_324 : f32 to vector<16x1xf32>
    %768 = arith.addf %766, %767 : vector<16x1xf32>
    %769 = math.rsqrt %768 : vector<16x1xf32>
    %770 = vector.broadcast %769 : vector<16x1xf32> to vector<16x32xf32>
    %771 = arith.mulf %761, %770 : vector<16x32xf32>
    %772 = vector.broadcast %753 : vector<1x32xf32> to vector<16x32xf32>
    %773 = arith.mulf %771, %772 : vector<16x32xf32>
    %774 = vector.broadcast %755 : vector<1x32xf32> to vector<16x32xf32>
    %775 = arith.addf %773, %774 : vector<16x32xf32>
    %c1_325 = arith.constant 1 : index
    %c0_326 = arith.constant 0 : index
    %c0_327 = arith.constant 0 : index
    %776 = vector.load %arg21[%c1_325, %c0_326, %c0_327] : memref<2x32x96xf32, #tpu.memory_space<vmem>>, vector<1x32x96xf32>
    %777 = vector.shape_cast %776 : vector<1x32x96xf32> to vector<32x96xf32>
    %c1_328 = arith.constant 1 : index
    %c0_329 = arith.constant 0 : index
    %c0_330 = arith.constant 0 : index
    %778 = vector.load %arg22[%c1_328, %c0_329, %c0_330] : memref<2x1x96xf32, #tpu.memory_space<vmem>>, vector<1x1x96xf32>
    %779 = vector.shape_cast %778 : vector<1x1x96xf32> to vector<1x96xf32>
    %c1_331 = arith.constant 1 : index
    %c0_332 = arith.constant 0 : index
    %c0_333 = arith.constant 0 : index
    %780 = vector.load %arg23[%c1_331, %c0_332, %c0_333] : memref<2x32x32xf32, #tpu.memory_space<vmem>>, vector<1x32x32xf32>
    %781 = vector.shape_cast %780 : vector<1x32x32xf32> to vector<32x32xf32>
    %c1_334 = arith.constant 1 : index
    %c0_335 = arith.constant 0 : index
    %c0_336 = arith.constant 0 : index
    %782 = vector.load %arg24[%c1_334, %c0_335, %c0_336] : memref<2x1x32xf32, #tpu.memory_space<vmem>>, vector<1x1x32xf32>
    %783 = vector.shape_cast %782 : vector<1x1x32xf32> to vector<1x32xf32>
    %784 = vector.extract_strided_slice %777 {offsets = [0, 0], sizes = [32, 32], strides = [1, 1]} : vector<32x96xf32> to vector<32x32xf32>
    %cst_337 = arith.constant dense<0.000000e+00> : vector<16x32xf32>
    %785 = tpu.matmul %775, %784, %cst_337 {dimension_numbers = #tpu.dot_dimension_numbers<[1], [0], [0], [1], [0, 0, 1, 1], [], []>} : vector<16x32xf32>, vector<32x32xf32>, vector<16x32xf32> -> vector<16x32xf32>
    %786 = vector.extract_strided_slice %779 {offsets = [0, 0], sizes = [1, 32], strides = [1, 1]} : vector<1x96xf32> to vector<1x32xf32>
    %787 = vector.broadcast %786 : vector<1x32xf32> to vector<16x32xf32>
    %788 = arith.addf %785, %787 : vector<16x32xf32>
    %789 = vector.extract_strided_slice %777 {offsets = [0, 32], sizes = [32, 64], strides = [1, 1]} : vector<32x96xf32> to vector<32x64xf32>
    %cst_338 = arith.constant dense<0.000000e+00> : vector<16x64xf32>
    %790 = tpu.matmul %355, %789, %cst_338 {dimension_numbers = #tpu.dot_dimension_numbers<[1], [0], [0], [1], [0, 0, 1, 1], [], []>} : vector<16x32xf32>, vector<32x64xf32>, vector<16x64xf32> -> vector<16x64xf32>
    %791 = vector.extract_strided_slice %779 {offsets = [0, 32], sizes = [1, 64], strides = [1, 1]} : vector<1x96xf32> to vector<1x64xf32>
    %792 = vector.broadcast %791 : vector<1x64xf32> to vector<16x64xf32>
    %793 = arith.addf %790, %792 : vector<16x64xf32>
    %794 = vector.extract_strided_slice %793 {offsets = [0, 0], sizes = [16, 32], strides = [1, 1]} : vector<16x64xf32> to vector<16x32xf32>
    %795 = vector.extract_strided_slice %793 {offsets = [0, 32], sizes = [16, 32], strides = [1, 1]} : vector<16x64xf32> to vector<16x32xf32>
    %cst_339 = arith.constant 0.353553385 : f32
    %796 = vector.broadcast %cst_339 : f32 to vector<16x32xf32>
    %797 = arith.mulf %788, %796 : vector<16x32xf32>
    %cst_340 = arith.constant 0.000000e+00 : f32
    %798 = vector.broadcast %cst_340 : f32 to vector<16x32xf32>
    %799 = vector.extract_strided_slice %797 {offsets = [0, 0], sizes = [16, 8], strides = [1, 1]} : vector<16x32xf32> to vector<16x8xf32>
    %800 = vector.extract_strided_slice %794 {offsets = [0, 0], sizes = [16, 8], strides = [1, 1]} : vector<16x32xf32> to vector<16x8xf32>
    %801 = tpu.transpose %800, [1, 0] : vector<16x8xf32> -> vector<8x16xf32>
    %cst_341 = arith.constant dense<0.000000e+00> : vector<16x16xf32>
    %802 = tpu.matmul %799, %801, %cst_341 {dimension_numbers = #tpu.dot_dimension_numbers<[1], [0], [0], [1], [0, 0, 1, 1], [], []>} : vector<16x8xf32>, vector<8x16xf32>, vector<16x16xf32> -> vector<16x16xf32>
    %803 = arith.addf %802, %2 : vector<16x16xf32>
    %cst_342 = arith.constant dense<0xFF800000> : vector<16xf32>
    %804 = vector.multi_reduction <maximumf>, %803, %cst_342 [1] : vector<16x16xf32> to vector<16xf32>
    %805 = vector.shape_cast %804 : vector<16xf32> to vector<16x1xf32>
    %806 = vector.broadcast %805 : vector<16x1xf32> to vector<16x16xf32>
    %807 = arith.subf %803, %806 : vector<16x16xf32>
    %808 = math.exp %807 : vector<16x16xf32>
    %cst_343 = arith.constant dense<0.000000e+00> : vector<16xf32>
    %809 = vector.multi_reduction <add>, %808, %cst_343 [1] : vector<16x16xf32> to vector<16xf32>
    %810 = vector.shape_cast %809 : vector<16xf32> to vector<16x1xf32>
    %811 = tpu.reciprocal %810 {approx = true} : vector<16x1xf32> -> vector<16x1xf32>
    %812 = vector.broadcast %811 : vector<16x1xf32> to vector<16x16xf32>
    %813 = arith.mulf %808, %812 : vector<16x16xf32>
    %814 = vector.extract_strided_slice %795 {offsets = [0, 0], sizes = [16, 8], strides = [1, 1]} : vector<16x32xf32> to vector<16x8xf32>
    %cst_344 = arith.constant dense<0.000000e+00> : vector<16x8xf32>
    %815 = tpu.matmul %813, %814, %cst_344 {dimension_numbers = #tpu.dot_dimension_numbers<[1], [0], [0], [1], [0, 0, 1, 1], [], []>} : vector<16x16xf32>, vector<16x8xf32>, vector<16x8xf32> -> vector<16x8xf32>
    %816 = vector.extract_strided_slice %781 {offsets = [0, 0], sizes = [8, 32], strides = [1, 1]} : vector<32x32xf32> to vector<8x32xf32>
    %cst_345 = arith.constant dense<0.000000e+00> : vector<16x32xf32>
    %817 = tpu.matmul %815, %816, %cst_345 {dimension_numbers = #tpu.dot_dimension_numbers<[1], [0], [0], [1], [0, 0, 1, 1], [], []>} : vector<16x8xf32>, vector<8x32xf32>, vector<16x32xf32> -> vector<16x32xf32>
    %818 = arith.addf %798, %817 : vector<16x32xf32>
    %819 = vector.extract_strided_slice %797 {offsets = [0, 8], sizes = [16, 8], strides = [1, 1]} : vector<16x32xf32> to vector<16x8xf32>
    %820 = vector.extract_strided_slice %794 {offsets = [0, 8], sizes = [16, 8], strides = [1, 1]} : vector<16x32xf32> to vector<16x8xf32>
    %821 = tpu.transpose %820, [1, 0] : vector<16x8xf32> -> vector<8x16xf32>
    %cst_346 = arith.constant dense<0.000000e+00> : vector<16x16xf32>
    %822 = tpu.matmul %819, %821, %cst_346 {dimension_numbers = #tpu.dot_dimension_numbers<[1], [0], [0], [1], [0, 0, 1, 1], [], []>} : vector<16x8xf32>, vector<8x16xf32>, vector<16x16xf32> -> vector<16x16xf32>
    %823 = arith.addf %822, %2 : vector<16x16xf32>
    %cst_347 = arith.constant dense<0xFF800000> : vector<16xf32>
    %824 = vector.multi_reduction <maximumf>, %823, %cst_347 [1] : vector<16x16xf32> to vector<16xf32>
    %825 = vector.shape_cast %824 : vector<16xf32> to vector<16x1xf32>
    %826 = vector.broadcast %825 : vector<16x1xf32> to vector<16x16xf32>
    %827 = arith.subf %823, %826 : vector<16x16xf32>
    %828 = math.exp %827 : vector<16x16xf32>
    %cst_348 = arith.constant dense<0.000000e+00> : vector<16xf32>
    %829 = vector.multi_reduction <add>, %828, %cst_348 [1] : vector<16x16xf32> to vector<16xf32>
    %830 = vector.shape_cast %829 : vector<16xf32> to vector<16x1xf32>
    %831 = tpu.reciprocal %830 {approx = true} : vector<16x1xf32> -> vector<16x1xf32>
    %832 = vector.broadcast %831 : vector<16x1xf32> to vector<16x16xf32>
    %833 = arith.mulf %828, %832 : vector<16x16xf32>
    %834 = vector.extract_strided_slice %795 {offsets = [0, 8], sizes = [16, 8], strides = [1, 1]} : vector<16x32xf32> to vector<16x8xf32>
    %cst_349 = arith.constant dense<0.000000e+00> : vector<16x8xf32>
    %835 = tpu.matmul %833, %834, %cst_349 {dimension_numbers = #tpu.dot_dimension_numbers<[1], [0], [0], [1], [0, 0, 1, 1], [], []>} : vector<16x16xf32>, vector<16x8xf32>, vector<16x8xf32> -> vector<16x8xf32>
    %836 = vector.extract_strided_slice %781 {offsets = [8, 0], sizes = [8, 32], strides = [1, 1]} : vector<32x32xf32> to vector<8x32xf32>
    %cst_350 = arith.constant dense<0.000000e+00> : vector<16x32xf32>
    %837 = tpu.matmul %835, %836, %cst_350 {dimension_numbers = #tpu.dot_dimension_numbers<[1], [0], [0], [1], [0, 0, 1, 1], [], []>} : vector<16x8xf32>, vector<8x32xf32>, vector<16x32xf32> -> vector<16x32xf32>
    %838 = arith.addf %818, %837 : vector<16x32xf32>
    %839 = vector.extract_strided_slice %797 {offsets = [0, 16], sizes = [16, 8], strides = [1, 1]} : vector<16x32xf32> to vector<16x8xf32>
    %840 = vector.extract_strided_slice %794 {offsets = [0, 16], sizes = [16, 8], strides = [1, 1]} : vector<16x32xf32> to vector<16x8xf32>
    %841 = tpu.transpose %840, [1, 0] : vector<16x8xf32> -> vector<8x16xf32>
    %cst_351 = arith.constant dense<0.000000e+00> : vector<16x16xf32>
    %842 = tpu.matmul %839, %841, %cst_351 {dimension_numbers = #tpu.dot_dimension_numbers<[1], [0], [0], [1], [0, 0, 1, 1], [], []>} : vector<16x8xf32>, vector<8x16xf32>, vector<16x16xf32> -> vector<16x16xf32>
    %843 = arith.addf %842, %2 : vector<16x16xf32>
    %cst_352 = arith.constant dense<0xFF800000> : vector<16xf32>
    %844 = vector.multi_reduction <maximumf>, %843, %cst_352 [1] : vector<16x16xf32> to vector<16xf32>
    %845 = vector.shape_cast %844 : vector<16xf32> to vector<16x1xf32>
    %846 = vector.broadcast %845 : vector<16x1xf32> to vector<16x16xf32>
    %847 = arith.subf %843, %846 : vector<16x16xf32>
    %848 = math.exp %847 : vector<16x16xf32>
    %cst_353 = arith.constant dense<0.000000e+00> : vector<16xf32>
    %849 = vector.multi_reduction <add>, %848, %cst_353 [1] : vector<16x16xf32> to vector<16xf32>
    %850 = vector.shape_cast %849 : vector<16xf32> to vector<16x1xf32>
    %851 = tpu.reciprocal %850 {approx = true} : vector<16x1xf32> -> vector<16x1xf32>
    %852 = vector.broadcast %851 : vector<16x1xf32> to vector<16x16xf32>
    %853 = arith.mulf %848, %852 : vector<16x16xf32>
    %854 = vector.extract_strided_slice %795 {offsets = [0, 16], sizes = [16, 8], strides = [1, 1]} : vector<16x32xf32> to vector<16x8xf32>
    %cst_354 = arith.constant dense<0.000000e+00> : vector<16x8xf32>
    %855 = tpu.matmul %853, %854, %cst_354 {dimension_numbers = #tpu.dot_dimension_numbers<[1], [0], [0], [1], [0, 0, 1, 1], [], []>} : vector<16x16xf32>, vector<16x8xf32>, vector<16x8xf32> -> vector<16x8xf32>
    %856 = vector.extract_strided_slice %781 {offsets = [16, 0], sizes = [8, 32], strides = [1, 1]} : vector<32x32xf32> to vector<8x32xf32>
    %cst_355 = arith.constant dense<0.000000e+00> : vector<16x32xf32>
    %857 = tpu.matmul %855, %856, %cst_355 {dimension_numbers = #tpu.dot_dimension_numbers<[1], [0], [0], [1], [0, 0, 1, 1], [], []>} : vector<16x8xf32>, vector<8x32xf32>, vector<16x32xf32> -> vector<16x32xf32>
    %858 = arith.addf %838, %857 : vector<16x32xf32>
    %859 = vector.extract_strided_slice %797 {offsets = [0, 24], sizes = [16, 8], strides = [1, 1]} : vector<16x32xf32> to vector<16x8xf32>
    %860 = vector.extract_strided_slice %794 {offsets = [0, 24], sizes = [16, 8], strides = [1, 1]} : vector<16x32xf32> to vector<16x8xf32>
    %861 = tpu.transpose %860, [1, 0] : vector<16x8xf32> -> vector<8x16xf32>
    %cst_356 = arith.constant dense<0.000000e+00> : vector<16x16xf32>
    %862 = tpu.matmul %859, %861, %cst_356 {dimension_numbers = #tpu.dot_dimension_numbers<[1], [0], [0], [1], [0, 0, 1, 1], [], []>} : vector<16x8xf32>, vector<8x16xf32>, vector<16x16xf32> -> vector<16x16xf32>
    %863 = arith.addf %862, %2 : vector<16x16xf32>
    %cst_357 = arith.constant dense<0xFF800000> : vector<16xf32>
    %864 = vector.multi_reduction <maximumf>, %863, %cst_357 [1] : vector<16x16xf32> to vector<16xf32>
    %865 = vector.shape_cast %864 : vector<16xf32> to vector<16x1xf32>
    %866 = vector.broadcast %865 : vector<16x1xf32> to vector<16x16xf32>
    %867 = arith.subf %863, %866 : vector<16x16xf32>
    %868 = math.exp %867 : vector<16x16xf32>
    %cst_358 = arith.constant dense<0.000000e+00> : vector<16xf32>
    %869 = vector.multi_reduction <add>, %868, %cst_358 [1] : vector<16x16xf32> to vector<16xf32>
    %870 = vector.shape_cast %869 : vector<16xf32> to vector<16x1xf32>
    %871 = tpu.reciprocal %870 {approx = true} : vector<16x1xf32> -> vector<16x1xf32>
    %872 = vector.broadcast %871 : vector<16x1xf32> to vector<16x16xf32>
    %873 = arith.mulf %868, %872 : vector<16x16xf32>
    %874 = vector.extract_strided_slice %795 {offsets = [0, 24], sizes = [16, 8], strides = [1, 1]} : vector<16x32xf32> to vector<16x8xf32>
    %cst_359 = arith.constant dense<0.000000e+00> : vector<16x8xf32>
    %875 = tpu.matmul %873, %874, %cst_359 {dimension_numbers = #tpu.dot_dimension_numbers<[1], [0], [0], [1], [0, 0, 1, 1], [], []>} : vector<16x16xf32>, vector<16x8xf32>, vector<16x8xf32> -> vector<16x8xf32>
    %876 = vector.extract_strided_slice %781 {offsets = [24, 0], sizes = [8, 32], strides = [1, 1]} : vector<32x32xf32> to vector<8x32xf32>
    %cst_360 = arith.constant dense<0.000000e+00> : vector<16x32xf32>
    %877 = tpu.matmul %875, %876, %cst_360 {dimension_numbers = #tpu.dot_dimension_numbers<[1], [0], [0], [1], [0, 0, 1, 1], [], []>} : vector<16x8xf32>, vector<8x32xf32>, vector<16x32xf32> -> vector<16x32xf32>
    %878 = arith.addf %858, %877 : vector<16x32xf32>
    %879 = vector.broadcast %783 : vector<1x32xf32> to vector<16x32xf32>
    %880 = arith.addf %878, %879 : vector<16x32xf32>
    %881 = arith.addf %775, %880 : vector<16x32xf32>
    %c1_361 = arith.constant 1 : index
    %c0_362 = arith.constant 0 : index
    %c0_363 = arith.constant 0 : index
    %882 = vector.load %arg31[%c1_361, %c0_362, %c0_363] : memref<2x1x32xf32, #tpu.memory_space<vmem>>, vector<1x1x32xf32>
    %883 = vector.shape_cast %882 : vector<1x1x32xf32> to vector<1x32xf32>
    %c1_364 = arith.constant 1 : index
    %c0_365 = arith.constant 0 : index
    %c0_366 = arith.constant 0 : index
    %884 = vector.load %arg32[%c1_364, %c0_365, %c0_366] : memref<2x1x32xf32, #tpu.memory_space<vmem>>, vector<1x1x32xf32>
    %885 = vector.shape_cast %884 : vector<1x1x32xf32> to vector<1x32xf32>
    %cst_367 = arith.constant dense<0.000000e+00> : vector<16xf32>
    %886 = vector.multi_reduction <add>, %881, %cst_367 [1] : vector<16x32xf32> to vector<16xf32>
    %887 = vector.shape_cast %886 : vector<16xf32> to vector<16x1xf32>
    %cst_368 = arith.constant 3.200000e+01 : f32
    %888 = vector.broadcast %cst_368 : f32 to vector<16x1xf32>
    %889 = arith.divf %887, %888 : vector<16x1xf32>
    %890 = vector.broadcast %889 : vector<16x1xf32> to vector<16x32xf32>
    %891 = arith.subf %881, %890 : vector<16x32xf32>
    %892 = arith.mulf %891, %891 : vector<16x32xf32>
    %cst_369 = arith.constant dense<0.000000e+00> : vector<16xf32>
    %893 = vector.multi_reduction <add>, %892, %cst_369 [1] : vector<16x32xf32> to vector<16xf32>
    %894 = vector.shape_cast %893 : vector<16xf32> to vector<16x1xf32>
    %cst_370 = arith.constant 3.200000e+01 : f32
    %895 = vector.broadcast %cst_370 : f32 to vector<16x1xf32>
    %896 = arith.divf %894, %895 : vector<16x1xf32>
    %cst_371 = arith.constant 9.99999974E-6 : f32
    %897 = vector.broadcast %cst_371 : f32 to vector<16x1xf32>
    %898 = arith.addf %896, %897 : vector<16x1xf32>
    %899 = math.rsqrt %898 : vector<16x1xf32>
    %900 = vector.broadcast %899 : vector<16x1xf32> to vector<16x32xf32>
    %901 = arith.mulf %891, %900 : vector<16x32xf32>
    %902 = vector.broadcast %883 : vector<1x32xf32> to vector<16x32xf32>
    %903 = arith.mulf %901, %902 : vector<16x32xf32>
    %904 = vector.broadcast %885 : vector<1x32xf32> to vector<16x32xf32>
    %905 = arith.addf %903, %904 : vector<16x32xf32>
    %c1_372 = arith.constant 1 : index
    %c0_373 = arith.constant 0 : index
    %c0_374 = arith.constant 0 : index
    %906 = vector.load %arg25[%c1_372, %c0_373, %c0_374] : memref<2x32x64xf32, #tpu.memory_space<vmem>>, vector<1x32x64xf32>
    %907 = vector.shape_cast %906 : vector<1x32x64xf32> to vector<32x64xf32>
    %c1_375 = arith.constant 1 : index
    %c0_376 = arith.constant 0 : index
    %c0_377 = arith.constant 0 : index
    %908 = vector.load %arg26[%c1_375, %c0_376, %c0_377] : memref<2x1x64xf32, #tpu.memory_space<vmem>>, vector<1x1x64xf32>
    %909 = vector.shape_cast %908 : vector<1x1x64xf32> to vector<1x64xf32>
    %c1_378 = arith.constant 1 : index
    %c0_379 = arith.constant 0 : index
    %c0_380 = arith.constant 0 : index
    %910 = vector.load %arg27[%c1_378, %c0_379, %c0_380] : memref<2x64x32xf32, #tpu.memory_space<vmem>>, vector<1x64x32xf32>
    %911 = vector.shape_cast %910 : vector<1x64x32xf32> to vector<64x32xf32>
    %c1_381 = arith.constant 1 : index
    %c0_382 = arith.constant 0 : index
    %c0_383 = arith.constant 0 : index
    %912 = vector.load %arg28[%c1_381, %c0_382, %c0_383] : memref<2x1x32xf32, #tpu.memory_space<vmem>>, vector<1x1x32xf32>
    %913 = vector.shape_cast %912 : vector<1x1x32xf32> to vector<1x32xf32>
    %cst_384 = arith.constant dense<0.000000e+00> : vector<16x64xf32>
    %914 = tpu.matmul %905, %907, %cst_384 {dimension_numbers = #tpu.dot_dimension_numbers<[1], [0], [0], [1], [0, 0, 1, 1], [], []>} : vector<16x32xf32>, vector<32x64xf32>, vector<16x64xf32> -> vector<16x64xf32>
    %915 = vector.broadcast %909 : vector<1x64xf32> to vector<16x64xf32>
    %916 = arith.addf %914, %915 : vector<16x64xf32>
    %cst_385 = arith.constant 0.000000e+00 : f32
    %917 = vector.broadcast %cst_385 : f32 to vector<16x64xf32>
    %918 = arith.maximumf %916, %917 : vector<16x64xf32>
    %cst_386 = arith.constant dense<0.000000e+00> : vector<16x32xf32>
    %919 = tpu.matmul %918, %911, %cst_386 {dimension_numbers = #tpu.dot_dimension_numbers<[1], [0], [0], [1], [0, 0, 1, 1], [], []>} : vector<16x64xf32>, vector<64x32xf32>, vector<16x32xf32> -> vector<16x32xf32>
    %920 = vector.broadcast %913 : vector<1x32xf32> to vector<16x32xf32>
    %921 = arith.addf %919, %920 : vector<16x32xf32>
    %922 = arith.addf %905, %921 : vector<16x32xf32>
    %c1_387 = arith.constant 1 : index
    %c0_388 = arith.constant 0 : index
    %c0_389 = arith.constant 0 : index
    %923 = vector.load %arg33[%c1_387, %c0_388, %c0_389] : memref<2x1x32xf32, #tpu.memory_space<vmem>>, vector<1x1x32xf32>
    %924 = vector.shape_cast %923 : vector<1x1x32xf32> to vector<1x32xf32>
    %c1_390 = arith.constant 1 : index
    %c0_391 = arith.constant 0 : index
    %c0_392 = arith.constant 0 : index
    %925 = vector.load %arg34[%c1_390, %c0_391, %c0_392] : memref<2x1x32xf32, #tpu.memory_space<vmem>>, vector<1x1x32xf32>
    %926 = vector.shape_cast %925 : vector<1x1x32xf32> to vector<1x32xf32>
    %cst_393 = arith.constant dense<0.000000e+00> : vector<16xf32>
    %927 = vector.multi_reduction <add>, %922, %cst_393 [1] : vector<16x32xf32> to vector<16xf32>
    %928 = vector.shape_cast %927 : vector<16xf32> to vector<16x1xf32>
    %cst_394 = arith.constant 3.200000e+01 : f32
    %929 = vector.broadcast %cst_394 : f32 to vector<16x1xf32>
    %930 = arith.divf %928, %929 : vector<16x1xf32>
    %931 = vector.broadcast %930 : vector<16x1xf32> to vector<16x32xf32>
    %932 = arith.subf %922, %931 : vector<16x32xf32>
    %933 = arith.mulf %932, %932 : vector<16x32xf32>
    %cst_395 = arith.constant dense<0.000000e+00> : vector<16xf32>
    %934 = vector.multi_reduction <add>, %933, %cst_395 [1] : vector<16x32xf32> to vector<16xf32>
    %935 = vector.shape_cast %934 : vector<16xf32> to vector<16x1xf32>
    %cst_396 = arith.constant 3.200000e+01 : f32
    %936 = vector.broadcast %cst_396 : f32 to vector<16x1xf32>
    %937 = arith.divf %935, %936 : vector<16x1xf32>
    %cst_397 = arith.constant 9.99999974E-6 : f32
    %938 = vector.broadcast %cst_397 : f32 to vector<16x1xf32>
    %939 = arith.addf %937, %938 : vector<16x1xf32>
    %940 = math.rsqrt %939 : vector<16x1xf32>
    %941 = vector.broadcast %940 : vector<16x1xf32> to vector<16x32xf32>
    %942 = arith.mulf %932, %941 : vector<16x32xf32>
    %943 = vector.broadcast %924 : vector<1x32xf32> to vector<16x32xf32>
    %944 = arith.mulf %942, %943 : vector<16x32xf32>
    %945 = vector.broadcast %926 : vector<1x32xf32> to vector<16x32xf32>
    %946 = arith.addf %944, %945 : vector<16x32xf32>
    %c0_398 = arith.constant 0 : index
    %c0_399 = arith.constant 0 : index
    %947 = vector.load %arg37[%c0_398, %c0_399] : memref<1x32xf32, #tpu.memory_space<vmem>>, vector<1x32xf32>
    %c0_400 = arith.constant 0 : index
    %c0_401 = arith.constant 0 : index
    %948 = vector.load %arg38[%c0_400, %c0_401] : memref<1x32xf32, #tpu.memory_space<vmem>>, vector<1x32xf32>
    %cst_402 = arith.constant dense<0.000000e+00> : vector<16xf32>
    %949 = vector.multi_reduction <add>, %946, %cst_402 [1] : vector<16x32xf32> to vector<16xf32>
    %950 = vector.shape_cast %949 : vector<16xf32> to vector<16x1xf32>
    %cst_403 = arith.constant 3.200000e+01 : f32
    %951 = vector.broadcast %cst_403 : f32 to vector<16x1xf32>
    %952 = arith.divf %950, %951 : vector<16x1xf32>
    %953 = vector.broadcast %952 : vector<16x1xf32> to vector<16x32xf32>
    %954 = arith.subf %946, %953 : vector<16x32xf32>
    %955 = arith.mulf %954, %954 : vector<16x32xf32>
    %cst_404 = arith.constant dense<0.000000e+00> : vector<16xf32>
    %956 = vector.multi_reduction <add>, %955, %cst_404 [1] : vector<16x32xf32> to vector<16xf32>
    %957 = vector.shape_cast %956 : vector<16xf32> to vector<16x1xf32>
    %cst_405 = arith.constant 3.200000e+01 : f32
    %958 = vector.broadcast %cst_405 : f32 to vector<16x1xf32>
    %959 = arith.divf %957, %958 : vector<16x1xf32>
    %cst_406 = arith.constant 9.99999974E-6 : f32
    %960 = vector.broadcast %cst_406 : f32 to vector<16x1xf32>
    %961 = arith.addf %959, %960 : vector<16x1xf32>
    %962 = math.rsqrt %961 : vector<16x1xf32>
    %963 = vector.broadcast %962 : vector<16x1xf32> to vector<16x32xf32>
    %964 = arith.mulf %954, %963 : vector<16x32xf32>
    %965 = vector.broadcast %947 : vector<1x32xf32> to vector<16x32xf32>
    %966 = arith.mulf %964, %965 : vector<16x32xf32>
    %967 = vector.broadcast %948 : vector<1x32xf32> to vector<16x32xf32>
    %968 = arith.addf %966, %967 : vector<16x32xf32>
    %c0_407 = arith.constant 0 : index
    %c0_408 = arith.constant 0 : index
    %969 = vector.load %arg39[%c0_407, %c0_408] : memref<16x32xf32, #tpu.memory_space<vmem>>, vector<16x32xf32>
    tpu.vector_store %arg39[%c0_407, %c0_408], %968 {strides = array<i32>} : memref<16x32xf32, #tpu.memory_space<vmem>>, vector<16x32xf32>,
    return
  }
}

</mosaic_0001>

<llo_original>
// kernel: transformer_forward.1
$region0: #{transformer_forward.1}
  #allocation0 [shape = 'u32[]', space=smem, size = 0x4, offset = 0x4, fixed_abs, tag = 'smem constant byte address 0x4 - core index']
  #allocation1 [shape = 'u32[144,128]{1,0:T(1,128)}', space=vmem, size = 0x12000, scoped, tag = 'internal scratch']
  %s0 = inlined_call_operand.smem [shape: u32[40], index: -1, kind: input, shape index: {}]
  %s1 = sld [smem:[%s0]]
  %s2 = scalar_lea.smem %s0, 1
  %s3 = sld [smem:[%s2]]
  %s4 = scalar_lea.smem %s0, 2
  %s5 = sld [smem:[%s4]]
  %s6 = scalar_lea.smem %s0, 3
  %s7 = sld [smem:[%s6]]
  %s8 = scalar_lea.smem %s0, 4
  %s9 = sld [smem:[%s8]]
  %s10 = scalar_lea.smem %s0, 5
  %s11 = sld [smem:[%s10]]
  %s12 = scalar_lea.smem %s0, 6
  %s13 = sld [smem:[%s12]]
  %s14 = scalar_lea.smem %s0, 7
  %s15 = sld [smem:[%s14]]
  %s16 = scalar_lea.smem %s0, 8
  %s17 = sld [smem:[%s16]]
  %s18 = scalar_lea.smem %s0, 9
  %s19 = sld [smem:[%s18]]
  %s20 = scalar_lea.smem %s0, 10
  %s21 = sld [smem:[%s20]]
  %s22 = scalar_lea.smem %s0, 11
  %s23 = sld [smem:[%s22]]
  %s24 = scalar_lea.smem %s0, 12
  %s25 = sld [smem:[%s24]]
  %s26 = scalar_lea.smem %s0, 13
  %s27 = sld [smem:[%s26]]
  %s28 = scalar_lea.smem %s0, 14
  %s29 = sld [smem:[%s28]]
  %s30 = scalar_lea.smem %s0, 15
  %s31 = sld [smem:[%s30]]
  %s32 = scalar_lea.smem %s0, 16
  %s33 = sld [smem:[%s32]]
  %s34 = scalar_lea.smem %s0, 17
  %s35 = sld [smem:[%s34]]
  %s36 = scalar_lea.smem %s0, 18
  %s37 = sld [smem:[%s36]]
  %s38 = scalar_lea.smem %s0, 19
  %s39 = sld [smem:[%s38]]
  %s40 = scalar_lea.smem %s0, 20
  %s41 = sld [smem:[%s40]]
  %s42 = scalar_lea.smem %s0, 21
  %s43 = sld [smem:[%s42]]
  %s44 = scalar_lea.smem %s0, 22
  %s45 = sld [smem:[%s44]]
  %s46 = scalar_lea.smem %s0, 23
  %s47 = sld [smem:[%s46]]
  %s48 = scalar_lea.smem %s0, 24
  %s49 = sld [smem:[%s48]]
  %s50 = scalar_lea.smem %s0, 25
  %s51 = sld [smem:[%s50]]
  %s52 = scalar_lea.smem %s0, 26
  %s53 = sld [smem:[%s52]]
  %s54 = scalar_lea.smem %s0, 27
  %s55 = sld [smem:[%s54]]
  %s56 = scalar_lea.smem %s0, 28
  %s57 = sld [smem:[%s56]]
  %s58 = scalar_lea.smem %s0, 29
  %s59 = sld [smem:[%s58]]
  %s60 = scalar_lea.smem %s0, 30
  %s61 = sld [smem:[%s60]]
  %s62 = scalar_lea.smem %s0, 31
  %s63 = sld [smem:[%s62]]
  %s64 = scalar_lea.smem %s0, 32
  %s65 = sld [smem:[%s64]]
  %s66 = scalar_lea.smem %s0, 33
  %s67 = sld [smem:[%s66]]
  %s68 = scalar_lea.smem %s0, 34
  %s69 = sld [smem:[%s68]]
  %s70 = scalar_lea.smem %s0, 35
  %s71 = sld [smem:[%s70]]
  %s72 = scalar_lea.smem %s0, 36
  %s73 = sld [smem:[%s72]]
  %s74 = scalar_lea.smem %s0, 37
  %s75 = sld [smem:[%s74]]
  %s76 = scalar_lea.smem %s0, 38
  %s77 = sld [smem:[%s76]]
  %s78 = scalar_lea.smem %s0, 39
  %s79 = sld [smem:[%s78]]
  %s80 = sld [smem:[#allocation0]]
  $region254: #{transformer_forward.1} parent=0
    _
  %s82 = ssub.s32 1, %s80
  %s83 = scalar_select 0, %s82, %s80
  $region1: #{transformer_forward.1} parent=0
    #allocation2 [shape = 'u8[8192]{0}', space=vmem, size = 0x2000, scoped, tag = 'input window, operand 0, single buffered']
    #allocation3 [shape = 's32[1]{0}', space=sflag, size = 0x4, scoped, tag = 'scoped memory for transformer_forward.1']
    #allocation4 [shape = 's32[1]{0}', space=sflag, size = 0x4, scoped, tag = 'scoped memory for transformer_forward.1']
    #allocation5 [shape = 'u8[8192]{0}', space=vmem, size = 0x2000, scoped, tag = 'input window, operand 1, single buffered']
    #allocation6 [shape = 's32[1]{0}', space=sflag, size = 0x4, scoped, tag = 'scoped memory for transformer_forward.1']
    #allocation7 [shape = 'u8[1024]{0}', space=vmem, size = 0x400, scoped, tag = 'input window, operand 8, single buffered']
    #allocation8 [shape = 'u8[1024]{0}', space=vmem, size = 0x400, scoped, tag = 'input window, operand 10, single buffered']
    #allocation9 [shape = 's32[1]{0}', space=sflag, size = 0x4, scoped, tag = 'scoped memory for transformer_forward.1']
    #allocation10 [shape = 'u8[1024]{0}', space=vmem, size = 0x400, scoped, tag = 'input window, operand 12, single buffered']
    #allocation11 [shape = 'u8[1024]{0}', space=vmem, size = 0x400, scoped, tag = 'input window, operand 14, single buffered']
    #allocation12 [shape = 's32[1]{0}', space=sflag, size = 0x4, scoped, tag = 'scoped memory for transformer_forward.1']
    #allocation13 [shape = 'u8[1024]{0}', space=vmem, size = 0x400, scoped, tag = 'input window, operand 18, single buffered']
    #allocation14 [shape = 'u8[1024]{0}', space=vmem, size = 0x400, scoped, tag = 'input window, operand 20, single buffered']
    #allocation15 [shape = 's32[1]{0}', space=sflag, size = 0x4, scoped, tag = 'scoped memory for transformer_forward.1']
    #allocation16 [shape = 'u8[1024]{0}', space=vmem, size = 0x400, scoped, tag = 'input window, operand 22, single buffered']
    #allocation17 [shape = 'u8[32768]{0}', space=vmem, size = 0x8000, scoped, tag = 'input window, operand 23, single buffered']
    #allocation18 [shape = 's32[1]{0}', space=sflag, size = 0x4, scoped, tag = 'scoped memory for transformer_forward.1']
    #allocation19 [shape = 'u8[1024]{0}', space=vmem, size = 0x400, scoped, tag = 'input window, operand 24, single buffered']
    #allocation20 [shape = 'u8[32768]{0}', space=vmem, size = 0x8000, scoped, tag = 'input window, operand 25, single buffered']
    #allocation21 [shape = 's32[1]{0}', space=sflag, size = 0x4, scoped, tag = 'scoped memory for transformer_forward.1']
    #allocation22 [shape = 'u8[1024]{0}', space=vmem, size = 0x400, scoped, tag = 'input window, operand 26, single buffered']
    #allocation23 [shape = 'u8[1024]{0}', space=vmem, size = 0x400, scoped, tag = 'input window, operand 28, single buffered']
    #allocation24 [shape = 's32[1]{0}', space=sflag, size = 0x4, scoped, tag = 'scoped memory for transformer_forward.1']
    #allocation25 [shape = 'u8[1024]{0}', space=vmem, size = 0x400, scoped, tag = 'input window, operand 29, single buffered']
    #allocation26 [shape = 'u8[1024]{0}', space=vmem, size = 0x400, scoped, tag = 'input window, operand 30, single buffered']
    #allocation27 [shape = 's32[1]{0}', space=sflag, size = 0x4, scoped, tag = 'scoped memory for transformer_forward.1']
    #allocation28 [shape = 'u8[1024]{0}', space=vmem, size = 0x400, scoped, tag = 'input window, operand 31, single buffered']
    #allocation29 [shape = 'u8[1024]{0}', space=vmem, size = 0x400, scoped, tag = 'input window, operand 32, single buffered']
    #allocation30 [shape = 's32[1]{0}', space=sflag, size = 0x4, scoped, tag = 'scoped memory for transformer_forward.1']
    #allocation31 [shape = 'u8[1024]{0}', space=vmem, size = 0x400, scoped, tag = 'input window, operand 33, single buffered']
    #allocation32 [shape = 'u8[1024]{0}', space=vmem, size = 0x400, scoped, tag = 'input window, operand 34, single buffered']
    #allocation33 [shape = 's32[1]{0}', space=sflag, size = 0x4, scoped, tag = 'scoped memory for transformer_forward.1']
    #allocation34 [shape = 'u8[512]{0}', space=vmem, size = 0x400, scoped, tag = 'input window, operand 37, single buffered']
    #allocation35 [shape = 'u8[512]{0}', space=vmem, size = 0x400, scoped, tag = 'input window, operand 38, single buffered']
    #allocation36 [shape = 's32[1]{0}', space=sflag, size = 0x4, scoped, tag = 'scoped memory for transformer_forward.1']
    #allocation37 [shape = 'u8[8192]{0}', space=vmem, size = 0x2000, scoped, tag = 'output window, operand 0, single buffered']
    %84 = vsyncpa [#allocation3], 0
    %85 = vsyncpa [#allocation6], 0
    %86 = vsyncpa [#allocation9], 0
    %87 = vsyncpa [#allocation12], 0
    %88 = vsyncpa [#allocation15], 0
    %89 = vsyncpa [#allocation18], 0
    %90 = vsyncpa [#allocation21], 0
    %91 = vsyncpa [#allocation24], 0
    %92 = vsyncpa [#allocation27], 0
    %93 = vsyncpa [#allocation30], 0
    %94 = vsyncpa [#allocation33], 0
    %95 = vsyncpa [#allocation36], 0
    %96 = vsyncpa [#allocation4], 0
    // Predicated region
    $region2: #{transformer_forward.1} parent=1 // pred_check
      _
    $region3: #{transformer_forward.1} parent=1 // pred_check_branch
      %98 = sbr.rel (0) target = $region5
    $region4: #{transformer_forward.1} parent=1 // pred_region
      %s100 = ssub.s32 256, 256
      %101 = vsyncadd [#allocation3], %s100
      %s102 = sshll.u32 [#allocation2], 4
      %s103 = int_to_ptr.vmem [resolvable:$true] %s102
      %108 = dma.hbm_to_vmem [thread:$0]  %s1, 256, %s103, [#allocation3], 128, 128, 8
    $region5: #{transformer_forward.1} parent=1 // pred_fallthru
      _
    // Predicated region
    $region6: #{transformer_forward.1} parent=1 // pred_check
      _
    $region7: #{transformer_forward.1} parent=1 // pred_check_branch
      %110 = sbr.rel (0) target = $region9
    $region8: #{transformer_forward.1} parent=1 // pred_region
      %s112 = ssub.s32 256, 256
      %113 = vsyncadd [#allocation6], %s112
      %s114 = sshll.u32 [#allocation5], 4
      %s115 = int_to_ptr.vmem [resolvable:$true] %s114
      %120 = dma.hbm_to_vmem [thread:$0]  %s3, 256, %s115, [#allocation6], 128, 128, 8
    $region9: #{transformer_forward.1} parent=1 // pred_fallthru
      _
    // Predicated region
    $region10: #{transformer_forward.1} parent=1 // pred_check
      _
    $region11: #{transformer_forward.1} parent=1 // pred_check_branch
      %122 = sbr.rel (0) target = $region13
    $region12: #{transformer_forward.1} parent=1 // pred_region
      _
    $region13: #{transformer_forward.1} parent=1 // pred_fallthru
      _
    // Predicated region
    $region14: #{transformer_forward.1} parent=1 // pred_check
      _
    $region15: #{transformer_forward.1} parent=1 // pred_check_branch
      %124 = sbr.rel (0) target = $region17
    $region16: #{transformer_forward.1} parent=1 // pred_region
      _
    $region17: #{transformer_forward.1} parent=1 // pred_fallthru
      _
    // Predicated region
    $region18: #{transformer_forward.1} parent=1 // pred_check
      _
    $region19: #{transformer_forward.1} parent=1 // pred_check_branch
      %126 = sbr.rel (0) target = $region21
    $region20: #{transformer_forward.1} parent=1 // pred_region
      _
    $region21: #{transformer_forward.1} parent=1 // pred_fallthru
      _
    // Predicated region
    $region22: #{transformer_forward.1} parent=1 // pred_check
      _
    $region23: #{transformer_forward.1} parent=1 // pred_check_branch
      %128 = sbr.rel (0) target = $region25
    $region24: #{transformer_forward.1} parent=1 // pred_region
      _
    $region25: #{transformer_forward.1} parent=1 // pred_fallthru
      _
    // Predicated region
    $region26: #{transformer_forward.1} parent=1 // pred_check
      _
    $region27: #{transformer_forward.1} parent=1 // pred_check_branch
      %130 = sbr.rel (0) target = $region29
    $region28: #{transformer_forward.1} parent=1 // pred_region
      _
    $region29: #{transformer_forward.1} parent=1 // pred_fallthru
      _
    // Predicated region
    $region30: #{transformer_forward.1} parent=1 // pred_check
      _
    $region31: #{transformer_forward.1} parent=1 // pred_check_branch
      %132 = sbr.rel (0) target = $region33
    $region32: #{transformer_forward.1} parent=1 // pred_region
      _
    $region33: #{transformer_forward.1} parent=1 // pred_fallthru
      _
    // Predicated region
    $region34: #{transformer_forward.1} parent=1 // pred_check
      _
    $region35: #{transformer_forward.1} parent=1 // pred_check_branch
      %134 = sbr.rel (0) target = $region37
    $region36: #{transformer_forward.1} parent=1 // pred_region
      %s136 = ssub.s32 32, 32
      %137 = vsyncadd [#allocation6], %s136
      %s138 = sshll.u32 [#allocation7], 4
      %s139 = int_to_ptr.vmem [resolvable:$true] %s138
      %144 = dma.hbm_to_vmem [thread:$0]  %s17, 32, %s139, [#allocation6], 16, 16, 1
    $region37: #{transformer_forward.1} parent=1 // pred_fallthru
      _
    // Predicated region
    $region38: #{transformer_forward.1} parent=1 // pred_check
      _
    $region39: #{transformer_forward.1} parent=1 // pred_check_branch
      %146 = sbr.rel (0) target = $region41
    $region40: #{transformer_forward.1} parent=1 // pred_region
      _
    $region41: #{transformer_forward.1} parent=1 // pred_fallthru
      _
    // Predicated region
    $region42: #{transformer_forward.1} parent=1 // pred_check
      _
    $region43: #{transformer_forward.1} parent=1 // pred_check_branch
      %148 = sbr.rel (0) target = $region45
    $region44: #{transformer_forward.1} parent=1 // pred_region
      %s150 = ssub.s32 32, 32
      %151 = vsyncadd [#allocation9], %s150
      %s152 = sshll.u32 [#allocation8], 4
      %s153 = int_to_ptr.vmem [resolvable:$true] %s152
      %158 = dma.hbm_to_vmem [thread:$0]  %s21, 32, %s153, [#allocation9], 16, 16, 1
    $region45: #{transformer_forward.1} parent=1 // pred_fallthru
      _
    // Predicated region
    $region46: #{transformer_forward.1} parent=1 // pred_check
      _
    $region47: #{transformer_forward.1} parent=1 // pred_check_branch
      %160 = sbr.rel (0) target = $region49
    $region48: #{transformer_forward.1} parent=1 // pred_region
      _
    $region49: #{transformer_forward.1} parent=1 // pred_fallthru
      _
    // Predicated region
    $region50: #{transformer_forward.1} parent=1 // pred_check
      _
    $region51: #{transformer_forward.1} parent=1 // pred_check_branch
      %162 = sbr.rel (0) target = $region53
    $region52: #{transformer_forward.1} parent=1 // pred_region
      %s164 = ssub.s32 32, 32
      %165 = vsyncadd [#allocation9], %s164
      %s166 = sshll.u32 [#allocation10], 4
      %s167 = int_to_ptr.vmem [resolvable:$true] %s166
      %172 = dma.hbm_to_vmem [thread:$0]  %s25, 32, %s167, [#allocation9], 16, 16, 1
    $region53: #{transformer_forward.1} parent=1 // pred_fallthru
      _
    // Predicated region
    $region54: #{transformer_forward.1} parent=1 // pred_check
      _
    $region55: #{transformer_forward.1} parent=1 // pred_check_branch
      %174 = sbr.rel (0) target = $region57
    $region56: #{transformer_forward.1} parent=1 // pred_region
      _
    $region57: #{transformer_forward.1} parent=1 // pred_fallthru
      _
    // Predicated region
    $region58: #{transformer_forward.1} parent=1 // pred_check
      _
    $region59: #{transformer_forward.1} parent=1 // pred_check_branch
      %176 = sbr.rel (0) target = $region61
    $region60: #{transformer_forward.1} parent=1 // pred_region
      %s178 = ssub.s32 32, 32
      %179 = vsyncadd [#allocation12], %s178
      %s180 = sshll.u32 [#allocation11], 4
      %s181 = int_to_ptr.vmem [resolvable:$true] %s180
      %186 = dma.hbm_to_vmem [thread:$0]  %s29, 32, %s181, [#allocation12], 16, 16, 1
    $region61: #{transformer_forward.1} parent=1 // pred_fallthru
      _
    // Predicated region
    $region62: #{transformer_forward.1} parent=1 // pred_check
      _
    $region63: #{transformer_forward.1} parent=1 // pred_check_branch
      %188 = sbr.rel (0) target = $region65
    $region64: #{transformer_forward.1} parent=1 // pred_region
      _
    $region65: #{transformer_forward.1} parent=1 // pred_fallthru
      _
    // Predicated region
    $region66: #{transformer_forward.1} parent=1 // pred_check
      _
    $region67: #{transformer_forward.1} parent=1 // pred_check_branch
      %190 = sbr.rel (0) target = $region69
    $region68: #{transformer_forward.1} parent=1 // pred_region
      _
    $region69: #{transformer_forward.1} parent=1 // pred_fallthru
      _
    // Predicated region
    $region70: #{transformer_forward.1} parent=1 // pred_check
      _
    $region71: #{transformer_forward.1} parent=1 // pred_check_branch
      %192 = sbr.rel (0) target = $region73
    $region72: #{transformer_forward.1} parent=1 // pred_region
      _
    $region73: #{transformer_forward.1} parent=1 // pred_fallthru
      _
    // Predicated region
    $region74: #{transformer_forward.1} parent=1 // pred_check
      _
    $region75: #{transformer_forward.1} parent=1 // pred_check_branch
      %194 = sbr.rel (0) target = $region77
    $region76: #{transformer_forward.1} parent=1 // pred_region
      %s196 = ssub.s32 32, 32
      %197 = vsyncadd [#allocation12], %s196
      %s198 = sshll.u32 [#allocation13], 4
      %s199 = int_to_ptr.vmem [resolvable:$true] %s198
      %204 = dma.hbm_to_vmem [thread:$0]  %s37, 32, %s199, [#allocation12], 16, 16, 1
    $region77: #{transformer_forward.1} parent=1 // pred_fallthru
      _
    // Predicated region
    $region78: #{transformer_forward.1} parent=1 // pred_check
      _
    $region79: #{transformer_forward.1} parent=1 // pred_check_branch
      %206 = sbr.rel (0) target = $region81
    $region80: #{transformer_forward.1} parent=1 // pred_region
      _
    $region81: #{transformer_forward.1} parent=1 // pred_fallthru
      _
    // Predicated region
    $region82: #{transformer_forward.1} parent=1 // pred_check
      _
    $region83: #{transformer_forward.1} parent=1 // pred_check_branch
      %208 = sbr.rel (0) target = $region85
    $region84: #{transformer_forward.1} parent=1 // pred_region
      %s210 = ssub.s32 32, 32
      %211 = vsyncadd [#allocation15], %s210
      %s212 = sshll.u32 [#allocation14], 4
      %s213 = int_to_ptr.vmem [resolvable:$true] %s212
      %218 = dma.hbm_to_vmem [thread:$0]  %s41, 32, %s213, [#allocation15], 16, 16, 1
    $region85: #{transformer_forward.1} parent=1 // pred_fallthru
      _
    // Predicated region
    $region86: #{transformer_forward.1} parent=1 // pred_check
      _
    $region87: #{transformer_forward.1} parent=1 // pred_check_branch
      %220 = sbr.rel (0) target = $region89
    $region88: #{transformer_forward.1} parent=1 // pred_region
      _
    $region89: #{transformer_forward.1} parent=1 // pred_fallthru
      _
    // Predicated region
    $region90: #{transformer_forward.1} parent=1 // pred_check
      _
    $region91: #{transformer_forward.1} parent=1 // pred_check_branch
      %222 = sbr.rel (0) target = $region93
    $region92: #{transformer_forward.1} parent=1 // pred_region
      %s224 = ssub.s32 32, 32
      %225 = vsyncadd [#allocation15], %s224
      %s226 = sshll.u32 [#allocation16], 4
      %s227 = int_to_ptr.vmem [resolvable:$true] %s226
      %232 = dma.hbm_to_vmem [thread:$0]  %s45, 32, %s227, [#allocation15], 16, 16, 1
    $region93: #{transformer_forward.1} parent=1 // pred_fallthru
      _
    // Predicated region
    $region94: #{transformer_forward.1} parent=1 // pred_check
      _
    $region95: #{transformer_forward.1} parent=1 // pred_check_branch
      %234 = sbr.rel (0) target = $region97
    $region96: #{transformer_forward.1} parent=1 // pred_region
      %s236 = ssub.s32 1024, 1024
      %237 = vsyncadd [#allocation18], %s236
      %s238 = sshll.u32 [#allocation17], 4
      %s239 = int_to_ptr.vmem [resolvable:$true] %s238
      %244 = dma.hbm_to_vmem [thread:$0]  %s47, 1024, %s239, [#allocation18], 128, 128, 8
    $region97: #{transformer_forward.1} parent=1 // pred_fallthru
      _
    // Predicated region
    $region98: #{transformer_forward.1} parent=1 // pred_check
      _
    $region99: #{transformer_forward.1} parent=1 // pred_check_branch
      %246 = sbr.rel (0) target = $region101
    $region100: #{transformer_forward.1} parent=1 // pred_region
      %s248 = ssub.s32 32, 32
      %249 = vsyncadd [#allocation18], %s248
      %s250 = sshll.u32 [#allocation19], 4
      %s251 = int_to_ptr.vmem [resolvable:$true] %s250
      %256 = dma.hbm_to_vmem [thread:$0]  %s49, 32, %s251, [#allocation18], 16, 16, 1
    $region101: #{transformer_forward.1} parent=1 // pred_fallthru
      _
    // Predicated region
    $region102: #{transformer_forward.1} parent=1 // pred_check
      _
    $region103: #{transformer_forward.1} parent=1 // pred_check_branch
      %258 = sbr.rel (0) target = $region105
    $region104: #{transformer_forward.1} parent=1 // pred_region
      %s260 = ssub.s32 1024, 1024
      %261 = vsyncadd [#allocation21], %s260
      %s262 = sshll.u32 [#allocation20], 4
      %s263 = int_to_ptr.vmem [resolvable:$true] %s262
      %268 = dma.hbm_to_vmem [thread:$0]  %s51, 1024, %s263, [#allocation21], 128, 128, 8
    $region105: #{transformer_forward.1} parent=1 // pred_fallthru
      _
    // Predicated region
    $region106: #{transformer_forward.1} parent=1 // pred_check
      _
    $region107: #{transformer_forward.1} parent=1 // pred_check_branch
      %270 = sbr.rel (0) target = $region109
    $region108: #{transformer_forward.1} parent=1 // pred_region
      %s272 = ssub.s32 32, 32
      %273 = vsyncadd [#allocation21], %s272
      %s274 = sshll.u32 [#allocation22], 4
      %s275 = int_to_ptr.vmem [resolvable:$true] %s274
      %280 = dma.hbm_to_vmem [thread:$0]  %s53, 32, %s275, [#allocation21], 16, 16, 1
    $region109: #{transformer_forward.1} parent=1 // pred_fallthru
      _
    // Predicated region
    $region110: #{transformer_forward.1} parent=1 // pred_check
      _
    $region111: #{transformer_forward.1} parent=1 // pred_check_branch
      %282 = sbr.rel (0) target = $region113
    $region112: #{transformer_forward.1} parent=1 // pred_region
      _
    $region113: #{transformer_forward.1} parent=1 // pred_fallthru
      _
    // Predicated region
    $region114: #{transformer_forward.1} parent=1 // pred_check
      _
    $region115: #{transformer_forward.1} parent=1 // pred_check_branch
      %284 = sbr.rel (0) target = $region117
    $region116: #{transformer_forward.1} parent=1 // pred_region
      %s286 = ssub.s32 32, 32
      %287 = vsyncadd [#allocation24], %s286
      %s288 = sshll.u32 [#allocation23], 4
      %s289 = int_to_ptr.vmem [resolvable:$true] %s288
      %294 = dma.hbm_to_vmem [thread:$0]  %s57, 32, %s289, [#allocation24], 16, 16, 1
    $region117: #{transformer_forward.1} parent=1 // pred_fallthru
      _
    // Predicated region
    $region118: #{transformer_forward.1} parent=1 // pred_check
      _
    $region119: #{transformer_forward.1} parent=1 // pred_check_branch
      %296 = sbr.rel (0) target = $region121
    $region120: #{transformer_forward.1} parent=1 // pred_region
      %s298 = ssub.s32 32, 32
      %299 = vsyncadd [#allocation24], %s298
      %s300 = sshll.u32 [#allocation25], 4
      %s301 = int_to_ptr.vmem [resolvable:$true] %s300
      %306 = dma.hbm_to_vmem [thread:$0]  %s59, 32, %s301, [#allocation24], 16, 16, 1
    $region121: #{transformer_forward.1} parent=1 // pred_fallthru
      _
    // Predicated region
    $region122: #{transformer_forward.1} parent=1 // pred_check
      _
    $region123: #{transformer_forward.1} parent=1 // pred_check_branch
      %308 = sbr.rel (0) target = $region125
    $region124: #{transformer_forward.1} parent=1 // pred_region
      %s310 = ssub.s32 32, 32
      %311 = vsyncadd [#allocation27], %s310
      %s312 = sshll.u32 [#allocation26], 4
      %s313 = int_to_ptr.vmem [resolvable:$true] %s312
      %318 = dma.hbm_to_vmem [thread:$0]  %s61, 32, %s313, [#allocation27], 16, 16, 1
    $region125: #{transformer_forward.1} parent=1 // pred_fallthru
      _
    // Predicated region
    $region126: #{transformer_forward.1} parent=1 // pred_check
      _
    $region127: #{transformer_forward.1} parent=1 // pred_check_branch
      %320 = sbr.rel (0) target = $region129
    $region128: #{transformer_forward.1} parent=1 // pred_region
      %s322 = ssub.s32 32, 32
      %323 = vsyncadd [#allocation27], %s322
      %s324 = sshll.u32 [#allocation28], 4
      %s325 = int_to_ptr.vmem [resolvable:$true] %s324
      %330 = dma.hbm_to_vmem [thread:$0]  %s63, 32, %s325, [#allocation27], 16, 16, 1
    $region129: #{transformer_forward.1} parent=1 // pred_fallthru
      _
    // Predicated region
    $region130: #{transformer_forward.1} parent=1 // pred_check
      _
    $region131: #{transformer_forward.1} parent=1 // pred_check_branch
      %332 = sbr.rel (0) target = $region133
    $region132: #{transformer_forward.1} parent=1 // pred_region
      %s334 = ssub.s32 32, 32
      %335 = vsyncadd [#allocation30], %s334
      %s336 = sshll.u32 [#allocation29], 4
      %s337 = int_to_ptr.vmem [resolvable:$true] %s336
      %342 = dma.hbm_to_vmem [thread:$0]  %s65, 32, %s337, [#allocation30], 16, 16, 1
    $region133: #{transformer_forward.1} parent=1 // pred_fallthru
      _
    // Predicated region
    $region134: #{transformer_forward.1} parent=1 // pred_check
      _
    $region135: #{transformer_forward.1} parent=1 // pred_check_branch
      %344 = sbr.rel (0) target = $region137
    $region136: #{transformer_forward.1} parent=1 // pred_region
      %s346 = ssub.s32 32, 32
      %347 = vsyncadd [#allocation30], %s346
      %s348 = sshll.u32 [#allocation31], 4
      %s349 = int_to_ptr.vmem [resolvable:$true] %s348
      %354 = dma.hbm_to_vmem [thread:$0]  %s67, 32, %s349, [#allocation30], 16, 16, 1
    $region137: #{transformer_forward.1} parent=1 // pred_fallthru
      _
    // Predicated region
    $region138: #{transformer_forward.1} parent=1 // pred_check
      _
    $region139: #{transformer_forward.1} parent=1 // pred_check_branch
      %356 = sbr.rel (0) target = $region141
    $region140: #{transformer_forward.1} parent=1 // pred_region
      %s358 = ssub.s32 32, 32
      %359 = vsyncadd [#allocation33], %s358
      %s360 = sshll.u32 [#allocation32], 4
      %s361 = int_to_ptr.vmem [resolvable:$true] %s360
      %366 = dma.hbm_to_vmem [thread:$0]  %s69, 32, %s361, [#allocation33], 16, 16, 1
    $region141: #{transformer_forward.1} parent=1 // pred_fallthru
      _
    // Predicated region
    $region142: #{transformer_forward.1} parent=1 // pred_check
      _
    $region143: #{transformer_forward.1} parent=1 // pred_check_branch
      %368 = sbr.rel (0) target = $region145
    $region144: #{transformer_forward.1} parent=1 // pred_region
      _
    $region145: #{transformer_forward.1} parent=1 // pred_fallthru
      _
    // Predicated region
    $region146: #{transformer_forward.1} parent=1 // pred_check
      _
    $region147: #{transformer_forward.1} parent=1 // pred_check_branch
      %370 = sbr.rel (0) target = $region149
    $region148: #{transformer_forward.1} parent=1 // pred_region
      _
    $region149: #{transformer_forward.1} parent=1 // pred_fallthru
      _
    // Predicated region
    $region150: #{transformer_forward.1} parent=1 // pred_check
      _
    $region151: #{transformer_forward.1} parent=1 // pred_check_branch
      %372 = sbr.rel (0) target = $region153
    $region152: #{transformer_forward.1} parent=1 // pred_region
      %s374 = ssub.s32 16, 16
      %375 = vsyncadd [#allocation33], %s374
      %s377 = sshll.u32 [#allocation34], 4
      %s378 = int_to_ptr.vmem [resolvable:$true] %s377
      %380 = dma.hbm_to_vmem [thread:$0]  %s75, 16, %s378, [#allocation33]
    $region153: #{transformer_forward.1} parent=1 // pred_fallthru
      _
    // Predicated region
    $region154: #{transformer_forward.1} parent=1 // pred_check
      _
    $region155: #{transformer_forward.1} parent=1 // pred_check_branch
      %382 = sbr.rel (0) target = $region157
    $region156: #{transformer_forward.1} parent=1 // pred_region
      %s384 = ssub.s32 16, 16
      %385 = vsyncadd [#allocation36], %s384
      %s387 = sshll.u32 [#allocation35], 4
      %s388 = int_to_ptr.vmem [resolvable:$true] %s387
      %390 = dma.hbm_to_vmem [thread:$0]  %s77, 16, %s388, [#allocation36]
    $region157: #{transformer_forward.1} parent=1 // pred_fallthru
      _
    // Predicated region
    $region158: #{transformer_forward.1} parent=1 // pred_check
      _
    $region159: #{transformer_forward.1} parent=1 // pred_check_branch
      %392 = sbr.rel (0) target = $region161
    $region160: #{transformer_forward.1} parent=1 // pred_region
      %393 = dma.done [#allocation3], 256
    $region161: #{transformer_forward.1} parent=1 // pred_fallthru
      _
    // Predicated region
    $region162: #{transformer_forward.1} parent=1 // pred_check
      _
    $region163: #{transformer_forward.1} parent=1 // pred_check_branch
      %395 = sbr.rel (0) target = $region165
    $region164: #{transformer_forward.1} parent=1 // pred_region
      %396 = dma.done [#allocation6], 256
    $region165: #{transformer_forward.1} parent=1 // pred_fallthru
      _
    // Predicated region
    $region166: #{transformer_forward.1} parent=1 // pred_check
      _
    $region167: #{transformer_forward.1} parent=1 // pred_check_branch
      %398 = sbr.rel (0) target = $region169
    $region168: #{transformer_forward.1} parent=1 // pred_region
      %399 = dma.done [#allocation6], 32
    $region169: #{transformer_forward.1} parent=1 // pred_fallthru
      _
    // Predicated region
    $region170: #{transformer_forward.1} parent=1 // pred_check
      _
    $region171: #{transformer_forward.1} parent=1 // pred_check_branch
      %401 = sbr.rel (0) target = $region173
    $region172: #{transformer_forward.1} parent=1 // pred_region
      %402 = dma.done [#allocation9], 32
    $region173: #{transformer_forward.1} parent=1 // pred_fallthru
      _
    // Predicated region
    $region174: #{transformer_forward.1} parent=1 // pred_check
      _
    $region175: #{transformer_forward.1} parent=1 // pred_check_branch
      %404 = sbr.rel (0) target = $region177
    $region176: #{transformer_forward.1} parent=1 // pred_region
      %405 = dma.done [#allocation9], 32
    $region177: #{transformer_forward.1} parent=1 // pred_fallthru
      _
    // Predicated region
    $region178: #{transformer_forward.1} parent=1 // pred_check
      _
    $region179: #{transformer_forward.1} parent=1 // pred_check_branch
      %407 = sbr.rel (0) target = $region181
    $region180: #{transformer_forward.1} parent=1 // pred_region
      %408 = dma.done [#allocation12], 32
    $region181: #{transformer_forward.1} parent=1 // pred_fallthru
      _
    // Predicated region
    $region182: #{transformer_forward.1} parent=1 // pred_check
      _
    $region183: #{transformer_forward.1} parent=1 // pred_check_branch
      %410 = sbr.rel (0) target = $region185
    $region184: #{transformer_forward.1} parent=1 // pred_region
      %411 = dma.done [#allocation12], 32
    $region185: #{transformer_forward.1} parent=1 // pred_fallthru
      _
    // Predicated region
    $region186: #{transformer_forward.1} parent=1 // pred_check
      _
    $region187: #{transformer_forward.1} parent=1 // pred_check_branch
      %413 = sbr.rel (0) target = $region189
    $region188: #{transformer_forward.1} parent=1 // pred_region
      %414 = dma.done [#allocation15], 32
    $region189: #{transformer_forward.1} parent=1 // pred_fallthru
      _
    // Predicated region
    $region190: #{transformer_forward.1} parent=1 // pred_check
      _
    $region191: #{transformer_forward.1} parent=1 // pred_check_branch
      %416 = sbr.rel (0) target = $region193
    $region192: #{transformer_forward.1} parent=1 // pred_region
      %417 = dma.done [#allocation15], 32
    $region193: #{transformer_forward.1} parent=1 // pred_fallthru
      _
    // Predicated region
    $region194: #{transformer_forward.1} parent=1 // pred_check
      _
    $region195: #{transformer_forward.1} parent=1 // pred_check_branch
      %419 = sbr.rel (0) target = $region197
    $region196: #{transformer_forward.1} parent=1 // pred_region
      %420 = dma.done [#allocation18], 1024
    $region197: #{transformer_forward.1} parent=1 // pred_fallthru
      _
    // Predicated region
    $region198: #{transformer_forward.1} parent=1 // pred_check
      _
    $region199: #{transformer_forward.1} parent=1 // pred_check_branch
      %422 = sbr.rel (0) target = $region201
    $region200: #{transformer_forward.1} parent=1 // pred_region
      %423 = dma.done [#allocation18], 32
    $region201: #{transformer_forward.1} parent=1 // pred_fallthru
      _
    // Predicated region
    $region202: #{transformer_forward.1} parent=1 // pred_check
      _
    $region203: #{transformer_forward.1} parent=1 // pred_check_branch
      %425 = sbr.rel (0) target = $region205
    $region204: #{transformer_forward.1} parent=1 // pred_region
      %426 = dma.done [#allocation21], 1024
    $region205: #{transformer_forward.1} parent=1 // pred_fallthru
      _
    // Predicated region
    $region206: #{transformer_forward.1} parent=1 // pred_check
      _
    $region207: #{transformer_forward.1} parent=1 // pred_check_branch
      %428 = sbr.rel (0) target = $region209
    $region208: #{transformer_forward.1} parent=1 // pred_region
      %429 = dma.done [#allocation21], 32
    $region209: #{transformer_forward.1} parent=1 // pred_fallthru
      _
    // Predicated region
    $region210: #{transformer_forward.1} parent=1 // pred_check
      _
    $region211: #{transformer_forward.1} parent=1 // pred_check_branch
      %431 = sbr.rel (0) target = $region213
    $region212: #{transformer_forward.1} parent=1 // pred_region
      %432 = dma.done [#allocation24], 32
    $region213: #{transformer_forward.1} parent=1 // pred_fallthru
      _
    // Predicated region
    $region214: #{transformer_forward.1} parent=1 // pred_check
      _
    $region215: #{transformer_forward.1} parent=1 // pred_check_branch
      %434 = sbr.rel (0) target = $region217
    $region216: #{transformer_forward.1} parent=1 // pred_region
      %435 = dma.done [#allocation24], 32
    $region217: #{transformer_forward.1} parent=1 // pred_fallthru
      _
    // Predicated region
    $region218: #{transformer_forward.1} parent=1 // pred_check
      _
    $region219: #{transformer_forward.1} parent=1 // pred_check_branch
      %437 = sbr.rel (0) target = $region221
    $region220: #{transformer_forward.1} parent=1 // pred_region
      %438 = dma.done [#allocation27], 32
    $region221: #{transformer_forward.1} parent=1 // pred_fallthru
      _
    // Predicated region
    $region222: #{transformer_forward.1} parent=1 // pred_check
      _
    $region223: #{transformer_forward.1} parent=1 // pred_check_branch
      %440 = sbr.rel (0) target = $region225
    $region224: #{transformer_forward.1} parent=1 // pred_region
      %441 = dma.done [#allocation27], 32
    $region225: #{transformer_forward.1} parent=1 // pred_fallthru
      _
    // Predicated region
    $region226: #{transformer_forward.1} parent=1 // pred_check
      _
    $region227: #{transformer_forward.1} parent=1 // pred_check_branch
      %443 = sbr.rel (0) target = $region229
    $region228: #{transformer_forward.1} parent=1 // pred_region
      %444 = dma.done [#allocation30], 32
    $region229: #{transformer_forward.1} parent=1 // pred_fallthru
      _
    // Predicated region
    $region230: #{transformer_forward.1} parent=1 // pred_check
      _
    $region231: #{transformer_forward.1} parent=1 // pred_check_branch
      %446 = sbr.rel (0) target = $region233
    $region232: #{transformer_forward.1} parent=1 // pred_region
      %447 = dma.done [#allocation30], 32
    $region233: #{transformer_forward.1} parent=1 // pred_fallthru
      _
    // Predicated region
    $region234: #{transformer_forward.1} parent=1 // pred_check
      _
    $region235: #{transformer_forward.1} parent=1 // pred_check_branch
      %449 = sbr.rel (0) target = $region237
    $region236: #{transformer_forward.1} parent=1 // pred_region
      %450 = dma.done [#allocation33], 32
    $region237: #{transformer_forward.1} parent=1 // pred_fallthru
      _
    // Predicated region
    $region238: #{transformer_forward.1} parent=1 // pred_check
      _
    $region239: #{transformer_forward.1} parent=1 // pred_check_branch
      %452 = sbr.rel (0) target = $region241
    $region240: #{transformer_forward.1} parent=1 // pred_region
      %453 = dma.done [#allocation33], 16
    $region241: #{transformer_forward.1} parent=1 // pred_fallthru
      _
    // Predicated region
    $region242: #{transformer_forward.1} parent=1 // pred_check
      _
    $region243: #{transformer_forward.1} parent=1 // pred_check_branch
      %455 = sbr.rel (0) target = $region245
    $region244: #{transformer_forward.1} parent=1 // pred_region
      %456 = dma.done [#allocation36], 16
    $region245: #{transformer_forward.1} parent=1 // pred_fallthru
      _
    %v457 = vld [vmem:[%s5] sm:$0xff]
    %v458 = vld [vmem:[%s5 + $0x8] sm:$0xff]
    %v459 = vld [vmem:[%s7] sm:$0xff]
    %v460 = vld [vmem:[%s7 + $0x8] sm:$0xff]
    %v461 = vld [vmem:[%s9] sm:$0xff]
    %v462 = vld [vmem:[%s9 + $0x8] sm:$0xff]
    %v463 = vld [vmem:[#allocation2] sm:$0xff]
    %v464 = vld [vmem:[#allocation2 + $0x8] sm:$0xff]
    %v465 = vld [vmem:[%s11] sm:$0xff]
    %v466 = vld [vmem:[%s11 + $0x8] sm:$0xff]
    %v467 = vld [vmem:[%s11 + $0x10] sm:$0xff]
    %v468 = vld [vmem:[%s11 + $0x18] sm:$0xff]
    %v469 = vld [vmem:[%s13] sm:$0x1]
    %v470 = vld [vmem:[%s15] sm:$0xff]
    %v471 = vld [vmem:[%s15 + $0x8] sm:$0xff]
    %v472 = vld [vmem:[%s15 + $0x10] sm:$0xff]
    %v473 = vld [vmem:[%s15 + $0x18] sm:$0xff]
    %v474 = vld [vmem:[#allocation7] sm:$0x1]
    %v476 = vlaneseq
    %v477 = vshrl.u32 %v476, 7
    %v478 = vsub.s32 0, %v477
    %v479 = vrot.slane %v469, %v478
    %vm481 = vcmask 261120
    %v483 = vsel %vm481, %v463, 0
    %v486 = vsel %vm481, %v464, 0
    %488 = vmatprep.subr.mxu0 0.0
    %489 = vmatpush1.msra.mxu0 0.0
    %490 = vmatprep.subr.mxu0 0.0
    %491 = vmatpush1.msra.mxu0 0.0
    %492 = vmatprep.subr.mxu0 0.0
    %493 = vmatpush1.msra.mxu0 0.0
    %494 = vmatprep.subr.mxu0 0.0
    %495 = vmatpush1.msra.mxu0 0.0
    %496 = vmatprep.subr.mxu0 0.0
    %497 = vmatpush1.msra.mxu0 0.0
    %498 = vmatprep.subr.mxu0 0.0
    %499 = vmatpush1.msra.mxu0 0.0
    %500 = vmatprep.subr.mxu0 0.0
    %501 = vmatpush1.msra.mxu0 0.0
    %502 = vmatprep.subr.mxu0 0.0
    %503 = vmatpush1.msra.mxu0 0.0
    %504 = vmatprep.subr.mxu0 0.0
    %505 = vmatpush1.msra.mxu0 0.0
    %506 = vmatprep.subr.mxu0 0.0
    %507 = vmatpush1.msra.mxu0 0.0
    %508 = vmatprep.subr.mxu0 0.0
    %509 = vmatpush1.msra.mxu0 0.0
    %510 = vmatprep.subr.mxu0 0.0
    %511 = vmatpush1.msra.mxu0 0.0
    %512 = vmatprep.subr.mxu0 0.0
    %513 = vmatpush1.msra.mxu0 %v468
    %514 = vmatprep.subr.mxu0 0.0
    %515 = vmatpush1.msra.mxu0 %v467
    %516 = vmatprep.subr.mxu0 0.0
    %517 = vmatpush1.msra.mxu0 %v466
    %518 = vmatprep.subr.mxu0 0.0
    %519 = vmatpush1.msra.mxu0 %v465
    %520 = vmatprep.subr.mxu0 0.0
    %521 = vmatpush2.msra.mxu0 0.0
    %522 = vmatprep.subr.mxu0 0.0
    %523 = vmatpush2.msra.mxu0 0.0
    %524 = vmatprep.subr.mxu0 0.0
    %525 = vmatpush2.msra.mxu0 0.0
    %526 = vmatprep.subr.mxu0 0.0
    %527 = vmatpush2.msra.mxu0 0.0
    %528 = vmatprep.subr.mxu0 0.0
    %529 = vmatpush2.msra.mxu0 0.0
    %530 = vmatprep.subr.mxu0 0.0
    %531 = vmatpush2.msra.mxu0 0.0
    %532 = vmatprep.subr.mxu0 0.0
    %533 = vmatpush2.msra.mxu0 0.0
    %534 = vmatprep.subr.mxu0 0.0
    %535 = vmatpush2.msra.mxu0 0.0
    %536 = vmatprep.subr.mxu0 0.0
    %537 = vmatpush2.msra.mxu0 0.0
    %538 = vmatprep.subr.mxu0 0.0
    %539 = vmatpush2.msra.mxu0 0.0
    %540 = vmatprep.subr.mxu0 0.0
    %541 = vmatpush2.msra.mxu0 0.0
    %542 = vmatprep.subr.mxu0 0.0
    %543 = vmatpush2.msra.mxu0 0.0
    %544 = vmatprep.subr.mxu0 0.0
    %545 = vmatpush2.msra.mxu0 0.0
    %546 = vmatprep.subr.mxu0 0.0
    %547 = vmatpush2.msra.mxu0 0.0
    %548 = vmatprep.subr.mxu0 0.0
    %549 = vmatpush2.msra.mxu0 0.0
    %550 = vmatprep.subr.mxu0 0.0
    %551 = vmatpush2.msra.mxu0 0.0
    %552 = vmatprep.mubr.f32.mxu0 0.0
    %553 = vmatmul.mubr.f32.gmra.mxu0 %v483
    %v554 = vpop.f32.mrf.mxu0
    %v555 = vadd.f32 %v479, %v554
    %v556 = vpop.f32.mrf.mxu0
    %557 = vmatprep.mubr.f32.mxu0 0.0
    %558 = vmatmul.mubr.f32.gmra.mxu0 %v486
    %v559 = vpop.f32.mrf.mxu0
    %v560 = vadd.f32 %v479, %v559
    %v561 = vpop.f32.mrf.mxu0
    %562 = vdwg.mxu0
    %v563 = vmul.f32 %v555, 0.35355338
    %v564 = vmul.f32 %v560, 0.35355338
    %567 = vrot.lane.b32.xlu0 %v555, 96
    %v568 = vpop.permute.xlu0 %567
    %569 = vrot.lane.b32.xlu0 %v560, 96
    %v570 = vpop.permute.xlu0 %569
    %vm571 = vcmask 64512
    %v573 = vsel %vm571, %v563, 0
    %v576 = vsel %vm571, %v564, 0
    %v578 = vsel %vm571, %v568, 0
    %v580 = vsel %vm571, %v570, 0
    %582 = vmatprep.subr.mxu0 0.0
    %583 = vmatpush1.xpose.msra.mxu0 0.0
    %584 = vmatprep.subr.mxu0 0.0
    %585 = vmatpush1.xpose.msra.mxu0 0.0
    %586 = vmatprep.subr.mxu0 0.0
    %587 = vmatpush1.xpose.msra.mxu0 0.0
    %588 = vmatprep.subr.mxu0 0.0
    %589 = vmatpush1.xpose.msra.mxu0 0.0
    %590 = vmatprep.subr.mxu0 0.0
    %591 = vmatpush1.xpose.msra.mxu0 0.0
    %592 = vmatprep.subr.mxu0 0.0
    %593 = vmatpush1.xpose.msra.mxu0 0.0
    %594 = vmatprep.subr.mxu0 0.0
    %595 = vmatpush1.xpose.msra.mxu0 0.0
    %596 = vmatprep.subr.mxu0 0.0
    %597 = vmatpush1.xpose.msra.mxu0 0.0
    %598 = vmatprep.subr.mxu0 0.0
    %599 = vmatpush1.xpose.msra.mxu0 0.0
    %600 = vmatprep.subr.mxu0 0.0
    %601 = vmatpush1.xpose.msra.mxu0 0.0
    %602 = vmatprep.subr.mxu0 0.0
    %603 = vmatpush1.xpose.msra.mxu0 0.0
    %604 = vmatprep.subr.mxu0 0.0
    %605 = vmatpush1.xpose.msra.mxu0 0.0
    %606 = vmatprep.subr.mxu0 0.0
    %607 = vmatpush1.xpose.msra.mxu0 0.0
    %608 = vmatprep.subr.mxu0 0.0
    %609 = vmatpush1.xpose.msra.mxu0 0.0
    %610 = vmatprep.subr.mxu0 0.0
    %611 = vmatpush1.xpose.msra.mxu0 %v580
    %612 = vmatprep.subr.mxu0 0.0
    %613 = vmatpush1.xpose.msra.mxu0 %v578
    %614 = vmatprep.subr.mxu0 0.0
    %615 = vmatpush2.xpose.msra.mxu0 0.0
    %616 = vmatprep.subr.mxu0 0.0
    %617 = vmatpush2.xpose.msra.mxu0 0.0
    %618 = vmatprep.subr.mxu0 0.0
    %619 = vmatpush2.xpose.msra.mxu0 0.0
    %620 = vmatprep.subr.mxu0 0.0
    %621 = vmatpush2.xpose.msra.mxu0 0.0
    %622 = vmatprep.subr.mxu0 0.0
    %623 = vmatpush2.xpose.msra.mxu0 0.0
    %624 = vmatprep.subr.mxu0 0.0
    %625 = vmatpush2.xpose.msra.mxu0 0.0
    %626 = vmatprep.subr.mxu0 0.0
    %627 = vmatpush2.xpose.msra.mxu0 0.0
    %628 = vmatprep.subr.mxu0 0.0
    %629 = vmatpush2.xpose.msra.mxu0 0.0
    %630 = vmatprep.subr.mxu0 0.0
    %631 = vmatpush2.xpose.msra.mxu0 0.0
    %632 = vmatprep.subr.mxu0 0.0
    %633 = vmatpush2.xpose.msra.mxu0 0.0
    %634 = vmatprep.subr.mxu0 0.0
    %635 = vmatpush2.xpose.msra.mxu0 0.0
    %636 = vmatprep.subr.mxu0 0.0
    %637 = vmatpush2.xpose.msra.mxu0 0.0
    %638 = vmatprep.subr.mxu0 0.0
    %639 = vmatpush2.xpose.msra.mxu0 0.0
    %640 = vmatprep.subr.mxu0 0.0
    %641 = vmatpush2.xpose.msra.mxu0 0.0
    %642 = vmatprep.subr.mxu0 0.0
    %643 = vmatpush2.xpose.msra.mxu0 0.0
    %644 = vmatprep.subr.mxu0 0.0
    %645 = vmatpush2.xpose.msra.mxu0 0.0
    %646 = vmatprep.mubr.f32.mxu0 0.0
    %647 = vmatmul.mubr.f32.gmra.mxu0 %v573
    %v648 = vpop.f32.mrf.mxu0
    %v649 = vadd.f32 %v457, %v648
    %v650 = vpop.f32.mrf.mxu0
    %651 = vmatprep.mubr.f32.mxu0 0.0
    %652 = vmatmul.mubr.f32.gmra.mxu0 %v576
    %v653 = vpop.f32.mrf.mxu0
    %v654 = vadd.f32 %v458, %v653
    %v655 = vpop.f32.mrf.mxu0
    %656 = vdwg.mxu0
    %vm657 = vcmask 130048
    %v658 = vsel %vm657, %v649, -inf
    %659 = vmax.xlane.f32.xlu0 %v658
    %v660 = vpop.xlane.xlu0 %659
    %v661 = vsel %vm657, %v654, -inf
    %662 = vmax.xlane.f32.xlu0 %v661
    %v663 = vpop.xlane.xlu0 %662
    %v664 = vsub.f32 %v649, %v660
    %v665 = vsub.f32 %v654, %v663
    %v666 = vmul.f32 %v664, 1.442695
    %v667 = vpow.pop %v666
    %v668 = vmul.f32 %v665, 1.442695
    %v669 = vpow.pop %v668
    %v670 = vsel %vm657, %v667, 0.0
    %671 = vadd.xlane.f32.xlu0 %v670
    %v672 = vpop.xlane.xlu0 %671
    %v673 = vsel %vm657, %v669, 0.0
    %674 = vadd.xlane.f32.xlu0 %v673
    %v675 = vpop.xlane.xlu0 %674
    %v676 = vrcp.pop %v672
    %v677 = vrcp.pop %v675
    %v678 = vmul.f32 %v667, %v676
    %v679 = vmul.f32 %v669, %v677
    %680 = vrot.lane.b32.xlu0 %v555, 64
    %v681 = vpop.permute.xlu0 %680
    %682 = vrot.lane.b32.xlu0 %v560, 64
    %v683 = vpop.permute.xlu0 %682
    %v687 = vsel %vm657, %v678, 0
    %v690 = vsel %vm657, %v679, 0
    %692 = vmatprep.subr.mxu0 0.0
    %693 = vmatpush1.msra.mxu0 0.0
    %694 = vmatprep.subr.mxu0 0.0
    %695 = vmatpush1.msra.mxu0 0.0
    %696 = vmatprep.subr.mxu0 0.0
    %697 = vmatpush1.msra.mxu0 0.0
    %698 = vmatprep.subr.mxu0 0.0
    %699 = vmatpush1.msra.mxu0 0.0
    %700 = vmatprep.subr.mxu0 0.0
    %701 = vmatpush1.msra.mxu0 0.0
    %702 = vmatprep.subr.mxu0 0.0
    %703 = vmatpush1.msra.mxu0 0.0
    %704 = vmatprep.subr.mxu0 0.0
    %705 = vmatpush1.msra.mxu0 0.0
    %706 = vmatprep.subr.mxu0 0.0
    %707 = vmatpush1.msra.mxu0 0.0
    %708 = vmatprep.subr.mxu0 0.0
    %709 = vmatpush1.msra.mxu0 0.0
    %710 = vmatprep.subr.mxu0 0.0
    %711 = vmatpush1.msra.mxu0 0.0
    %712 = vmatprep.subr.mxu0 0.0
    %713 = vmatpush1.msra.mxu0 0.0
    %714 = vmatprep.subr.mxu0 0.0
    %715 = vmatpush1.msra.mxu0 0.0
    %716 = vmatprep.subr.mxu0 0.0
    %717 = vmatpush1.msra.mxu0 0.0
    %718 = vmatprep.subr.mxu0 0.0
    %719 = vmatpush1.msra.mxu0 0.0
    %720 = vmatprep.subr.mxu0 0.0
    %721 = vmatpush1.msra.mxu0 %v683
    %722 = vmatprep.subr.mxu0 0.0
    %723 = vmatpush1.msra.mxu0 %v681
    %724 = vmatprep.subr.mxu0 0.0
    %725 = vmatpush2.msra.mxu0 0.0
    %726 = vmatprep.subr.mxu0 0.0
    %727 = vmatpush2.msra.mxu0 0.0
    %728 = vmatprep.subr.mxu0 0.0
    %729 = vmatpush2.msra.mxu0 0.0
    %730 = vmatprep.subr.mxu0 0.0
    %731 = vmatpush2.msra.mxu0 0.0
    %732 = vmatprep.subr.mxu0 0.0
    %733 = vmatpush2.msra.mxu0 0.0
    %734 = vmatprep.subr.mxu0 0.0
    %735 = vmatpush2.msra.mxu0 0.0
    %736 = vmatprep.subr.mxu0 0.0
    %737 = vmatpush2.msra.mxu0 0.0
    %738 = vmatprep.subr.mxu0 0.0
    %739 = vmatpush2.msra.mxu0 0.0
    %740 = vmatprep.subr.mxu0 0.0
    %741 = vmatpush2.msra.mxu0 0.0
    %742 = vmatprep.subr.mxu0 0.0
    %743 = vmatpush2.msra.mxu0 0.0
    %744 = vmatprep.subr.mxu0 0.0
    %745 = vmatpush2.msra.mxu0 0.0
    %746 = vmatprep.subr.mxu0 0.0
    %747 = vmatpush2.msra.mxu0 0.0
    %748 = vmatprep.subr.mxu0 0.0
    %749 = vmatpush2.msra.mxu0 0.0
    %750 = vmatprep.subr.mxu0 0.0
    %751 = vmatpush2.msra.mxu0 0.0
    %752 = vmatprep.subr.mxu0 0.0
    %753 = vmatpush2.msra.mxu0 0.0
    %754 = vmatprep.subr.mxu0 0.0
    %755 = vmatpush2.msra.mxu0 0.0
    %756 = vmatprep.mubr.f32.mxu0 0.0
    %757 = vmatmul.mubr.f32.gmra.mxu0 %v687
    %v758 = vpop.f32.mrf.mxu0
    %v759 = vadd.f32 0.0, %v758
    %v760 = vpop.f32.mrf.mxu0
    %761 = vmatprep.mubr.f32.mxu0 0.0
    %762 = vmatmul.mubr.f32.gmra.mxu0 %v690
    %v763 = vpop.f32.mrf.mxu0
    %v764 = vadd.f32 0.0, %v763
    %v765 = vpop.f32.mrf.mxu0
    %766 = vdwg.mxu0
    %767 = vrot.lane.b32.xlu0 %v563, 120
    %v768 = vpop.permute.xlu0 %767
    %769 = vrot.lane.b32.xlu0 %v564, 120
    %v770 = vpop.permute.xlu0 %769
    %771 = vrot.lane.b32.xlu0 %v555, 88
    %v772 = vpop.permute.xlu0 %771
    %773 = vrot.lane.b32.xlu0 %v560, 88
    %v774 = vpop.permute.xlu0 %773
    %v775 = vsel %vm571, %v768, 0
    %v777 = vsel %vm571, %v770, 0
    %v779 = vsel %vm571, %v772, 0
    %v781 = vsel %vm571, %v774, 0
    %783 = vmatprep.subr.mxu0 0.0
    %784 = vmatpush1.xpose.msra.mxu0 0.0
    %785 = vmatprep.subr.mxu0 0.0
    %786 = vmatpush1.xpose.msra.mxu0 0.0
    %787 = vmatprep.subr.mxu0 0.0
    %788 = vmatpush1.xpose.msra.mxu0 0.0
    %789 = vmatprep.subr.mxu0 0.0
    %790 = vmatpush1.xpose.msra.mxu0 0.0
    %791 = vmatprep.subr.mxu0 0.0
    %792 = vmatpush1.xpose.msra.mxu0 0.0
    %793 = vmatprep.subr.mxu0 0.0
    %794 = vmatpush1.xpose.msra.mxu0 0.0
    %795 = vmatprep.subr.mxu0 0.0
    %796 = vmatpush1.xpose.msra.mxu0 0.0
    %797 = vmatprep.subr.mxu0 0.0
    %798 = vmatpush1.xpose.msra.mxu0 0.0
    %799 = vmatprep.subr.mxu0 0.0
    %800 = vmatpush1.xpose.msra.mxu0 0.0
    %801 = vmatprep.subr.mxu0 0.0
    %802 = vmatpush1.xpose.msra.mxu0 0.0
    %803 = vmatprep.subr.mxu0 0.0
    %804 = vmatpush1.xpose.msra.mxu0 0.0
    %805 = vmatprep.subr.mxu0 0.0
    %806 = vmatpush1.xpose.msra.mxu0 0.0
    %807 = vmatprep.subr.mxu0 0.0
    %808 = vmatpush1.xpose.msra.mxu0 0.0
    %809 = vmatprep.subr.mxu0 0.0
    %810 = vmatpush1.xpose.msra.mxu0 0.0
    %811 = vmatprep.subr.mxu0 0.0
    %812 = vmatpush1.xpose.msra.mxu0 %v781
    %813 = vmatprep.subr.mxu0 0.0
    %814 = vmatpush1.xpose.msra.mxu0 %v779
    %815 = vmatprep.subr.mxu0 0.0
    %816 = vmatpush2.xpose.msra.mxu0 0.0
    %817 = vmatprep.subr.mxu0 0.0
    %818 = vmatpush2.xpose.msra.mxu0 0.0
    %819 = vmatprep.subr.mxu0 0.0
    %820 = vmatpush2.xpose.msra.mxu0 0.0
    %821 = vmatprep.subr.mxu0 0.0
    %822 = vmatpush2.xpose.msra.mxu0 0.0
    %823 = vmatprep.subr.mxu0 0.0
    %824 = vmatpush2.xpose.msra.mxu0 0.0
    %825 = vmatprep.subr.mxu0 0.0
    %826 = vmatpush2.xpose.msra.mxu0 0.0
    %827 = vmatprep.subr.mxu0 0.0
    %828 = vmatpush2.xpose.msra.mxu0 0.0
    %829 = vmatprep.subr.mxu0 0.0
    %830 = vmatpush2.xpose.msra.mxu0 0.0
    %831 = vmatprep.subr.mxu0 0.0
    %832 = vmatpush2.xpose.msra.mxu0 0.0
    %833 = vmatprep.subr.mxu0 0.0
    %834 = vmatpush2.xpose.msra.mxu0 0.0
    %835 = vmatprep.subr.mxu0 0.0
    %836 = vmatpush2.xpose.msra.mxu0 0.0
    %837 = vmatprep.subr.mxu0 0.0
    %838 = vmatpush2.xpose.msra.mxu0 0.0
    %839 = vmatprep.subr.mxu0 0.0
    %840 = vmatpush2.xpose.msra.mxu0 0.0
    %841 = vmatprep.subr.mxu0 0.0
    %842 = vmatpush2.xpose.msra.mxu0 0.0
    %843 = vmatprep.subr.mxu0 0.0
    %844 = vmatpush2.xpose.msra.mxu0 0.0
    %845 = vmatprep.subr.mxu0 0.0
    %846 = vmatpush2.xpose.msra.mxu0 0.0
    %847 = vmatprep.mubr.f32.mxu0 0.0
    %848 = vmatmul.mubr.f32.gmra.mxu0 %v775
    %v849 = vpop.f32.mrf.mxu0
    %v850 = vadd.f32 %v457, %v849
    %v851 = vpop.f32.mrf.mxu0
    %852 = vmatprep.mubr.f32.mxu0 0.0
    %853 = vmatmul.mubr.f32.gmra.mxu0 %v777
    %v854 = vpop.f32.mrf.mxu0
    %v855 = vadd.f32 %v458, %v854
    %v856 = vpop.f32.mrf.mxu0
    %857 = vdwg.mxu0
    %v858 = vsel %vm657, %v850, -inf
    %859 = vmax.xlane.f32.xlu0 %v858
    %v860 = vpop.xlane.xlu0 %859
    %v861 = vsel %vm657, %v855, -inf
    %862 = vmax.xlane.f32.xlu0 %v861
    %v863 = vpop.xlane.xlu0 %862
    %v864 = vsub.f32 %v850, %v860
    %v865 = vsub.f32 %v855, %v863
    %v866 = vmul.f32 %v864, 1.442695
    %v867 = vpow.pop %v866
    %v868 = vmul.f32 %v865, 1.442695
    %v869 = vpow.pop %v868
    %v870 = vsel %vm657, %v867, 0.0
    %871 = vadd.xlane.f32.xlu0 %v870
    %v872 = vpop.xlane.xlu0 %871
    %v873 = vsel %vm657, %v869, 0.0
    %874 = vadd.xlane.f32.xlu0 %v873
    %v875 = vpop.xlane.xlu0 %874
    %v876 = vrcp.pop %v872
    %v877 = vrcp.pop %v875
    %v878 = vmul.f32 %v867, %v876
    %v879 = vmul.f32 %v869, %v877
    %880 = vrot.lane.b32.xlu0 %v555, 56
    %v881 = vpop.permute.xlu0 %880
    %882 = vrot.lane.b32.xlu0 %v560, 56
    %v883 = vpop.permute.xlu0 %882
    %v887 = vsel %vm657, %v878, 0
    %v890 = vsel %vm657, %v879, 0
    %892 = vmatprep.subr.mxu0 0.0
    %893 = vmatpush1.msra.mxu0 0.0
    %894 = vmatprep.subr.mxu0 0.0
    %895 = vmatpush1.msra.mxu0 0.0
    %896 = vmatprep.subr.mxu0 0.0
    %897 = vmatpush1.msra.mxu0 0.0
    %898 = vmatprep.subr.mxu0 0.0
    %899 = vmatpush1.msra.mxu0 0.0
    %900 = vmatprep.subr.mxu0 0.0
    %901 = vmatpush1.msra.mxu0 0.0
    %902 = vmatprep.subr.mxu0 0.0
    %903 = vmatpush1.msra.mxu0 0.0
    %904 = vmatprep.subr.mxu0 0.0
    %905 = vmatpush1.msra.mxu0 0.0
    %906 = vmatprep.subr.mxu0 0.0
    %907 = vmatpush1.msra.mxu0 0.0
    %908 = vmatprep.subr.mxu0 0.0
    %909 = vmatpush1.msra.mxu0 0.0
    %910 = vmatprep.subr.mxu0 0.0
    %911 = vmatpush1.msra.mxu0 0.0
    %912 = vmatprep.subr.mxu0 0.0
    %913 = vmatpush1.msra.mxu0 0.0
    %914 = vmatprep.subr.mxu0 0.0
    %915 = vmatpush1.msra.mxu0 0.0
    %916 = vmatprep.subr.mxu0 0.0
    %917 = vmatpush1.msra.mxu0 0.0
    %918 = vmatprep.subr.mxu0 0.0
    %919 = vmatpush1.msra.mxu0 0.0
    %920 = vmatprep.subr.mxu0 0.0
    %921 = vmatpush1.msra.mxu0 %v883
    %922 = vmatprep.subr.mxu0 0.0
    %923 = vmatpush1.msra.mxu0 %v881
    %924 = vmatprep.subr.mxu0 0.0
    %925 = vmatpush2.msra.mxu0 0.0
    %926 = vmatprep.subr.mxu0 0.0
    %927 = vmatpush2.msra.mxu0 0.0
    %928 = vmatprep.subr.mxu0 0.0
    %929 = vmatpush2.msra.mxu0 0.0
    %930 = vmatprep.subr.mxu0 0.0
    %931 = vmatpush2.msra.mxu0 0.0
    %932 = vmatprep.subr.mxu0 0.0
    %933 = vmatpush2.msra.mxu0 0.0
    %934 = vmatprep.subr.mxu0 0.0
    %935 = vmatpush2.msra.mxu0 0.0
    %936 = vmatprep.subr.mxu0 0.0
    %937 = vmatpush2.msra.mxu0 0.0
    %938 = vmatprep.subr.mxu0 0.0
    %939 = vmatpush2.msra.mxu0 0.0
    %940 = vmatprep.subr.mxu0 0.0
    %941 = vmatpush2.msra.mxu0 0.0
    %942 = vmatprep.subr.mxu0 0.0
    %943 = vmatpush2.msra.mxu0 0.0
    %944 = vmatprep.subr.mxu0 0.0
    %945 = vmatpush2.msra.mxu0 0.0
    %946 = vmatprep.subr.mxu0 0.0
    %947 = vmatpush2.msra.mxu0 0.0
    %948 = vmatprep.subr.mxu0 0.0
    %949 = vmatpush2.msra.mxu0 0.0
    %950 = vmatprep.subr.mxu0 0.0
    %951 = vmatpush2.msra.mxu0 0.0
    %952 = vmatprep.subr.mxu0 0.0
    %953 = vmatpush2.msra.mxu0 0.0
    %954 = vmatprep.subr.mxu0 0.0
    %955 = vmatpush2.msra.mxu0 0.0
    %956 = vmatprep.mubr.f32.mxu0 0.0
    %957 = vmatmul.mubr.f32.gmra.mxu0 %v887
    %v958 = vpop.f32.mrf.mxu0
    %v959 = vadd.f32 0.0, %v958
    %v960 = vpop.f32.mrf.mxu0
    %961 = vmatprep.mubr.f32.mxu0 0.0
    %962 = vmatmul.mubr.f32.gmra.mxu0 %v890
    %v963 = vpop.f32.mrf.mxu0
    %v964 = vadd.f32 0.0, %v963
    %v965 = vpop.f32.mrf.mxu0
    %966 = vdwg.mxu0
    %v968 = vsel %vm571, %v959, 0
    %v971 = vsel %vm571, %v964, 0
    %973 = vmatprep.subr.mxu0 0.0
    %974 = vmatpush1.msra.mxu0 0.0
    %975 = vmatprep.subr.mxu0 0.0
    %976 = vmatpush1.msra.mxu0 0.0
    %977 = vmatprep.subr.mxu0 0.0
    %978 = vmatpush1.msra.mxu0 0.0
    %979 = vmatprep.subr.mxu0 0.0
    %980 = vmatpush1.msra.mxu0 0.0
    %981 = vmatprep.subr.mxu0 0.0
    %982 = vmatpush1.msra.mxu0 0.0
    %983 = vmatprep.subr.mxu0 0.0
    %984 = vmatpush1.msra.mxu0 0.0
    %985 = vmatprep.subr.mxu0 0.0
    %986 = vmatpush1.msra.mxu0 0.0
    %987 = vmatprep.subr.mxu0 0.0
    %988 = vmatpush1.msra.mxu0 0.0
    %989 = vmatprep.subr.mxu0 0.0
    %990 = vmatpush1.msra.mxu0 0.0
    %991 = vmatprep.subr.mxu0 0.0
    %992 = vmatpush1.msra.mxu0 0.0
    %993 = vmatprep.subr.mxu0 0.0
    %994 = vmatpush1.msra.mxu0 0.0
    %995 = vmatprep.subr.mxu0 0.0
    %996 = vmatpush1.msra.mxu0 0.0
    %997 = vmatprep.subr.mxu0 0.0
    %998 = vmatpush1.msra.mxu0 0.0
    %999 = vmatprep.subr.mxu0 0.0
    %1000 = vmatpush1.msra.mxu0 0.0
    %1001 = vmatprep.subr.mxu0 0.0
    %1002 = vmatpush1.msra.mxu0 0.0
    %1003 = vmatprep.subr.mxu0 0.0
    %1004 = vmatpush1.msra.mxu0 %v471
    %1005 = vmatprep.subr.mxu0 0.0
    %1006 = vmatpush2.msra.mxu0 0.0
    %1007 = vmatprep.subr.mxu0 0.0
    %1008 = vmatpush2.msra.mxu0 0.0
    %1009 = vmatprep.subr.mxu0 0.0
    %1010 = vmatpush2.msra.mxu0 0.0
    %1011 = vmatprep.subr.mxu0 0.0
    %1012 = vmatpush2.msra.mxu0 0.0
    %1013 = vmatprep.subr.mxu0 0.0
    %1014 = vmatpush2.msra.mxu0 0.0
    %1015 = vmatprep.subr.mxu0 0.0
    %1016 = vmatpush2.msra.mxu0 0.0
    %1017 = vmatprep.subr.mxu0 0.0
    %1018 = vmatpush2.msra.mxu0 0.0
    %1019 = vmatprep.subr.mxu0 0.0
    %1020 = vmatpush2.msra.mxu0 0.0
    %1021 = vmatprep.subr.mxu0 0.0
    %1022 = vmatpush2.msra.mxu0 0.0
    %1023 = vmatprep.subr.mxu0 0.0
    %1024 = vmatpush2.msra.mxu0 0.0
    %1025 = vmatprep.subr.mxu0 0.0
    %1026 = vmatpush2.msra.mxu0 0.0
    %1027 = vmatprep.subr.mxu0 0.0
    %1028 = vmatpush2.msra.mxu0 0.0
    %1029 = vmatprep.subr.mxu0 0.0
    %1030 = vmatpush2.msra.mxu0 0.0
    %1031 = vmatprep.subr.mxu0 0.0
    %1032 = vmatpush2.msra.mxu0 0.0
    %1033 = vmatprep.subr.mxu0 0.0
    %1034 = vmatpush2.msra.mxu0 0.0
    %1035 = vmatprep.subr.mxu0 0.0
    %1036 = vmatpush2.msra.mxu0 0.0
    %1037 = vmatprep.mubr.f32.mxu0 0.0
    %1038 = vmatmul.mubr.f32.gmra.mxu0 %v968
    %v1039 = vpop.f32.mrf.mxu0
    %v1040 = vadd.f32 0.0, %v1039
    %v1041 = vpop.f32.mrf.mxu0
    %1042 = vmatprep.mubr.f32.mxu0 0.0
    %1043 = vmatmul.mubr.f32.gmra.mxu0 %v971
    %v1044 = vpop.f32.mrf.mxu0
    %v1045 = vadd.f32 0.0, %v1044
    %v1046 = vpop.f32.mrf.mxu0
    %1047 = vdwg.mxu0
    %v1049 = vsel %vm571, %v759, 0
    %v1052 = vsel %vm571, %v764, 0
    %1054 = vmatprep.subr.mxu0 0.0
    %1055 = vmatpush1.msra.mxu0 0.0
    %1056 = vmatprep.subr.mxu0 0.0
    %1057 = vmatpush1.msra.mxu0 0.0
    %1058 = vmatprep.subr.mxu0 0.0
    %1059 = vmatpush1.msra.mxu0 0.0
    %1060 = vmatprep.subr.mxu0 0.0
    %1061 = vmatpush1.msra.mxu0 0.0
    %1062 = vmatprep.subr.mxu0 0.0
    %1063 = vmatpush1.msra.mxu0 0.0
    %1064 = vmatprep.subr.mxu0 0.0
    %1065 = vmatpush1.msra.mxu0 0.0
    %1066 = vmatprep.subr.mxu0 0.0
    %1067 = vmatpush1.msra.mxu0 0.0
    %1068 = vmatprep.subr.mxu0 0.0
    %1069 = vmatpush1.msra.mxu0 0.0
    %1070 = vmatprep.subr.mxu0 0.0
    %1071 = vmatpush1.msra.mxu0 0.0
    %1072 = vmatprep.subr.mxu0 0.0
    %1073 = vmatpush1.msra.mxu0 0.0
    %1074 = vmatprep.subr.mxu0 0.0
    %1075 = vmatpush1.msra.mxu0 0.0
    %1076 = vmatprep.subr.mxu0 0.0
    %1077 = vmatpush1.msra.mxu0 0.0
    %1078 = vmatprep.subr.mxu0 0.0
    %1079 = vmatpush1.msra.mxu0 0.0
    %1080 = vmatprep.subr.mxu0 0.0
    %1081 = vmatpush1.msra.mxu0 0.0
    %1082 = vmatprep.subr.mxu0 0.0
    %1083 = vmatpush1.msra.mxu0 0.0
    %1084 = vmatprep.subr.mxu0 0.0
    %1085 = vmatpush1.msra.mxu0 %v470
    %1086 = vmatprep.subr.mxu0 0.0
    %1087 = vmatpush2.msra.mxu0 0.0
    %1088 = vmatprep.subr.mxu0 0.0
    %1089 = vmatpush2.msra.mxu0 0.0
    %1090 = vmatprep.subr.mxu0 0.0
    %1091 = vmatpush2.msra.mxu0 0.0
    %1092 = vmatprep.subr.mxu0 0.0
    %1093 = vmatpush2.msra.mxu0 0.0
    %1094 = vmatprep.subr.mxu0 0.0
    %1095 = vmatpush2.msra.mxu0 0.0
    %1096 = vmatprep.subr.mxu0 0.0
    %1097 = vmatpush2.msra.mxu0 0.0
    %1098 = vmatprep.subr.mxu0 0.0
    %1099 = vmatpush2.msra.mxu0 0.0
    %1100 = vmatprep.subr.mxu0 0.0
    %1101 = vmatpush2.msra.mxu0 0.0
    %1102 = vmatprep.subr.mxu0 0.0
    %1103 = vmatpush2.msra.mxu0 0.0
    %1104 = vmatprep.subr.mxu0 0.0
    %1105 = vmatpush2.msra.mxu0 0.0
    %1106 = vmatprep.subr.mxu0 0.0
    %1107 = vmatpush2.msra.mxu0 0.0
    %1108 = vmatprep.subr.mxu0 0.0
    %1109 = vmatpush2.msra.mxu0 0.0
    %1110 = vmatprep.subr.mxu0 0.0
    %1111 = vmatpush2.msra.mxu0 0.0
    %1112 = vmatprep.subr.mxu0 0.0
    %1113 = vmatpush2.msra.mxu0 0.0
    %1114 = vmatprep.subr.mxu0 0.0
    %1115 = vmatpush2.msra.mxu0 0.0
    %1116 = vmatprep.subr.mxu0 0.0
    %1117 = vmatpush2.msra.mxu0 0.0
    %1118 = vmatprep.mubr.f32.mxu0 0.0
    %1119 = vmatmul.mubr.f32.gmra.mxu0 %v1049
    %v1120 = vpop.f32.mrf.mxu0
    %v1121 = vadd.f32 %v1040, %v1120
    %v1122 = vpop.f32.mrf.mxu0
    %1123 = vmatprep.mubr.f32.mxu0 0.0
    %1124 = vmatmul.mubr.f32.gmra.mxu0 %v1052
    %v1125 = vpop.f32.mrf.mxu0
    %v1126 = vadd.f32 %v1045, %v1125
    %v1127 = vpop.f32.mrf.mxu0
    %1128 = vdwg.mxu0
    %1129 = vrot.lane.b32.xlu0 %v563, 112
    %v1130 = vpop.permute.xlu0 %1129
    %1131 = vrot.lane.b32.xlu0 %v564, 112
    %v1132 = vpop.permute.xlu0 %1131
    %1133 = vrot.lane.b32.xlu0 %v555, 80
    %v1134 = vpop.permute.xlu0 %1133
    %1135 = vrot.lane.b32.xlu0 %v560, 80
    %v1136 = vpop.permute.xlu0 %1135
    %v1137 = vsel %vm571, %v1130, 0
    %v1139 = vsel %vm571, %v1132, 0
    %v1141 = vsel %vm571, %v1134, 0
    %v1143 = vsel %vm571, %v1136, 0
    %1145 = vmatprep.subr.mxu0 0.0
    %1146 = vmatpush1.xpose.msra.mxu0 0.0
    %1147 = vmatprep.subr.mxu0 0.0
    %1148 = vmatpush1.xpose.msra.mxu0 0.0
    %1149 = vmatprep.subr.mxu0 0.0
    %1150 = vmatpush1.xpose.msra.mxu0 0.0
    %1151 = vmatprep.subr.mxu0 0.0
    %1152 = vmatpush1.xpose.msra.mxu0 0.0
    %1153 = vmatprep.subr.mxu0 0.0
    %1154 = vmatpush1.xpose.msra.mxu0 0.0
    %1155 = vmatprep.subr.mxu0 0.0
    %1156 = vmatpush1.xpose.msra.mxu0 0.0
    %1157 = vmatprep.subr.mxu0 0.0
    %1158 = vmatpush1.xpose.msra.mxu0 0.0
    %1159 = vmatprep.subr.mxu0 0.0
    %1160 = vmatpush1.xpose.msra.mxu0 0.0
    %1161 = vmatprep.subr.mxu0 0.0
    %1162 = vmatpush1.xpose.msra.mxu0 0.0
    %1163 = vmatprep.subr.mxu0 0.0
    %1164 = vmatpush1.xpose.msra.mxu0 0.0
    %1165 = vmatprep.subr.mxu0 0.0
    %1166 = vmatpush1.xpose.msra.mxu0 0.0
    %1167 = vmatprep.subr.mxu0 0.0
    %1168 = vmatpush1.xpose.msra.mxu0 0.0
    %1169 = vmatprep.subr.mxu0 0.0
    %1170 = vmatpush1.xpose.msra.mxu0 0.0
    %1171 = vmatprep.subr.mxu0 0.0
    %1172 = vmatpush1.xpose.msra.mxu0 0.0
    %1173 = vmatprep.subr.mxu0 0.0
    %1174 = vmatpush1.xpose.msra.mxu0 %v1143
    %1175 = vmatprep.subr.mxu0 0.0
    %1176 = vmatpush1.xpose.msra.mxu0 %v1141
    %1177 = vmatprep.subr.mxu0 0.0
    %1178 = vmatpush2.xpose.msra.mxu0 0.0
    %1179 = vmatprep.subr.mxu0 0.0
    %1180 = vmatpush2.xpose.msra.mxu0 0.0
    %1181 = vmatprep.subr.mxu0 0.0
    %1182 = vmatpush2.xpose.msra.mxu0 0.0
    %1183 = vmatprep.subr.mxu0 0.0
    %1184 = vmatpush2.xpose.msra.mxu0 0.0
    %1185 = vmatprep.subr.mxu0 0.0
    %1186 = vmatpush2.xpose.msra.mxu0 0.0
    %1187 = vmatprep.subr.mxu0 0.0
    %1188 = vmatpush2.xpose.msra.mxu0 0.0
    %1189 = vmatprep.subr.mxu0 0.0
    %1190 = vmatpush2.xpose.msra.mxu0 0.0
    %1191 = vmatprep.subr.mxu0 0.0
    %1192 = vmatpush2.xpose.msra.mxu0 0.0
    %1193 = vmatprep.subr.mxu0 0.0
    %1194 = vmatpush2.xpose.msra.mxu0 0.0
    %1195 = vmatprep.subr.mxu0 0.0
    %1196 = vmatpush2.xpose.msra.mxu0 0.0
    %1197 = vmatprep.subr.mxu0 0.0
    %1198 = vmatpush2.xpose.msra.mxu0 0.0
    %1199 = vmatprep.subr.mxu0 0.0
    %1200 = vmatpush2.xpose.msra.mxu0 0.0
    %1201 = vmatprep.subr.mxu0 0.0
    %1202 = vmatpush2.xpose.msra.mxu0 0.0
    %1203 = vmatprep.subr.mxu0 0.0
    %1204 = vmatpush2.xpose.msra.mxu0 0.0
    %1205 = vmatprep.subr.mxu0 0.0
    %1206 = vmatpush2.xpose.msra.mxu0 0.0
    %1207 = vmatprep.subr.mxu0 0.0
    %1208 = vmatpush2.xpose.msra.mxu0 0.0
    %1209 = vmatprep.mubr.f32.mxu0 0.0
    %1210 = vmatmul.mubr.f32.gmra.mxu0 %v1137
    %v1211 = vpop.f32.mrf.mxu0
    %v1212 = vadd.f32 %v457, %v1211
    %v1213 = vpop.f32.mrf.mxu0
    %1214 = vmatprep.mubr.f32.mxu0 0.0
    %1215 = vmatmul.mubr.f32.gmra.mxu0 %v1139
    %v1216 = vpop.f32.mrf.mxu0
    %v1217 = vadd.f32 %v458, %v1216
    %v1218 = vpop.f32.mrf.mxu0
    %1219 = vdwg.mxu0
    %v1220 = vsel %vm657, %v1212, -inf
    %1221 = vmax.xlane.f32.xlu0 %v1220
    %v1222 = vpop.xlane.xlu0 %1221
    %v1223 = vsel %vm657, %v1217, -inf
    %1224 = vmax.xlane.f32.xlu0 %v1223
    %v1225 = vpop.xlane.xlu0 %1224
    %v1226 = vsub.f32 %v1212, %v1222
    %v1227 = vsub.f32 %v1217, %v1225
    %v1228 = vmul.f32 %v1226, 1.442695
    %v1229 = vpow.pop %v1228
    %v1230 = vmul.f32 %v1227, 1.442695
    %v1231 = vpow.pop %v1230
    %v1232 = vsel %vm657, %v1229, 0.0
    %1233 = vadd.xlane.f32.xlu0 %v1232
    %v1234 = vpop.xlane.xlu0 %1233
    %v1235 = vsel %vm657, %v1231, 0.0
    %1236 = vadd.xlane.f32.xlu0 %v1235
    %v1237 = vpop.xlane.xlu0 %1236
    %v1238 = vrcp.pop %v1234
    %v1239 = vrcp.pop %v1237
    %v1240 = vmul.f32 %v1229, %v1238
    %v1241 = vmul.f32 %v1231, %v1239
    %1242 = vrot.lane.b32.xlu0 %v555, 48
    %v1243 = vpop.permute.xlu0 %1242
    %1244 = vrot.lane.b32.xlu0 %v560, 48
    %v1245 = vpop.permute.xlu0 %1244
    %v1249 = vsel %vm657, %v1240, 0
    %v1252 = vsel %vm657, %v1241, 0
    %1254 = vmatprep.subr.mxu0 0.0
    %1255 = vmatpush1.msra.mxu0 0.0
    %1256 = vmatprep.subr.mxu0 0.0
    %1257 = vmatpush1.msra.mxu0 0.0
    %1258 = vmatprep.subr.mxu0 0.0
    %1259 = vmatpush1.msra.mxu0 0.0
    %1260 = vmatprep.subr.mxu0 0.0
    %1261 = vmatpush1.msra.mxu0 0.0
    %1262 = vmatprep.subr.mxu0 0.0
    %1263 = vmatpush1.msra.mxu0 0.0
    %1264 = vmatprep.subr.mxu0 0.0
    %1265 = vmatpush1.msra.mxu0 0.0
    %1266 = vmatprep.subr.mxu0 0.0
    %1267 = vmatpush1.msra.mxu0 0.0
    %1268 = vmatprep.subr.mxu0 0.0
    %1269 = vmatpush1.msra.mxu0 0.0
    %1270 = vmatprep.subr.mxu0 0.0
    %1271 = vmatpush1.msra.mxu0 0.0
    %1272 = vmatprep.subr.mxu0 0.0
    %1273 = vmatpush1.msra.mxu0 0.0
    %1274 = vmatprep.subr.mxu0 0.0
    %1275 = vmatpush1.msra.mxu0 0.0
    %1276 = vmatprep.subr.mxu0 0.0
    %1277 = vmatpush1.msra.mxu0 0.0
    %1278 = vmatprep.subr.mxu0 0.0
    %1279 = vmatpush1.msra.mxu0 0.0
    %1280 = vmatprep.subr.mxu0 0.0
    %1281 = vmatpush1.msra.mxu0 0.0
    %1282 = vmatprep.subr.mxu0 0.0
    %1283 = vmatpush1.msra.mxu0 %v1245
    %1284 = vmatprep.subr.mxu0 0.0
    %1285 = vmatpush1.msra.mxu0 %v1243
    %1286 = vmatprep.subr.mxu0 0.0
    %1287 = vmatpush2.msra.mxu0 0.0
    %1288 = vmatprep.subr.mxu0 0.0
    %1289 = vmatpush2.msra.mxu0 0.0
    %1290 = vmatprep.subr.mxu0 0.0
    %1291 = vmatpush2.msra.mxu0 0.0
    %1292 = vmatprep.subr.mxu0 0.0
    %1293 = vmatpush2.msra.mxu0 0.0
    %1294 = vmatprep.subr.mxu0 0.0
    %1295 = vmatpush2.msra.mxu0 0.0
    %1296 = vmatprep.subr.mxu0 0.0
    %1297 = vmatpush2.msra.mxu0 0.0
    %1298 = vmatprep.subr.mxu0 0.0
    %1299 = vmatpush2.msra.mxu0 0.0
    %1300 = vmatprep.subr.mxu0 0.0
    %1301 = vmatpush2.msra.mxu0 0.0
    %1302 = vmatprep.subr.mxu0 0.0
    %1303 = vmatpush2.msra.mxu0 0.0
    %1304 = vmatprep.subr.mxu0 0.0
    %1305 = vmatpush2.msra.mxu0 0.0
    %1306 = vmatprep.subr.mxu0 0.0
    %1307 = vmatpush2.msra.mxu0 0.0
    %1308 = vmatprep.subr.mxu0 0.0
    %1309 = vmatpush2.msra.mxu0 0.0
    %1310 = vmatprep.subr.mxu0 0.0
    %1311 = vmatpush2.msra.mxu0 0.0
    %1312 = vmatprep.subr.mxu0 0.0
    %1313 = vmatpush2.msra.mxu0 0.0
    %1314 = vmatprep.subr.mxu0 0.0
    %1315 = vmatpush2.msra.mxu0 0.0
    %1316 = vmatprep.subr.mxu0 0.0
    %1317 = vmatpush2.msra.mxu0 0.0
    %1318 = vmatprep.mubr.f32.mxu0 0.0
    %1319 = vmatmul.mubr.f32.gmra.mxu0 %v1249
    %v1320 = vpop.f32.mrf.mxu0
    %v1321 = vadd.f32 0.0, %v1320
    %v1322 = vpop.f32.mrf.mxu0
    %1323 = vmatprep.mubr.f32.mxu0 0.0
    %1324 = vmatmul.mubr.f32.gmra.mxu0 %v1252
    %v1325 = vpop.f32.mrf.mxu0
    %v1326 = vadd.f32 0.0, %v1325
    %v1327 = vpop.f32.mrf.mxu0
    %1328 = vdwg.mxu0
    %v1330 = vsel %vm571, %v1321, 0
    %v1333 = vsel %vm571, %v1326, 0
    %1335 = vmatprep.subr.mxu0 0.0
    %1336 = vmatpush1.msra.mxu0 0.0
    %1337 = vmatprep.subr.mxu0 0.0
    %1338 = vmatpush1.msra.mxu0 0.0
    %1339 = vmatprep.subr.mxu0 0.0
    %1340 = vmatpush1.msra.mxu0 0.0
    %1341 = vmatprep.subr.mxu0 0.0
    %1342 = vmatpush1.msra.mxu0 0.0
    %1343 = vmatprep.subr.mxu0 0.0
    %1344 = vmatpush1.msra.mxu0 0.0
    %1345 = vmatprep.subr.mxu0 0.0
    %1346 = vmatpush1.msra.mxu0 0.0
    %1347 = vmatprep.subr.mxu0 0.0
    %1348 = vmatpush1.msra.mxu0 0.0
    %1349 = vmatprep.subr.mxu0 0.0
    %1350 = vmatpush1.msra.mxu0 0.0
    %1351 = vmatprep.subr.mxu0 0.0
    %1352 = vmatpush1.msra.mxu0 0.0
    %1353 = vmatprep.subr.mxu0 0.0
    %1354 = vmatpush1.msra.mxu0 0.0
    %1355 = vmatprep.subr.mxu0 0.0
    %1356 = vmatpush1.msra.mxu0 0.0
    %1357 = vmatprep.subr.mxu0 0.0
    %1358 = vmatpush1.msra.mxu0 0.0
    %1359 = vmatprep.subr.mxu0 0.0
    %1360 = vmatpush1.msra.mxu0 0.0
    %1361 = vmatprep.subr.mxu0 0.0
    %1362 = vmatpush1.msra.mxu0 0.0
    %1363 = vmatprep.subr.mxu0 0.0
    %1364 = vmatpush1.msra.mxu0 0.0
    %1365 = vmatprep.subr.mxu0 0.0
    %1366 = vmatpush1.msra.mxu0 %v472
    %1367 = vmatprep.subr.mxu0 0.0
    %1368 = vmatpush2.msra.mxu0 0.0
    %1369 = vmatprep.subr.mxu0 0.0
    %1370 = vmatpush2.msra.mxu0 0.0
    %1371 = vmatprep.subr.mxu0 0.0
    %1372 = vmatpush2.msra.mxu0 0.0
    %1373 = vmatprep.subr.mxu0 0.0
    %1374 = vmatpush2.msra.mxu0 0.0
    %1375 = vmatprep.subr.mxu0 0.0
    %1376 = vmatpush2.msra.mxu0 0.0
    %1377 = vmatprep.subr.mxu0 0.0
    %1378 = vmatpush2.msra.mxu0 0.0
    %1379 = vmatprep.subr.mxu0 0.0
    %1380 = vmatpush2.msra.mxu0 0.0
    %1381 = vmatprep.subr.mxu0 0.0
    %1382 = vmatpush2.msra.mxu0 0.0
    %1383 = vmatprep.subr.mxu0 0.0
    %1384 = vmatpush2.msra.mxu0 0.0
    %1385 = vmatprep.subr.mxu0 0.0
    %1386 = vmatpush2.msra.mxu0 0.0
    %1387 = vmatprep.subr.mxu0 0.0
    %1388 = vmatpush2.msra.mxu0 0.0
    %1389 = vmatprep.subr.mxu0 0.0
    %1390 = vmatpush2.msra.mxu0 0.0
    %1391 = vmatprep.subr.mxu0 0.0
    %1392 = vmatpush2.msra.mxu0 0.0
    %1393 = vmatprep.subr.mxu0 0.0
    %1394 = vmatpush2.msra.mxu0 0.0
    %1395 = vmatprep.subr.mxu0 0.0
    %1396 = vmatpush2.msra.mxu0 0.0
    %1397 = vmatprep.subr.mxu0 0.0
    %1398 = vmatpush2.msra.mxu0 0.0
    %1399 = vmatprep.mubr.f32.mxu0 0.0
    %1400 = vmatmul.mubr.f32.gmra.mxu0 %v1330
    %v1401 = vpop.f32.mrf.mxu0
    %v1402 = vadd.f32 0.0, %v1401
    %v1403 = vpop.f32.mrf.mxu0
    %1404 = vmatprep.mubr.f32.mxu0 0.0
    %1405 = vmatmul.mubr.f32.gmra.mxu0 %v1333
    %v1406 = vpop.f32.mrf.mxu0
    %v1407 = vadd.f32 0.0, %v1406
    %v1408 = vpop.f32.mrf.mxu0
    %1409 = vdwg.mxu0
    %v1410 = vadd.f32 %v1121, %v1402
    %v1411 = vadd.f32 %v1126, %v1407
    %1412 = vrot.lane.b32.xlu0 %v563, 104
    %v1413 = vpop.permute.xlu0 %1412
    %1414 = vrot.lane.b32.xlu0 %v564, 104
    %v1415 = vpop.permute.xlu0 %1414
    %1416 = vrot.lane.b32.xlu0 %v555, 72
    %v1417 = vpop.permute.xlu0 %1416
    %1418 = vrot.lane.b32.xlu0 %v560, 72
    %v1419 = vpop.permute.xlu0 %1418
    %v1420 = vsel %vm571, %v1413, 0
    %v1422 = vsel %vm571, %v1415, 0
    %v1424 = vsel %vm571, %v1417, 0
    %v1426 = vsel %vm571, %v1419, 0
    %1428 = vmatprep.subr.mxu0 0.0
    %1429 = vmatpush1.xpose.msra.mxu0 0.0
    %1430 = vmatprep.subr.mxu0 0.0
    %1431 = vmatpush1.xpose.msra.mxu0 0.0
    %1432 = vmatprep.subr.mxu0 0.0
    %1433 = vmatpush1.xpose.msra.mxu0 0.0
    %1434 = vmatprep.subr.mxu0 0.0
    %1435 = vmatpush1.xpose.msra.mxu0 0.0
    %1436 = vmatprep.subr.mxu0 0.0
    %1437 = vmatpush1.xpose.msra.mxu0 0.0
    %1438 = vmatprep.subr.mxu0 0.0
    %1439 = vmatpush1.xpose.msra.mxu0 0.0
    %1440 = vmatprep.subr.mxu0 0.0
    %1441 = vmatpush1.xpose.msra.mxu0 0.0
    %1442 = vmatprep.subr.mxu0 0.0
    %1443 = vmatpush1.xpose.msra.mxu0 0.0
    %1444 = vmatprep.subr.mxu0 0.0
    %1445 = vmatpush1.xpose.msra.mxu0 0.0
    %1446 = vmatprep.subr.mxu0 0.0
    %1447 = vmatpush1.xpose.msra.mxu0 0.0
    %1448 = vmatprep.subr.mxu0 0.0
    %1449 = vmatpush1.xpose.msra.mxu0 0.0
    %1450 = vmatprep.subr.mxu0 0.0
    %1451 = vmatpush1.xpose.msra.mxu0 0.0
    %1452 = vmatprep.subr.mxu0 0.0
    %1453 = vmatpush1.xpose.msra.mxu0 0.0
    %1454 = vmatprep.subr.mxu0 0.0
    %1455 = vmatpush1.xpose.msra.mxu0 0.0
    %1456 = vmatprep.subr.mxu0 0.0
    %1457 = vmatpush1.xpose.msra.mxu0 %v1426
    %1458 = vmatprep.subr.mxu0 0.0
    %1459 = vmatpush1.xpose.msra.mxu0 %v1424
    %1460 = vmatprep.subr.mxu0 0.0
    %1461 = vmatpush2.xpose.msra.mxu0 0.0
    %1462 = vmatprep.subr.mxu0 0.0
    %1463 = vmatpush2.xpose.msra.mxu0 0.0
    %1464 = vmatprep.subr.mxu0 0.0
    %1465 = vmatpush2.xpose.msra.mxu0 0.0
    %1466 = vmatprep.subr.mxu0 0.0
    %1467 = vmatpush2.xpose.msra.mxu0 0.0
    %1468 = vmatprep.subr.mxu0 0.0
    %1469 = vmatpush2.xpose.msra.mxu0 0.0
    %1470 = vmatprep.subr.mxu0 0.0
    %1471 = vmatpush2.xpose.msra.mxu0 0.0
    %1472 = vmatprep.subr.mxu0 0.0
    %1473 = vmatpush2.xpose.msra.mxu0 0.0
    %1474 = vmatprep.subr.mxu0 0.0
    %1475 = vmatpush2.xpose.msra.mxu0 0.0
    %1476 = vmatprep.subr.mxu0 0.0
    %1477 = vmatpush2.xpose.msra.mxu0 0.0
    %1478 = vmatprep.subr.mxu0 0.0
    %1479 = vmatpush2.xpose.msra.mxu0 0.0
    %1480 = vmatprep.subr.mxu0 0.0
    %1481 = vmatpush2.xpose.msra.mxu0 0.0
    %1482 = vmatprep.subr.mxu0 0.0
    %1483 = vmatpush2.xpose.msra.mxu0 0.0
    %1484 = vmatprep.subr.mxu0 0.0
    %1485 = vmatpush2.xpose.msra.mxu0 0.0
    %1486 = vmatprep.subr.mxu0 0.0
    %1487 = vmatpush2.xpose.msra.mxu0 0.0
    %1488 = vmatprep.subr.mxu0 0.0
    %1489 = vmatpush2.xpose.msra.mxu0 0.0
    %1490 = vmatprep.subr.mxu0 0.0
    %1491 = vmatpush2.xpose.msra.mxu0 0.0
    %1492 = vmatprep.mubr.f32.mxu0 0.0
    %1493 = vmatmul.mubr.f32.gmra.mxu0 %v1420
    %v1494 = vpop.f32.mrf.mxu0
    %v1495 = vadd.f32 %v457, %v1494
    %v1496 = vpop.f32.mrf.mxu0
    %1497 = vmatprep.mubr.f32.mxu0 0.0
    %1498 = vmatmul.mubr.f32.gmra.mxu0 %v1422
    %v1499 = vpop.f32.mrf.mxu0
    %v1500 = vadd.f32 %v458, %v1499
    %v1501 = vpop.f32.mrf.mxu0
    %1502 = vdwg.mxu0
    %v1503 = vsel %vm657, %v1495, -inf
    %1504 = vmax.xlane.f32.xlu0 %v1503
    %v1505 = vpop.xlane.xlu0 %1504
    %v1506 = vsel %vm657, %v1500, -inf
    %1507 = vmax.xlane.f32.xlu0 %v1506
    %v1508 = vpop.xlane.xlu0 %1507
    %v1509 = vsub.f32 %v1495, %v1505
    %v1510 = vsub.f32 %v1500, %v1508
    %v1511 = vmul.f32 %v1509, 1.442695
    %v1512 = vpow.pop %v1511
    %v1513 = vmul.f32 %v1510, 1.442695
    %v1514 = vpow.pop %v1513
    %v1515 = vsel %vm657, %v1512, 0.0
    %1516 = vadd.xlane.f32.xlu0 %v1515
    %v1517 = vpop.xlane.xlu0 %1516
    %v1518 = vsel %vm657, %v1514, 0.0
    %1519 = vadd.xlane.f32.xlu0 %v1518
    %v1520 = vpop.xlane.xlu0 %1519
    %v1521 = vrcp.pop %v1517
    %v1522 = vrcp.pop %v1520
    %v1523 = vmul.f32 %v1512, %v1521
    %v1524 = vmul.f32 %v1514, %v1522
    %1525 = vrot.lane.b32.xlu0 %v555, 40
    %v1526 = vpop.permute.xlu0 %1525
    %1527 = vrot.lane.b32.xlu0 %v560, 40
    %v1528 = vpop.permute.xlu0 %1527
    %v1532 = vsel %vm657, %v1523, 0
    %v1535 = vsel %vm657, %v1524, 0
    %1537 = vmatprep.subr.mxu0 0.0
    %1538 = vmatpush1.msra.mxu0 0.0
    %1539 = vmatprep.subr.mxu0 0.0
    %1540 = vmatpush1.msra.mxu0 0.0
    %1541 = vmatprep.subr.mxu0 0.0
    %1542 = vmatpush1.msra.mxu0 0.0
    %1543 = vmatprep.subr.mxu0 0.0
    %1544 = vmatpush1.msra.mxu0 0.0
    %1545 = vmatprep.subr.mxu0 0.0
    %1546 = vmatpush1.msra.mxu0 0.0
    %1547 = vmatprep.subr.mxu0 0.0
    %1548 = vmatpush1.msra.mxu0 0.0
    %1549 = vmatprep.subr.mxu0 0.0
    %1550 = vmatpush1.msra.mxu0 0.0
    %1551 = vmatprep.subr.mxu0 0.0
    %1552 = vmatpush1.msra.mxu0 0.0
    %1553 = vmatprep.subr.mxu0 0.0
    %1554 = vmatpush1.msra.mxu0 0.0
    %1555 = vmatprep.subr.mxu0 0.0
    %1556 = vmatpush1.msra.mxu0 0.0
    %1557 = vmatprep.subr.mxu0 0.0
    %1558 = vmatpush1.msra.mxu0 0.0
    %1559 = vmatprep.subr.mxu0 0.0
    %1560 = vmatpush1.msra.mxu0 0.0
    %1561 = vmatprep.subr.mxu0 0.0
    %1562 = vmatpush1.msra.mxu0 0.0
    %1563 = vmatprep.subr.mxu0 0.0
    %1564 = vmatpush1.msra.mxu0 0.0
    %1565 = vmatprep.subr.mxu0 0.0
    %1566 = vmatpush1.msra.mxu0 %v1528
    %1567 = vmatprep.subr.mxu0 0.0
    %1568 = vmatpush1.msra.mxu0 %v1526
    %1569 = vmatprep.subr.mxu0 0.0
    %1570 = vmatpush2.msra.mxu0 0.0
    %1571 = vmatprep.subr.mxu0 0.0
    %1572 = vmatpush2.msra.mxu0 0.0
    %1573 = vmatprep.subr.mxu0 0.0
    %1574 = vmatpush2.msra.mxu0 0.0
    %1575 = vmatprep.subr.mxu0 0.0
    %1576 = vmatpush2.msra.mxu0 0.0
    %1577 = vmatprep.subr.mxu0 0.0
    %1578 = vmatpush2.msra.mxu0 0.0
    %1579 = vmatprep.subr.mxu0 0.0
    %1580 = vmatpush2.msra.mxu0 0.0
    %1581 = vmatprep.subr.mxu0 0.0
    %1582 = vmatpush2.msra.mxu0 0.0
    %1583 = vmatprep.subr.mxu0 0.0
    %1584 = vmatpush2.msra.mxu0 0.0
    %1585 = vmatprep.subr.mxu0 0.0
    %1586 = vmatpush2.msra.mxu0 0.0
    %1587 = vmatprep.subr.mxu0 0.0
    %1588 = vmatpush2.msra.mxu0 0.0
    %1589 = vmatprep.subr.mxu0 0.0
    %1590 = vmatpush2.msra.mxu0 0.0
    %1591 = vmatprep.subr.mxu0 0.0
    %1592 = vmatpush2.msra.mxu0 0.0
    %1593 = vmatprep.subr.mxu0 0.0
    %1594 = vmatpush2.msra.mxu0 0.0
    %1595 = vmatprep.subr.mxu0 0.0
    %1596 = vmatpush2.msra.mxu0 0.0
    %1597 = vmatprep.subr.mxu0 0.0
    %1598 = vmatpush2.msra.mxu0 0.0
    %1599 = vmatprep.subr.mxu0 0.0
    %1600 = vmatpush2.msra.mxu0 0.0
    %1601 = vmatprep.mubr.f32.mxu0 0.0
    %1602 = vmatmul.mubr.f32.gmra.mxu0 %v1532
    %v1603 = vpop.f32.mrf.mxu0
    %v1604 = vadd.f32 0.0, %v1603
    %v1605 = vpop.f32.mrf.mxu0
    %1606 = vmatprep.mubr.f32.mxu0 0.0
    %1607 = vmatmul.mubr.f32.gmra.mxu0 %v1535
    %v1608 = vpop.f32.mrf.mxu0
    %v1609 = vadd.f32 0.0, %v1608
    %v1610 = vpop.f32.mrf.mxu0
    %1611 = vdwg.mxu0
    %v1613 = vsel %vm571, %v1604, 0
    %v1616 = vsel %vm571, %v1609, 0
    %1618 = vmatprep.subr.mxu0 0.0
    %1619 = vmatpush1.msra.mxu0 0.0
    %1620 = vmatprep.subr.mxu0 0.0
    %1621 = vmatpush1.msra.mxu0 0.0
    %1622 = vmatprep.subr.mxu0 0.0
    %1623 = vmatpush1.msra.mxu0 0.0
    %1624 = vmatprep.subr.mxu0 0.0
    %1625 = vmatpush1.msra.mxu0 0.0
    %1626 = vmatprep.subr.mxu0 0.0
    %1627 = vmatpush1.msra.mxu0 0.0
    %1628 = vmatprep.subr.mxu0 0.0
    %1629 = vmatpush1.msra.mxu0 0.0
    %1630 = vmatprep.subr.mxu0 0.0
    %1631 = vmatpush1.msra.mxu0 0.0
    %1632 = vmatprep.subr.mxu0 0.0
    %1633 = vmatpush1.msra.mxu0 0.0
    %1634 = vmatprep.subr.mxu0 0.0
    %1635 = vmatpush1.msra.mxu0 0.0
    %1636 = vmatprep.subr.mxu0 0.0
    %1637 = vmatpush1.msra.mxu0 0.0
    %1638 = vmatprep.subr.mxu0 0.0
    %1639 = vmatpush1.msra.mxu0 0.0
    %1640 = vmatprep.subr.mxu0 0.0
    %1641 = vmatpush1.msra.mxu0 0.0
    %1642 = vmatprep.subr.mxu0 0.0
    %1643 = vmatpush1.msra.mxu0 0.0
    %1644 = vmatprep.subr.mxu0 0.0
    %1645 = vmatpush1.msra.mxu0 0.0
    %1646 = vmatprep.subr.mxu0 0.0
    %1647 = vmatpush1.msra.mxu0 0.0
    %1648 = vmatprep.subr.mxu0 0.0
    %1649 = vmatpush1.msra.mxu0 %v473
    %1650 = vmatprep.subr.mxu0 0.0
    %1651 = vmatpush2.msra.mxu0 0.0
    %1652 = vmatprep.subr.mxu0 0.0
    %1653 = vmatpush2.msra.mxu0 0.0
    %1654 = vmatprep.subr.mxu0 0.0
    %1655 = vmatpush2.msra.mxu0 0.0
    %1656 = vmatprep.subr.mxu0 0.0
    %1657 = vmatpush2.msra.mxu0 0.0
    %1658 = vmatprep.subr.mxu0 0.0
    %1659 = vmatpush2.msra.mxu0 0.0
    %1660 = vmatprep.subr.mxu0 0.0
    %1661 = vmatpush2.msra.mxu0 0.0
    %1662 = vmatprep.subr.mxu0 0.0
    %1663 = vmatpush2.msra.mxu0 0.0
    %1664 = vmatprep.subr.mxu0 0.0
    %1665 = vmatpush2.msra.mxu0 0.0
    %1666 = vmatprep.subr.mxu0 0.0
    %1667 = vmatpush2.msra.mxu0 0.0
    %1668 = vmatprep.subr.mxu0 0.0
    %1669 = vmatpush2.msra.mxu0 0.0
    %1670 = vmatprep.subr.mxu0 0.0
    %1671 = vmatpush2.msra.mxu0 0.0
    %1672 = vmatprep.subr.mxu0 0.0
    %1673 = vmatpush2.msra.mxu0 0.0
    %1674 = vmatprep.subr.mxu0 0.0
    %1675 = vmatpush2.msra.mxu0 0.0
    %1676 = vmatprep.subr.mxu0 0.0
    %1677 = vmatpush2.msra.mxu0 0.0
    %1678 = vmatprep.subr.mxu0 0.0
    %1679 = vmatpush2.msra.mxu0 0.0
    %1680 = vmatprep.subr.mxu0 0.0
    %1681 = vmatpush2.msra.mxu0 0.0
    %1682 = vmatprep.mubr.f32.mxu0 0.0
    %1683 = vmatmul.mubr.f32.gmra.mxu0 %v1613
    %v1684 = vpop.f32.mrf.mxu0
    %v1685 = vadd.f32 0.0, %v1684
    %v1686 = vpop.f32.mrf.mxu0
    %1687 = vmatprep.mubr.f32.mxu0 0.0
    %1688 = vmatmul.mubr.f32.gmra.mxu0 %v1616
    %v1689 = vpop.f32.mrf.mxu0
    %v1690 = vadd.f32 0.0, %v1689
    %v1691 = vpop.f32.mrf.mxu0
    %1692 = vdwg.mxu0
    %v1693 = vadd.f32 %v1410, %v1685
    %v1694 = vadd.f32 %v1411, %v1690
    %v1696 = vlaneseq
    %v1697 = vshrl.u32 %v1696, 7
    %v1698 = vsub.s32 0, %v1697
    %v1699 = vrot.slane %v474, %v1698
    %v1701 = vadd.f32 %v1693, %v1699
    %v1702 = vadd.f32 %v1694, %v1699
    %v1703 = vadd.f32 %v463, %v1701
    %v1704 = vadd.f32 %v464, %v1702
    %v1705 = vld [vmem:[%s27] sm:$0x1]
    %v1706 = vld [vmem:[#allocation11] sm:$0x1]
    %v1707 = vsel %vm481, %v1703, 0.0
    %1708 = vadd.xlane.f32.xlu0 %v1707
    %v1709 = vpop.xlane.xlu0 %1708
    %v1710 = vsel %vm481, %v1704, 0.0
    %1711 = vadd.xlane.f32.xlu0 %v1710
    %v1712 = vpop.xlane.xlu0 %1711
    %v1713 = vrcp.pop 32.0
    %v1714 = vmul.f32 %v1709, %v1713
    %v1715 = vmul.f32 %v1712, %v1713
    %v1716 = vsub.f32 %v1703, %v1714
    %v1717 = vsub.f32 %v1704, %v1715
    %v1718 = vmul.f32 %v1716, %v1716
    %v1719 = vmul.f32 %v1717, %v1717
    %v1720 = vsel %vm481, %v1718, 0.0
    %1721 = vadd.xlane.f32.xlu0 %v1720
    %v1722 = vpop.xlane.xlu0 %1721
    %v1723 = vsel %vm481, %v1719, 0.0
    %1724 = vadd.xlane.f32.xlu0 %v1723
    %v1725 = vpop.xlane.xlu0 %1724
    %v1726 = vmul.f32 %v1722, %v1713
    %v1727 = vmul.f32 %v1725, %v1713
    %v1728 = vadd.f32 %v1726, 1e-05
    %v1729 = vadd.f32 %v1727, 1e-05
    %v1730 = vrsqrt.pop %v1728
    %v1731 = vrsqrt.pop %v1729
    %v1732 = vmul.f32 %v1716, %v1730
    %v1733 = vmul.f32 %v1717, %v1731
    %v1735 = vlaneseq
    %v1736 = vshrl.u32 %v1735, 7
    %v1737 = vsub.s32 0, %v1736
    %v1738 = vrot.slane %v1705, %v1737
    %v1740 = vmul.f32 %v1732, %v1738
    %v1741 = vmul.f32 %v1733, %v1738
    %v1743 = vlaneseq
    %v1744 = vshrl.u32 %v1743, 7
    %v1745 = vsub.s32 0, %v1744
    %v1746 = vrot.slane %v1706, %v1745
    %v1748 = vadd.f32 %v1740, %v1746
    %v1749 = vadd.f32 %v1741, %v1746
    %v1750 = vld [vmem:[%s19] sm:$0xff]
    %v1751 = vld [vmem:[%s19 + $0x8] sm:$0xff]
    %v1752 = vld [vmem:[%s19 + $0x10] sm:$0xff]
    %v1753 = vld [vmem:[%s19 + $0x18] sm:$0xff]
    %v1754 = vld [vmem:[#allocation8] sm:$0x1]
    %v1755 = vld [vmem:[%s23] sm:$0xff]
    %v1756 = vld [vmem:[%s23 + $0x8] sm:$0xff]
    %v1757 = vld [vmem:[%s23 + $0x10] sm:$0xff]
    %v1758 = vld [vmem:[%s23 + $0x18] sm:$0xff]
    %v1759 = vld [vmem:[%s23 + $0x20] sm:$0xff]
    %v1760 = vld [vmem:[%s23 + $0x28] sm:$0xff]
    %v1761 = vld [vmem:[%s23 + $0x30] sm:$0xff]
    %v1762 = vld [vmem:[%s23 + $0x38] sm:$0xff]
    %v1763 = vld [vmem:[#allocation10] sm:$0x1]
    %v1765 = vlaneseq
    %v1766 = vshrl.u32 %v1765, 7
    %v1767 = vsub.s32 0, %v1766
    %v1768 = vrot.slane %v1754, %v1767
    %v1771 = vsel %vm481, %v1748, 0
    %v1774 = vsel %vm481, %v1749, 0
    %1776 = vmatprep.subr.mxu0 0.0
    %1777 = vmatpush1.msra.mxu0 0.0
    %1778 = vmatprep.subr.mxu0 0.0
    %1779 = vmatpush1.msra.mxu0 0.0
    %1780 = vmatprep.subr.mxu0 0.0
    %1781 = vmatpush1.msra.mxu0 0.0
    %1782 = vmatprep.subr.mxu0 0.0
    %1783 = vmatpush1.msra.mxu0 0.0
    %1784 = vmatprep.subr.mxu0 0.0
    %1785 = vmatpush1.msra.mxu0 0.0
    %1786 = vmatprep.subr.mxu0 0.0
    %1787 = vmatpush1.msra.mxu0 0.0
    %1788 = vmatprep.subr.mxu0 0.0
    %1789 = vmatpush1.msra.mxu0 0.0
    %1790 = vmatprep.subr.mxu0 0.0
    %1791 = vmatpush1.msra.mxu0 0.0
    %1792 = vmatprep.subr.mxu0 0.0
    %1793 = vmatpush1.msra.mxu0 0.0
    %1794 = vmatprep.subr.mxu0 0.0
    %1795 = vmatpush1.msra.mxu0 0.0
    %1796 = vmatprep.subr.mxu0 0.0
    %1797 = vmatpush1.msra.mxu0 0.0
    %1798 = vmatprep.subr.mxu0 0.0
    %1799 = vmatpush1.msra.mxu0 0.0
    %1800 = vmatprep.subr.mxu0 0.0
    %1801 = vmatpush1.msra.mxu0 %v1753
    %1802 = vmatprep.subr.mxu0 0.0
    %1803 = vmatpush1.msra.mxu0 %v1752
    %1804 = vmatprep.subr.mxu0 0.0
    %1805 = vmatpush1.msra.mxu0 %v1751
    %1806 = vmatprep.subr.mxu0 0.0
    %1807 = vmatpush1.msra.mxu0 %v1750
    %1808 = vmatprep.subr.mxu0 0.0
    %1809 = vmatpush2.msra.mxu0 0.0
    %1810 = vmatprep.subr.mxu0 0.0
    %1811 = vmatpush2.msra.mxu0 0.0
    %1812 = vmatprep.subr.mxu0 0.0
    %1813 = vmatpush2.msra.mxu0 0.0
    %1814 = vmatprep.subr.mxu0 0.0
    %1815 = vmatpush2.msra.mxu0 0.0
    %1816 = vmatprep.subr.mxu0 0.0
    %1817 = vmatpush2.msra.mxu0 0.0
    %1818 = vmatprep.subr.mxu0 0.0
    %1819 = vmatpush2.msra.mxu0 0.0
    %1820 = vmatprep.subr.mxu0 0.0
    %1821 = vmatpush2.msra.mxu0 0.0
    %1822 = vmatprep.subr.mxu0 0.0
    %1823 = vmatpush2.msra.mxu0 0.0
    %1824 = vmatprep.subr.mxu0 0.0
    %1825 = vmatpush2.msra.mxu0 0.0
    %1826 = vmatprep.subr.mxu0 0.0
    %1827 = vmatpush2.msra.mxu0 0.0
    %1828 = vmatprep.subr.mxu0 0.0
    %1829 = vmatpush2.msra.mxu0 0.0
    %1830 = vmatprep.subr.mxu0 0.0
    %1831 = vmatpush2.msra.mxu0 0.0
    %1832 = vmatprep.subr.mxu0 0.0
    %1833 = vmatpush2.msra.mxu0 0.0
    %1834 = vmatprep.subr.mxu0 0.0
    %1835 = vmatpush2.msra.mxu0 0.0
    %1836 = vmatprep.subr.mxu0 0.0
    %1837 = vmatpush2.msra.mxu0 0.0
    %1838 = vmatprep.subr.mxu0 0.0
    %1839 = vmatpush2.msra.mxu0 0.0
    %1840 = vmatprep.mubr.f32.mxu0 0.0
    %1841 = vmatmul.mubr.f32.gmra.mxu0 %v1771
    %v1842 = vpop.f32.mrf.mxu0
    %v1843 = vadd.f32 %v1768, %v1842
    %v1844 = vpop.f32.mrf.mxu0
    %1845 = vmatprep.mubr.f32.mxu0 0.0
    %1846 = vmatmul.mubr.f32.gmra.mxu0 %v1774
    %v1847 = vpop.f32.mrf.mxu0
    %v1848 = vadd.f32 %v1768, %v1847
    %v1849 = vpop.f32.mrf.mxu0
    %1850 = vdwg.mxu0
    %v1851 = vmax.f32 %v1843, 0.0
    %v1852 = vmax.f32 %v1848, 0.0
    %v1854 = vlaneseq
    %v1855 = vshrl.u32 %v1854, 7
    %v1856 = vsub.s32 0, %v1855
    %v1857 = vrot.slane %v1763, %v1856
    %vm1859 = vcmask 523264
    %v1861 = vsel %vm1859, %v1851, 0
    %v1864 = vsel %vm1859, %v1852, 0
    %1866 = vmatprep.subr.mxu0 0.0
    %1867 = vmatpush1.msra.mxu0 0.0
    %1868 = vmatprep.subr.mxu0 0.0
    %1869 = vmatpush1.msra.mxu0 0.0
    %1870 = vmatprep.subr.mxu0 0.0
    %1871 = vmatpush1.msra.mxu0 0.0
    %1872 = vmatprep.subr.mxu0 0.0
    %1873 = vmatpush1.msra.mxu0 0.0
    %1874 = vmatprep.subr.mxu0 0.0
    %1875 = vmatpush1.msra.mxu0 0.0
    %1876 = vmatprep.subr.mxu0 0.0
    %1877 = vmatpush1.msra.mxu0 0.0
    %1878 = vmatprep.subr.mxu0 0.0
    %1879 = vmatpush1.msra.mxu0 0.0
    %1880 = vmatprep.subr.mxu0 0.0
    %1881 = vmatpush1.msra.mxu0 0.0
    %1882 = vmatprep.subr.mxu0 0.0
    %1883 = vmatpush1.msra.mxu0 %v1762
    %1884 = vmatprep.subr.mxu0 0.0
    %1885 = vmatpush1.msra.mxu0 %v1761
    %1886 = vmatprep.subr.mxu0 0.0
    %1887 = vmatpush1.msra.mxu0 %v1760
    %1888 = vmatprep.subr.mxu0 0.0
    %1889 = vmatpush1.msra.mxu0 %v1759
    %1890 = vmatprep.subr.mxu0 0.0
    %1891 = vmatpush1.msra.mxu0 %v1758
    %1892 = vmatprep.subr.mxu0 0.0
    %1893 = vmatpush1.msra.mxu0 %v1757
    %1894 = vmatprep.subr.mxu0 0.0
    %1895 = vmatpush1.msra.mxu0 %v1756
    %1896 = vmatprep.subr.mxu0 0.0
    %1897 = vmatpush1.msra.mxu0 %v1755
    %1898 = vmatprep.subr.mxu0 0.0
    %1899 = vmatpush2.msra.mxu0 0.0
    %1900 = vmatprep.subr.mxu0 0.0
    %1901 = vmatpush2.msra.mxu0 0.0
    %1902 = vmatprep.subr.mxu0 0.0
    %1903 = vmatpush2.msra.mxu0 0.0
    %1904 = vmatprep.subr.mxu0 0.0
    %1905 = vmatpush2.msra.mxu0 0.0
    %1906 = vmatprep.subr.mxu0 0.0
    %1907 = vmatpush2.msra.mxu0 0.0
    %1908 = vmatprep.subr.mxu0 0.0
    %1909 = vmatpush2.msra.mxu0 0.0
    %1910 = vmatprep.subr.mxu0 0.0
    %1911 = vmatpush2.msra.mxu0 0.0
    %1912 = vmatprep.subr.mxu0 0.0
    %1913 = vmatpush2.msra.mxu0 0.0
    %1914 = vmatprep.subr.mxu0 0.0
    %1915 = vmatpush2.msra.mxu0 0.0
    %1916 = vmatprep.subr.mxu0 0.0
    %1917 = vmatpush2.msra.mxu0 0.0
    %1918 = vmatprep.subr.mxu0 0.0
    %1919 = vmatpush2.msra.mxu0 0.0
    %1920 = vmatprep.subr.mxu0 0.0
    %1921 = vmatpush2.msra.mxu0 0.0
    %1922 = vmatprep.subr.mxu0 0.0
    %1923 = vmatpush2.msra.mxu0 0.0
    %1924 = vmatprep.subr.mxu0 0.0
    %1925 = vmatpush2.msra.mxu0 0.0
    %1926 = vmatprep.subr.mxu0 0.0
    %1927 = vmatpush2.msra.mxu0 0.0
    %1928 = vmatprep.subr.mxu0 0.0
    %1929 = vmatpush2.msra.mxu0 0.0
    %1930 = vmatprep.mubr.f32.mxu0 0.0
    %1931 = vmatmul.mubr.f32.gmra.mxu0 %v1861
    %v1932 = vpop.f32.mrf.mxu0
    %v1933 = vadd.f32 %v1857, %v1932
    %v1934 = vpop.f32.mrf.mxu0
    %1935 = vmatprep.mubr.f32.mxu0 0.0
    %1936 = vmatmul.mubr.f32.gmra.mxu0 %v1864
    %v1937 = vpop.f32.mrf.mxu0
    %v1938 = vadd.f32 %v1857, %v1937
    %v1939 = vpop.f32.mrf.mxu0
    %1940 = vdwg.mxu0
    %v1941 = vadd.f32 %v1748, %v1933
    %v1942 = vadd.f32 %v1749, %v1938
    %v1943 = vld [vmem:[%s31] sm:$0x1]
    %v1944 = vld [vmem:[%s33] sm:$0x1]
    %v1945 = vsel %vm481, %v1941, 0.0
    %1946 = vadd.xlane.f32.xlu0 %v1945
    %v1947 = vpop.xlane.xlu0 %1946
    %v1948 = vsel %vm481, %v1942, 0.0
    %1949 = vadd.xlane.f32.xlu0 %v1948
    %v1950 = vpop.xlane.xlu0 %1949
    %v1951 = vmul.f32 %v1947, %v1713
    %v1952 = vmul.f32 %v1950, %v1713
    %v1953 = vsub.f32 %v1941, %v1951
    %v1954 = vsub.f32 %v1942, %v1952
    %v1955 = vmul.f32 %v1953, %v1953
    %v1956 = vmul.f32 %v1954, %v1954
    %v1957 = vsel %vm481, %v1955, 0.0
    %1958 = vadd.xlane.f32.xlu0 %v1957
    %v1959 = vpop.xlane.xlu0 %1958
    %v1960 = vsel %vm481, %v1956, 0.0
    %1961 = vadd.xlane.f32.xlu0 %v1960
    %v1962 = vpop.xlane.xlu0 %1961
    %v1963 = vmul.f32 %v1959, %v1713
    %v1964 = vmul.f32 %v1962, %v1713
    %v1965 = vadd.f32 %v1963, 1e-05
    %v1966 = vadd.f32 %v1964, 1e-05
    %v1967 = vrsqrt.pop %v1965
    %v1968 = vrsqrt.pop %v1966
    %v1969 = vmul.f32 %v1953, %v1967
    %v1970 = vmul.f32 %v1954, %v1968
    %v1972 = vlaneseq
    %v1973 = vshrl.u32 %v1972, 7
    %v1974 = vsub.s32 0, %v1973
    %v1975 = vrot.slane %v1943, %v1974
    %v1977 = vmul.f32 %v1969, %v1975
    %v1978 = vmul.f32 %v1970, %v1975
    %v1980 = vlaneseq
    %v1981 = vshrl.u32 %v1980, 7
    %v1982 = vsub.s32 0, %v1981
    %v1983 = vrot.slane %v1944, %v1982
    %v1985 = vadd.f32 %v1977, %v1983
    %v1986 = vadd.f32 %v1978, %v1983
    %s1987 = scalar_lea.vmem %s11, 32
    %v1988 = vld [vmem:[%s1987] sm:$0xff]
    %v1989 = vld [vmem:[%s1987 + $0x8] sm:$0xff]
    %v1990 = vld [vmem:[%s1987 + $0x10] sm:$0xff]
    %v1991 = vld [vmem:[%s1987 + $0x18] sm:$0xff]
    %s1992 = scalar_lea.vmem %s13, 1
    %v1993 = vld [vmem:[%s1992] sm:$0x1]
    %s1994 = scalar_lea.vmem %s15, 32
    %v1995 = vld [vmem:[%s1994] sm:$0xff]
    %v1996 = vld [vmem:[%s1994 + $0x8] sm:$0xff]
    %v1997 = vld [vmem:[%s1994 + $0x10] sm:$0xff]
    %v1998 = vld [vmem:[%s1994 + $0x18] sm:$0xff]
    %s1999 = scalar_lea.vmem [#allocation7], 1
    %v2000 = vld [vmem:[%s1999] sm:$0x1]
    %v2002 = vlaneseq
    %v2003 = vshrl.u32 %v2002, 7
    %v2004 = vsub.s32 0, %v2003
    %v2005 = vrot.slane %v1993, %v2004
    %v2008 = vsel %vm481, %v1985, 0
    %v2011 = vsel %vm481, %v1986, 0
    %2013 = vmatprep.subr.mxu0 0.0
    %2014 = vmatpush1.msra.mxu0 0.0
    %2015 = vmatprep.subr.mxu0 0.0
    %2016 = vmatpush1.msra.mxu0 0.0
    %2017 = vmatprep.subr.mxu0 0.0
    %2018 = vmatpush1.msra.mxu0 0.0
    %2019 = vmatprep.subr.mxu0 0.0
    %2020 = vmatpush1.msra.mxu0 0.0
    %2021 = vmatprep.subr.mxu0 0.0
    %2022 = vmatpush1.msra.mxu0 0.0
    %2023 = vmatprep.subr.mxu0 0.0
    %2024 = vmatpush1.msra.mxu0 0.0
    %2025 = vmatprep.subr.mxu0 0.0
    %2026 = vmatpush1.msra.mxu0 0.0
    %2027 = vmatprep.subr.mxu0 0.0
    %2028 = vmatpush1.msra.mxu0 0.0
    %2029 = vmatprep.subr.mxu0 0.0
    %2030 = vmatpush1.msra.mxu0 0.0
    %2031 = vmatprep.subr.mxu0 0.0
    %2032 = vmatpush1.msra.mxu0 0.0
    %2033 = vmatprep.subr.mxu0 0.0
    %2034 = vmatpush1.msra.mxu0 0.0
    %2035 = vmatprep.subr.mxu0 0.0
    %2036 = vmatpush1.msra.mxu0 0.0
    %2037 = vmatprep.subr.mxu0 0.0
    %2038 = vmatpush1.msra.mxu0 %v1991
    %2039 = vmatprep.subr.mxu0 0.0
    %2040 = vmatpush1.msra.mxu0 %v1990
    %2041 = vmatprep.subr.mxu0 0.0
    %2042 = vmatpush1.msra.mxu0 %v1989
    %2043 = vmatprep.subr.mxu0 0.0
    %2044 = vmatpush1.msra.mxu0 %v1988
    %2045 = vmatprep.subr.mxu0 0.0
    %2046 = vmatpush2.msra.mxu0 0.0
    %2047 = vmatprep.subr.mxu0 0.0
    %2048 = vmatpush2.msra.mxu0 0.0
    %2049 = vmatprep.subr.mxu0 0.0
    %2050 = vmatpush2.msra.mxu0 0.0
    %2051 = vmatprep.subr.mxu0 0.0
    %2052 = vmatpush2.msra.mxu0 0.0
    %2053 = vmatprep.subr.mxu0 0.0
    %2054 = vmatpush2.msra.mxu0 0.0
    %2055 = vmatprep.subr.mxu0 0.0
    %2056 = vmatpush2.msra.mxu0 0.0
    %2057 = vmatprep.subr.mxu0 0.0
    %2058 = vmatpush2.msra.mxu0 0.0
    %2059 = vmatprep.subr.mxu0 0.0
    %2060 = vmatpush2.msra.mxu0 0.0
    %2061 = vmatprep.subr.mxu0 0.0
    %2062 = vmatpush2.msra.mxu0 0.0
    %2063 = vmatprep.subr.mxu0 0.0
    %2064 = vmatpush2.msra.mxu0 0.0
    %2065 = vmatprep.subr.mxu0 0.0
    %2066 = vmatpush2.msra.mxu0 0.0
    %2067 = vmatprep.subr.mxu0 0.0
    %2068 = vmatpush2.msra.mxu0 0.0
    %2069 = vmatprep.subr.mxu0 0.0
    %2070 = vmatpush2.msra.mxu0 0.0
    %2071 = vmatprep.subr.mxu0 0.0
    %2072 = vmatpush2.msra.mxu0 0.0
    %2073 = vmatprep.subr.mxu0 0.0
    %2074 = vmatpush2.msra.mxu0 0.0
    %2075 = vmatprep.subr.mxu0 0.0
    %2076 = vmatpush2.msra.mxu0 0.0
    %2077 = vmatprep.mubr.f32.mxu0 0.0
    %2078 = vmatmul.mubr.f32.gmra.mxu0 %v2008
    %v2079 = vpop.f32.mrf.mxu0
    %v2080 = vadd.f32 %v2005, %v2079
    %v2081 = vpop.f32.mrf.mxu0
    %2082 = vmatprep.mubr.f32.mxu0 0.0
    %2083 = vmatmul.mubr.f32.gmra.mxu0 %v2011
    %v2084 = vpop.f32.mrf.mxu0
    %v2085 = vadd.f32 %v2005, %v2084
    %v2086 = vpop.f32.mrf.mxu0
    %2087 = vdwg.mxu0
    %v2088 = vmul.f32 %v2080, 0.35355338
    %v2089 = vmul.f32 %v2085, 0.35355338
    %2092 = vrot.lane.b32.xlu0 %v2080, 96
    %v2093 = vpop.permute.xlu0 %2092
    %2094 = vrot.lane.b32.xlu0 %v2085, 96
    %v2095 = vpop.permute.xlu0 %2094
    %v2097 = vsel %vm571, %v2088, 0
    %v2100 = vsel %vm571, %v2089, 0
    %v2102 = vsel %vm571, %v2093, 0
    %v2104 = vsel %vm571, %v2095, 0
    %2106 = vmatprep.subr.mxu0 0.0
    %2107 = vmatpush1.xpose.msra.mxu0 0.0
    %2108 = vmatprep.subr.mxu0 0.0
    %2109 = vmatpush1.xpose.msra.mxu0 0.0
    %2110 = vmatprep.subr.mxu0 0.0
    %2111 = vmatpush1.xpose.msra.mxu0 0.0
    %2112 = vmatprep.subr.mxu0 0.0
    %2113 = vmatpush1.xpose.msra.mxu0 0.0
    %2114 = vmatprep.subr.mxu0 0.0
    %2115 = vmatpush1.xpose.msra.mxu0 0.0
    %2116 = vmatprep.subr.mxu0 0.0
    %2117 = vmatpush1.xpose.msra.mxu0 0.0
    %2118 = vmatprep.subr.mxu0 0.0
    %2119 = vmatpush1.xpose.msra.mxu0 0.0
    %2120 = vmatprep.subr.mxu0 0.0
    %2121 = vmatpush1.xpose.msra.mxu0 0.0
    %2122 = vmatprep.subr.mxu0 0.0
    %2123 = vmatpush1.xpose.msra.mxu0 0.0
    %2124 = vmatprep.subr.mxu0 0.0
    %2125 = vmatpush1.xpose.msra.mxu0 0.0
    %2126 = vmatprep.subr.mxu0 0.0
    %2127 = vmatpush1.xpose.msra.mxu0 0.0
    %2128 = vmatprep.subr.mxu0 0.0
    %2129 = vmatpush1.xpose.msra.mxu0 0.0
    %2130 = vmatprep.subr.mxu0 0.0
    %2131 = vmatpush1.xpose.msra.mxu0 0.0
    %2132 = vmatprep.subr.mxu0 0.0
    %2133 = vmatpush1.xpose.msra.mxu0 0.0
    %2134 = vmatprep.subr.mxu0 0.0
    %2135 = vmatpush1.xpose.msra.mxu0 %v2104
    %2136 = vmatprep.subr.mxu0 0.0
    %2137 = vmatpush1.xpose.msra.mxu0 %v2102
    %2138 = vmatprep.subr.mxu0 0.0
    %2139 = vmatpush2.xpose.msra.mxu0 0.0
    %2140 = vmatprep.subr.mxu0 0.0
    %2141 = vmatpush2.xpose.msra.mxu0 0.0
    %2142 = vmatprep.subr.mxu0 0.0
    %2143 = vmatpush2.xpose.msra.mxu0 0.0
    %2144 = vmatprep.subr.mxu0 0.0
    %2145 = vmatpush2.xpose.msra.mxu0 0.0
    %2146 = vmatprep.subr.mxu0 0.0
    %2147 = vmatpush2.xpose.msra.mxu0 0.0
    %2148 = vmatprep.subr.mxu0 0.0
    %2149 = vmatpush2.xpose.msra.mxu0 0.0
    %2150 = vmatprep.subr.mxu0 0.0
    %2151 = vmatpush2.xpose.msra.mxu0 0.0
    %2152 = vmatprep.subr.mxu0 0.0
    %2153 = vmatpush2.xpose.msra.mxu0 0.0
    %2154 = vmatprep.subr.mxu0 0.0
    %2155 = vmatpush2.xpose.msra.mxu0 0.0
    %2156 = vmatprep.subr.mxu0 0.0
    %2157 = vmatpush2.xpose.msra.mxu0 0.0
    %2158 = vmatprep.subr.mxu0 0.0
    %2159 = vmatpush2.xpose.msra.mxu0 0.0
    %2160 = vmatprep.subr.mxu0 0.0
    %2161 = vmatpush2.xpose.msra.mxu0 0.0
    %2162 = vmatprep.subr.mxu0 0.0
    %2163 = vmatpush2.xpose.msra.mxu0 0.0
    %2164 = vmatprep.subr.mxu0 0.0
    %2165 = vmatpush2.xpose.msra.mxu0 0.0
    %2166 = vmatprep.subr.mxu0 0.0
    %2167 = vmatpush2.xpose.msra.mxu0 0.0
    %2168 = vmatprep.subr.mxu0 0.0
    %2169 = vmatpush2.xpose.msra.mxu0 0.0
    %2170 = vmatprep.mubr.f32.mxu0 0.0
    %2171 = vmatmul.mubr.f32.gmra.mxu0 %v2097
    %v2172 = vpop.f32.mrf.mxu0
    %v2173 = vadd.f32 %v457, %v2172
    %v2174 = vpop.f32.mrf.mxu0
    %2175 = vmatprep.mubr.f32.mxu0 0.0
    %2176 = vmatmul.mubr.f32.gmra.mxu0 %v2100
    %v2177 = vpop.f32.mrf.mxu0
    %v2178 = vadd.f32 %v458, %v2177
    %v2179 = vpop.f32.mrf.mxu0
    %2180 = vdwg.mxu0
    %v2181 = vsel %vm657, %v2173, -inf
    %2182 = vmax.xlane.f32.xlu0 %v2181
    %v2183 = vpop.xlane.xlu0 %2182
    %v2184 = vsel %vm657, %v2178, -inf
    %2185 = vmax.xlane.f32.xlu0 %v2184
    %v2186 = vpop.xlane.xlu0 %2185
    %v2187 = vsub.f32 %v2173, %v2183
    %v2188 = vsub.f32 %v2178, %v2186
    %v2189 = vmul.f32 %v2187, 1.442695
    %v2190 = vpow.pop %v2189
    %v2191 = vmul.f32 %v2188, 1.442695
    %v2192 = vpow.pop %v2191
    %v2193 = vsel %vm657, %v2190, 0.0
    %2194 = vadd.xlane.f32.xlu0 %v2193
    %v2195 = vpop.xlane.xlu0 %2194
    %v2196 = vsel %vm657, %v2192, 0.0
    %2197 = vadd.xlane.f32.xlu0 %v2196
    %v2198 = vpop.xlane.xlu0 %2197
    %v2199 = vrcp.pop %v2195
    %v2200 = vrcp.pop %v2198
    %v2201 = vmul.f32 %v2190, %v2199
    %v2202 = vmul.f32 %v2192, %v2200
    %2203 = vrot.lane.b32.xlu0 %v2080, 64
    %v2204 = vpop.permute.xlu0 %2203
    %2205 = vrot.lane.b32.xlu0 %v2085, 64
    %v2206 = vpop.permute.xlu0 %2205
    %v2210 = vsel %vm657, %v2201, 0
    %v2213 = vsel %vm657, %v2202, 0
    %2215 = vmatprep.subr.mxu0 0.0
    %2216 = vmatpush1.msra.mxu0 0.0
    %2217 = vmatprep.subr.mxu0 0.0
    %2218 = vmatpush1.msra.mxu0 0.0
    %2219 = vmatprep.subr.mxu0 0.0
    %2220 = vmatpush1.msra.mxu0 0.0
    %2221 = vmatprep.subr.mxu0 0.0
    %2222 = vmatpush1.msra.mxu0 0.0
    %2223 = vmatprep.subr.mxu0 0.0
    %2224 = vmatpush1.msra.mxu0 0.0
    %2225 = vmatprep.subr.mxu0 0.0
    %2226 = vmatpush1.msra.mxu0 0.0
    %2227 = vmatprep.subr.mxu0 0.0
    %2228 = vmatpush1.msra.mxu0 0.0
    %2229 = vmatprep.subr.mxu0 0.0
    %2230 = vmatpush1.msra.mxu0 0.0
    %2231 = vmatprep.subr.mxu0 0.0
    %2232 = vmatpush1.msra.mxu0 0.0
    %2233 = vmatprep.subr.mxu0 0.0
    %2234 = vmatpush1.msra.mxu0 0.0
    %2235 = vmatprep.subr.mxu0 0.0
    %2236 = vmatpush1.msra.mxu0 0.0
    %2237 = vmatprep.subr.mxu0 0.0
    %2238 = vmatpush1.msra.mxu0 0.0
    %2239 = vmatprep.subr.mxu0 0.0
    %2240 = vmatpush1.msra.mxu0 0.0
    %2241 = vmatprep.subr.mxu0 0.0
    %2242 = vmatpush1.msra.mxu0 0.0
    %2243 = vmatprep.subr.mxu0 0.0
    %2244 = vmatpush1.msra.mxu0 %v2206
    %2245 = vmatprep.subr.mxu0 0.0
    %2246 = vmatpush1.msra.mxu0 %v2204
    %2247 = vmatprep.subr.mxu0 0.0
    %2248 = vmatpush2.msra.mxu0 0.0
    %2249 = vmatprep.subr.mxu0 0.0
    %2250 = vmatpush2.msra.mxu0 0.0
    %2251 = vmatprep.subr.mxu0 0.0
    %2252 = vmatpush2.msra.mxu0 0.0
    %2253 = vmatprep.subr.mxu0 0.0
    %2254 = vmatpush2.msra.mxu0 0.0
    %2255 = vmatprep.subr.mxu0 0.0
    %2256 = vmatpush2.msra.mxu0 0.0
    %2257 = vmatprep.subr.mxu0 0.0
    %2258 = vmatpush2.msra.mxu0 0.0
    %2259 = vmatprep.subr.mxu0 0.0
    %2260 = vmatpush2.msra.mxu0 0.0
    %2261 = vmatprep.subr.mxu0 0.0
    %2262 = vmatpush2.msra.mxu0 0.0
    %2263 = vmatprep.subr.mxu0 0.0
    %2264 = vmatpush2.msra.mxu0 0.0
    %2265 = vmatprep.subr.mxu0 0.0
    %2266 = vmatpush2.msra.mxu0 0.0
    %2267 = vmatprep.subr.mxu0 0.0
    %2268 = vmatpush2.msra.mxu0 0.0
    %2269 = vmatprep.subr.mxu0 0.0
    %2270 = vmatpush2.msra.mxu0 0.0
    %2271 = vmatprep.subr.mxu0 0.0
    %2272 = vmatpush2.msra.mxu0 0.0
    %2273 = vmatprep.subr.mxu0 0.0
    %2274 = vmatpush2.msra.mxu0 0.0
    %2275 = vmatprep.subr.mxu0 0.0
    %2276 = vmatpush2.msra.mxu0 0.0
    %2277 = vmatprep.subr.mxu0 0.0
    %2278 = vmatpush2.msra.mxu0 0.0
    %2279 = vmatprep.mubr.f32.mxu0 0.0
    %2280 = vmatmul.mubr.f32.gmra.mxu0 %v2210
    %v2281 = vpop.f32.mrf.mxu0
    %v2282 = vadd.f32 0.0, %v2281
    %v2283 = vpop.f32.mrf.mxu0
    %2284 = vmatprep.mubr.f32.mxu0 0.0
    %2285 = vmatmul.mubr.f32.gmra.mxu0 %v2213
    %v2286 = vpop.f32.mrf.mxu0
    %v2287 = vadd.f32 0.0, %v2286
    %v2288 = vpop.f32.mrf.mxu0
    %2289 = vdwg.mxu0
    %2290 = vrot.lane.b32.xlu0 %v2088, 120
    %v2291 = vpop.permute.xlu0 %2290
    %2292 = vrot.lane.b32.xlu0 %v2089, 120
    %v2293 = vpop.permute.xlu0 %2292
    %2294 = vrot.lane.b32.xlu0 %v2080, 88
    %v2295 = vpop.permute.xlu0 %2294
    %2296 = vrot.lane.b32.xlu0 %v2085, 88
    %v2297 = vpop.permute.xlu0 %2296
    %v2298 = vsel %vm571, %v2291, 0
    %v2300 = vsel %vm571, %v2293, 0
    %v2302 = vsel %vm571, %v2295, 0
    %v2304 = vsel %vm571, %v2297, 0
    %2306 = vmatprep.subr.mxu0 0.0
    %2307 = vmatpush1.xpose.msra.mxu0 0.0
    %2308 = vmatprep.subr.mxu0 0.0
    %2309 = vmatpush1.xpose.msra.mxu0 0.0
    %2310 = vmatprep.subr.mxu0 0.0
    %2311 = vmatpush1.xpose.msra.mxu0 0.0
    %2312 = vmatprep.subr.mxu0 0.0
    %2313 = vmatpush1.xpose.msra.mxu0 0.0
    %2314 = vmatprep.subr.mxu0 0.0
    %2315 = vmatpush1.xpose.msra.mxu0 0.0
    %2316 = vmatprep.subr.mxu0 0.0
    %2317 = vmatpush1.xpose.msra.mxu0 0.0
    %2318 = vmatprep.subr.mxu0 0.0
    %2319 = vmatpush1.xpose.msra.mxu0 0.0
    %2320 = vmatprep.subr.mxu0 0.0
    %2321 = vmatpush1.xpose.msra.mxu0 0.0
    %2322 = vmatprep.subr.mxu0 0.0
    %2323 = vmatpush1.xpose.msra.mxu0 0.0
    %2324 = vmatprep.subr.mxu0 0.0
    %2325 = vmatpush1.xpose.msra.mxu0 0.0
    %2326 = vmatprep.subr.mxu0 0.0
    %2327 = vmatpush1.xpose.msra.mxu0 0.0
    %2328 = vmatprep.subr.mxu0 0.0
    %2329 = vmatpush1.xpose.msra.mxu0 0.0
    %2330 = vmatprep.subr.mxu0 0.0
    %2331 = vmatpush1.xpose.msra.mxu0 0.0
    %2332 = vmatprep.subr.mxu0 0.0
    %2333 = vmatpush1.xpose.msra.mxu0 0.0
    %2334 = vmatprep.subr.mxu0 0.0
    %2335 = vmatpush1.xpose.msra.mxu0 %v2304
    %2336 = vmatprep.subr.mxu0 0.0
    %2337 = vmatpush1.xpose.msra.mxu0 %v2302
    %2338 = vmatprep.subr.mxu0 0.0
    %2339 = vmatpush2.xpose.msra.mxu0 0.0
    %2340 = vmatprep.subr.mxu0 0.0
    %2341 = vmatpush2.xpose.msra.mxu0 0.0
    %2342 = vmatprep.subr.mxu0 0.0
    %2343 = vmatpush2.xpose.msra.mxu0 0.0
    %2344 = vmatprep.subr.mxu0 0.0
    %2345 = vmatpush2.xpose.msra.mxu0 0.0
    %2346 = vmatprep.subr.mxu0 0.0
    %2347 = vmatpush2.xpose.msra.mxu0 0.0
    %2348 = vmatprep.subr.mxu0 0.0
    %2349 = vmatpush2.xpose.msra.mxu0 0.0
    %2350 = vmatprep.subr.mxu0 0.0
    %2351 = vmatpush2.xpose.msra.mxu0 0.0
    %2352 = vmatprep.subr.mxu0 0.0
    %2353 = vmatpush2.xpose.msra.mxu0 0.0
    %2354 = vmatprep.subr.mxu0 0.0
    %2355 = vmatpush2.xpose.msra.mxu0 0.0
    %2356 = vmatprep.subr.mxu0 0.0
    %2357 = vmatpush2.xpose.msra.mxu0 0.0
    %2358 = vmatprep.subr.mxu0 0.0
    %2359 = vmatpush2.xpose.msra.mxu0 0.0
    %2360 = vmatprep.subr.mxu0 0.0
    %2361 = vmatpush2.xpose.msra.mxu0 0.0
    %2362 = vmatprep.subr.mxu0 0.0
    %2363 = vmatpush2.xpose.msra.mxu0 0.0
    %2364 = vmatprep.subr.mxu0 0.0
    %2365 = vmatpush2.xpose.msra.mxu0 0.0
    %2366 = vmatprep.subr.mxu0 0.0
    %2367 = vmatpush2.xpose.msra.mxu0 0.0
    %2368 = vmatprep.subr.mxu0 0.0
    %2369 = vmatpush2.xpose.msra.mxu0 0.0
    %2370 = vmatprep.mubr.f32.mxu0 0.0
    %2371 = vmatmul.mubr.f32.gmra.mxu0 %v2298
    %v2372 = vpop.f32.mrf.mxu0
    %v2373 = vadd.f32 %v457, %v2372
    %v2374 = vpop.f32.mrf.mxu0
    %2375 = vmatprep.mubr.f32.mxu0 0.0
    %2376 = vmatmul.mubr.f32.gmra.mxu0 %v2300
    %v2377 = vpop.f32.mrf.mxu0
    %v2378 = vadd.f32 %v458, %v2377
    %v2379 = vpop.f32.mrf.mxu0
    %2380 = vdwg.mxu0
    %v2381 = vsel %vm657, %v2373, -inf
    %2382 = vmax.xlane.f32.xlu0 %v2381
    %v2383 = vpop.xlane.xlu0 %2382
    %v2384 = vsel %vm657, %v2378, -inf
    %2385 = vmax.xlane.f32.xlu0 %v2384
    %v2386 = vpop.xlane.xlu0 %2385
    %v2387 = vsub.f32 %v2373, %v2383
    %v2388 = vsub.f32 %v2378, %v2386
    %v2389 = vmul.f32 %v2387, 1.442695
    %v2390 = vpow.pop %v2389
    %v2391 = vmul.f32 %v2388, 1.442695
    %v2392 = vpow.pop %v2391
    %v2393 = vsel %vm657, %v2390, 0.0
    %2394 = vadd.xlane.f32.xlu0 %v2393
    %v2395 = vpop.xlane.xlu0 %2394
    %v2396 = vsel %vm657, %v2392, 0.0
    %2397 = vadd.xlane.f32.xlu0 %v2396
    %v2398 = vpop.xlane.xlu0 %2397
    %v2399 = vrcp.pop %v2395
    %v2400 = vrcp.pop %v2398
    %v2401 = vmul.f32 %v2390, %v2399
    %v2402 = vmul.f32 %v2392, %v2400
    %2403 = vrot.lane.b32.xlu0 %v2080, 56
    %v2404 = vpop.permute.xlu0 %2403
    %2405 = vrot.lane.b32.xlu0 %v2085, 56
    %v2406 = vpop.permute.xlu0 %2405
    %v2410 = vsel %vm657, %v2401, 0
    %v2413 = vsel %vm657, %v2402, 0
    %2415 = vmatprep.subr.mxu0 0.0
    %2416 = vmatpush1.msra.mxu0 0.0
    %2417 = vmatprep.subr.mxu0 0.0
    %2418 = vmatpush1.msra.mxu0 0.0
    %2419 = vmatprep.subr.mxu0 0.0
    %2420 = vmatpush1.msra.mxu0 0.0
    %2421 = vmatprep.subr.mxu0 0.0
    %2422 = vmatpush1.msra.mxu0 0.0
    %2423 = vmatprep.subr.mxu0 0.0
    %2424 = vmatpush1.msra.mxu0 0.0
    %2425 = vmatprep.subr.mxu0 0.0
    %2426 = vmatpush1.msra.mxu0 0.0
    %2427 = vmatprep.subr.mxu0 0.0
    %2428 = vmatpush1.msra.mxu0 0.0
    %2429 = vmatprep.subr.mxu0 0.0
    %2430 = vmatpush1.msra.mxu0 0.0
    %2431 = vmatprep.subr.mxu0 0.0
    %2432 = vmatpush1.msra.mxu0 0.0
    %2433 = vmatprep.subr.mxu0 0.0
    %2434 = vmatpush1.msra.mxu0 0.0
    %2435 = vmatprep.subr.mxu0 0.0
    %2436 = vmatpush1.msra.mxu0 0.0
    %2437 = vmatprep.subr.mxu0 0.0
    %2438 = vmatpush1.msra.mxu0 0.0
    %2439 = vmatprep.subr.mxu0 0.0
    %2440 = vmatpush1.msra.mxu0 0.0
    %2441 = vmatprep.subr.mxu0 0.0
    %2442 = vmatpush1.msra.mxu0 0.0
    %2443 = vmatprep.subr.mxu0 0.0
    %2444 = vmatpush1.msra.mxu0 %v2406
    %2445 = vmatprep.subr.mxu0 0.0
    %2446 = vmatpush1.msra.mxu0 %v2404
    %2447 = vmatprep.subr.mxu0 0.0
    %2448 = vmatpush2.msra.mxu0 0.0
    %2449 = vmatprep.subr.mxu0 0.0
    %2450 = vmatpush2.msra.mxu0 0.0
    %2451 = vmatprep.subr.mxu0 0.0
    %2452 = vmatpush2.msra.mxu0 0.0
    %2453 = vmatprep.subr.mxu0 0.0
    %2454 = vmatpush2.msra.mxu0 0.0
    %2455 = vmatprep.subr.mxu0 0.0
    %2456 = vmatpush2.msra.mxu0 0.0
    %2457 = vmatprep.subr.mxu0 0.0
    %2458 = vmatpush2.msra.mxu0 0.0
    %2459 = vmatprep.subr.mxu0 0.0
    %2460 = vmatpush2.msra.mxu0 0.0
    %2461 = vmatprep.subr.mxu0 0.0
    %2462 = vmatpush2.msra.mxu0 0.0
    %2463 = vmatprep.subr.mxu0 0.0
    %2464 = vmatpush2.msra.mxu0 0.0
    %2465 = vmatprep.subr.mxu0 0.0
    %2466 = vmatpush2.msra.mxu0 0.0
    %2467 = vmatprep.subr.mxu0 0.0
    %2468 = vmatpush2.msra.mxu0 0.0
    %2469 = vmatprep.subr.mxu0 0.0
    %2470 = vmatpush2.msra.mxu0 0.0
    %2471 = vmatprep.subr.mxu0 0.0
    %2472 = vmatpush2.msra.mxu0 0.0
    %2473 = vmatprep.subr.mxu0 0.0
    %2474 = vmatpush2.msra.mxu0 0.0
    %2475 = vmatprep.subr.mxu0 0.0
    %2476 = vmatpush2.msra.mxu0 0.0
    %2477 = vmatprep.subr.mxu0 0.0
    %2478 = vmatpush2.msra.mxu0 0.0
    %2479 = vmatprep.mubr.f32.mxu0 0.0
    %2480 = vmatmul.mubr.f32.gmra.mxu0 %v2410
    %v2481 = vpop.f32.mrf.mxu0
    %v2482 = vadd.f32 0.0, %v2481
    %v2483 = vpop.f32.mrf.mxu0
    %2484 = vmatprep.mubr.f32.mxu0 0.0
    %2485 = vmatmul.mubr.f32.gmra.mxu0 %v2413
    %v2486 = vpop.f32.mrf.mxu0
    %v2487 = vadd.f32 0.0, %v2486
    %v2488 = vpop.f32.mrf.mxu0
    %2489 = vdwg.mxu0
    %v2491 = vsel %vm571, %v2482, 0
    %v2494 = vsel %vm571, %v2487, 0
    %2496 = vmatprep.subr.mxu0 0.0
    %2497 = vmatpush1.msra.mxu0 0.0
    %2498 = vmatprep.subr.mxu0 0.0
    %2499 = vmatpush1.msra.mxu0 0.0
    %2500 = vmatprep.subr.mxu0 0.0
    %2501 = vmatpush1.msra.mxu0 0.0
    %2502 = vmatprep.subr.mxu0 0.0
    %2503 = vmatpush1.msra.mxu0 0.0
    %2504 = vmatprep.subr.mxu0 0.0
    %2505 = vmatpush1.msra.mxu0 0.0
    %2506 = vmatprep.subr.mxu0 0.0
    %2507 = vmatpush1.msra.mxu0 0.0
    %2508 = vmatprep.subr.mxu0 0.0
    %2509 = vmatpush1.msra.mxu0 0.0
    %2510 = vmatprep.subr.mxu0 0.0
    %2511 = vmatpush1.msra.mxu0 0.0
    %2512 = vmatprep.subr.mxu0 0.0
    %2513 = vmatpush1.msra.mxu0 0.0
    %2514 = vmatprep.subr.mxu0 0.0
    %2515 = vmatpush1.msra.mxu0 0.0
    %2516 = vmatprep.subr.mxu0 0.0
    %2517 = vmatpush1.msra.mxu0 0.0
    %2518 = vmatprep.subr.mxu0 0.0
    %2519 = vmatpush1.msra.mxu0 0.0
    %2520 = vmatprep.subr.mxu0 0.0
    %2521 = vmatpush1.msra.mxu0 0.0
    %2522 = vmatprep.subr.mxu0 0.0
    %2523 = vmatpush1.msra.mxu0 0.0
    %2524 = vmatprep.subr.mxu0 0.0
    %2525 = vmatpush1.msra.mxu0 0.0
    %2526 = vmatprep.subr.mxu0 0.0
    %2527 = vmatpush1.msra.mxu0 %v1996
    %2528 = vmatprep.subr.mxu0 0.0
    %2529 = vmatpush2.msra.mxu0 0.0
    %2530 = vmatprep.subr.mxu0 0.0
    %2531 = vmatpush2.msra.mxu0 0.0
    %2532 = vmatprep.subr.mxu0 0.0
    %2533 = vmatpush2.msra.mxu0 0.0
    %2534 = vmatprep.subr.mxu0 0.0
    %2535 = vmatpush2.msra.mxu0 0.0
    %2536 = vmatprep.subr.mxu0 0.0
    %2537 = vmatpush2.msra.mxu0 0.0
    %2538 = vmatprep.subr.mxu0 0.0
    %2539 = vmatpush2.msra.mxu0 0.0
    %2540 = vmatprep.subr.mxu0 0.0
    %2541 = vmatpush2.msra.mxu0 0.0
    %2542 = vmatprep.subr.mxu0 0.0
    %2543 = vmatpush2.msra.mxu0 0.0
    %2544 = vmatprep.subr.mxu0 0.0
    %2545 = vmatpush2.msra.mxu0 0.0
    %2546 = vmatprep.subr.mxu0 0.0
    %2547 = vmatpush2.msra.mxu0 0.0
    %2548 = vmatprep.subr.mxu0 0.0
    %2549 = vmatpush2.msra.mxu0 0.0
    %2550 = vmatprep.subr.mxu0 0.0
    %2551 = vmatpush2.msra.mxu0 0.0
    %2552 = vmatprep.subr.mxu0 0.0
    %2553 = vmatpush2.msra.mxu0 0.0
    %2554 = vmatprep.subr.mxu0 0.0
    %2555 = vmatpush2.msra.mxu0 0.0
    %2556 = vmatprep.subr.mxu0 0.0
    %2557 = vmatpush2.msra.mxu0 0.0
    %2558 = vmatprep.subr.mxu0 0.0
    %2559 = vmatpush2.msra.mxu0 0.0
    %2560 = vmatprep.mubr.f32.mxu0 0.0
    %2561 = vmatmul.mubr.f32.gmra.mxu0 %v2491
    %v2562 = vpop.f32.mrf.mxu0
    %v2563 = vadd.f32 0.0, %v2562
    %v2564 = vpop.f32.mrf.mxu0
    %2565 = vmatprep.mubr.f32.mxu0 0.0
    %2566 = vmatmul.mubr.f32.gmra.mxu0 %v2494
    %v2567 = vpop.f32.mrf.mxu0
    %v2568 = vadd.f32 0.0, %v2567
    %v2569 = vpop.f32.mrf.mxu0
    %2570 = vdwg.mxu0
    %v2572 = vsel %vm571, %v2282, 0
    %v2575 = vsel %vm571, %v2287, 0
    %2577 = vmatprep.subr.mxu0 0.0
    %2578 = vmatpush1.msra.mxu0 0.0
    %2579 = vmatprep.subr.mxu0 0.0
    %2580 = vmatpush1.msra.mxu0 0.0
    %2581 = vmatprep.subr.mxu0 0.0
    %2582 = vmatpush1.msra.mxu0 0.0
    %2583 = vmatprep.subr.mxu0 0.0
    %2584 = vmatpush1.msra.mxu0 0.0
    %2585 = vmatprep.subr.mxu0 0.0
    %2586 = vmatpush1.msra.mxu0 0.0
    %2587 = vmatprep.subr.mxu0 0.0
    %2588 = vmatpush1.msra.mxu0 0.0
    %2589 = vmatprep.subr.mxu0 0.0
    %2590 = vmatpush1.msra.mxu0 0.0
    %2591 = vmatprep.subr.mxu0 0.0
    %2592 = vmatpush1.msra.mxu0 0.0
    %2593 = vmatprep.subr.mxu0 0.0
    %2594 = vmatpush1.msra.mxu0 0.0
    %2595 = vmatprep.subr.mxu0 0.0
    %2596 = vmatpush1.msra.mxu0 0.0
    %2597 = vmatprep.subr.mxu0 0.0
    %2598 = vmatpush1.msra.mxu0 0.0
    %2599 = vmatprep.subr.mxu0 0.0
    %2600 = vmatpush1.msra.mxu0 0.0
    %2601 = vmatprep.subr.mxu0 0.0
    %2602 = vmatpush1.msra.mxu0 0.0
    %2603 = vmatprep.subr.mxu0 0.0
    %2604 = vmatpush1.msra.mxu0 0.0
    %2605 = vmatprep.subr.mxu0 0.0
    %2606 = vmatpush1.msra.mxu0 0.0
    %2607 = vmatprep.subr.mxu0 0.0
    %2608 = vmatpush1.msra.mxu0 %v1995
    %2609 = vmatprep.subr.mxu0 0.0
    %2610 = vmatpush2.msra.mxu0 0.0
    %2611 = vmatprep.subr.mxu0 0.0
    %2612 = vmatpush2.msra.mxu0 0.0
    %2613 = vmatprep.subr.mxu0 0.0
    %2614 = vmatpush2.msra.mxu0 0.0
    %2615 = vmatprep.subr.mxu0 0.0
    %2616 = vmatpush2.msra.mxu0 0.0
    %2617 = vmatprep.subr.mxu0 0.0
    %2618 = vmatpush2.msra.mxu0 0.0
    %2619 = vmatprep.subr.mxu0 0.0
    %2620 = vmatpush2.msra.mxu0 0.0
    %2621 = vmatprep.subr.mxu0 0.0
    %2622 = vmatpush2.msra.mxu0 0.0
    %2623 = vmatprep.subr.mxu0 0.0
    %2624 = vmatpush2.msra.mxu0 0.0
    %2625 = vmatprep.subr.mxu0 0.0
    %2626 = vmatpush2.msra.mxu0 0.0
    %2627 = vmatprep.subr.mxu0 0.0
    %2628 = vmatpush2.msra.mxu0 0.0
    %2629 = vmatprep.subr.mxu0 0.0
    %2630 = vmatpush2.msra.mxu0 0.0
    %2631 = vmatprep.subr.mxu0 0.0
    %2632 = vmatpush2.msra.mxu0 0.0
    %2633 = vmatprep.subr.mxu0 0.0
    %2634 = vmatpush2.msra.mxu0 0.0
    %2635 = vmatprep.subr.mxu0 0.0
    %2636 = vmatpush2.msra.mxu0 0.0
    %2637 = vmatprep.subr.mxu0 0.0
    %2638 = vmatpush2.msra.mxu0 0.0
    %2639 = vmatprep.subr.mxu0 0.0
    %2640 = vmatpush2.msra.mxu0 0.0
    %2641 = vmatprep.mubr.f32.mxu0 0.0
    %2642 = vmatmul.mubr.f32.gmra.mxu0 %v2572
    %v2643 = vpop.f32.mrf.mxu0
    %v2644 = vadd.f32 %v2563, %v2643
    %v2645 = vpop.f32.mrf.mxu0
    %2646 = vmatprep.mubr.f32.mxu0 0.0
    %2647 = vmatmul.mubr.f32.gmra.mxu0 %v2575
    %v2648 = vpop.f32.mrf.mxu0
    %v2649 = vadd.f32 %v2568, %v2648
    %v2650 = vpop.f32.mrf.mxu0
    %2651 = vdwg.mxu0
    %2652 = vrot.lane.b32.xlu0 %v2088, 112
    %v2653 = vpop.permute.xlu0 %2652
    %2654 = vrot.lane.b32.xlu0 %v2089, 112
    %v2655 = vpop.permute.xlu0 %2654
    %2656 = vrot.lane.b32.xlu0 %v2080, 80
    %v2657 = vpop.permute.xlu0 %2656
    %2658 = vrot.lane.b32.xlu0 %v2085, 80
    %v2659 = vpop.permute.xlu0 %2658
    %v2660 = vsel %vm571, %v2653, 0
    %v2662 = vsel %vm571, %v2655, 0
    %v2664 = vsel %vm571, %v2657, 0
    %v2666 = vsel %vm571, %v2659, 0
    %2668 = vmatprep.subr.mxu0 0.0
    %2669 = vmatpush1.xpose.msra.mxu0 0.0
    %2670 = vmatprep.subr.mxu0 0.0
    %2671 = vmatpush1.xpose.msra.mxu0 0.0
    %2672 = vmatprep.subr.mxu0 0.0
    %2673 = vmatpush1.xpose.msra.mxu0 0.0
    %2674 = vmatprep.subr.mxu0 0.0
    %2675 = vmatpush1.xpose.msra.mxu0 0.0
    %2676 = vmatprep.subr.mxu0 0.0
    %2677 = vmatpush1.xpose.msra.mxu0 0.0
    %2678 = vmatprep.subr.mxu0 0.0
    %2679 = vmatpush1.xpose.msra.mxu0 0.0
    %2680 = vmatprep.subr.mxu0 0.0
    %2681 = vmatpush1.xpose.msra.mxu0 0.0
    %2682 = vmatprep.subr.mxu0 0.0
    %2683 = vmatpush1.xpose.msra.mxu0 0.0
    %2684 = vmatprep.subr.mxu0 0.0
    %2685 = vmatpush1.xpose.msra.mxu0 0.0
    %2686 = vmatprep.subr.mxu0 0.0
    %2687 = vmatpush1.xpose.msra.mxu0 0.0
    %2688 = vmatprep.subr.mxu0 0.0
    %2689 = vmatpush1.xpose.msra.mxu0 0.0
    %2690 = vmatprep.subr.mxu0 0.0
    %2691 = vmatpush1.xpose.msra.mxu0 0.0
    %2692 = vmatprep.subr.mxu0 0.0
    %2693 = vmatpush1.xpose.msra.mxu0 0.0
    %2694 = vmatprep.subr.mxu0 0.0
    %2695 = vmatpush1.xpose.msra.mxu0 0.0
    %2696 = vmatprep.subr.mxu0 0.0
    %2697 = vmatpush1.xpose.msra.mxu0 %v2666
    %2698 = vmatprep.subr.mxu0 0.0
    %2699 = vmatpush1.xpose.msra.mxu0 %v2664
    %2700 = vmatprep.subr.mxu0 0.0
    %2701 = vmatpush2.xpose.msra.mxu0 0.0
    %2702 = vmatprep.subr.mxu0 0.0
    %2703 = vmatpush2.xpose.msra.mxu0 0.0
    %2704 = vmatprep.subr.mxu0 0.0
    %2705 = vmatpush2.xpose.msra.mxu0 0.0
    %2706 = vmatprep.subr.mxu0 0.0
    %2707 = vmatpush2.xpose.msra.mxu0 0.0
    %2708 = vmatprep.subr.mxu0 0.0
    %2709 = vmatpush2.xpose.msra.mxu0 0.0
    %2710 = vmatprep.subr.mxu0 0.0
    %2711 = vmatpush2.xpose.msra.mxu0 0.0
    %2712 = vmatprep.subr.mxu0 0.0
    %2713 = vmatpush2.xpose.msra.mxu0 0.0
    %2714 = vmatprep.subr.mxu0 0.0
    %2715 = vmatpush2.xpose.msra.mxu0 0.0
    %2716 = vmatprep.subr.mxu0 0.0
    %2717 = vmatpush2.xpose.msra.mxu0 0.0
    %2718 = vmatprep.subr.mxu0 0.0
    %2719 = vmatpush2.xpose.msra.mxu0 0.0
    %2720 = vmatprep.subr.mxu0 0.0
    %2721 = vmatpush2.xpose.msra.mxu0 0.0
    %2722 = vmatprep.subr.mxu0 0.0
    %2723 = vmatpush2.xpose.msra.mxu0 0.0
    %2724 = vmatprep.subr.mxu0 0.0
    %2725 = vmatpush2.xpose.msra.mxu0 0.0
    %2726 = vmatprep.subr.mxu0 0.0
    %2727 = vmatpush2.xpose.msra.mxu0 0.0
    %2728 = vmatprep.subr.mxu0 0.0
    %2729 = vmatpush2.xpose.msra.mxu0 0.0
    %2730 = vmatprep.subr.mxu0 0.0
    %2731 = vmatpush2.xpose.msra.mxu0 0.0
    %2732 = vmatprep.mubr.f32.mxu0 0.0
    %2733 = vmatmul.mubr.f32.gmra.mxu0 %v2660
    %v2734 = vpop.f32.mrf.mxu0
    %v2735 = vadd.f32 %v457, %v2734
    %v2736 = vpop.f32.mrf.mxu0
    %2737 = vmatprep.mubr.f32.mxu0 0.0
    %2738 = vmatmul.mubr.f32.gmra.mxu0 %v2662
    %v2739 = vpop.f32.mrf.mxu0
    %v2740 = vadd.f32 %v458, %v2739
    %v2741 = vpop.f32.mrf.mxu0
    %2742 = vdwg.mxu0
    %v2743 = vsel %vm657, %v2735, -inf
    %2744 = vmax.xlane.f32.xlu0 %v2743
    %v2745 = vpop.xlane.xlu0 %2744
    %v2746 = vsel %vm657, %v2740, -inf
    %2747 = vmax.xlane.f32.xlu0 %v2746
    %v2748 = vpop.xlane.xlu0 %2747
    %v2749 = vsub.f32 %v2735, %v2745
    %v2750 = vsub.f32 %v2740, %v2748
    %v2751 = vmul.f32 %v2749, 1.442695
    %v2752 = vpow.pop %v2751
    %v2753 = vmul.f32 %v2750, 1.442695
    %v2754 = vpow.pop %v2753
    %v2755 = vsel %vm657, %v2752, 0.0
    %2756 = vadd.xlane.f32.xlu0 %v2755
    %v2757 = vpop.xlane.xlu0 %2756
    %v2758 = vsel %vm657, %v2754, 0.0
    %2759 = vadd.xlane.f32.xlu0 %v2758
    %v2760 = vpop.xlane.xlu0 %2759
    %v2761 = vrcp.pop %v2757
    %v2762 = vrcp.pop %v2760
    %v2763 = vmul.f32 %v2752, %v2761
    %v2764 = vmul.f32 %v2754, %v2762
    %2765 = vrot.lane.b32.xlu0 %v2080, 48
    %v2766 = vpop.permute.xlu0 %2765
    %2767 = vrot.lane.b32.xlu0 %v2085, 48
    %v2768 = vpop.permute.xlu0 %2767
    %v2772 = vsel %vm657, %v2763, 0
    %v2775 = vsel %vm657, %v2764, 0
    %2777 = vmatprep.subr.mxu0 0.0
    %2778 = vmatpush1.msra.mxu0 0.0
    %2779 = vmatprep.subr.mxu0 0.0
    %2780 = vmatpush1.msra.mxu0 0.0
    %2781 = vmatprep.subr.mxu0 0.0
    %2782 = vmatpush1.msra.mxu0 0.0
    %2783 = vmatprep.subr.mxu0 0.0
    %2784 = vmatpush1.msra.mxu0 0.0
    %2785 = vmatprep.subr.mxu0 0.0
    %2786 = vmatpush1.msra.mxu0 0.0
    %2787 = vmatprep.subr.mxu0 0.0
    %2788 = vmatpush1.msra.mxu0 0.0
    %2789 = vmatprep.subr.mxu0 0.0
    %2790 = vmatpush1.msra.mxu0 0.0
    %2791 = vmatprep.subr.mxu0 0.0
    %2792 = vmatpush1.msra.mxu0 0.0
    %2793 = vmatprep.subr.mxu0 0.0
    %2794 = vmatpush1.msra.mxu0 0.0
    %2795 = vmatprep.subr.mxu0 0.0
    %2796 = vmatpush1.msra.mxu0 0.0
    %2797 = vmatprep.subr.mxu0 0.0
    %2798 = vmatpush1.msra.mxu0 0.0
    %2799 = vmatprep.subr.mxu0 0.0
    %2800 = vmatpush1.msra.mxu0 0.0
    %2801 = vmatprep.subr.mxu0 0.0
    %2802 = vmatpush1.msra.mxu0 0.0
    %2803 = vmatprep.subr.mxu0 0.0
    %2804 = vmatpush1.msra.mxu0 0.0
    %2805 = vmatprep.subr.mxu0 0.0
    %2806 = vmatpush1.msra.mxu0 %v2768
    %2807 = vmatprep.subr.mxu0 0.0
    %2808 = vmatpush1.msra.mxu0 %v2766
    %2809 = vmatprep.subr.mxu0 0.0
    %2810 = vmatpush2.msra.mxu0 0.0
    %2811 = vmatprep.subr.mxu0 0.0
    %2812 = vmatpush2.msra.mxu0 0.0
    %2813 = vmatprep.subr.mxu0 0.0
    %2814 = vmatpush2.msra.mxu0 0.0
    %2815 = vmatprep.subr.mxu0 0.0
    %2816 = vmatpush2.msra.mxu0 0.0
    %2817 = vmatprep.subr.mxu0 0.0
    %2818 = vmatpush2.msra.mxu0 0.0
    %2819 = vmatprep.subr.mxu0 0.0
    %2820 = vmatpush2.msra.mxu0 0.0
    %2821 = vmatprep.subr.mxu0 0.0
    %2822 = vmatpush2.msra.mxu0 0.0
    %2823 = vmatprep.subr.mxu0 0.0
    %2824 = vmatpush2.msra.mxu0 0.0
    %2825 = vmatprep.subr.mxu0 0.0
    %2826 = vmatpush2.msra.mxu0 0.0
    %2827 = vmatprep.subr.mxu0 0.0
    %2828 = vmatpush2.msra.mxu0 0.0
    %2829 = vmatprep.subr.mxu0 0.0
    %2830 = vmatpush2.msra.mxu0 0.0
    %2831 = vmatprep.subr.mxu0 0.0
    %2832 = vmatpush2.msra.mxu0 0.0
    %2833 = vmatprep.subr.mxu0 0.0
    %2834 = vmatpush2.msra.mxu0 0.0
    %2835 = vmatprep.subr.mxu0 0.0
    %2836 = vmatpush2.msra.mxu0 0.0
    %2837 = vmatprep.subr.mxu0 0.0
    %2838 = vmatpush2.msra.mxu0 0.0
    %2839 = vmatprep.subr.mxu0 0.0
    %2840 = vmatpush2.msra.mxu0 0.0
    %2841 = vmatprep.mubr.f32.mxu0 0.0
    %2842 = vmatmul.mubr.f32.gmra.mxu0 %v2772
    %v2843 = vpop.f32.mrf.mxu0
    %v2844 = vadd.f32 0.0, %v2843
    %v2845 = vpop.f32.mrf.mxu0
    %2846 = vmatprep.mubr.f32.mxu0 0.0
    %2847 = vmatmul.mubr.f32.gmra.mxu0 %v2775
    %v2848 = vpop.f32.mrf.mxu0
    %v2849 = vadd.f32 0.0, %v2848
    %v2850 = vpop.f32.mrf.mxu0
    %2851 = vdwg.mxu0
    %v2853 = vsel %vm571, %v2844, 0
    %v2856 = vsel %vm571, %v2849, 0
    %2858 = vmatprep.subr.mxu0 0.0
    %2859 = vmatpush1.msra.mxu0 0.0
    %2860 = vmatprep.subr.mxu0 0.0
    %2861 = vmatpush1.msra.mxu0 0.0
    %2862 = vmatprep.subr.mxu0 0.0
    %2863 = vmatpush1.msra.mxu0 0.0
    %2864 = vmatprep.subr.mxu0 0.0
    %2865 = vmatpush1.msra.mxu0 0.0
    %2866 = vmatprep.subr.mxu0 0.0
    %2867 = vmatpush1.msra.mxu0 0.0
    %2868 = vmatprep.subr.mxu0 0.0
    %2869 = vmatpush1.msra.mxu0 0.0
    %2870 = vmatprep.subr.mxu0 0.0
    %2871 = vmatpush1.msra.mxu0 0.0
    %2872 = vmatprep.subr.mxu0 0.0
    %2873 = vmatpush1.msra.mxu0 0.0
    %2874 = vmatprep.subr.mxu0 0.0
    %2875 = vmatpush1.msra.mxu0 0.0
    %2876 = vmatprep.subr.mxu0 0.0
    %2877 = vmatpush1.msra.mxu0 0.0
    %2878 = vmatprep.subr.mxu0 0.0
    %2879 = vmatpush1.msra.mxu0 0.0
    %2880 = vmatprep.subr.mxu0 0.0
    %2881 = vmatpush1.msra.mxu0 0.0
    %2882 = vmatprep.subr.mxu0 0.0
    %2883 = vmatpush1.msra.mxu0 0.0
    %2884 = vmatprep.subr.mxu0 0.0
    %2885 = vmatpush1.msra.mxu0 0.0
    %2886 = vmatprep.subr.mxu0 0.0
    %2887 = vmatpush1.msra.mxu0 0.0
    %2888 = vmatprep.subr.mxu0 0.0
    %2889 = vmatpush1.msra.mxu0 %v1997
    %2890 = vmatprep.subr.mxu0 0.0
    %2891 = vmatpush2.msra.mxu0 0.0
    %2892 = vmatprep.subr.mxu0 0.0
    %2893 = vmatpush2.msra.mxu0 0.0
    %2894 = vmatprep.subr.mxu0 0.0
    %2895 = vmatpush2.msra.mxu0 0.0
    %2896 = vmatprep.subr.mxu0 0.0
    %2897 = vmatpush2.msra.mxu0 0.0
    %2898 = vmatprep.subr.mxu0 0.0
    %2899 = vmatpush2.msra.mxu0 0.0
    %2900 = vmatprep.subr.mxu0 0.0
    %2901 = vmatpush2.msra.mxu0 0.0
    %2902 = vmatprep.subr.mxu0 0.0
    %2903 = vmatpush2.msra.mxu0 0.0
    %2904 = vmatprep.subr.mxu0 0.0
    %2905 = vmatpush2.msra.mxu0 0.0
    %2906 = vmatprep.subr.mxu0 0.0
    %2907 = vmatpush2.msra.mxu0 0.0
    %2908 = vmatprep.subr.mxu0 0.0
    %2909 = vmatpush2.msra.mxu0 0.0
    %2910 = vmatprep.subr.mxu0 0.0
    %2911 = vmatpush2.msra.mxu0 0.0
    %2912 = vmatprep.subr.mxu0 0.0
    %2913 = vmatpush2.msra.mxu0 0.0
    %2914 = vmatprep.subr.mxu0 0.0
    %2915 = vmatpush2.msra.mxu0 0.0
    %2916 = vmatprep.subr.mxu0 0.0
    %2917 = vmatpush2.msra.mxu0 0.0
    %2918 = vmatprep.subr.mxu0 0.0
    %2919 = vmatpush2.msra.mxu0 0.0
    %2920 = vmatprep.subr.mxu0 0.0
    %2921 = vmatpush2.msra.mxu0 0.0
    %2922 = vmatprep.mubr.f32.mxu0 0.0
    %2923 = vmatmul.mubr.f32.gmra.mxu0 %v2853
    %v2924 = vpop.f32.mrf.mxu0
    %v2925 = vadd.f32 0.0, %v2924
    %v2926 = vpop.f32.mrf.mxu0
    %2927 = vmatprep.mubr.f32.mxu0 0.0
    %2928 = vmatmul.mubr.f32.gmra.mxu0 %v2856
    %v2929 = vpop.f32.mrf.mxu0
    %v2930 = vadd.f32 0.0, %v2929
    %v2931 = vpop.f32.mrf.mxu0
    %2932 = vdwg.mxu0
    %v2933 = vadd.f32 %v2644, %v2925
    %v2934 = vadd.f32 %v2649, %v2930
    %2935 = vrot.lane.b32.xlu0 %v2088, 104
    %v2936 = vpop.permute.xlu0 %2935
    %2937 = vrot.lane.b32.xlu0 %v2089, 104
    %v2938 = vpop.permute.xlu0 %2937
    %2939 = vrot.lane.b32.xlu0 %v2080, 72
    %v2940 = vpop.permute.xlu0 %2939
    %2941 = vrot.lane.b32.xlu0 %v2085, 72
    %v2942 = vpop.permute.xlu0 %2941
    %v2943 = vsel %vm571, %v2936, 0
    %v2945 = vsel %vm571, %v2938, 0
    %v2947 = vsel %vm571, %v2940, 0
    %v2949 = vsel %vm571, %v2942, 0
    %2951 = vmatprep.subr.mxu0 0.0
    %2952 = vmatpush1.xpose.msra.mxu0 0.0
    %2953 = vmatprep.subr.mxu0 0.0
    %2954 = vmatpush1.xpose.msra.mxu0 0.0
    %2955 = vmatprep.subr.mxu0 0.0
    %2956 = vmatpush1.xpose.msra.mxu0 0.0
    %2957 = vmatprep.subr.mxu0 0.0
    %2958 = vmatpush1.xpose.msra.mxu0 0.0
    %2959 = vmatprep.subr.mxu0 0.0
    %2960 = vmatpush1.xpose.msra.mxu0 0.0
    %2961 = vmatprep.subr.mxu0 0.0
    %2962 = vmatpush1.xpose.msra.mxu0 0.0
    %2963 = vmatprep.subr.mxu0 0.0
    %2964 = vmatpush1.xpose.msra.mxu0 0.0
    %2965 = vmatprep.subr.mxu0 0.0
    %2966 = vmatpush1.xpose.msra.mxu0 0.0
    %2967 = vmatprep.subr.mxu0 0.0
    %2968 = vmatpush1.xpose.msra.mxu0 0.0
    %2969 = vmatprep.subr.mxu0 0.0
    %2970 = vmatpush1.xpose.msra.mxu0 0.0
    %2971 = vmatprep.subr.mxu0 0.0
    %2972 = vmatpush1.xpose.msra.mxu0 0.0
    %2973 = vmatprep.subr.mxu0 0.0
    %2974 = vmatpush1.xpose.msra.mxu0 0.0
    %2975 = vmatprep.subr.mxu0 0.0
    %2976 = vmatpush1.xpose.msra.mxu0 0.0
    %2977 = vmatprep.subr.mxu0 0.0
    %2978 = vmatpush1.xpose.msra.mxu0 0.0
    %2979 = vmatprep.subr.mxu0 0.0
    %2980 = vmatpush1.xpose.msra.mxu0 %v2949
    %2981 = vmatprep.subr.mxu0 0.0
    %2982 = vmatpush1.xpose.msra.mxu0 %v2947
    %2983 = vmatprep.subr.mxu0 0.0
    %2984 = vmatpush2.xpose.msra.mxu0 0.0
    %2985 = vmatprep.subr.mxu0 0.0
    %2986 = vmatpush2.xpose.msra.mxu0 0.0
    %2987 = vmatprep.subr.mxu0 0.0
    %2988 = vmatpush2.xpose.msra.mxu0 0.0
    %2989 = vmatprep.subr.mxu0 0.0
    %2990 = vmatpush2.xpose.msra.mxu0 0.0
    %2991 = vmatprep.subr.mxu0 0.0
    %2992 = vmatpush2.xpose.msra.mxu0 0.0
    %2993 = vmatprep.subr.mxu0 0.0
    %2994 = vmatpush2.xpose.msra.mxu0 0.0
    %2995 = vmatprep.subr.mxu0 0.0
    %2996 = vmatpush2.xpose.msra.mxu0 0.0
    %2997 = vmatprep.subr.mxu0 0.0
    %2998 = vmatpush2.xpose.msra.mxu0 0.0
    %2999 = vmatprep.subr.mxu0 0.0
    %3000 = vmatpush2.xpose.msra.mxu0 0.0
    %3001 = vmatprep.subr.mxu0 0.0
    %3002 = vmatpush2.xpose.msra.mxu0 0.0
    %3003 = vmatprep.subr.mxu0 0.0
    %3004 = vmatpush2.xpose.msra.mxu0 0.0
    %3005 = vmatprep.subr.mxu0 0.0
    %3006 = vmatpush2.xpose.msra.mxu0 0.0
    %3007 = vmatprep.subr.mxu0 0.0
    %3008 = vmatpush2.xpose.msra.mxu0 0.0
    %3009 = vmatprep.subr.mxu0 0.0
    %3010 = vmatpush2.xpose.msra.mxu0 0.0
    %3011 = vmatprep.subr.mxu0 0.0
    %3012 = vmatpush2.xpose.msra.mxu0 0.0
    %3013 = vmatprep.subr.mxu0 0.0
    %3014 = vmatpush2.xpose.msra.mxu0 0.0
    %3015 = vmatprep.mubr.f32.mxu0 0.0
    %3016 = vmatmul.mubr.f32.gmra.mxu0 %v2943
    %v3017 = vpop.f32.mrf.mxu0
    %v3018 = vadd.f32 %v457, %v3017
    %v3019 = vpop.f32.mrf.mxu0
    %3020 = vmatprep.mubr.f32.mxu0 0.0
    %3021 = vmatmul.mubr.f32.gmra.mxu0 %v2945
    %v3022 = vpop.f32.mrf.mxu0
    %v3023 = vadd.f32 %v458, %v3022
    %v3024 = vpop.f32.mrf.mxu0
    %3025 = vdwg.mxu0
    %v3026 = vsel %vm657, %v3018, -inf
    %3027 = vmax.xlane.f32.xlu0 %v3026
    %v3028 = vpop.xlane.xlu0 %3027
    %v3029 = vsel %vm657, %v3023, -inf
    %3030 = vmax.xlane.f32.xlu0 %v3029
    %v3031 = vpop.xlane.xlu0 %3030
    %v3032 = vsub.f32 %v3018, %v3028
    %v3033 = vsub.f32 %v3023, %v3031
    %v3034 = vmul.f32 %v3032, 1.442695
    %v3035 = vpow.pop %v3034
    %v3036 = vmul.f32 %v3033, 1.442695
    %v3037 = vpow.pop %v3036
    %v3038 = vsel %vm657, %v3035, 0.0
    %3039 = vadd.xlane.f32.xlu0 %v3038
    %v3040 = vpop.xlane.xlu0 %3039
    %v3041 = vsel %vm657, %v3037, 0.0
    %3042 = vadd.xlane.f32.xlu0 %v3041
    %v3043 = vpop.xlane.xlu0 %3042
    %v3044 = vrcp.pop %v3040
    %v3045 = vrcp.pop %v3043
    %v3046 = vmul.f32 %v3035, %v3044
    %v3047 = vmul.f32 %v3037, %v3045
    %3048 = vrot.lane.b32.xlu0 %v2080, 40
    %v3049 = vpop.permute.xlu0 %3048
    %3050 = vrot.lane.b32.xlu0 %v2085, 40
    %v3051 = vpop.permute.xlu0 %3050
    %v3055 = vsel %vm657, %v3046, 0
    %v3058 = vsel %vm657, %v3047, 0
    %3060 = vmatprep.subr.mxu0 0.0
    %3061 = vmatpush1.msra.mxu0 0.0
    %3062 = vmatprep.subr.mxu0 0.0
    %3063 = vmatpush1.msra.mxu0 0.0
    %3064 = vmatprep.subr.mxu0 0.0
    %3065 = vmatpush1.msra.mxu0 0.0
    %3066 = vmatprep.subr.mxu0 0.0
    %3067 = vmatpush1.msra.mxu0 0.0
    %3068 = vmatprep.subr.mxu0 0.0
    %3069 = vmatpush1.msra.mxu0 0.0
    %3070 = vmatprep.subr.mxu0 0.0
    %3071 = vmatpush1.msra.mxu0 0.0
    %3072 = vmatprep.subr.mxu0 0.0
    %3073 = vmatpush1.msra.mxu0 0.0
    %3074 = vmatprep.subr.mxu0 0.0
    %3075 = vmatpush1.msra.mxu0 0.0
    %3076 = vmatprep.subr.mxu0 0.0
    %3077 = vmatpush1.msra.mxu0 0.0
    %3078 = vmatprep.subr.mxu0 0.0
    %3079 = vmatpush1.msra.mxu0 0.0
    %3080 = vmatprep.subr.mxu0 0.0
    %3081 = vmatpush1.msra.mxu0 0.0
    %3082 = vmatprep.subr.mxu0 0.0
    %3083 = vmatpush1.msra.mxu0 0.0
    %3084 = vmatprep.subr.mxu0 0.0
    %3085 = vmatpush1.msra.mxu0 0.0
    %3086 = vmatprep.subr.mxu0 0.0
    %3087 = vmatpush1.msra.mxu0 0.0
    %3088 = vmatprep.subr.mxu0 0.0
    %3089 = vmatpush1.msra.mxu0 %v3051
    %3090 = vmatprep.subr.mxu0 0.0
    %3091 = vmatpush1.msra.mxu0 %v3049
    %3092 = vmatprep.subr.mxu0 0.0
    %3093 = vmatpush2.msra.mxu0 0.0
    %3094 = vmatprep.subr.mxu0 0.0
    %3095 = vmatpush2.msra.mxu0 0.0
    %3096 = vmatprep.subr.mxu0 0.0
    %3097 = vmatpush2.msra.mxu0 0.0
    %3098 = vmatprep.subr.mxu0 0.0
    %3099 = vmatpush2.msra.mxu0 0.0
    %3100 = vmatprep.subr.mxu0 0.0
    %3101 = vmatpush2.msra.mxu0 0.0
    %3102 = vmatprep.subr.mxu0 0.0
    %3103 = vmatpush2.msra.mxu0 0.0
    %3104 = vmatprep.subr.mxu0 0.0
    %3105 = vmatpush2.msra.mxu0 0.0
    %3106 = vmatprep.subr.mxu0 0.0
    %3107 = vmatpush2.msra.mxu0 0.0
    %3108 = vmatprep.subr.mxu0 0.0
    %3109 = vmatpush2.msra.mxu0 0.0
    %3110 = vmatprep.subr.mxu0 0.0
    %3111 = vmatpush2.msra.mxu0 0.0
    %3112 = vmatprep.subr.mxu0 0.0
    %3113 = vmatpush2.msra.mxu0 0.0
    %3114 = vmatprep.subr.mxu0 0.0
    %3115 = vmatpush2.msra.mxu0 0.0
    %3116 = vmatprep.subr.mxu0 0.0
    %3117 = vmatpush2.msra.mxu0 0.0
    %3118 = vmatprep.subr.mxu0 0.0
    %3119 = vmatpush2.msra.mxu0 0.0
    %3120 = vmatprep.subr.mxu0 0.0
    %3121 = vmatpush2.msra.mxu0 0.0
    %3122 = vmatprep.subr.mxu0 0.0
    %3123 = vmatpush2.msra.mxu0 0.0
    %3124 = vmatprep.mubr.f32.mxu0 0.0
    %3125 = vmatmul.mubr.f32.gmra.mxu0 %v3055
    %v3126 = vpop.f32.mrf.mxu0
    %v3127 = vadd.f32 0.0, %v3126
    %v3128 = vpop.f32.mrf.mxu0
    %3129 = vmatprep.mubr.f32.mxu0 0.0
    %3130 = vmatmul.mubr.f32.gmra.mxu0 %v3058
    %v3131 = vpop.f32.mrf.mxu0
    %v3132 = vadd.f32 0.0, %v3131
    %v3133 = vpop.f32.mrf.mxu0
    %3134 = vdwg.mxu0
    %v3136 = vsel %vm571, %v3127, 0
    %v3139 = vsel %vm571, %v3132, 0
    %3141 = vmatprep.subr.mxu0 0.0
    %3142 = vmatpush1.msra.mxu0 0.0
    %3143 = vmatprep.subr.mxu0 0.0
    %3144 = vmatpush1.msra.mxu0 0.0
    %3145 = vmatprep.subr.mxu0 0.0
    %3146 = vmatpush1.msra.mxu0 0.0
    %3147 = vmatprep.subr.mxu0 0.0
    %3148 = vmatpush1.msra.mxu0 0.0
    %3149 = vmatprep.subr.mxu0 0.0
    %3150 = vmatpush1.msra.mxu0 0.0
    %3151 = vmatprep.subr.mxu0 0.0
    %3152 = vmatpush1.msra.mxu0 0.0
    %3153 = vmatprep.subr.mxu0 0.0
    %3154 = vmatpush1.msra.mxu0 0.0
    %3155 = vmatprep.subr.mxu0 0.0
    %3156 = vmatpush1.msra.mxu0 0.0
    %3157 = vmatprep.subr.mxu0 0.0
    %3158 = vmatpush1.msra.mxu0 0.0
    %3159 = vmatprep.subr.mxu0 0.0
    %3160 = vmatpush1.msra.mxu0 0.0
    %3161 = vmatprep.subr.mxu0 0.0
    %3162 = vmatpush1.msra.mxu0 0.0
    %3163 = vmatprep.subr.mxu0 0.0
    %3164 = vmatpush1.msra.mxu0 0.0
    %3165 = vmatprep.subr.mxu0 0.0
    %3166 = vmatpush1.msra.mxu0 0.0
    %3167 = vmatprep.subr.mxu0 0.0
    %3168 = vmatpush1.msra.mxu0 0.0
    %3169 = vmatprep.subr.mxu0 0.0
    %3170 = vmatpush1.msra.mxu0 0.0
    %3171 = vmatprep.subr.mxu0 0.0
    %3172 = vmatpush1.msra.mxu0 %v1998
    %3173 = vmatprep.subr.mxu0 0.0
    %3174 = vmatpush2.msra.mxu0 0.0
    %3175 = vmatprep.subr.mxu0 0.0
    %3176 = vmatpush2.msra.mxu0 0.0
    %3177 = vmatprep.subr.mxu0 0.0
    %3178 = vmatpush2.msra.mxu0 0.0
    %3179 = vmatprep.subr.mxu0 0.0
    %3180 = vmatpush2.msra.mxu0 0.0
    %3181 = vmatprep.subr.mxu0 0.0
    %3182 = vmatpush2.msra.mxu0 0.0
    %3183 = vmatprep.subr.mxu0 0.0
    %3184 = vmatpush2.msra.mxu0 0.0
    %3185 = vmatprep.subr.mxu0 0.0
    %3186 = vmatpush2.msra.mxu0 0.0
    %3187 = vmatprep.subr.mxu0 0.0
    %3188 = vmatpush2.msra.mxu0 0.0
    %3189 = vmatprep.subr.mxu0 0.0
    %3190 = vmatpush2.msra.mxu0 0.0
    %3191 = vmatprep.subr.mxu0 0.0
    %3192 = vmatpush2.msra.mxu0 0.0
    %3193 = vmatprep.subr.mxu0 0.0
    %3194 = vmatpush2.msra.mxu0 0.0
    %3195 = vmatprep.subr.mxu0 0.0
    %3196 = vmatpush2.msra.mxu0 0.0
    %3197 = vmatprep.subr.mxu0 0.0
    %3198 = vmatpush2.msra.mxu0 0.0
    %3199 = vmatprep.subr.mxu0 0.0
    %3200 = vmatpush2.msra.mxu0 0.0
    %3201 = vmatprep.subr.mxu0 0.0
    %3202 = vmatpush2.msra.mxu0 0.0
    %3203 = vmatprep.subr.mxu0 0.0
    %3204 = vmatpush2.msra.mxu0 0.0
    %3205 = vmatprep.mubr.f32.mxu0 0.0
    %3206 = vmatmul.mubr.f32.gmra.mxu0 %v3136
    %v3207 = vpop.f32.mrf.mxu0
    %v3208 = vadd.f32 0.0, %v3207
    %v3209 = vpop.f32.mrf.mxu0
    %3210 = vmatprep.mubr.f32.mxu0 0.0
    %3211 = vmatmul.mubr.f32.gmra.mxu0 %v3139
    %v3212 = vpop.f32.mrf.mxu0
    %v3213 = vadd.f32 0.0, %v3212
    %v3214 = vpop.f32.mrf.mxu0
    %3215 = vdwg.mxu0
    %v3216 = vadd.f32 %v2933, %v3208
    %v3217 = vadd.f32 %v2934, %v3213
    %v3219 = vlaneseq
    %v3220 = vshrl.u32 %v3219, 7
    %v3221 = vsub.s32 0, %v3220
    %v3222 = vrot.slane %v2000, %v3221
    %v3224 = vadd.f32 %v3216, %v3222
    %v3225 = vadd.f32 %v3217, %v3222
    %v3226 = vadd.f32 %v1985, %v3224
    %v3227 = vadd.f32 %v1986, %v3225
    %s3228 = scalar_lea.vmem %s27, 1
    %v3229 = vld [vmem:[%s3228] sm:$0x1]
    %s3230 = scalar_lea.vmem [#allocation11], 1
    %v3231 = vld [vmem:[%s3230] sm:$0x1]
    %v3232 = vsel %vm481, %v3226, 0.0
    %3233 = vadd.xlane.f32.xlu0 %v3232
    %v3234 = vpop.xlane.xlu0 %3233
    %v3235 = vsel %vm481, %v3227, 0.0
    %3236 = vadd.xlane.f32.xlu0 %v3235
    %v3237 = vpop.xlane.xlu0 %3236
    %v3238 = vmul.f32 %v3234, %v1713
    %v3239 = vmul.f32 %v3237, %v1713
    %v3240 = vsub.f32 %v3226, %v3238
    %v3241 = vsub.f32 %v3227, %v3239
    %v3242 = vmul.f32 %v3240, %v3240
    %v3243 = vmul.f32 %v3241, %v3241
    %v3244 = vsel %vm481, %v3242, 0.0
    %3245 = vadd.xlane.f32.xlu0 %v3244
    %v3246 = vpop.xlane.xlu0 %3245
    %v3247 = vsel %vm481, %v3243, 0.0
    %3248 = vadd.xlane.f32.xlu0 %v3247
    %v3249 = vpop.xlane.xlu0 %3248
    %v3250 = vmul.f32 %v3246, %v1713
    %v3251 = vmul.f32 %v3249, %v1713
    %v3252 = vadd.f32 %v3250, 1e-05
    %v3253 = vadd.f32 %v3251, 1e-05
    %v3254 = vrsqrt.pop %v3252
    %v3255 = vrsqrt.pop %v3253
    %v3256 = vmul.f32 %v3240, %v3254
    %v3257 = vmul.f32 %v3241, %v3255
    %v3259 = vlaneseq
    %v3260 = vshrl.u32 %v3259, 7
    %v3261 = vsub.s32 0, %v3260
    %v3262 = vrot.slane %v3229, %v3261
    %v3264 = vmul.f32 %v3256, %v3262
    %v3265 = vmul.f32 %v3257, %v3262
    %v3267 = vlaneseq
    %v3268 = vshrl.u32 %v3267, 7
    %v3269 = vsub.s32 0, %v3268
    %v3270 = vrot.slane %v3231, %v3269
    %v3272 = vadd.f32 %v3264, %v3270
    %v3273 = vadd.f32 %v3265, %v3270
    %s3274 = scalar_lea.vmem %s19, 32
    %v3275 = vld [vmem:[%s3274] sm:$0xff]
    %v3276 = vld [vmem:[%s3274 + $0x8] sm:$0xff]
    %v3277 = vld [vmem:[%s3274 + $0x10] sm:$0xff]
    %v3278 = vld [vmem:[%s3274 + $0x18] sm:$0xff]
    %s3279 = scalar_lea.vmem [#allocation8], 1
    %v3280 = vld [vmem:[%s3279] sm:$0x1]
    %s3281 = scalar_lea.vmem %s23, 64
    %v3282 = vld [vmem:[%s3281] sm:$0xff]
    %v3283 = vld [vmem:[%s3281 + $0x8] sm:$0xff]
    %v3284 = vld [vmem:[%s3281 + $0x10] sm:$0xff]
    %v3285 = vld [vmem:[%s3281 + $0x18] sm:$0xff]
    %v3286 = vld [vmem:[%s3281 + $0x20] sm:$0xff]
    %v3287 = vld [vmem:[%s3281 + $0x28] sm:$0xff]
    %v3288 = vld [vmem:[%s3281 + $0x30] sm:$0xff]
    %v3289 = vld [vmem:[%s3281 + $0x38] sm:$0xff]
    %s3290 = scalar_lea.vmem [#allocation10], 1
    %v3291 = vld [vmem:[%s3290] sm:$0x1]
    %v3293 = vlaneseq
    %v3294 = vshrl.u32 %v3293, 7
    %v3295 = vsub.s32 0, %v3294
    %v3296 = vrot.slane %v3280, %v3295
    %v3299 = vsel %vm481, %v3272, 0
    %v3302 = vsel %vm481, %v3273, 0
    %3304 = vmatprep.subr.mxu0 0.0
    %3305 = vmatpush1.msra.mxu0 0.0
    %3306 = vmatprep.subr.mxu0 0.0
    %3307 = vmatpush1.msra.mxu0 0.0
    %3308 = vmatprep.subr.mxu0 0.0
    %3309 = vmatpush1.msra.mxu0 0.0
    %3310 = vmatprep.subr.mxu0 0.0
    %3311 = vmatpush1.msra.mxu0 0.0
    %3312 = vmatprep.subr.mxu0 0.0
    %3313 = vmatpush1.msra.mxu0 0.0
    %3314 = vmatprep.subr.mxu0 0.0
    %3315 = vmatpush1.msra.mxu0 0.0
    %3316 = vmatprep.subr.mxu0 0.0
    %3317 = vmatpush1.msra.mxu0 0.0
    %3318 = vmatprep.subr.mxu0 0.0
    %3319 = vmatpush1.msra.mxu0 0.0
    %3320 = vmatprep.subr.mxu0 0.0
    %3321 = vmatpush1.msra.mxu0 0.0
    %3322 = vmatprep.subr.mxu0 0.0
    %3323 = vmatpush1.msra.mxu0 0.0
    %3324 = vmatprep.subr.mxu0 0.0
    %3325 = vmatpush1.msra.mxu0 0.0
    %3326 = vmatprep.subr.mxu0 0.0
    %3327 = vmatpush1.msra.mxu0 0.0
    %3328 = vmatprep.subr.mxu0 0.0
    %3329 = vmatpush1.msra.mxu0 %v3278
    %3330 = vmatprep.subr.mxu0 0.0
    %3331 = vmatpush1.msra.mxu0 %v3277
    %3332 = vmatprep.subr.mxu0 0.0
    %3333 = vmatpush1.msra.mxu0 %v3276
    %3334 = vmatprep.subr.mxu0 0.0
    %3335 = vmatpush1.msra.mxu0 %v3275
    %3336 = vmatprep.subr.mxu0 0.0
    %3337 = vmatpush2.msra.mxu0 0.0
    %3338 = vmatprep.subr.mxu0 0.0
    %3339 = vmatpush2.msra.mxu0 0.0
    %3340 = vmatprep.subr.mxu0 0.0
    %3341 = vmatpush2.msra.mxu0 0.0
    %3342 = vmatprep.subr.mxu0 0.0
    %3343 = vmatpush2.msra.mxu0 0.0
    %3344 = vmatprep.subr.mxu0 0.0
    %3345 = vmatpush2.msra.mxu0 0.0
    %3346 = vmatprep.subr.mxu0 0.0
    %3347 = vmatpush2.msra.mxu0 0.0
    %3348 = vmatprep.subr.mxu0 0.0
    %3349 = vmatpush2.msra.mxu0 0.0
    %3350 = vmatprep.subr.mxu0 0.0
    %3351 = vmatpush2.msra.mxu0 0.0
    %3352 = vmatprep.subr.mxu0 0.0
    %3353 = vmatpush2.msra.mxu0 0.0
    %3354 = vmatprep.subr.mxu0 0.0
    %3355 = vmatpush2.msra.mxu0 0.0
    %3356 = vmatprep.subr.mxu0 0.0
    %3357 = vmatpush2.msra.mxu0 0.0
    %3358 = vmatprep.subr.mxu0 0.0
    %3359 = vmatpush2.msra.mxu0 0.0
    %3360 = vmatprep.subr.mxu0 0.0
    %3361 = vmatpush2.msra.mxu0 0.0
    %3362 = vmatprep.subr.mxu0 0.0
    %3363 = vmatpush2.msra.mxu0 0.0
    %3364 = vmatprep.subr.mxu0 0.0
    %3365 = vmatpush2.msra.mxu0 0.0
    %3366 = vmatprep.subr.mxu0 0.0
    %3367 = vmatpush2.msra.mxu0 0.0
    %3368 = vmatprep.mubr.f32.mxu0 0.0
    %3369 = vmatmul.mubr.f32.gmra.mxu0 %v3299
    %v3370 = vpop.f32.mrf.mxu0
    %v3371 = vadd.f32 %v3296, %v3370
    %v3372 = vpop.f32.mrf.mxu0
    %3373 = vmatprep.mubr.f32.mxu0 0.0
    %3374 = vmatmul.mubr.f32.gmra.mxu0 %v3302
    %v3375 = vpop.f32.mrf.mxu0
    %v3376 = vadd.f32 %v3296, %v3375
    %v3377 = vpop.f32.mrf.mxu0
    %3378 = vdwg.mxu0
    %v3379 = vmax.f32 %v3371, 0.0
    %v3380 = vmax.f32 %v3376, 0.0
    %v3382 = vlaneseq
    %v3383 = vshrl.u32 %v3382, 7
    %v3384 = vsub.s32 0, %v3383
    %v3385 = vrot.slane %v3291, %v3384
    %v3388 = vsel %vm1859, %v3379, 0
    %v3391 = vsel %vm1859, %v3380, 0
    %3393 = vmatprep.subr.mxu0 0.0
    %3394 = vmatpush1.msra.mxu0 0.0
    %3395 = vmatprep.subr.mxu0 0.0
    %3396 = vmatpush1.msra.mxu0 0.0
    %3397 = vmatprep.subr.mxu0 0.0
    %3398 = vmatpush1.msra.mxu0 0.0
    %3399 = vmatprep.subr.mxu0 0.0
    %3400 = vmatpush1.msra.mxu0 0.0
    %3401 = vmatprep.subr.mxu0 0.0
    %3402 = vmatpush1.msra.mxu0 0.0
    %3403 = vmatprep.subr.mxu0 0.0
    %3404 = vmatpush1.msra.mxu0 0.0
    %3405 = vmatprep.subr.mxu0 0.0
    %3406 = vmatpush1.msra.mxu0 0.0
    %3407 = vmatprep.subr.mxu0 0.0
    %3408 = vmatpush1.msra.mxu0 0.0
    %3409 = vmatprep.subr.mxu0 0.0
    %3410 = vmatpush1.msra.mxu0 %v3289
    %3411 = vmatprep.subr.mxu0 0.0
    %3412 = vmatpush1.msra.mxu0 %v3288
    %3413 = vmatprep.subr.mxu0 0.0
    %3414 = vmatpush1.msra.mxu0 %v3287
    %3415 = vmatprep.subr.mxu0 0.0
    %3416 = vmatpush1.msra.mxu0 %v3286
    %3417 = vmatprep.subr.mxu0 0.0
    %3418 = vmatpush1.msra.mxu0 %v3285
    %3419 = vmatprep.subr.mxu0 0.0
    %3420 = vmatpush1.msra.mxu0 %v3284
    %3421 = vmatprep.subr.mxu0 0.0
    %3422 = vmatpush1.msra.mxu0 %v3283
    %3423 = vmatprep.subr.mxu0 0.0
    %3424 = vmatpush1.msra.mxu0 %v3282
    %3425 = vmatprep.subr.mxu0 0.0
    %3426 = vmatpush2.msra.mxu0 0.0
    %3427 = vmatprep.subr.mxu0 0.0
    %3428 = vmatpush2.msra.mxu0 0.0
    %3429 = vmatprep.subr.mxu0 0.0
    %3430 = vmatpush2.msra.mxu0 0.0
    %3431 = vmatprep.subr.mxu0 0.0
    %3432 = vmatpush2.msra.mxu0 0.0
    %3433 = vmatprep.subr.mxu0 0.0
    %3434 = vmatpush2.msra.mxu0 0.0
    %3435 = vmatprep.subr.mxu0 0.0
    %3436 = vmatpush2.msra.mxu0 0.0
    %3437 = vmatprep.subr.mxu0 0.0
    %3438 = vmatpush2.msra.mxu0 0.0
    %3439 = vmatprep.subr.mxu0 0.0
    %3440 = vmatpush2.msra.mxu0 0.0
    %3441 = vmatprep.subr.mxu0 0.0
    %3442 = vmatpush2.msra.mxu0 0.0
    %3443 = vmatprep.subr.mxu0 0.0
    %3444 = vmatpush2.msra.mxu0 0.0
    %3445 = vmatprep.subr.mxu0 0.0
    %3446 = vmatpush2.msra.mxu0 0.0
    %3447 = vmatprep.subr.mxu0 0.0
    %3448 = vmatpush2.msra.mxu0 0.0
    %3449 = vmatprep.subr.mxu0 0.0
    %3450 = vmatpush2.msra.mxu0 0.0
    %3451 = vmatprep.subr.mxu0 0.0
    %3452 = vmatpush2.msra.mxu0 0.0
    %3453 = vmatprep.subr.mxu0 0.0
    %3454 = vmatpush2.msra.mxu0 0.0
    %3455 = vmatprep.subr.mxu0 0.0
    %3456 = vmatpush2.msra.mxu0 0.0
    %3457 = vmatprep.mubr.f32.mxu0 0.0
    %3458 = vmatmul.mubr.f32.gmra.mxu0 %v3388
    %v3459 = vpop.f32.mrf.mxu0
    %v3460 = vadd.f32 %v3385, %v3459
    %v3461 = vpop.f32.mrf.mxu0
    %3462 = vmatprep.mubr.f32.mxu0 0.0
    %3463 = vmatmul.mubr.f32.gmra.mxu0 %v3391
    %v3464 = vpop.f32.mrf.mxu0
    %v3465 = vadd.f32 %v3385, %v3464
    %v3466 = vpop.f32.mrf.mxu0
    %3467 = vdwg.mxu0
    %v3468 = vadd.f32 %v3272, %v3460
    %v3469 = vadd.f32 %v3273, %v3465
    %s3470 = scalar_lea.vmem %s31, 1
    %v3471 = vld [vmem:[%s3470] sm:$0x1]
    %s3472 = scalar_lea.vmem %s33, 1
    %v3473 = vld [vmem:[%s3472] sm:$0x1]
    %v3474 = vsel %vm481, %v3468, 0.0
    %3475 = vadd.xlane.f32.xlu0 %v3474
    %v3476 = vpop.xlane.xlu0 %3475
    %v3477 = vsel %vm481, %v3469, 0.0
    %3478 = vadd.xlane.f32.xlu0 %v3477
    %v3479 = vpop.xlane.xlu0 %3478
    %v3480 = vmul.f32 %v3476, %v1713
    %v3481 = vmul.f32 %v3479, %v1713
    %v3482 = vsub.f32 %v3468, %v3480
    %v3483 = vsub.f32 %v3469, %v3481
    %v3484 = vmul.f32 %v3482, %v3482
    %v3485 = vmul.f32 %v3483, %v3483
    %v3486 = vsel %vm481, %v3484, 0.0
    %3487 = vadd.xlane.f32.xlu0 %v3486
    %v3488 = vpop.xlane.xlu0 %3487
    %v3489 = vsel %vm481, %v3485, 0.0
    %3490 = vadd.xlane.f32.xlu0 %v3489
    %v3491 = vpop.xlane.xlu0 %3490
    %v3492 = vmul.f32 %v3488, %v1713
    %v3493 = vmul.f32 %v3491, %v1713
    %v3494 = vadd.f32 %v3492, 1e-05
    %v3495 = vadd.f32 %v3493, 1e-05
    %v3496 = vrsqrt.pop %v3494
    %v3497 = vrsqrt.pop %v3495
    %v3498 = vmul.f32 %v3482, %v3496
    %v3499 = vmul.f32 %v3483, %v3497
    %v3501 = vlaneseq
    %v3502 = vshrl.u32 %v3501, 7
    %v3503 = vsub.s32 0, %v3502
    %v3504 = vrot.slane %v3471, %v3503
    %v3506 = vmul.f32 %v3498, %v3504
    %v3507 = vmul.f32 %v3499, %v3504
    %v3509 = vlaneseq
    %v3510 = vshrl.u32 %v3509, 7
    %v3511 = vsub.s32 0, %v3510
    %v3512 = vrot.slane %v3473, %v3511
    %v3514 = vadd.f32 %v3506, %v3512
    %v3515 = vadd.f32 %v3507, %v3512
    %v3516 = vld [vmem:[%s71] sm:$0x1]
    %v3517 = vld [vmem:[%s73] sm:$0x1]
    %v3518 = vsel %vm481, %v3514, 0.0
    %3519 = vadd.xlane.f32.xlu0 %v3518
    %v3520 = vpop.xlane.xlu0 %3519
    %v3521 = vsel %vm481, %v3515, 0.0
    %3522 = vadd.xlane.f32.xlu0 %v3521
    %v3523 = vpop.xlane.xlu0 %3522
    %v3524 = vmul.f32 %v3520, %v1713
    %v3525 = vmul.f32 %v3523, %v1713
    %v3526 = vsub.f32 %v3514, %v3524
    %v3527 = vsub.f32 %v3515, %v3525
    %v3528 = vmul.f32 %v3526, %v3526
    %v3529 = vmul.f32 %v3527, %v3527
    %v3530 = vsel %vm481, %v3528, 0.0
    %3531 = vadd.xlane.f32.xlu0 %v3530
    %v3532 = vpop.xlane.xlu0 %3531
    %v3533 = vsel %vm481, %v3529, 0.0
    %3534 = vadd.xlane.f32.xlu0 %v3533
    %v3535 = vpop.xlane.xlu0 %3534
    %v3536 = vmul.f32 %v3532, %v1713
    %v3537 = vmul.f32 %v3535, %v1713
    %v3538 = vadd.f32 %v3536, 1e-05
    %v3539 = vadd.f32 %v3537, 1e-05
    %v3540 = vrsqrt.pop %v3538
    %v3541 = vrsqrt.pop %v3539
    %v3542 = vmul.f32 %v3526, %v3540
    %v3543 = vmul.f32 %v3527, %v3541
    %v3545 = vlaneseq
    %v3546 = vshrl.u32 %v3545, 7
    %v3547 = vsub.s32 0, %v3546
    %v3548 = vrot.slane %v3516, %v3547
    %v3550 = vmul.f32 %v3542, %v3548
    %v3551 = vmul.f32 %v3543, %v3548
    %v3553 = vlaneseq
    %v3554 = vshrl.u32 %v3553, 7
    %v3555 = vsub.s32 0, %v3554
    %v3556 = vrot.slane %v3517, %v3555
    %v3558 = vadd.f32 %v3550, %v3556
    %v3559 = vadd.f32 %v3551, %v3556
    %v3560 = vld [vmem:[#allocation5] sm:$0xff]
    %v3561 = vld [vmem:[#allocation5 + $0x8] sm:$0xff]
    %v3562 = vld [vmem:[%s35] sm:$0xff]
    %v3563 = vld [vmem:[%s35 + $0x8] sm:$0xff]
    %v3564 = vld [vmem:[%s35 + $0x10] sm:$0xff]
    %v3565 = vld [vmem:[%s35 + $0x18] sm:$0xff]
    %v3566 = vld [vmem:[#allocation13] sm:$0x1]
    %v3567 = vld [vmem:[%s39] sm:$0xff]
    %v3568 = vld [vmem:[%s39 + $0x8] sm:$0xff]
    %v3569 = vld [vmem:[%s39 + $0x10] sm:$0xff]
    %v3570 = vld [vmem:[%s39 + $0x18] sm:$0xff]
    %v3571 = vld [vmem:[#allocation14] sm:$0x1]
    %v3573 = vlaneseq
    %v3574 = vshrl.u32 %v3573, 7
    %v3575 = vsub.s32 0, %v3574
    %v3576 = vrot.slane %v3566, %v3575
    %v3579 = vsel %vm481, %v3560, 0
    %v3582 = vsel %vm481, %v3561, 0
    %3584 = vmatprep.subr.mxu0 0.0
    %3585 = vmatpush1.msra.mxu0 0.0
    %3586 = vmatprep.subr.mxu0 0.0
    %3587 = vmatpush1.msra.mxu0 0.0
    %3588 = vmatprep.subr.mxu0 0.0
    %3589 = vmatpush1.msra.mxu0 0.0
    %3590 = vmatprep.subr.mxu0 0.0
    %3591 = vmatpush1.msra.mxu0 0.0
    %3592 = vmatprep.subr.mxu0 0.0
    %3593 = vmatpush1.msra.mxu0 0.0
    %3594 = vmatprep.subr.mxu0 0.0
    %3595 = vmatpush1.msra.mxu0 0.0
    %3596 = vmatprep.subr.mxu0 0.0
    %3597 = vmatpush1.msra.mxu0 0.0
    %3598 = vmatprep.subr.mxu0 0.0
    %3599 = vmatpush1.msra.mxu0 0.0
    %3600 = vmatprep.subr.mxu0 0.0
    %3601 = vmatpush1.msra.mxu0 0.0
    %3602 = vmatprep.subr.mxu0 0.0
    %3603 = vmatpush1.msra.mxu0 0.0
    %3604 = vmatprep.subr.mxu0 0.0
    %3605 = vmatpush1.msra.mxu0 0.0
    %3606 = vmatprep.subr.mxu0 0.0
    %3607 = vmatpush1.msra.mxu0 0.0
    %3608 = vmatprep.subr.mxu0 0.0
    %3609 = vmatpush1.msra.mxu0 %v3565
    %3610 = vmatprep.subr.mxu0 0.0
    %3611 = vmatpush1.msra.mxu0 %v3564
    %3612 = vmatprep.subr.mxu0 0.0
    %3613 = vmatpush1.msra.mxu0 %v3563
    %3614 = vmatprep.subr.mxu0 0.0
    %3615 = vmatpush1.msra.mxu0 %v3562
    %3616 = vmatprep.subr.mxu0 0.0
    %3617 = vmatpush2.msra.mxu0 0.0
    %3618 = vmatprep.subr.mxu0 0.0
    %3619 = vmatpush2.msra.mxu0 0.0
    %3620 = vmatprep.subr.mxu0 0.0
    %3621 = vmatpush2.msra.mxu0 0.0
    %3622 = vmatprep.subr.mxu0 0.0
    %3623 = vmatpush2.msra.mxu0 0.0
    %3624 = vmatprep.subr.mxu0 0.0
    %3625 = vmatpush2.msra.mxu0 0.0
    %3626 = vmatprep.subr.mxu0 0.0
    %3627 = vmatpush2.msra.mxu0 0.0
    %3628 = vmatprep.subr.mxu0 0.0
    %3629 = vmatpush2.msra.mxu0 0.0
    %3630 = vmatprep.subr.mxu0 0.0
    %3631 = vmatpush2.msra.mxu0 0.0
    %3632 = vmatprep.subr.mxu0 0.0
    %3633 = vmatpush2.msra.mxu0 0.0
    %3634 = vmatprep.subr.mxu0 0.0
    %3635 = vmatpush2.msra.mxu0 0.0
    %3636 = vmatprep.subr.mxu0 0.0
    %3637 = vmatpush2.msra.mxu0 0.0
    %3638 = vmatprep.subr.mxu0 0.0
    %3639 = vmatpush2.msra.mxu0 0.0
    %3640 = vmatprep.subr.mxu0 0.0
    %3641 = vmatpush2.msra.mxu0 0.0
    %3642 = vmatprep.subr.mxu0 0.0
    %3643 = vmatpush2.msra.mxu0 0.0
    %3644 = vmatprep.subr.mxu0 0.0
    %3645 = vmatpush2.msra.mxu0 0.0
    %3646 = vmatprep.subr.mxu0 0.0
    %3647 = vmatpush2.msra.mxu0 0.0
    %3648 = vmatprep.mubr.f32.mxu0 0.0
    %3649 = vmatmul.mubr.f32.gmra.mxu0 %v3579
    %v3650 = vpop.f32.mrf.mxu0
    %v3651 = vadd.f32 %v3576, %v3650
    %v3652 = vpop.f32.mrf.mxu0
    %3653 = vmatprep.mubr.f32.mxu0 0.0
    %3654 = vmatmul.mubr.f32.gmra.mxu0 %v3582
    %v3655 = vpop.f32.mrf.mxu0
    %v3656 = vadd.f32 %v3576, %v3655
    %v3657 = vpop.f32.mrf.mxu0
    %3658 = vdwg.mxu0
    %v3659 = vmul.f32 %v3651, 0.35355338
    %v3660 = vmul.f32 %v3656, 0.35355338
    %3663 = vrot.lane.b32.xlu0 %v3651, 96
    %v3664 = vpop.permute.xlu0 %3663
    %3665 = vrot.lane.b32.xlu0 %v3656, 96
    %v3666 = vpop.permute.xlu0 %3665
    %v3668 = vsel %vm571, %v3659, 0
    %v3671 = vsel %vm571, %v3660, 0
    %v3673 = vsel %vm571, %v3664, 0
    %v3675 = vsel %vm571, %v3666, 0
    %3677 = vmatprep.subr.mxu0 0.0
    %3678 = vmatpush1.xpose.msra.mxu0 0.0
    %3679 = vmatprep.subr.mxu0 0.0
    %3680 = vmatpush1.xpose.msra.mxu0 0.0
    %3681 = vmatprep.subr.mxu0 0.0
    %3682 = vmatpush1.xpose.msra.mxu0 0.0
    %3683 = vmatprep.subr.mxu0 0.0
    %3684 = vmatpush1.xpose.msra.mxu0 0.0
    %3685 = vmatprep.subr.mxu0 0.0
    %3686 = vmatpush1.xpose.msra.mxu0 0.0
    %3687 = vmatprep.subr.mxu0 0.0
    %3688 = vmatpush1.xpose.msra.mxu0 0.0
    %3689 = vmatprep.subr.mxu0 0.0
    %3690 = vmatpush1.xpose.msra.mxu0 0.0
    %3691 = vmatprep.subr.mxu0 0.0
    %3692 = vmatpush1.xpose.msra.mxu0 0.0
    %3693 = vmatprep.subr.mxu0 0.0
    %3694 = vmatpush1.xpose.msra.mxu0 0.0
    %3695 = vmatprep.subr.mxu0 0.0
    %3696 = vmatpush1.xpose.msra.mxu0 0.0
    %3697 = vmatprep.subr.mxu0 0.0
    %3698 = vmatpush1.xpose.msra.mxu0 0.0
    %3699 = vmatprep.subr.mxu0 0.0
    %3700 = vmatpush1.xpose.msra.mxu0 0.0
    %3701 = vmatprep.subr.mxu0 0.0
    %3702 = vmatpush1.xpose.msra.mxu0 0.0
    %3703 = vmatprep.subr.mxu0 0.0
    %3704 = vmatpush1.xpose.msra.mxu0 0.0
    %3705 = vmatprep.subr.mxu0 0.0
    %3706 = vmatpush1.xpose.msra.mxu0 %v3675
    %3707 = vmatprep.subr.mxu0 0.0
    %3708 = vmatpush1.xpose.msra.mxu0 %v3673
    %3709 = vmatprep.subr.mxu0 0.0
    %3710 = vmatpush2.xpose.msra.mxu0 0.0
    %3711 = vmatprep.subr.mxu0 0.0
    %3712 = vmatpush2.xpose.msra.mxu0 0.0
    %3713 = vmatprep.subr.mxu0 0.0
    %3714 = vmatpush2.xpose.msra.mxu0 0.0
    %3715 = vmatprep.subr.mxu0 0.0
    %3716 = vmatpush2.xpose.msra.mxu0 0.0
    %3717 = vmatprep.subr.mxu0 0.0
    %3718 = vmatpush2.xpose.msra.mxu0 0.0
    %3719 = vmatprep.subr.mxu0 0.0
    %3720 = vmatpush2.xpose.msra.mxu0 0.0
    %3721 = vmatprep.subr.mxu0 0.0
    %3722 = vmatpush2.xpose.msra.mxu0 0.0
    %3723 = vmatprep.subr.mxu0 0.0
    %3724 = vmatpush2.xpose.msra.mxu0 0.0
    %3725 = vmatprep.subr.mxu0 0.0
    %3726 = vmatpush2.xpose.msra.mxu0 0.0
    %3727 = vmatprep.subr.mxu0 0.0
    %3728 = vmatpush2.xpose.msra.mxu0 0.0
    %3729 = vmatprep.subr.mxu0 0.0
    %3730 = vmatpush2.xpose.msra.mxu0 0.0
    %3731 = vmatprep.subr.mxu0 0.0
    %3732 = vmatpush2.xpose.msra.mxu0 0.0
    %3733 = vmatprep.subr.mxu0 0.0
    %3734 = vmatpush2.xpose.msra.mxu0 0.0
    %3735 = vmatprep.subr.mxu0 0.0
    %3736 = vmatpush2.xpose.msra.mxu0 0.0
    %3737 = vmatprep.subr.mxu0 0.0
    %3738 = vmatpush2.xpose.msra.mxu0 0.0
    %3739 = vmatprep.subr.mxu0 0.0
    %3740 = vmatpush2.xpose.msra.mxu0 0.0
    %3741 = vmatprep.mubr.f32.mxu0 0.0
    %3742 = vmatmul.mubr.f32.gmra.mxu0 %v3668
    %v3743 = vpop.f32.mrf.mxu0
    %v3744 = vadd.f32 %v459, %v3743
    %v3745 = vpop.f32.mrf.mxu0
    %3746 = vmatprep.mubr.f32.mxu0 0.0
    %3747 = vmatmul.mubr.f32.gmra.mxu0 %v3671
    %v3748 = vpop.f32.mrf.mxu0
    %v3749 = vadd.f32 %v460, %v3748
    %v3750 = vpop.f32.mrf.mxu0
    %3751 = vdwg.mxu0
    %v3752 = vsel %vm657, %v3744, -inf
    %3753 = vmax.xlane.f32.xlu0 %v3752
    %v3754 = vpop.xlane.xlu0 %3753
    %v3755 = vsel %vm657, %v3749, -inf
    %3756 = vmax.xlane.f32.xlu0 %v3755
    %v3757 = vpop.xlane.xlu0 %3756
    %v3758 = vsub.f32 %v3744, %v3754
    %v3759 = vsub.f32 %v3749, %v3757
    %v3760 = vmul.f32 %v3758, 1.442695
    %v3761 = vpow.pop %v3760
    %v3762 = vmul.f32 %v3759, 1.442695
    %v3763 = vpow.pop %v3762
    %v3764 = vsel %vm657, %v3761, 0.0
    %3765 = vadd.xlane.f32.xlu0 %v3764
    %v3766 = vpop.xlane.xlu0 %3765
    %v3767 = vsel %vm657, %v3763, 0.0
    %3768 = vadd.xlane.f32.xlu0 %v3767
    %v3769 = vpop.xlane.xlu0 %3768
    %v3770 = vrcp.pop %v3766
    %v3771 = vrcp.pop %v3769
    %v3772 = vmul.f32 %v3761, %v3770
    %v3773 = vmul.f32 %v3763, %v3771
    %3774 = vrot.lane.b32.xlu0 %v3651, 64
    %v3775 = vpop.permute.xlu0 %3774
    %3776 = vrot.lane.b32.xlu0 %v3656, 64
    %v3777 = vpop.permute.xlu0 %3776
    %v3781 = vsel %vm657, %v3772, 0
    %v3784 = vsel %vm657, %v3773, 0
    %3786 = vmatprep.subr.mxu0 0.0
    %3787 = vmatpush1.msra.mxu0 0.0
    %3788 = vmatprep.subr.mxu0 0.0
    %3789 = vmatpush1.msra.mxu0 0.0
    %3790 = vmatprep.subr.mxu0 0.0
    %3791 = vmatpush1.msra.mxu0 0.0
    %3792 = vmatprep.subr.mxu0 0.0
    %3793 = vmatpush1.msra.mxu0 0.0
    %3794 = vmatprep.subr.mxu0 0.0
    %3795 = vmatpush1.msra.mxu0 0.0
    %3796 = vmatprep.subr.mxu0 0.0
    %3797 = vmatpush1.msra.mxu0 0.0
    %3798 = vmatprep.subr.mxu0 0.0
    %3799 = vmatpush1.msra.mxu0 0.0
    %3800 = vmatprep.subr.mxu0 0.0
    %3801 = vmatpush1.msra.mxu0 0.0
    %3802 = vmatprep.subr.mxu0 0.0
    %3803 = vmatpush1.msra.mxu0 0.0
    %3804 = vmatprep.subr.mxu0 0.0
    %3805 = vmatpush1.msra.mxu0 0.0
    %3806 = vmatprep.subr.mxu0 0.0
    %3807 = vmatpush1.msra.mxu0 0.0
    %3808 = vmatprep.subr.mxu0 0.0
    %3809 = vmatpush1.msra.mxu0 0.0
    %3810 = vmatprep.subr.mxu0 0.0
    %3811 = vmatpush1.msra.mxu0 0.0
    %3812 = vmatprep.subr.mxu0 0.0
    %3813 = vmatpush1.msra.mxu0 0.0
    %3814 = vmatprep.subr.mxu0 0.0
    %3815 = vmatpush1.msra.mxu0 %v3777
    %3816 = vmatprep.subr.mxu0 0.0
    %3817 = vmatpush1.msra.mxu0 %v3775
    %3818 = vmatprep.subr.mxu0 0.0
    %3819 = vmatpush2.msra.mxu0 0.0
    %3820 = vmatprep.subr.mxu0 0.0
    %3821 = vmatpush2.msra.mxu0 0.0
    %3822 = vmatprep.subr.mxu0 0.0
    %3823 = vmatpush2.msra.mxu0 0.0
    %3824 = vmatprep.subr.mxu0 0.0
    %3825 = vmatpush2.msra.mxu0 0.0
    %3826 = vmatprep.subr.mxu0 0.0
    %3827 = vmatpush2.msra.mxu0 0.0
    %3828 = vmatprep.subr.mxu0 0.0
    %3829 = vmatpush2.msra.mxu0 0.0
    %3830 = vmatprep.subr.mxu0 0.0
    %3831 = vmatpush2.msra.mxu0 0.0
    %3832 = vmatprep.subr.mxu0 0.0
    %3833 = vmatpush2.msra.mxu0 0.0
    %3834 = vmatprep.subr.mxu0 0.0
    %3835 = vmatpush2.msra.mxu0 0.0
    %3836 = vmatprep.subr.mxu0 0.0
    %3837 = vmatpush2.msra.mxu0 0.0
    %3838 = vmatprep.subr.mxu0 0.0
    %3839 = vmatpush2.msra.mxu0 0.0
    %3840 = vmatprep.subr.mxu0 0.0
    %3841 = vmatpush2.msra.mxu0 0.0
    %3842 = vmatprep.subr.mxu0 0.0
    %3843 = vmatpush2.msra.mxu0 0.0
    %3844 = vmatprep.subr.mxu0 0.0
    %3845 = vmatpush2.msra.mxu0 0.0
    %3846 = vmatprep.subr.mxu0 0.0
    %3847 = vmatpush2.msra.mxu0 0.0
    %3848 = vmatprep.subr.mxu0 0.0
    %3849 = vmatpush2.msra.mxu0 0.0
    %3850 = vmatprep.mubr.f32.mxu0 0.0
    %3851 = vmatmul.mubr.f32.gmra.mxu0 %v3781
    %v3852 = vpop.f32.mrf.mxu0
    %v3853 = vadd.f32 0.0, %v3852
    %v3854 = vpop.f32.mrf.mxu0
    %3855 = vmatprep.mubr.f32.mxu0 0.0
    %3856 = vmatmul.mubr.f32.gmra.mxu0 %v3784
    %v3857 = vpop.f32.mrf.mxu0
    %v3858 = vadd.f32 0.0, %v3857
    %v3859 = vpop.f32.mrf.mxu0
    %3860 = vdwg.mxu0
    %3861 = vrot.lane.b32.xlu0 %v3659, 120
    %v3862 = vpop.permute.xlu0 %3861
    %3863 = vrot.lane.b32.xlu0 %v3660, 120
    %v3864 = vpop.permute.xlu0 %3863
    %3865 = vrot.lane.b32.xlu0 %v3651, 88
    %v3866 = vpop.permute.xlu0 %3865
    %3867 = vrot.lane.b32.xlu0 %v3656, 88
    %v3868 = vpop.permute.xlu0 %3867
    %v3869 = vsel %vm571, %v3862, 0
    %v3871 = vsel %vm571, %v3864, 0
    %v3873 = vsel %vm571, %v3866, 0
    %v3875 = vsel %vm571, %v3868, 0
    %3877 = vmatprep.subr.mxu0 0.0
    %3878 = vmatpush1.xpose.msra.mxu0 0.0
    %3879 = vmatprep.subr.mxu0 0.0
    %3880 = vmatpush1.xpose.msra.mxu0 0.0
    %3881 = vmatprep.subr.mxu0 0.0
    %3882 = vmatpush1.xpose.msra.mxu0 0.0
    %3883 = vmatprep.subr.mxu0 0.0
    %3884 = vmatpush1.xpose.msra.mxu0 0.0
    %3885 = vmatprep.subr.mxu0 0.0
    %3886 = vmatpush1.xpose.msra.mxu0 0.0
    %3887 = vmatprep.subr.mxu0 0.0
    %3888 = vmatpush1.xpose.msra.mxu0 0.0
    %3889 = vmatprep.subr.mxu0 0.0
    %3890 = vmatpush1.xpose.msra.mxu0 0.0
    %3891 = vmatprep.subr.mxu0 0.0
    %3892 = vmatpush1.xpose.msra.mxu0 0.0
    %3893 = vmatprep.subr.mxu0 0.0
    %3894 = vmatpush1.xpose.msra.mxu0 0.0
    %3895 = vmatprep.subr.mxu0 0.0
    %3896 = vmatpush1.xpose.msra.mxu0 0.0
    %3897 = vmatprep.subr.mxu0 0.0
    %3898 = vmatpush1.xpose.msra.mxu0 0.0
    %3899 = vmatprep.subr.mxu0 0.0
    %3900 = vmatpush1.xpose.msra.mxu0 0.0
    %3901 = vmatprep.subr.mxu0 0.0
    %3902 = vmatpush1.xpose.msra.mxu0 0.0
    %3903 = vmatprep.subr.mxu0 0.0
    %3904 = vmatpush1.xpose.msra.mxu0 0.0
    %3905 = vmatprep.subr.mxu0 0.0
    %3906 = vmatpush1.xpose.msra.mxu0 %v3875
    %3907 = vmatprep.subr.mxu0 0.0
    %3908 = vmatpush1.xpose.msra.mxu0 %v3873
    %3909 = vmatprep.subr.mxu0 0.0
    %3910 = vmatpush2.xpose.msra.mxu0 0.0
    %3911 = vmatprep.subr.mxu0 0.0
    %3912 = vmatpush2.xpose.msra.mxu0 0.0
    %3913 = vmatprep.subr.mxu0 0.0
    %3914 = vmatpush2.xpose.msra.mxu0 0.0
    %3915 = vmatprep.subr.mxu0 0.0
    %3916 = vmatpush2.xpose.msra.mxu0 0.0
    %3917 = vmatprep.subr.mxu0 0.0
    %3918 = vmatpush2.xpose.msra.mxu0 0.0
    %3919 = vmatprep.subr.mxu0 0.0
    %3920 = vmatpush2.xpose.msra.mxu0 0.0
    %3921 = vmatprep.subr.mxu0 0.0
    %3922 = vmatpush2.xpose.msra.mxu0 0.0
    %3923 = vmatprep.subr.mxu0 0.0
    %3924 = vmatpush2.xpose.msra.mxu0 0.0
    %3925 = vmatprep.subr.mxu0 0.0
    %3926 = vmatpush2.xpose.msra.mxu0 0.0
    %3927 = vmatprep.subr.mxu0 0.0
    %3928 = vmatpush2.xpose.msra.mxu0 0.0
    %3929 = vmatprep.subr.mxu0 0.0
    %3930 = vmatpush2.xpose.msra.mxu0 0.0
    %3931 = vmatprep.subr.mxu0 0.0
    %3932 = vmatpush2.xpose.msra.mxu0 0.0
    %3933 = vmatprep.subr.mxu0 0.0
    %3934 = vmatpush2.xpose.msra.mxu0 0.0
    %3935 = vmatprep.subr.mxu0 0.0
    %3936 = vmatpush2.xpose.msra.mxu0 0.0
    %3937 = vmatprep.subr.mxu0 0.0
    %3938 = vmatpush2.xpose.msra.mxu0 0.0
    %3939 = vmatprep.subr.mxu0 0.0
    %3940 = vmatpush2.xpose.msra.mxu0 0.0
    %3941 = vmatprep.mubr.f32.mxu0 0.0
    %3942 = vmatmul.mubr.f32.gmra.mxu0 %v3869
    %v3943 = vpop.f32.mrf.mxu0
    %v3944 = vadd.f32 %v459, %v3943
    %v3945 = vpop.f32.mrf.mxu0
    %3946 = vmatprep.mubr.f32.mxu0 0.0
    %3947 = vmatmul.mubr.f32.gmra.mxu0 %v3871
    %v3948 = vpop.f32.mrf.mxu0
    %v3949 = vadd.f32 %v460, %v3948
    %v3950 = vpop.f32.mrf.mxu0
    %3951 = vdwg.mxu0
    %v3952 = vsel %vm657, %v3944, -inf
    %3953 = vmax.xlane.f32.xlu0 %v3952
    %v3954 = vpop.xlane.xlu0 %3953
    %v3955 = vsel %vm657, %v3949, -inf
    %3956 = vmax.xlane.f32.xlu0 %v3955
    %v3957 = vpop.xlane.xlu0 %3956
    %v3958 = vsub.f32 %v3944, %v3954
    %v3959 = vsub.f32 %v3949, %v3957
    %v3960 = vmul.f32 %v3958, 1.442695
    %v3961 = vpow.pop %v3960
    %v3962 = vmul.f32 %v3959, 1.442695
    %v3963 = vpow.pop %v3962
    %v3964 = vsel %vm657, %v3961, 0.0
    %3965 = vadd.xlane.f32.xlu0 %v3964
    %v3966 = vpop.xlane.xlu0 %3965
    %v3967 = vsel %vm657, %v3963, 0.0
    %3968 = vadd.xlane.f32.xlu0 %v3967
    %v3969 = vpop.xlane.xlu0 %3968
    %v3970 = vrcp.pop %v3966
    %v3971 = vrcp.pop %v3969
    %v3972 = vmul.f32 %v3961, %v3970
    %v3973 = vmul.f32 %v3963, %v3971
    %3974 = vrot.lane.b32.xlu0 %v3651, 56
    %v3975 = vpop.permute.xlu0 %3974
    %3976 = vrot.lane.b32.xlu0 %v3656, 56
    %v3977 = vpop.permute.xlu0 %3976
    %v3981 = vsel %vm657, %v3972, 0
    %v3984 = vsel %vm657, %v3973, 0
    %3986 = vmatprep.subr.mxu0 0.0
    %3987 = vmatpush1.msra.mxu0 0.0
    %3988 = vmatprep.subr.mxu0 0.0
    %3989 = vmatpush1.msra.mxu0 0.0
    %3990 = vmatprep.subr.mxu0 0.0
    %3991 = vmatpush1.msra.mxu0 0.0
    %3992 = vmatprep.subr.mxu0 0.0
    %3993 = vmatpush1.msra.mxu0 0.0
    %3994 = vmatprep.subr.mxu0 0.0
    %3995 = vmatpush1.msra.mxu0 0.0
    %3996 = vmatprep.subr.mxu0 0.0
    %3997 = vmatpush1.msra.mxu0 0.0
    %3998 = vmatprep.subr.mxu0 0.0
    %3999 = vmatpush1.msra.mxu0 0.0
    %4000 = vmatprep.subr.mxu0 0.0
    %4001 = vmatpush1.msra.mxu0 0.0
    %4002 = vmatprep.subr.mxu0 0.0
    %4003 = vmatpush1.msra.mxu0 0.0
    %4004 = vmatprep.subr.mxu0 0.0
    %4005 = vmatpush1.msra.mxu0 0.0
    %4006 = vmatprep.subr.mxu0 0.0
    %4007 = vmatpush1.msra.mxu0 0.0
    %4008 = vmatprep.subr.mxu0 0.0
    %4009 = vmatpush1.msra.mxu0 0.0
    %4010 = vmatprep.subr.mxu0 0.0
    %4011 = vmatpush1.msra.mxu0 0.0
    %4012 = vmatprep.subr.mxu0 0.0
    %4013 = vmatpush1.msra.mxu0 0.0
    %4014 = vmatprep.subr.mxu0 0.0
    %4015 = vmatpush1.msra.mxu0 %v3977
    %4016 = vmatprep.subr.mxu0 0.0
    %4017 = vmatpush1.msra.mxu0 %v3975
    %4018 = vmatprep.subr.mxu0 0.0
    %4019 = vmatpush2.msra.mxu0 0.0
    %4020 = vmatprep.subr.mxu0 0.0
    %4021 = vmatpush2.msra.mxu0 0.0
    %4022 = vmatprep.subr.mxu0 0.0
    %4023 = vmatpush2.msra.mxu0 0.0
    %4024 = vmatprep.subr.mxu0 0.0
    %4025 = vmatpush2.msra.mxu0 0.0
    %4026 = vmatprep.subr.mxu0 0.0
    %4027 = vmatpush2.msra.mxu0 0.0
    %4028 = vmatprep.subr.mxu0 0.0
    %4029 = vmatpush2.msra.mxu0 0.0
    %4030 = vmatprep.subr.mxu0 0.0
    %4031 = vmatpush2.msra.mxu0 0.0
    %4032 = vmatprep.subr.mxu0 0.0
    %4033 = vmatpush2.msra.mxu0 0.0
    %4034 = vmatprep.subr.mxu0 0.0
    %4035 = vmatpush2.msra.mxu0 0.0
    %4036 = vmatprep.subr.mxu0 0.0
    %4037 = vmatpush2.msra.mxu0 0.0
    %4038 = vmatprep.subr.mxu0 0.0
    %4039 = vmatpush2.msra.mxu0 0.0
    %4040 = vmatprep.subr.mxu0 0.0
    %4041 = vmatpush2.msra.mxu0 0.0
    %4042 = vmatprep.subr.mxu0 0.0
    %4043 = vmatpush2.msra.mxu0 0.0
    %4044 = vmatprep.subr.mxu0 0.0
    %4045 = vmatpush2.msra.mxu0 0.0
    %4046 = vmatprep.subr.mxu0 0.0
    %4047 = vmatpush2.msra.mxu0 0.0
    %4048 = vmatprep.subr.mxu0 0.0
    %4049 = vmatpush2.msra.mxu0 0.0
    %4050 = vmatprep.mubr.f32.mxu0 0.0
    %4051 = vmatmul.mubr.f32.gmra.mxu0 %v3981
    %v4052 = vpop.f32.mrf.mxu0
    %v4053 = vadd.f32 0.0, %v4052
    %v4054 = vpop.f32.mrf.mxu0
    %4055 = vmatprep.mubr.f32.mxu0 0.0
    %4056 = vmatmul.mubr.f32.gmra.mxu0 %v3984
    %v4057 = vpop.f32.mrf.mxu0
    %v4058 = vadd.f32 0.0, %v4057
    %v4059 = vpop.f32.mrf.mxu0
    %4060 = vdwg.mxu0
    %v4062 = vsel %vm571, %v4053, 0
    %v4065 = vsel %vm571, %v4058, 0
    %4067 = vmatprep.subr.mxu0 0.0
    %4068 = vmatpush1.msra.mxu0 0.0
    %4069 = vmatprep.subr.mxu0 0.0
    %4070 = vmatpush1.msra.mxu0 0.0
    %4071 = vmatprep.subr.mxu0 0.0
    %4072 = vmatpush1.msra.mxu0 0.0
    %4073 = vmatprep.subr.mxu0 0.0
    %4074 = vmatpush1.msra.mxu0 0.0
    %4075 = vmatprep.subr.mxu0 0.0
    %4076 = vmatpush1.msra.mxu0 0.0
    %4077 = vmatprep.subr.mxu0 0.0
    %4078 = vmatpush1.msra.mxu0 0.0
    %4079 = vmatprep.subr.mxu0 0.0
    %4080 = vmatpush1.msra.mxu0 0.0
    %4081 = vmatprep.subr.mxu0 0.0
    %4082 = vmatpush1.msra.mxu0 0.0
    %4083 = vmatprep.subr.mxu0 0.0
    %4084 = vmatpush1.msra.mxu0 0.0
    %4085 = vmatprep.subr.mxu0 0.0
    %4086 = vmatpush1.msra.mxu0 0.0
    %4087 = vmatprep.subr.mxu0 0.0
    %4088 = vmatpush1.msra.mxu0 0.0
    %4089 = vmatprep.subr.mxu0 0.0
    %4090 = vmatpush1.msra.mxu0 0.0
    %4091 = vmatprep.subr.mxu0 0.0
    %4092 = vmatpush1.msra.mxu0 0.0
    %4093 = vmatprep.subr.mxu0 0.0
    %4094 = vmatpush1.msra.mxu0 0.0
    %4095 = vmatprep.subr.mxu0 0.0
    %4096 = vmatpush1.msra.mxu0 0.0
    %4097 = vmatprep.subr.mxu0 0.0
    %4098 = vmatpush1.msra.mxu0 %v3568
    %4099 = vmatprep.subr.mxu0 0.0
    %4100 = vmatpush2.msra.mxu0 0.0
    %4101 = vmatprep.subr.mxu0 0.0
    %4102 = vmatpush2.msra.mxu0 0.0
    %4103 = vmatprep.subr.mxu0 0.0
    %4104 = vmatpush2.msra.mxu0 0.0
    %4105 = vmatprep.subr.mxu0 0.0
    %4106 = vmatpush2.msra.mxu0 0.0
    %4107 = vmatprep.subr.mxu0 0.0
    %4108 = vmatpush2.msra.mxu0 0.0
    %4109 = vmatprep.subr.mxu0 0.0
    %4110 = vmatpush2.msra.mxu0 0.0
    %4111 = vmatprep.subr.mxu0 0.0
    %4112 = vmatpush2.msra.mxu0 0.0
    %4113 = vmatprep.subr.mxu0 0.0
    %4114 = vmatpush2.msra.mxu0 0.0
    %4115 = vmatprep.subr.mxu0 0.0
    %4116 = vmatpush2.msra.mxu0 0.0
    %4117 = vmatprep.subr.mxu0 0.0
    %4118 = vmatpush2.msra.mxu0 0.0
    %4119 = vmatprep.subr.mxu0 0.0
    %4120 = vmatpush2.msra.mxu0 0.0
    %4121 = vmatprep.subr.mxu0 0.0
    %4122 = vmatpush2.msra.mxu0 0.0
    %4123 = vmatprep.subr.mxu0 0.0
    %4124 = vmatpush2.msra.mxu0 0.0
    %4125 = vmatprep.subr.mxu0 0.0
    %4126 = vmatpush2.msra.mxu0 0.0
    %4127 = vmatprep.subr.mxu0 0.0
    %4128 = vmatpush2.msra.mxu0 0.0
    %4129 = vmatprep.subr.mxu0 0.0
    %4130 = vmatpush2.msra.mxu0 0.0
    %4131 = vmatprep.mubr.f32.mxu0 0.0
    %4132 = vmatmul.mubr.f32.gmra.mxu0 %v4062
    %v4133 = vpop.f32.mrf.mxu0
    %v4134 = vadd.f32 0.0, %v4133
    %v4135 = vpop.f32.mrf.mxu0
    %4136 = vmatprep.mubr.f32.mxu0 0.0
    %4137 = vmatmul.mubr.f32.gmra.mxu0 %v4065
    %v4138 = vpop.f32.mrf.mxu0
    %v4139 = vadd.f32 0.0, %v4138
    %v4140 = vpop.f32.mrf.mxu0
    %4141 = vdwg.mxu0
    %v4143 = vsel %vm571, %v3853, 0
    %v4146 = vsel %vm571, %v3858, 0
    %4148 = vmatprep.subr.mxu0 0.0
    %4149 = vmatpush1.msra.mxu0 0.0
    %4150 = vmatprep.subr.mxu0 0.0
    %4151 = vmatpush1.msra.mxu0 0.0
    %4152 = vmatprep.subr.mxu0 0.0
    %4153 = vmatpush1.msra.mxu0 0.0
    %4154 = vmatprep.subr.mxu0 0.0
    %4155 = vmatpush1.msra.mxu0 0.0
    %4156 = vmatprep.subr.mxu0 0.0
    %4157 = vmatpush1.msra.mxu0 0.0
    %4158 = vmatprep.subr.mxu0 0.0
    %4159 = vmatpush1.msra.mxu0 0.0
    %4160 = vmatprep.subr.mxu0 0.0
    %4161 = vmatpush1.msra.mxu0 0.0
    %4162 = vmatprep.subr.mxu0 0.0
    %4163 = vmatpush1.msra.mxu0 0.0
    %4164 = vmatprep.subr.mxu0 0.0
    %4165 = vmatpush1.msra.mxu0 0.0
    %4166 = vmatprep.subr.mxu0 0.0
    %4167 = vmatpush1.msra.mxu0 0.0
    %4168 = vmatprep.subr.mxu0 0.0
    %4169 = vmatpush1.msra.mxu0 0.0
    %4170 = vmatprep.subr.mxu0 0.0
    %4171 = vmatpush1.msra.mxu0 0.0
    %4172 = vmatprep.subr.mxu0 0.0
    %4173 = vmatpush1.msra.mxu0 0.0
    %4174 = vmatprep.subr.mxu0 0.0
    %4175 = vmatpush1.msra.mxu0 0.0
    %4176 = vmatprep.subr.mxu0 0.0
    %4177 = vmatpush1.msra.mxu0 0.0
    %4178 = vmatprep.subr.mxu0 0.0
    %4179 = vmatpush1.msra.mxu0 %v3567
    %4180 = vmatprep.subr.mxu0 0.0
    %4181 = vmatpush2.msra.mxu0 0.0
    %4182 = vmatprep.subr.mxu0 0.0
    %4183 = vmatpush2.msra.mxu0 0.0
    %4184 = vmatprep.subr.mxu0 0.0
    %4185 = vmatpush2.msra.mxu0 0.0
    %4186 = vmatprep.subr.mxu0 0.0
    %4187 = vmatpush2.msra.mxu0 0.0
    %4188 = vmatprep.subr.mxu0 0.0
    %4189 = vmatpush2.msra.mxu0 0.0
    %4190 = vmatprep.subr.mxu0 0.0
    %4191 = vmatpush2.msra.mxu0 0.0
    %4192 = vmatprep.subr.mxu0 0.0
    %4193 = vmatpush2.msra.mxu0 0.0
    %4194 = vmatprep.subr.mxu0 0.0
    %4195 = vmatpush2.msra.mxu0 0.0
    %4196 = vmatprep.subr.mxu0 0.0
    %4197 = vmatpush2.msra.mxu0 0.0
    %4198 = vmatprep.subr.mxu0 0.0
    %4199 = vmatpush2.msra.mxu0 0.0
    %4200 = vmatprep.subr.mxu0 0.0
    %4201 = vmatpush2.msra.mxu0 0.0
    %4202 = vmatprep.subr.mxu0 0.0
    %4203 = vmatpush2.msra.mxu0 0.0
    %4204 = vmatprep.subr.mxu0 0.0
    %4205 = vmatpush2.msra.mxu0 0.0
    %4206 = vmatprep.subr.mxu0 0.0
    %4207 = vmatpush2.msra.mxu0 0.0
    %4208 = vmatprep.subr.mxu0 0.0
    %4209 = vmatpush2.msra.mxu0 0.0
    %4210 = vmatprep.subr.mxu0 0.0
    %4211 = vmatpush2.msra.mxu0 0.0
    %4212 = vmatprep.mubr.f32.mxu0 0.0
    %4213 = vmatmul.mubr.f32.gmra.mxu0 %v4143
    %v4214 = vpop.f32.mrf.mxu0
    %v4215 = vadd.f32 %v4134, %v4214
    %v4216 = vpop.f32.mrf.mxu0
    %4217 = vmatprep.mubr.f32.mxu0 0.0
    %4218 = vmatmul.mubr.f32.gmra.mxu0 %v4146
    %v4219 = vpop.f32.mrf.mxu0
    %v4220 = vadd.f32 %v4139, %v4219
    %v4221 = vpop.f32.mrf.mxu0
    %4222 = vdwg.mxu0
    %4223 = vrot.lane.b32.xlu0 %v3659, 112
    %v4224 = vpop.permute.xlu0 %4223
    %4225 = vrot.lane.b32.xlu0 %v3660, 112
    %v4226 = vpop.permute.xlu0 %4225
    %4227 = vrot.lane.b32.xlu0 %v3651, 80
    %v4228 = vpop.permute.xlu0 %4227
    %4229 = vrot.lane.b32.xlu0 %v3656, 80
    %v4230 = vpop.permute.xlu0 %4229
    %v4231 = vsel %vm571, %v4224, 0
    %v4233 = vsel %vm571, %v4226, 0
    %v4235 = vsel %vm571, %v4228, 0
    %v4237 = vsel %vm571, %v4230, 0
    %4239 = vmatprep.subr.mxu0 0.0
    %4240 = vmatpush1.xpose.msra.mxu0 0.0
    %4241 = vmatprep.subr.mxu0 0.0
    %4242 = vmatpush1.xpose.msra.mxu0 0.0
    %4243 = vmatprep.subr.mxu0 0.0
    %4244 = vmatpush1.xpose.msra.mxu0 0.0
    %4245 = vmatprep.subr.mxu0 0.0
    %4246 = vmatpush1.xpose.msra.mxu0 0.0
    %4247 = vmatprep.subr.mxu0 0.0
    %4248 = vmatpush1.xpose.msra.mxu0 0.0
    %4249 = vmatprep.subr.mxu0 0.0
    %4250 = vmatpush1.xpose.msra.mxu0 0.0
    %4251 = vmatprep.subr.mxu0 0.0
    %4252 = vmatpush1.xpose.msra.mxu0 0.0
    %4253 = vmatprep.subr.mxu0 0.0
    %4254 = vmatpush1.xpose.msra.mxu0 0.0
    %4255 = vmatprep.subr.mxu0 0.0
    %4256 = vmatpush1.xpose.msra.mxu0 0.0
    %4257 = vmatprep.subr.mxu0 0.0
    %4258 = vmatpush1.xpose.msra.mxu0 0.0
    %4259 = vmatprep.subr.mxu0 0.0
    %4260 = vmatpush1.xpose.msra.mxu0 0.0
    %4261 = vmatprep.subr.mxu0 0.0
    %4262 = vmatpush1.xpose.msra.mxu0 0.0
    %4263 = vmatprep.subr.mxu0 0.0
    %4264 = vmatpush1.xpose.msra.mxu0 0.0
    %4265 = vmatprep.subr.mxu0 0.0
    %4266 = vmatpush1.xpose.msra.mxu0 0.0
    %4267 = vmatprep.subr.mxu0 0.0
    %4268 = vmatpush1.xpose.msra.mxu0 %v4237
    %4269 = vmatprep.subr.mxu0 0.0
    %4270 = vmatpush1.xpose.msra.mxu0 %v4235
    %4271 = vmatprep.subr.mxu0 0.0
    %4272 = vmatpush2.xpose.msra.mxu0 0.0
    %4273 = vmatprep.subr.mxu0 0.0
    %4274 = vmatpush2.xpose.msra.mxu0 0.0
    %4275 = vmatprep.subr.mxu0 0.0
    %4276 = vmatpush2.xpose.msra.mxu0 0.0
    %4277 = vmatprep.subr.mxu0 0.0
    %4278 = vmatpush2.xpose.msra.mxu0 0.0
    %4279 = vmatprep.subr.mxu0 0.0
    %4280 = vmatpush2.xpose.msra.mxu0 0.0
    %4281 = vmatprep.subr.mxu0 0.0
    %4282 = vmatpush2.xpose.msra.mxu0 0.0
    %4283 = vmatprep.subr.mxu0 0.0
    %4284 = vmatpush2.xpose.msra.mxu0 0.0
    %4285 = vmatprep.subr.mxu0 0.0
    %4286 = vmatpush2.xpose.msra.mxu0 0.0
    %4287 = vmatprep.subr.mxu0 0.0
    %4288 = vmatpush2.xpose.msra.mxu0 0.0
    %4289 = vmatprep.subr.mxu0 0.0
    %4290 = vmatpush2.xpose.msra.mxu0 0.0
    %4291 = vmatprep.subr.mxu0 0.0
    %4292 = vmatpush2.xpose.msra.mxu0 0.0
    %4293 = vmatprep.subr.mxu0 0.0
    %4294 = vmatpush2.xpose.msra.mxu0 0.0
    %4295 = vmatprep.subr.mxu0 0.0
    %4296 = vmatpush2.xpose.msra.mxu0 0.0
    %4297 = vmatprep.subr.mxu0 0.0
    %4298 = vmatpush2.xpose.msra.mxu0 0.0
    %4299 = vmatprep.subr.mxu0 0.0
    %4300 = vmatpush2.xpose.msra.mxu0 0.0
    %4301 = vmatprep.subr.mxu0 0.0
    %4302 = vmatpush2.xpose.msra.mxu0 0.0
    %4303 = vmatprep.mubr.f32.mxu0 0.0
    %4304 = vmatmul.mubr.f32.gmra.mxu0 %v4231
    %v4305 = vpop.f32.mrf.mxu0
    %v4306 = vadd.f32 %v459, %v4305
    %v4307 = vpop.f32.mrf.mxu0
    %4308 = vmatprep.mubr.f32.mxu0 0.0
    %4309 = vmatmul.mubr.f32.gmra.mxu0 %v4233
    %v4310 = vpop.f32.mrf.mxu0
    %v4311 = vadd.f32 %v460, %v4310
    %v4312 = vpop.f32.mrf.mxu0
    %4313 = vdwg.mxu0
    %v4314 = vsel %vm657, %v4306, -inf
    %4315 = vmax.xlane.f32.xlu0 %v4314
    %v4316 = vpop.xlane.xlu0 %4315
    %v4317 = vsel %vm657, %v4311, -inf
    %4318 = vmax.xlane.f32.xlu0 %v4317
    %v4319 = vpop.xlane.xlu0 %4318
    %v4320 = vsub.f32 %v4306, %v4316
    %v4321 = vsub.f32 %v4311, %v4319
    %v4322 = vmul.f32 %v4320, 1.442695
    %v4323 = vpow.pop %v4322
    %v4324 = vmul.f32 %v4321, 1.442695
    %v4325 = vpow.pop %v4324
    %v4326 = vsel %vm657, %v4323, 0.0
    %4327 = vadd.xlane.f32.xlu0 %v4326
    %v4328 = vpop.xlane.xlu0 %4327
    %v4329 = vsel %vm657, %v4325, 0.0
    %4330 = vadd.xlane.f32.xlu0 %v4329
    %v4331 = vpop.xlane.xlu0 %4330
    %v4332 = vrcp.pop %v4328
    %v4333 = vrcp.pop %v4331
    %v4334 = vmul.f32 %v4323, %v4332
    %v4335 = vmul.f32 %v4325, %v4333
    %4336 = vrot.lane.b32.xlu0 %v3651, 48
    %v4337 = vpop.permute.xlu0 %4336
    %4338 = vrot.lane.b32.xlu0 %v3656, 48
    %v4339 = vpop.permute.xlu0 %4338
    %v4343 = vsel %vm657, %v4334, 0
    %v4346 = vsel %vm657, %v4335, 0
    %4348 = vmatprep.subr.mxu0 0.0
    %4349 = vmatpush1.msra.mxu0 0.0
    %4350 = vmatprep.subr.mxu0 0.0
    %4351 = vmatpush1.msra.mxu0 0.0
    %4352 = vmatprep.subr.mxu0 0.0
    %4353 = vmatpush1.msra.mxu0 0.0
    %4354 = vmatprep.subr.mxu0 0.0
    %4355 = vmatpush1.msra.mxu0 0.0
    %4356 = vmatprep.subr.mxu0 0.0
    %4357 = vmatpush1.msra.mxu0 0.0
    %4358 = vmatprep.subr.mxu0 0.0
    %4359 = vmatpush1.msra.mxu0 0.0
    %4360 = vmatprep.subr.mxu0 0.0
    %4361 = vmatpush1.msra.mxu0 0.0
    %4362 = vmatprep.subr.mxu0 0.0
    %4363 = vmatpush1.msra.mxu0 0.0
    %4364 = vmatprep.subr.mxu0 0.0
    %4365 = vmatpush1.msra.mxu0 0.0
    %4366 = vmatprep.subr.mxu0 0.0
    %4367 = vmatpush1.msra.mxu0 0.0
    %4368 = vmatprep.subr.mxu0 0.0
    %4369 = vmatpush1.msra.mxu0 0.0
    %4370 = vmatprep.subr.mxu0 0.0
    %4371 = vmatpush1.msra.mxu0 0.0
    %4372 = vmatprep.subr.mxu0 0.0
    %4373 = vmatpush1.msra.mxu0 0.0
    %4374 = vmatprep.subr.mxu0 0.0
    %4375 = vmatpush1.msra.mxu0 0.0
    %4376 = vmatprep.subr.mxu0 0.0
    %4377 = vmatpush1.msra.mxu0 %v4339
    %4378 = vmatprep.subr.mxu0 0.0
    %4379 = vmatpush1.msra.mxu0 %v4337
    %4380 = vmatprep.subr.mxu0 0.0
    %4381 = vmatpush2.msra.mxu0 0.0
    %4382 = vmatprep.subr.mxu0 0.0
    %4383 = vmatpush2.msra.mxu0 0.0
    %4384 = vmatprep.subr.mxu0 0.0
    %4385 = vmatpush2.msra.mxu0 0.0
    %4386 = vmatprep.subr.mxu0 0.0
    %4387 = vmatpush2.msra.mxu0 0.0
    %4388 = vmatprep.subr.mxu0 0.0
    %4389 = vmatpush2.msra.mxu0 0.0
    %4390 = vmatprep.subr.mxu0 0.0
    %4391 = vmatpush2.msra.mxu0 0.0
    %4392 = vmatprep.subr.mxu0 0.0
    %4393 = vmatpush2.msra.mxu0 0.0
    %4394 = vmatprep.subr.mxu0 0.0
    %4395 = vmatpush2.msra.mxu0 0.0
    %4396 = vmatprep.subr.mxu0 0.0
    %4397 = vmatpush2.msra.mxu0 0.0
    %4398 = vmatprep.subr.mxu0 0.0
    %4399 = vmatpush2.msra.mxu0 0.0
    %4400 = vmatprep.subr.mxu0 0.0
    %4401 = vmatpush2.msra.mxu0 0.0
    %4402 = vmatprep.subr.mxu0 0.0
    %4403 = vmatpush2.msra.mxu0 0.0
    %4404 = vmatprep.subr.mxu0 0.0
    %4405 = vmatpush2.msra.mxu0 0.0
    %4406 = vmatprep.subr.mxu0 0.0
    %4407 = vmatpush2.msra.mxu0 0.0
    %4408 = vmatprep.subr.mxu0 0.0
    %4409 = vmatpush2.msra.mxu0 0.0
    %4410 = vmatprep.subr.mxu0 0.0
    %4411 = vmatpush2.msra.mxu0 0.0
    %4412 = vmatprep.mubr.f32.mxu0 0.0
    %4413 = vmatmul.mubr.f32.gmra.mxu0 %v4343
    %v4414 = vpop.f32.mrf.mxu0
    %v4415 = vadd.f32 0.0, %v4414
    %v4416 = vpop.f32.mrf.mxu0
    %4417 = vmatprep.mubr.f32.mxu0 0.0
    %4418 = vmatmul.mubr.f32.gmra.mxu0 %v4346
    %v4419 = vpop.f32.mrf.mxu0
    %v4420 = vadd.f32 0.0, %v4419
    %v4421 = vpop.f32.mrf.mxu0
    %4422 = vdwg.mxu0
    %v4424 = vsel %vm571, %v4415, 0
    %v4427 = vsel %vm571, %v4420, 0
    %4429 = vmatprep.subr.mxu0 0.0
    %4430 = vmatpush1.msra.mxu0 0.0
    %4431 = vmatprep.subr.mxu0 0.0
    %4432 = vmatpush1.msra.mxu0 0.0
    %4433 = vmatprep.subr.mxu0 0.0
    %4434 = vmatpush1.msra.mxu0 0.0
    %4435 = vmatprep.subr.mxu0 0.0
    %4436 = vmatpush1.msra.mxu0 0.0
    %4437 = vmatprep.subr.mxu0 0.0
    %4438 = vmatpush1.msra.mxu0 0.0
    %4439 = vmatprep.subr.mxu0 0.0
    %4440 = vmatpush1.msra.mxu0 0.0
    %4441 = vmatprep.subr.mxu0 0.0
    %4442 = vmatpush1.msra.mxu0 0.0
    %4443 = vmatprep.subr.mxu0 0.0
    %4444 = vmatpush1.msra.mxu0 0.0
    %4445 = vmatprep.subr.mxu0 0.0
    %4446 = vmatpush1.msra.mxu0 0.0
    %4447 = vmatprep.subr.mxu0 0.0
    %4448 = vmatpush1.msra.mxu0 0.0
    %4449 = vmatprep.subr.mxu0 0.0
    %4450 = vmatpush1.msra.mxu0 0.0
    %4451 = vmatprep.subr.mxu0 0.0
    %4452 = vmatpush1.msra.mxu0 0.0
    %4453 = vmatprep.subr.mxu0 0.0
    %4454 = vmatpush1.msra.mxu0 0.0
    %4455 = vmatprep.subr.mxu0 0.0
    %4456 = vmatpush1.msra.mxu0 0.0
    %4457 = vmatprep.subr.mxu0 0.0
    %4458 = vmatpush1.msra.mxu0 0.0
    %4459 = vmatprep.subr.mxu0 0.0
    %4460 = vmatpush1.msra.mxu0 %v3569
    %4461 = vmatprep.subr.mxu0 0.0
    %4462 = vmatpush2.msra.mxu0 0.0
    %4463 = vmatprep.subr.mxu0 0.0
    %4464 = vmatpush2.msra.mxu0 0.0
    %4465 = vmatprep.subr.mxu0 0.0
    %4466 = vmatpush2.msra.mxu0 0.0
    %4467 = vmatprep.subr.mxu0 0.0
    %4468 = vmatpush2.msra.mxu0 0.0
    %4469 = vmatprep.subr.mxu0 0.0
    %4470 = vmatpush2.msra.mxu0 0.0
    %4471 = vmatprep.subr.mxu0 0.0
    %4472 = vmatpush2.msra.mxu0 0.0
    %4473 = vmatprep.subr.mxu0 0.0
    %4474 = vmatpush2.msra.mxu0 0.0
    %4475 = vmatprep.subr.mxu0 0.0
    %4476 = vmatpush2.msra.mxu0 0.0
    %4477 = vmatprep.subr.mxu0 0.0
    %4478 = vmatpush2.msra.mxu0 0.0
    %4479 = vmatprep.subr.mxu0 0.0
    %4480 = vmatpush2.msra.mxu0 0.0
    %4481 = vmatprep.subr.mxu0 0.0
    %4482 = vmatpush2.msra.mxu0 0.0
    %4483 = vmatprep.subr.mxu0 0.0
    %4484 = vmatpush2.msra.mxu0 0.0
    %4485 = vmatprep.subr.mxu0 0.0
    %4486 = vmatpush2.msra.mxu0 0.0
    %4487 = vmatprep.subr.mxu0 0.0
    %4488 = vmatpush2.msra.mxu0 0.0
    %4489 = vmatprep.subr.mxu0 0.0
    %4490 = vmatpush2.msra.mxu0 0.0
    %4491 = vmatprep.subr.mxu0 0.0
    %4492 = vmatpush2.msra.mxu0 0.0
    %4493 = vmatprep.mubr.f32.mxu0 0.0
    %4494 = vmatmul.mubr.f32.gmra.mxu0 %v4424
    %v4495 = vpop.f32.mrf.mxu0
    %v4496 = vadd.f32 0.0, %v4495
    %v4497 = vpop.f32.mrf.mxu0
    %4498 = vmatprep.mubr.f32.mxu0 0.0
    %4499 = vmatmul.mubr.f32.gmra.mxu0 %v4427
    %v4500 = vpop.f32.mrf.mxu0
    %v4501 = vadd.f32 0.0, %v4500
    %v4502 = vpop.f32.mrf.mxu0
    %4503 = vdwg.mxu0
    %v4504 = vadd.f32 %v4215, %v4496
    %v4505 = vadd.f32 %v4220, %v4501
    %4506 = vrot.lane.b32.xlu0 %v3659, 104
    %v4507 = vpop.permute.xlu0 %4506
    %4508 = vrot.lane.b32.xlu0 %v3660, 104
    %v4509 = vpop.permute.xlu0 %4508
    %4510 = vrot.lane.b32.xlu0 %v3651, 72
    %v4511 = vpop.permute.xlu0 %4510
    %4512 = vrot.lane.b32.xlu0 %v3656, 72
    %v4513 = vpop.permute.xlu0 %4512
    %v4514 = vsel %vm571, %v4507, 0
    %v4516 = vsel %vm571, %v4509, 0
    %v4518 = vsel %vm571, %v4511, 0
    %v4520 = vsel %vm571, %v4513, 0
    %4522 = vmatprep.subr.mxu0 0.0
    %4523 = vmatpush1.xpose.msra.mxu0 0.0
    %4524 = vmatprep.subr.mxu0 0.0
    %4525 = vmatpush1.xpose.msra.mxu0 0.0
    %4526 = vmatprep.subr.mxu0 0.0
    %4527 = vmatpush1.xpose.msra.mxu0 0.0
    %4528 = vmatprep.subr.mxu0 0.0
    %4529 = vmatpush1.xpose.msra.mxu0 0.0
    %4530 = vmatprep.subr.mxu0 0.0
    %4531 = vmatpush1.xpose.msra.mxu0 0.0
    %4532 = vmatprep.subr.mxu0 0.0
    %4533 = vmatpush1.xpose.msra.mxu0 0.0
    %4534 = vmatprep.subr.mxu0 0.0
    %4535 = vmatpush1.xpose.msra.mxu0 0.0
    %4536 = vmatprep.subr.mxu0 0.0
    %4537 = vmatpush1.xpose.msra.mxu0 0.0
    %4538 = vmatprep.subr.mxu0 0.0
    %4539 = vmatpush1.xpose.msra.mxu0 0.0
    %4540 = vmatprep.subr.mxu0 0.0
    %4541 = vmatpush1.xpose.msra.mxu0 0.0
    %4542 = vmatprep.subr.mxu0 0.0
    %4543 = vmatpush1.xpose.msra.mxu0 0.0
    %4544 = vmatprep.subr.mxu0 0.0
    %4545 = vmatpush1.xpose.msra.mxu0 0.0
    %4546 = vmatprep.subr.mxu0 0.0
    %4547 = vmatpush1.xpose.msra.mxu0 0.0
    %4548 = vmatprep.subr.mxu0 0.0
    %4549 = vmatpush1.xpose.msra.mxu0 0.0
    %4550 = vmatprep.subr.mxu0 0.0
    %4551 = vmatpush1.xpose.msra.mxu0 %v4520
    %4552 = vmatprep.subr.mxu0 0.0
    %4553 = vmatpush1.xpose.msra.mxu0 %v4518
    %4554 = vmatprep.subr.mxu0 0.0
    %4555 = vmatpush2.xpose.msra.mxu0 0.0
    %4556 = vmatprep.subr.mxu0 0.0
    %4557 = vmatpush2.xpose.msra.mxu0 0.0
    %4558 = vmatprep.subr.mxu0 0.0
    %4559 = vmatpush2.xpose.msra.mxu0 0.0
    %4560 = vmatprep.subr.mxu0 0.0
    %4561 = vmatpush2.xpose.msra.mxu0 0.0
    %4562 = vmatprep.subr.mxu0 0.0
    %4563 = vmatpush2.xpose.msra.mxu0 0.0
    %4564 = vmatprep.subr.mxu0 0.0
    %4565 = vmatpush2.xpose.msra.mxu0 0.0
    %4566 = vmatprep.subr.mxu0 0.0
    %4567 = vmatpush2.xpose.msra.mxu0 0.0
    %4568 = vmatprep.subr.mxu0 0.0
    %4569 = vmatpush2.xpose.msra.mxu0 0.0
    %4570 = vmatprep.subr.mxu0 0.0
    %4571 = vmatpush2.xpose.msra.mxu0 0.0
    %4572 = vmatprep.subr.mxu0 0.0
    %4573 = vmatpush2.xpose.msra.mxu0 0.0
    %4574 = vmatprep.subr.mxu0 0.0
    %4575 = vmatpush2.xpose.msra.mxu0 0.0
    %4576 = vmatprep.subr.mxu0 0.0
    %4577 = vmatpush2.xpose.msra.mxu0 0.0
    %4578 = vmatprep.subr.mxu0 0.0
    %4579 = vmatpush2.xpose.msra.mxu0 0.0
    %4580 = vmatprep.subr.mxu0 0.0
    %4581 = vmatpush2.xpose.msra.mxu0 0.0
    %4582 = vmatprep.subr.mxu0 0.0
    %4583 = vmatpush2.xpose.msra.mxu0 0.0
    %4584 = vmatprep.subr.mxu0 0.0
    %4585 = vmatpush2.xpose.msra.mxu0 0.0
    %4586 = vmatprep.mubr.f32.mxu0 0.0
    %4587 = vmatmul.mubr.f32.gmra.mxu0 %v4514
    %v4588 = vpop.f32.mrf.mxu0
    %v4589 = vadd.f32 %v459, %v4588
    %v4590 = vpop.f32.mrf.mxu0
    %4591 = vmatprep.mubr.f32.mxu0 0.0
    %4592 = vmatmul.mubr.f32.gmra.mxu0 %v4516
    %v4593 = vpop.f32.mrf.mxu0
    %v4594 = vadd.f32 %v460, %v4593
    %v4595 = vpop.f32.mrf.mxu0
    %4596 = vdwg.mxu0
    %v4597 = vsel %vm657, %v4589, -inf
    %4598 = vmax.xlane.f32.xlu0 %v4597
    %v4599 = vpop.xlane.xlu0 %4598
    %v4600 = vsel %vm657, %v4594, -inf
    %4601 = vmax.xlane.f32.xlu0 %v4600
    %v4602 = vpop.xlane.xlu0 %4601
    %v4603 = vsub.f32 %v4589, %v4599
    %v4604 = vsub.f32 %v4594, %v4602
    %v4605 = vmul.f32 %v4603, 1.442695
    %v4606 = vpow.pop %v4605
    %v4607 = vmul.f32 %v4604, 1.442695
    %v4608 = vpow.pop %v4607
    %v4609 = vsel %vm657, %v4606, 0.0
    %4610 = vadd.xlane.f32.xlu0 %v4609
    %v4611 = vpop.xlane.xlu0 %4610
    %v4612 = vsel %vm657, %v4608, 0.0
    %4613 = vadd.xlane.f32.xlu0 %v4612
    %v4614 = vpop.xlane.xlu0 %4613
    %v4615 = vrcp.pop %v4611
    %v4616 = vrcp.pop %v4614
    %v4617 = vmul.f32 %v4606, %v4615
    %v4618 = vmul.f32 %v4608, %v4616
    %4619 = vrot.lane.b32.xlu0 %v3651, 40
    %v4620 = vpop.permute.xlu0 %4619
    %4621 = vrot.lane.b32.xlu0 %v3656, 40
    %v4622 = vpop.permute.xlu0 %4621
    %v4626 = vsel %vm657, %v4617, 0
    %v4629 = vsel %vm657, %v4618, 0
    %4631 = vmatprep.subr.mxu0 0.0
    %4632 = vmatpush1.msra.mxu0 0.0
    %4633 = vmatprep.subr.mxu0 0.0
    %4634 = vmatpush1.msra.mxu0 0.0
    %4635 = vmatprep.subr.mxu0 0.0
    %4636 = vmatpush1.msra.mxu0 0.0
    %4637 = vmatprep.subr.mxu0 0.0
    %4638 = vmatpush1.msra.mxu0 0.0
    %4639 = vmatprep.subr.mxu0 0.0
    %4640 = vmatpush1.msra.mxu0 0.0
    %4641 = vmatprep.subr.mxu0 0.0
    %4642 = vmatpush1.msra.mxu0 0.0
    %4643 = vmatprep.subr.mxu0 0.0
    %4644 = vmatpush1.msra.mxu0 0.0
    %4645 = vmatprep.subr.mxu0 0.0
    %4646 = vmatpush1.msra.mxu0 0.0
    %4647 = vmatprep.subr.mxu0 0.0
    %4648 = vmatpush1.msra.mxu0 0.0
    %4649 = vmatprep.subr.mxu0 0.0
    %4650 = vmatpush1.msra.mxu0 0.0
    %4651 = vmatprep.subr.mxu0 0.0
    %4652 = vmatpush1.msra.mxu0 0.0
    %4653 = vmatprep.subr.mxu0 0.0
    %4654 = vmatpush1.msra.mxu0 0.0
    %4655 = vmatprep.subr.mxu0 0.0
    %4656 = vmatpush1.msra.mxu0 0.0
    %4657 = vmatprep.subr.mxu0 0.0
    %4658 = vmatpush1.msra.mxu0 0.0
    %4659 = vmatprep.subr.mxu0 0.0
    %4660 = vmatpush1.msra.mxu0 %v4622
    %4661 = vmatprep.subr.mxu0 0.0
    %4662 = vmatpush1.msra.mxu0 %v4620
    %4663 = vmatprep.subr.mxu0 0.0
    %4664 = vmatpush2.msra.mxu0 0.0
    %4665 = vmatprep.subr.mxu0 0.0
    %4666 = vmatpush2.msra.mxu0 0.0
    %4667 = vmatprep.subr.mxu0 0.0
    %4668 = vmatpush2.msra.mxu0 0.0
    %4669 = vmatprep.subr.mxu0 0.0
    %4670 = vmatpush2.msra.mxu0 0.0
    %4671 = vmatprep.subr.mxu0 0.0
    %4672 = vmatpush2.msra.mxu0 0.0
    %4673 = vmatprep.subr.mxu0 0.0
    %4674 = vmatpush2.msra.mxu0 0.0
    %4675 = vmatprep.subr.mxu0 0.0
    %4676 = vmatpush2.msra.mxu0 0.0
    %4677 = vmatprep.subr.mxu0 0.0
    %4678 = vmatpush2.msra.mxu0 0.0
    %4679 = vmatprep.subr.mxu0 0.0
    %4680 = vmatpush2.msra.mxu0 0.0
    %4681 = vmatprep.subr.mxu0 0.0
    %4682 = vmatpush2.msra.mxu0 0.0
    %4683 = vmatprep.subr.mxu0 0.0
    %4684 = vmatpush2.msra.mxu0 0.0
    %4685 = vmatprep.subr.mxu0 0.0
    %4686 = vmatpush2.msra.mxu0 0.0
    %4687 = vmatprep.subr.mxu0 0.0
    %4688 = vmatpush2.msra.mxu0 0.0
    %4689 = vmatprep.subr.mxu0 0.0
    %4690 = vmatpush2.msra.mxu0 0.0
    %4691 = vmatprep.subr.mxu0 0.0
    %4692 = vmatpush2.msra.mxu0 0.0
    %4693 = vmatprep.subr.mxu0 0.0
    %4694 = vmatpush2.msra.mxu0 0.0
    %4695 = vmatprep.mubr.f32.mxu0 0.0
    %4696 = vmatmul.mubr.f32.gmra.mxu0 %v4626
    %v4697 = vpop.f32.mrf.mxu0
    %v4698 = vadd.f32 0.0, %v4697
    %v4699 = vpop.f32.mrf.mxu0
    %4700 = vmatprep.mubr.f32.mxu0 0.0
    %4701 = vmatmul.mubr.f32.gmra.mxu0 %v4629
    %v4702 = vpop.f32.mrf.mxu0
    %v4703 = vadd.f32 0.0, %v4702
    %v4704 = vpop.f32.mrf.mxu0
    %4705 = vdwg.mxu0
    %v4707 = vsel %vm571, %v4698, 0
    %v4710 = vsel %vm571, %v4703, 0
    %4712 = vmatprep.subr.mxu0 0.0
    %4713 = vmatpush1.msra.mxu0 0.0
    %4714 = vmatprep.subr.mxu0 0.0
    %4715 = vmatpush1.msra.mxu0 0.0
    %4716 = vmatprep.subr.mxu0 0.0
    %4717 = vmatpush1.msra.mxu0 0.0
    %4718 = vmatprep.subr.mxu0 0.0
    %4719 = vmatpush1.msra.mxu0 0.0
    %4720 = vmatprep.subr.mxu0 0.0
    %4721 = vmatpush1.msra.mxu0 0.0
    %4722 = vmatprep.subr.mxu0 0.0
    %4723 = vmatpush1.msra.mxu0 0.0
    %4724 = vmatprep.subr.mxu0 0.0
    %4725 = vmatpush1.msra.mxu0 0.0
    %4726 = vmatprep.subr.mxu0 0.0
    %4727 = vmatpush1.msra.mxu0 0.0
    %4728 = vmatprep.subr.mxu0 0.0
    %4729 = vmatpush1.msra.mxu0 0.0
    %4730 = vmatprep.subr.mxu0 0.0
    %4731 = vmatpush1.msra.mxu0 0.0
    %4732 = vmatprep.subr.mxu0 0.0
    %4733 = vmatpush1.msra.mxu0 0.0
    %4734 = vmatprep.subr.mxu0 0.0
    %4735 = vmatpush1.msra.mxu0 0.0
    %4736 = vmatprep.subr.mxu0 0.0
    %4737 = vmatpush1.msra.mxu0 0.0
    %4738 = vmatprep.subr.mxu0 0.0
    %4739 = vmatpush1.msra.mxu0 0.0
    %4740 = vmatprep.subr.mxu0 0.0
    %4741 = vmatpush1.msra.mxu0 0.0
    %4742 = vmatprep.subr.mxu0 0.0
    %4743 = vmatpush1.msra.mxu0 %v3570
    %4744 = vmatprep.subr.mxu0 0.0
    %4745 = vmatpush2.msra.mxu0 0.0
    %4746 = vmatprep.subr.mxu0 0.0
    %4747 = vmatpush2.msra.mxu0 0.0
    %4748 = vmatprep.subr.mxu0 0.0
    %4749 = vmatpush2.msra.mxu0 0.0
    %4750 = vmatprep.subr.mxu0 0.0
    %4751 = vmatpush2.msra.mxu0 0.0
    %4752 = vmatprep.subr.mxu0 0.0
    %4753 = vmatpush2.msra.mxu0 0.0
    %4754 = vmatprep.subr.mxu0 0.0
    %4755 = vmatpush2.msra.mxu0 0.0
    %4756 = vmatprep.subr.mxu0 0.0
    %4757 = vmatpush2.msra.mxu0 0.0
    %4758 = vmatprep.subr.mxu0 0.0
    %4759 = vmatpush2.msra.mxu0 0.0
    %4760 = vmatprep.subr.mxu0 0.0
    %4761 = vmatpush2.msra.mxu0 0.0
    %4762 = vmatprep.subr.mxu0 0.0
    %4763 = vmatpush2.msra.mxu0 0.0
    %4764 = vmatprep.subr.mxu0 0.0
    %4765 = vmatpush2.msra.mxu0 0.0
    %4766 = vmatprep.subr.mxu0 0.0
    %4767 = vmatpush2.msra.mxu0 0.0
    %4768 = vmatprep.subr.mxu0 0.0
    %4769 = vmatpush2.msra.mxu0 0.0
    %4770 = vmatprep.subr.mxu0 0.0
    %4771 = vmatpush2.msra.mxu0 0.0
    %4772 = vmatprep.subr.mxu0 0.0
    %4773 = vmatpush2.msra.mxu0 0.0
    %4774 = vmatprep.subr.mxu0 0.0
    %4775 = vmatpush2.msra.mxu0 0.0
    %4776 = vmatprep.mubr.f32.mxu0 0.0
    %4777 = vmatmul.mubr.f32.gmra.mxu0 %v4707
    %v4778 = vpop.f32.mrf.mxu0
    %v4779 = vadd.f32 0.0, %v4778
    %v4780 = vpop.f32.mrf.mxu0
    %4781 = vmatprep.mubr.f32.mxu0 0.0
    %4782 = vmatmul.mubr.f32.gmra.mxu0 %v4710
    %v4783 = vpop.f32.mrf.mxu0
    %v4784 = vadd.f32 0.0, %v4783
    %v4785 = vpop.f32.mrf.mxu0
    %4786 = vdwg.mxu0
    %v4787 = vadd.f32 %v4504, %v4779
    %v4788 = vadd.f32 %v4505, %v4784
    %v4790 = vlaneseq
    %v4791 = vshrl.u32 %v4790, 7
    %v4792 = vsub.s32 0, %v4791
    %v4793 = vrot.slane %v3571, %v4792
    %v4795 = vadd.f32 %v4787, %v4793
    %v4796 = vadd.f32 %v4788, %v4793
    %v4797 = vadd.f32 %v3560, %v4795
    %v4798 = vadd.f32 %v3561, %v4796
    %v4799 = vld [vmem:[#allocation25] sm:$0x1]
    %v4800 = vld [vmem:[#allocation26] sm:$0x1]
    %v4801 = vsel %vm481, %v4797, 0.0
    %4802 = vadd.xlane.f32.xlu0 %v4801
    %v4803 = vpop.xlane.xlu0 %4802
    %v4804 = vsel %vm481, %v4798, 0.0
    %4805 = vadd.xlane.f32.xlu0 %v4804
    %v4806 = vpop.xlane.xlu0 %4805
    %v4807 = vmul.f32 %v4803, %v1713
    %v4808 = vmul.f32 %v4806, %v1713
    %v4809 = vsub.f32 %v4797, %v4807
    %v4810 = vsub.f32 %v4798, %v4808
    %v4811 = vmul.f32 %v4809, %v4809
    %v4812 = vmul.f32 %v4810, %v4810
    %v4813 = vsel %vm481, %v4811, 0.0
    %4814 = vadd.xlane.f32.xlu0 %v4813
    %v4815 = vpop.xlane.xlu0 %4814
    %v4816 = vsel %vm481, %v4812, 0.0
    %4817 = vadd.xlane.f32.xlu0 %v4816
    %v4818 = vpop.xlane.xlu0 %4817
    %v4819 = vmul.f32 %v4815, %v1713
    %v4820 = vmul.f32 %v4818, %v1713
    %v4821 = vadd.f32 %v4819, 1e-05
    %v4822 = vadd.f32 %v4820, 1e-05
    %v4823 = vrsqrt.pop %v4821
    %v4824 = vrsqrt.pop %v4822
    %v4825 = vmul.f32 %v4809, %v4823
    %v4826 = vmul.f32 %v4810, %v4824
    %v4828 = vlaneseq
    %v4829 = vshrl.u32 %v4828, 7
    %v4830 = vsub.s32 0, %v4829
    %v4831 = vrot.slane %v4799, %v4830
    %v4833 = vmul.f32 %v4825, %v4831
    %v4834 = vmul.f32 %v4826, %v4831
    %v4836 = vlaneseq
    %v4837 = vshrl.u32 %v4836, 7
    %v4838 = vsub.s32 0, %v4837
    %v4839 = vrot.slane %v4800, %v4838
    %v4841 = vadd.f32 %v4833, %v4839
    %v4842 = vadd.f32 %v4834, %v4839
    %v4843 = vld [vmem:[%s43] sm:$0xff]
    %v4844 = vld [vmem:[%s43 + $0x8] sm:$0xff]
    %v4845 = vld [vmem:[%s43 + $0x10] sm:$0xff]
    %v4846 = vld [vmem:[%s43 + $0x18] sm:$0xff]
    %v4847 = vld [vmem:[#allocation16] sm:$0x1]
    %v4848 = vld [vmem:[#allocation17] sm:$0xff]
    %v4849 = vld [vmem:[#allocation17 + $0x8] sm:$0xff]
    %v4850 = vld [vmem:[#allocation17 + $0x10] sm:$0xff]
    %v4851 = vld [vmem:[#allocation17 + $0x18] sm:$0xff]
    %v4852 = vld [vmem:[#allocation19] sm:$0x1]
    %v4854 = vlaneseq
    %v4855 = vshrl.u32 %v4854, 7
    %v4856 = vsub.s32 0, %v4855
    %v4857 = vrot.slane %v4847, %v4856
    %v4860 = vsel %vm481, %v4841, 0
    %v4863 = vsel %vm481, %v4842, 0
    %4865 = vmatprep.subr.mxu0 0.0
    %4866 = vmatpush1.msra.mxu0 0.0
    %4867 = vmatprep.subr.mxu0 0.0
    %4868 = vmatpush1.msra.mxu0 0.0
    %4869 = vmatprep.subr.mxu0 0.0
    %4870 = vmatpush1.msra.mxu0 0.0
    %4871 = vmatprep.subr.mxu0 0.0
    %4872 = vmatpush1.msra.mxu0 0.0
    %4873 = vmatprep.subr.mxu0 0.0
    %4874 = vmatpush1.msra.mxu0 0.0
    %4875 = vmatprep.subr.mxu0 0.0
    %4876 = vmatpush1.msra.mxu0 0.0
    %4877 = vmatprep.subr.mxu0 0.0
    %4878 = vmatpush1.msra.mxu0 0.0
    %4879 = vmatprep.subr.mxu0 0.0
    %4880 = vmatpush1.msra.mxu0 0.0
    %4881 = vmatprep.subr.mxu0 0.0
    %4882 = vmatpush1.msra.mxu0 0.0
    %4883 = vmatprep.subr.mxu0 0.0
    %4884 = vmatpush1.msra.mxu0 0.0
    %4885 = vmatprep.subr.mxu0 0.0
    %4886 = vmatpush1.msra.mxu0 0.0
    %4887 = vmatprep.subr.mxu0 0.0
    %4888 = vmatpush1.msra.mxu0 0.0
    %4889 = vmatprep.subr.mxu0 0.0
    %4890 = vmatpush1.msra.mxu0 %v4846
    %4891 = vmatprep.subr.mxu0 0.0
    %4892 = vmatpush1.msra.mxu0 %v4845
    %4893 = vmatprep.subr.mxu0 0.0
    %4894 = vmatpush1.msra.mxu0 %v4844
    %4895 = vmatprep.subr.mxu0 0.0
    %4896 = vmatpush1.msra.mxu0 %v4843
    %4897 = vmatprep.subr.mxu0 0.0
    %4898 = vmatpush2.msra.mxu0 0.0
    %4899 = vmatprep.subr.mxu0 0.0
    %4900 = vmatpush2.msra.mxu0 0.0
    %4901 = vmatprep.subr.mxu0 0.0
    %4902 = vmatpush2.msra.mxu0 0.0
    %4903 = vmatprep.subr.mxu0 0.0
    %4904 = vmatpush2.msra.mxu0 0.0
    %4905 = vmatprep.subr.mxu0 0.0
    %4906 = vmatpush2.msra.mxu0 0.0
    %4907 = vmatprep.subr.mxu0 0.0
    %4908 = vmatpush2.msra.mxu0 0.0
    %4909 = vmatprep.subr.mxu0 0.0
    %4910 = vmatpush2.msra.mxu0 0.0
    %4911 = vmatprep.subr.mxu0 0.0
    %4912 = vmatpush2.msra.mxu0 0.0
    %4913 = vmatprep.subr.mxu0 0.0
    %4914 = vmatpush2.msra.mxu0 0.0
    %4915 = vmatprep.subr.mxu0 0.0
    %4916 = vmatpush2.msra.mxu0 0.0
    %4917 = vmatprep.subr.mxu0 0.0
    %4918 = vmatpush2.msra.mxu0 0.0
    %4919 = vmatprep.subr.mxu0 0.0
    %4920 = vmatpush2.msra.mxu0 0.0
    %4921 = vmatprep.subr.mxu0 0.0
    %4922 = vmatpush2.msra.mxu0 0.0
    %4923 = vmatprep.subr.mxu0 0.0
    %4924 = vmatpush2.msra.mxu0 0.0
    %4925 = vmatprep.subr.mxu0 0.0
    %4926 = vmatpush2.msra.mxu0 0.0
    %4927 = vmatprep.subr.mxu0 0.0
    %4928 = vmatpush2.msra.mxu0 0.0
    %4929 = vmatprep.mubr.f32.mxu0 0.0
    %4930 = vmatmul.mubr.f32.gmra.mxu0 %v4860
    %v4931 = vpop.f32.mrf.mxu0
    %v4932 = vadd.f32 %v4857, %v4931
    %v4933 = vpop.f32.mrf.mxu0
    %4934 = vmatprep.mubr.f32.mxu0 0.0
    %4935 = vmatmul.mubr.f32.gmra.mxu0 %v4863
    %v4936 = vpop.f32.mrf.mxu0
    %v4937 = vadd.f32 %v4857, %v4936
    %v4938 = vpop.f32.mrf.mxu0
    %4939 = vdwg.mxu0
    %4944 = vrot.lane.b32.xlu0 %v4843, 96
    %v4945 = vpop.permute.xlu0 %4944
    %4946 = vrot.lane.b32.xlu0 %v4844, 96
    %v4947 = vpop.permute.xlu0 %4946
    %4948 = vrot.lane.b32.xlu0 %v4845, 96
    %v4949 = vpop.permute.xlu0 %4948
    %4950 = vrot.lane.b32.xlu0 %v4846, 96
    %v4951 = vpop.permute.xlu0 %4950
    %4956 = vrot.lane.b32.xlu0 %v4857, 96
    %v4957 = vpop.permute.xlu0 %4956
    %v4960 = vsel %vm481, %v3558, 0
    %v4963 = vsel %vm481, %v3559, 0
    %4965 = vmatprep.subr.mxu0 0.0
    %4966 = vmatpush1.msra.mxu0 0.0
    %4967 = vmatprep.subr.mxu0 0.0
    %4968 = vmatpush1.msra.mxu0 0.0
    %4969 = vmatprep.subr.mxu0 0.0
    %4970 = vmatpush1.msra.mxu0 0.0
    %4971 = vmatprep.subr.mxu0 0.0
    %4972 = vmatpush1.msra.mxu0 0.0
    %4973 = vmatprep.subr.mxu0 0.0
    %4974 = vmatpush1.msra.mxu0 0.0
    %4975 = vmatprep.subr.mxu0 0.0
    %4976 = vmatpush1.msra.mxu0 0.0
    %4977 = vmatprep.subr.mxu0 0.0
    %4978 = vmatpush1.msra.mxu0 0.0
    %4979 = vmatprep.subr.mxu0 0.0
    %4980 = vmatpush1.msra.mxu0 0.0
    %4981 = vmatprep.subr.mxu0 0.0
    %4982 = vmatpush1.msra.mxu0 0.0
    %4983 = vmatprep.subr.mxu0 0.0
    %4984 = vmatpush1.msra.mxu0 0.0
    %4985 = vmatprep.subr.mxu0 0.0
    %4986 = vmatpush1.msra.mxu0 0.0
    %4987 = vmatprep.subr.mxu0 0.0
    %4988 = vmatpush1.msra.mxu0 0.0
    %4989 = vmatprep.subr.mxu0 0.0
    %4990 = vmatpush1.msra.mxu0 %v4951
    %4991 = vmatprep.subr.mxu0 0.0
    %4992 = vmatpush1.msra.mxu0 %v4949
    %4993 = vmatprep.subr.mxu0 0.0
    %4994 = vmatpush1.msra.mxu0 %v4947
    %4995 = vmatprep.subr.mxu0 0.0
    %4996 = vmatpush1.msra.mxu0 %v4945
    %4997 = vmatprep.subr.mxu0 0.0
    %4998 = vmatpush2.msra.mxu0 0.0
    %4999 = vmatprep.subr.mxu0 0.0
    %5000 = vmatpush2.msra.mxu0 0.0
    %5001 = vmatprep.subr.mxu0 0.0
    %5002 = vmatpush2.msra.mxu0 0.0
    %5003 = vmatprep.subr.mxu0 0.0
    %5004 = vmatpush2.msra.mxu0 0.0
    %5005 = vmatprep.subr.mxu0 0.0
    %5006 = vmatpush2.msra.mxu0 0.0
    %5007 = vmatprep.subr.mxu0 0.0
    %5008 = vmatpush2.msra.mxu0 0.0
    %5009 = vmatprep.subr.mxu0 0.0
    %5010 = vmatpush2.msra.mxu0 0.0
    %5011 = vmatprep.subr.mxu0 0.0
    %5012 = vmatpush2.msra.mxu0 0.0
    %5013 = vmatprep.subr.mxu0 0.0
    %5014 = vmatpush2.msra.mxu0 0.0
    %5015 = vmatprep.subr.mxu0 0.0
    %5016 = vmatpush2.msra.mxu0 0.0
    %5017 = vmatprep.subr.mxu0 0.0
    %5018 = vmatpush2.msra.mxu0 0.0
    %5019 = vmatprep.subr.mxu0 0.0
    %5020 = vmatpush2.msra.mxu0 0.0
    %5021 = vmatprep.subr.mxu0 0.0
    %5022 = vmatpush2.msra.mxu0 0.0
    %5023 = vmatprep.subr.mxu0 0.0
    %5024 = vmatpush2.msra.mxu0 0.0
    %5025 = vmatprep.subr.mxu0 0.0
    %5026 = vmatpush2.msra.mxu0 0.0
    %5027 = vmatprep.subr.mxu0 0.0
    %5028 = vmatpush2.msra.mxu0 0.0
    %5029 = vmatprep.mubr.f32.mxu0 0.0
    %5030 = vmatmul.mubr.f32.gmra.mxu0 %v4960
    %v5031 = vpop.f32.mrf.mxu0
    %v5032 = vadd.f32 %v4957, %v5031
    %v5033 = vpop.f32.mrf.mxu0
    %5034 = vmatprep.mubr.f32.mxu0 0.0
    %5035 = vmatmul.mubr.f32.gmra.mxu0 %v4963
    %v5036 = vpop.f32.mrf.mxu0
    %v5037 = vadd.f32 %v4957, %v5036
    %v5038 = vpop.f32.mrf.mxu0
    %5039 = vdwg.mxu0
    %v5040 = vmul.f32 %v4932, 0.35355338
    %v5041 = vmul.f32 %v4937, 0.35355338
    %v5043 = vsel %vm571, %v5040, 0
    %v5046 = vsel %vm571, %v5041, 0
    %v5049 = vsel %vm571, %v5032, 0
    %v5052 = vsel %vm571, %v5037, 0
    %5054 = vmatprep.subr.mxu0 0.0
    %5055 = vmatpush1.xpose.msra.mxu0 0.0
    %5056 = vmatprep.subr.mxu0 0.0
    %5057 = vmatpush1.xpose.msra.mxu0 0.0
    %5058 = vmatprep.subr.mxu0 0.0
    %5059 = vmatpush1.xpose.msra.mxu0 0.0
    %5060 = vmatprep.subr.mxu0 0.0
    %5061 = vmatpush1.xpose.msra.mxu0 0.0
    %5062 = vmatprep.subr.mxu0 0.0
    %5063 = vmatpush1.xpose.msra.mxu0 0.0
    %5064 = vmatprep.subr.mxu0 0.0
    %5065 = vmatpush1.xpose.msra.mxu0 0.0
    %5066 = vmatprep.subr.mxu0 0.0
    %5067 = vmatpush1.xpose.msra.mxu0 0.0
    %5068 = vmatprep.subr.mxu0 0.0
    %5069 = vmatpush1.xpose.msra.mxu0 0.0
    %5070 = vmatprep.subr.mxu0 0.0
    %5071 = vmatpush1.xpose.msra.mxu0 0.0
    %5072 = vmatprep.subr.mxu0 0.0
    %5073 = vmatpush1.xpose.msra.mxu0 0.0
    %5074 = vmatprep.subr.mxu0 0.0
    %5075 = vmatpush1.xpose.msra.mxu0 0.0
    %5076 = vmatprep.subr.mxu0 0.0
    %5077 = vmatpush1.xpose.msra.mxu0 0.0
    %5078 = vmatprep.subr.mxu0 0.0
    %5079 = vmatpush1.xpose.msra.mxu0 0.0
    %5080 = vmatprep.subr.mxu0 0.0
    %5081 = vmatpush1.xpose.msra.mxu0 0.0
    %5082 = vmatprep.subr.mxu0 0.0
    %5083 = vmatpush1.xpose.msra.mxu0 %v5052
    %5084 = vmatprep.subr.mxu0 0.0
    %5085 = vmatpush1.xpose.msra.mxu0 %v5049
    %5086 = vmatprep.subr.mxu0 0.0
    %5087 = vmatpush2.xpose.msra.mxu0 0.0
    %5088 = vmatprep.subr.mxu0 0.0
    %5089 = vmatpush2.xpose.msra.mxu0 0.0
    %5090 = vmatprep.subr.mxu0 0.0
    %5091 = vmatpush2.xpose.msra.mxu0 0.0
    %5092 = vmatprep.subr.mxu0 0.0
    %5093 = vmatpush2.xpose.msra.mxu0 0.0
    %5094 = vmatprep.subr.mxu0 0.0
    %5095 = vmatpush2.xpose.msra.mxu0 0.0
    %5096 = vmatprep.subr.mxu0 0.0
    %5097 = vmatpush2.xpose.msra.mxu0 0.0
    %5098 = vmatprep.subr.mxu0 0.0
    %5099 = vmatpush2.xpose.msra.mxu0 0.0
    %5100 = vmatprep.subr.mxu0 0.0
    %5101 = vmatpush2.xpose.msra.mxu0 0.0
    %5102 = vmatprep.subr.mxu0 0.0
    %5103 = vmatpush2.xpose.msra.mxu0 0.0
    %5104 = vmatprep.subr.mxu0 0.0
    %5105 = vmatpush2.xpose.msra.mxu0 0.0
    %5106 = vmatprep.subr.mxu0 0.0
    %5107 = vmatpush2.xpose.msra.mxu0 0.0
    %5108 = vmatprep.subr.mxu0 0.0
    %5109 = vmatpush2.xpose.msra.mxu0 0.0
    %5110 = vmatprep.subr.mxu0 0.0
    %5111 = vmatpush2.xpose.msra.mxu0 0.0
    %5112 = vmatprep.subr.mxu0 0.0
    %5113 = vmatpush2.xpose.msra.mxu0 0.0
    %5114 = vmatprep.subr.mxu0 0.0
    %5115 = vmatpush2.xpose.msra.mxu0 0.0
    %5116 = vmatprep.subr.mxu0 0.0
    %5117 = vmatpush2.xpose.msra.mxu0 0.0
    %5118 = vmatprep.mubr.f32.mxu0 0.0
    %5119 = vmatmul.mubr.f32.gmra.mxu0 %v5043
    %v5120 = vpop.f32.mrf.mxu0
    %v5121 = vadd.f32 %v461, %v5120
    %v5122 = vpop.f32.mrf.mxu0
    %5123 = vmatprep.mubr.f32.mxu0 0.0
    %5124 = vmatmul.mubr.f32.gmra.mxu0 %v5046
    %v5125 = vpop.f32.mrf.mxu0
    %v5126 = vadd.f32 %v462, %v5125
    %v5127 = vpop.f32.mrf.mxu0
    %5128 = vdwg.mxu0
    %v5129 = vsel %vm657, %v5121, -inf
    %5130 = vmax.xlane.f32.xlu0 %v5129
    %v5131 = vpop.xlane.xlu0 %5130
    %v5132 = vsel %vm657, %v5126, -inf
    %5133 = vmax.xlane.f32.xlu0 %v5132
    %v5134 = vpop.xlane.xlu0 %5133
    %v5135 = vsub.f32 %v5121, %v5131
    %v5136 = vsub.f32 %v5126, %v5134
    %v5137 = vmul.f32 %v5135, 1.442695
    %v5138 = vpow.pop %v5137
    %v5139 = vmul.f32 %v5136, 1.442695
    %v5140 = vpow.pop %v5139
    %v5141 = vsel %vm657, %v5138, 0.0
    %5142 = vadd.xlane.f32.xlu0 %v5141
    %v5143 = vpop.xlane.xlu0 %5142
    %v5144 = vsel %vm657, %v5140, 0.0
    %5145 = vadd.xlane.f32.xlu0 %v5144
    %v5146 = vpop.xlane.xlu0 %5145
    %v5147 = vrcp.pop %v5143
    %v5148 = vrcp.pop %v5146
    %v5149 = vmul.f32 %v5138, %v5147
    %v5150 = vmul.f32 %v5140, %v5148
    %5151 = vrot.lane.b32.xlu0 %v5032, 96
    %v5152 = vpop.permute.xlu0 %5151
    %5153 = vrot.lane.b32.xlu0 %v5037, 96
    %v5154 = vpop.permute.xlu0 %5153
    %v5158 = vsel %vm657, %v5149, 0
    %v5161 = vsel %vm657, %v5150, 0
    %5163 = vmatprep.subr.mxu0 0.0
    %5164 = vmatpush1.msra.mxu0 0.0
    %5165 = vmatprep.subr.mxu0 0.0
    %5166 = vmatpush1.msra.mxu0 0.0
    %5167 = vmatprep.subr.mxu0 0.0
    %5168 = vmatpush1.msra.mxu0 0.0
    %5169 = vmatprep.subr.mxu0 0.0
    %5170 = vmatpush1.msra.mxu0 0.0
    %5171 = vmatprep.subr.mxu0 0.0
    %5172 = vmatpush1.msra.mxu0 0.0
    %5173 = vmatprep.subr.mxu0 0.0
    %5174 = vmatpush1.msra.mxu0 0.0
    %5175 = vmatprep.subr.mxu0 0.0
    %5176 = vmatpush1.msra.mxu0 0.0
    %5177 = vmatprep.subr.mxu0 0.0
    %5178 = vmatpush1.msra.mxu0 0.0
    %5179 = vmatprep.subr.mxu0 0.0
    %5180 = vmatpush1.msra.mxu0 0.0
    %5181 = vmatprep.subr.mxu0 0.0
    %5182 = vmatpush1.msra.mxu0 0.0
    %5183 = vmatprep.subr.mxu0 0.0
    %5184 = vmatpush1.msra.mxu0 0.0
    %5185 = vmatprep.subr.mxu0 0.0
    %5186 = vmatpush1.msra.mxu0 0.0
    %5187 = vmatprep.subr.mxu0 0.0
    %5188 = vmatpush1.msra.mxu0 0.0
    %5189 = vmatprep.subr.mxu0 0.0
    %5190 = vmatpush1.msra.mxu0 0.0
    %5191 = vmatprep.subr.mxu0 0.0
    %5192 = vmatpush1.msra.mxu0 %v5154
    %5193 = vmatprep.subr.mxu0 0.0
    %5194 = vmatpush1.msra.mxu0 %v5152
    %5195 = vmatprep.subr.mxu0 0.0
    %5196 = vmatpush2.msra.mxu0 0.0
    %5197 = vmatprep.subr.mxu0 0.0
    %5198 = vmatpush2.msra.mxu0 0.0
    %5199 = vmatprep.subr.mxu0 0.0
    %5200 = vmatpush2.msra.mxu0 0.0
    %5201 = vmatprep.subr.mxu0 0.0
    %5202 = vmatpush2.msra.mxu0 0.0
    %5203 = vmatprep.subr.mxu0 0.0
    %5204 = vmatpush2.msra.mxu0 0.0
    %5205 = vmatprep.subr.mxu0 0.0
    %5206 = vmatpush2.msra.mxu0 0.0
    %5207 = vmatprep.subr.mxu0 0.0
    %5208 = vmatpush2.msra.mxu0 0.0
    %5209 = vmatprep.subr.mxu0 0.0
    %5210 = vmatpush2.msra.mxu0 0.0
    %5211 = vmatprep.subr.mxu0 0.0
    %5212 = vmatpush2.msra.mxu0 0.0
    %5213 = vmatprep.subr.mxu0 0.0
    %5214 = vmatpush2.msra.mxu0 0.0
    %5215 = vmatprep.subr.mxu0 0.0
    %5216 = vmatpush2.msra.mxu0 0.0
    %5217 = vmatprep.subr.mxu0 0.0
    %5218 = vmatpush2.msra.mxu0 0.0
    %5219 = vmatprep.subr.mxu0 0.0
    %5220 = vmatpush2.msra.mxu0 0.0
    %5221 = vmatprep.subr.mxu0 0.0
    %5222 = vmatpush2.msra.mxu0 0.0
    %5223 = vmatprep.subr.mxu0 0.0
    %5224 = vmatpush2.msra.mxu0 0.0
    %5225 = vmatprep.subr.mxu0 0.0
    %5226 = vmatpush2.msra.mxu0 0.0
    %5227 = vmatprep.mubr.f32.mxu0 0.0
    %5228 = vmatmul.mubr.f32.gmra.mxu0 %v5158
    %v5229 = vpop.f32.mrf.mxu0
    %v5230 = vadd.f32 0.0, %v5229
    %v5231 = vpop.f32.mrf.mxu0
    %5232 = vmatprep.mubr.f32.mxu0 0.0
    %5233 = vmatmul.mubr.f32.gmra.mxu0 %v5161
    %v5234 = vpop.f32.mrf.mxu0
    %v5235 = vadd.f32 0.0, %v5234
    %v5236 = vpop.f32.mrf.mxu0
    %5237 = vdwg.mxu0
    %5238 = vrot.lane.b32.xlu0 %v5040, 120
    %v5239 = vpop.permute.xlu0 %5238
    %5240 = vrot.lane.b32.xlu0 %v5041, 120
    %v5241 = vpop.permute.xlu0 %5240
    %5242 = vrot.lane.b32.xlu0 %v5032, 120
    %v5243 = vpop.permute.xlu0 %5242
    %5244 = vrot.lane.b32.xlu0 %v5037, 120
    %v5245 = vpop.permute.xlu0 %5244
    %v5246 = vsel %vm571, %v5239, 0
    %v5248 = vsel %vm571, %v5241, 0
    %v5250 = vsel %vm571, %v5243, 0
    %v5252 = vsel %vm571, %v5245, 0
    %5254 = vmatprep.subr.mxu0 0.0
    %5255 = vmatpush1.xpose.msra.mxu0 0.0
    %5256 = vmatprep.subr.mxu0 0.0
    %5257 = vmatpush1.xpose.msra.mxu0 0.0
    %5258 = vmatprep.subr.mxu0 0.0
    %5259 = vmatpush1.xpose.msra.mxu0 0.0
    %5260 = vmatprep.subr.mxu0 0.0
    %5261 = vmatpush1.xpose.msra.mxu0 0.0
    %5262 = vmatprep.subr.mxu0 0.0
    %5263 = vmatpush1.xpose.msra.mxu0 0.0
    %5264 = vmatprep.subr.mxu0 0.0
    %5265 = vmatpush1.xpose.msra.mxu0 0.0
    %5266 = vmatprep.subr.mxu0 0.0
    %5267 = vmatpush1.xpose.msra.mxu0 0.0
    %5268 = vmatprep.subr.mxu0 0.0
    %5269 = vmatpush1.xpose.msra.mxu0 0.0
    %5270 = vmatprep.subr.mxu0 0.0
    %5271 = vmatpush1.xpose.msra.mxu0 0.0
    %5272 = vmatprep.subr.mxu0 0.0
    %5273 = vmatpush1.xpose.msra.mxu0 0.0
    %5274 = vmatprep.subr.mxu0 0.0
    %5275 = vmatpush1.xpose.msra.mxu0 0.0
    %5276 = vmatprep.subr.mxu0 0.0
    %5277 = vmatpush1.xpose.msra.mxu0 0.0
    %5278 = vmatprep.subr.mxu0 0.0
    %5279 = vmatpush1.xpose.msra.mxu0 0.0
    %5280 = vmatprep.subr.mxu0 0.0
    %5281 = vmatpush1.xpose.msra.mxu0 0.0
    %5282 = vmatprep.subr.mxu0 0.0
    %5283 = vmatpush1.xpose.msra.mxu0 %v5252
    %5284 = vmatprep.subr.mxu0 0.0
    %5285 = vmatpush1.xpose.msra.mxu0 %v5250
    %5286 = vmatprep.subr.mxu0 0.0
    %5287 = vmatpush2.xpose.msra.mxu0 0.0
    %5288 = vmatprep.subr.mxu0 0.0
    %5289 = vmatpush2.xpose.msra.mxu0 0.0
    %5290 = vmatprep.subr.mxu0 0.0
    %5291 = vmatpush2.xpose.msra.mxu0 0.0
    %5292 = vmatprep.subr.mxu0 0.0
    %5293 = vmatpush2.xpose.msra.mxu0 0.0
    %5294 = vmatprep.subr.mxu0 0.0
    %5295 = vmatpush2.xpose.msra.mxu0 0.0
    %5296 = vmatprep.subr.mxu0 0.0
    %5297 = vmatpush2.xpose.msra.mxu0 0.0
    %5298 = vmatprep.subr.mxu0 0.0
    %5299 = vmatpush2.xpose.msra.mxu0 0.0
    %5300 = vmatprep.subr.mxu0 0.0
    %5301 = vmatpush2.xpose.msra.mxu0 0.0
    %5302 = vmatprep.subr.mxu0 0.0
    %5303 = vmatpush2.xpose.msra.mxu0 0.0
    %5304 = vmatprep.subr.mxu0 0.0
    %5305 = vmatpush2.xpose.msra.mxu0 0.0
    %5306 = vmatprep.subr.mxu0 0.0
    %5307 = vmatpush2.xpose.msra.mxu0 0.0
    %5308 = vmatprep.subr.mxu0 0.0
    %5309 = vmatpush2.xpose.msra.mxu0 0.0
    %5310 = vmatprep.subr.mxu0 0.0
    %5311 = vmatpush2.xpose.msra.mxu0 0.0
    %5312 = vmatprep.subr.mxu0 0.0
    %5313 = vmatpush2.xpose.msra.mxu0 0.0
    %5314 = vmatprep.subr.mxu0 0.0
    %5315 = vmatpush2.xpose.msra.mxu0 0.0
    %5316 = vmatprep.subr.mxu0 0.0
    %5317 = vmatpush2.xpose.msra.mxu0 0.0
    %5318 = vmatprep.mubr.f32.mxu0 0.0
    %5319 = vmatmul.mubr.f32.gmra.mxu0 %v5246
    %v5320 = vpop.f32.mrf.mxu0
    %v5321 = vadd.f32 %v461, %v5320
    %v5322 = vpop.f32.mrf.mxu0
    %5323 = vmatprep.mubr.f32.mxu0 0.0
    %5324 = vmatmul.mubr.f32.gmra.mxu0 %v5248
    %v5325 = vpop.f32.mrf.mxu0
    %v5326 = vadd.f32 %v462, %v5325
    %v5327 = vpop.f32.mrf.mxu0
    %5328 = vdwg.mxu0
    %v5329 = vsel %vm657, %v5321, -inf
    %5330 = vmax.xlane.f32.xlu0 %v5329
    %v5331 = vpop.xlane.xlu0 %5330
    %v5332 = vsel %vm657, %v5326, -inf
    %5333 = vmax.xlane.f32.xlu0 %v5332
    %v5334 = vpop.xlane.xlu0 %5333
    %v5335 = vsub.f32 %v5321, %v5331
    %v5336 = vsub.f32 %v5326, %v5334
    %v5337 = vmul.f32 %v5335, 1.442695
    %v5338 = vpow.pop %v5337
    %v5339 = vmul.f32 %v5336, 1.442695
    %v5340 = vpow.pop %v5339
    %v5341 = vsel %vm657, %v5338, 0.0
    %5342 = vadd.xlane.f32.xlu0 %v5341
    %v5343 = vpop.xlane.xlu0 %5342
    %v5344 = vsel %vm657, %v5340, 0.0
    %5345 = vadd.xlane.f32.xlu0 %v5344
    %v5346 = vpop.xlane.xlu0 %5345
    %v5347 = vrcp.pop %v5343
    %v5348 = vrcp.pop %v5346
    %v5349 = vmul.f32 %v5338, %v5347
    %v5350 = vmul.f32 %v5340, %v5348
    %5351 = vrot.lane.b32.xlu0 %v5032, 88
    %v5352 = vpop.permute.xlu0 %5351
    %5353 = vrot.lane.b32.xlu0 %v5037, 88
    %v5354 = vpop.permute.xlu0 %5353
    %v5358 = vsel %vm657, %v5349, 0
    %v5361 = vsel %vm657, %v5350, 0
    %5363 = vmatprep.subr.mxu0 0.0
    %5364 = vmatpush1.msra.mxu0 0.0
    %5365 = vmatprep.subr.mxu0 0.0
    %5366 = vmatpush1.msra.mxu0 0.0
    %5367 = vmatprep.subr.mxu0 0.0
    %5368 = vmatpush1.msra.mxu0 0.0
    %5369 = vmatprep.subr.mxu0 0.0
    %5370 = vmatpush1.msra.mxu0 0.0
    %5371 = vmatprep.subr.mxu0 0.0
    %5372 = vmatpush1.msra.mxu0 0.0
    %5373 = vmatprep.subr.mxu0 0.0
    %5374 = vmatpush1.msra.mxu0 0.0
    %5375 = vmatprep.subr.mxu0 0.0
    %5376 = vmatpush1.msra.mxu0 0.0
    %5377 = vmatprep.subr.mxu0 0.0
    %5378 = vmatpush1.msra.mxu0 0.0
    %5379 = vmatprep.subr.mxu0 0.0
    %5380 = vmatpush1.msra.mxu0 0.0
    %5381 = vmatprep.subr.mxu0 0.0
    %5382 = vmatpush1.msra.mxu0 0.0
    %5383 = vmatprep.subr.mxu0 0.0
    %5384 = vmatpush1.msra.mxu0 0.0
    %5385 = vmatprep.subr.mxu0 0.0
    %5386 = vmatpush1.msra.mxu0 0.0
    %5387 = vmatprep.subr.mxu0 0.0
    %5388 = vmatpush1.msra.mxu0 0.0
    %5389 = vmatprep.subr.mxu0 0.0
    %5390 = vmatpush1.msra.mxu0 0.0
    %5391 = vmatprep.subr.mxu0 0.0
    %5392 = vmatpush1.msra.mxu0 %v5354
    %5393 = vmatprep.subr.mxu0 0.0
    %5394 = vmatpush1.msra.mxu0 %v5352
    %5395 = vmatprep.subr.mxu0 0.0
    %5396 = vmatpush2.msra.mxu0 0.0
    %5397 = vmatprep.subr.mxu0 0.0
    %5398 = vmatpush2.msra.mxu0 0.0
    %5399 = vmatprep.subr.mxu0 0.0
    %5400 = vmatpush2.msra.mxu0 0.0
    %5401 = vmatprep.subr.mxu0 0.0
    %5402 = vmatpush2.msra.mxu0 0.0
    %5403 = vmatprep.subr.mxu0 0.0
    %5404 = vmatpush2.msra.mxu0 0.0
    %5405 = vmatprep.subr.mxu0 0.0
    %5406 = vmatpush2.msra.mxu0 0.0
    %5407 = vmatprep.subr.mxu0 0.0
    %5408 = vmatpush2.msra.mxu0 0.0
    %5409 = vmatprep.subr.mxu0 0.0
    %5410 = vmatpush2.msra.mxu0 0.0
    %5411 = vmatprep.subr.mxu0 0.0
    %5412 = vmatpush2.msra.mxu0 0.0
    %5413 = vmatprep.subr.mxu0 0.0
    %5414 = vmatpush2.msra.mxu0 0.0
    %5415 = vmatprep.subr.mxu0 0.0
    %5416 = vmatpush2.msra.mxu0 0.0
    %5417 = vmatprep.subr.mxu0 0.0
    %5418 = vmatpush2.msra.mxu0 0.0
    %5419 = vmatprep.subr.mxu0 0.0
    %5420 = vmatpush2.msra.mxu0 0.0
    %5421 = vmatprep.subr.mxu0 0.0
    %5422 = vmatpush2.msra.mxu0 0.0
    %5423 = vmatprep.subr.mxu0 0.0
    %5424 = vmatpush2.msra.mxu0 0.0
    %5425 = vmatprep.subr.mxu0 0.0
    %5426 = vmatpush2.msra.mxu0 0.0
    %5427 = vmatprep.mubr.f32.mxu0 0.0
    %5428 = vmatmul.mubr.f32.gmra.mxu0 %v5358
    %v5429 = vpop.f32.mrf.mxu0
    %v5430 = vadd.f32 0.0, %v5429
    %v5431 = vpop.f32.mrf.mxu0
    %5432 = vmatprep.mubr.f32.mxu0 0.0
    %5433 = vmatmul.mubr.f32.gmra.mxu0 %v5361
    %v5434 = vpop.f32.mrf.mxu0
    %v5435 = vadd.f32 0.0, %v5434
    %v5436 = vpop.f32.mrf.mxu0
    %5437 = vdwg.mxu0
    %v5439 = vsel %vm571, %v5430, 0
    %v5442 = vsel %vm571, %v5435, 0
    %5444 = vmatprep.subr.mxu0 0.0
    %5445 = vmatpush1.msra.mxu0 0.0
    %5446 = vmatprep.subr.mxu0 0.0
    %5447 = vmatpush1.msra.mxu0 0.0
    %5448 = vmatprep.subr.mxu0 0.0
    %5449 = vmatpush1.msra.mxu0 0.0
    %5450 = vmatprep.subr.mxu0 0.0
    %5451 = vmatpush1.msra.mxu0 0.0
    %5452 = vmatprep.subr.mxu0 0.0
    %5453 = vmatpush1.msra.mxu0 0.0
    %5454 = vmatprep.subr.mxu0 0.0
    %5455 = vmatpush1.msra.mxu0 0.0
    %5456 = vmatprep.subr.mxu0 0.0
    %5457 = vmatpush1.msra.mxu0 0.0
    %5458 = vmatprep.subr.mxu0 0.0
    %5459 = vmatpush1.msra.mxu0 0.0
    %5460 = vmatprep.subr.mxu0 0.0
    %5461 = vmatpush1.msra.mxu0 0.0
    %5462 = vmatprep.subr.mxu0 0.0
    %5463 = vmatpush1.msra.mxu0 0.0
    %5464 = vmatprep.subr.mxu0 0.0
    %5465 = vmatpush1.msra.mxu0 0.0
    %5466 = vmatprep.subr.mxu0 0.0
    %5467 = vmatpush1.msra.mxu0 0.0
    %5468 = vmatprep.subr.mxu0 0.0
    %5469 = vmatpush1.msra.mxu0 0.0
    %5470 = vmatprep.subr.mxu0 0.0
    %5471 = vmatpush1.msra.mxu0 0.0
    %5472 = vmatprep.subr.mxu0 0.0
    %5473 = vmatpush1.msra.mxu0 0.0
    %5474 = vmatprep.subr.mxu0 0.0
    %5475 = vmatpush1.msra.mxu0 %v4849
    %5476 = vmatprep.subr.mxu0 0.0
    %5477 = vmatpush2.msra.mxu0 0.0
    %5478 = vmatprep.subr.mxu0 0.0
    %5479 = vmatpush2.msra.mxu0 0.0
    %5480 = vmatprep.subr.mxu0 0.0
    %5481 = vmatpush2.msra.mxu0 0.0
    %5482 = vmatprep.subr.mxu0 0.0
    %5483 = vmatpush2.msra.mxu0 0.0
    %5484 = vmatprep.subr.mxu0 0.0
    %5485 = vmatpush2.msra.mxu0 0.0
    %5486 = vmatprep.subr.mxu0 0.0
    %5487 = vmatpush2.msra.mxu0 0.0
    %5488 = vmatprep.subr.mxu0 0.0
    %5489 = vmatpush2.msra.mxu0 0.0
    %5490 = vmatprep.subr.mxu0 0.0
    %5491 = vmatpush2.msra.mxu0 0.0
    %5492 = vmatprep.subr.mxu0 0.0
    %5493 = vmatpush2.msra.mxu0 0.0
    %5494 = vmatprep.subr.mxu0 0.0
    %5495 = vmatpush2.msra.mxu0 0.0
    %5496 = vmatprep.subr.mxu0 0.0
    %5497 = vmatpush2.msra.mxu0 0.0
    %5498 = vmatprep.subr.mxu0 0.0
    %5499 = vmatpush2.msra.mxu0 0.0
    %5500 = vmatprep.subr.mxu0 0.0
    %5501 = vmatpush2.msra.mxu0 0.0
    %5502 = vmatprep.subr.mxu0 0.0
    %5503 = vmatpush2.msra.mxu0 0.0
    %5504 = vmatprep.subr.mxu0 0.0
    %5505 = vmatpush2.msra.mxu0 0.0
    %5506 = vmatprep.subr.mxu0 0.0
    %5507 = vmatpush2.msra.mxu0 0.0
    %5508 = vmatprep.mubr.f32.mxu0 0.0
    %5509 = vmatmul.mubr.f32.gmra.mxu0 %v5439
    %v5510 = vpop.f32.mrf.mxu0
    %v5511 = vadd.f32 0.0, %v5510
    %v5512 = vpop.f32.mrf.mxu0
    %5513 = vmatprep.mubr.f32.mxu0 0.0
    %5514 = vmatmul.mubr.f32.gmra.mxu0 %v5442
    %v5515 = vpop.f32.mrf.mxu0
    %v5516 = vadd.f32 0.0, %v5515
    %v5517 = vpop.f32.mrf.mxu0
    %5518 = vdwg.mxu0
    %v5520 = vsel %vm571, %v5230, 0
    %v5523 = vsel %vm571, %v5235, 0
    %5525 = vmatprep.subr.mxu0 0.0
    %5526 = vmatpush1.msra.mxu0 0.0
    %5527 = vmatprep.subr.mxu0 0.0
    %5528 = vmatpush1.msra.mxu0 0.0
    %5529 = vmatprep.subr.mxu0 0.0
    %5530 = vmatpush1.msra.mxu0 0.0
    %5531 = vmatprep.subr.mxu0 0.0
    %5532 = vmatpush1.msra.mxu0 0.0
    %5533 = vmatprep.subr.mxu0 0.0
    %5534 = vmatpush1.msra.mxu0 0.0
    %5535 = vmatprep.subr.mxu0 0.0
    %5536 = vmatpush1.msra.mxu0 0.0
    %5537 = vmatprep.subr.mxu0 0.0
    %5538 = vmatpush1.msra.mxu0 0.0
    %5539 = vmatprep.subr.mxu0 0.0
    %5540 = vmatpush1.msra.mxu0 0.0
    %5541 = vmatprep.subr.mxu0 0.0
    %5542 = vmatpush1.msra.mxu0 0.0
    %5543 = vmatprep.subr.mxu0 0.0
    %5544 = vmatpush1.msra.mxu0 0.0
    %5545 = vmatprep.subr.mxu0 0.0
    %5546 = vmatpush1.msra.mxu0 0.0
    %5547 = vmatprep.subr.mxu0 0.0
    %5548 = vmatpush1.msra.mxu0 0.0
    %5549 = vmatprep.subr.mxu0 0.0
    %5550 = vmatpush1.msra.mxu0 0.0
    %5551 = vmatprep.subr.mxu0 0.0
    %5552 = vmatpush1.msra.mxu0 0.0
    %5553 = vmatprep.subr.mxu0 0.0
    %5554 = vmatpush1.msra.mxu0 0.0
    %5555 = vmatprep.subr.mxu0 0.0
    %5556 = vmatpush1.msra.mxu0 %v4848
    %5557 = vmatprep.subr.mxu0 0.0
    %5558 = vmatpush2.msra.mxu0 0.0
    %5559 = vmatprep.subr.mxu0 0.0
    %5560 = vmatpush2.msra.mxu0 0.0
    %5561 = vmatprep.subr.mxu0 0.0
    %5562 = vmatpush2.msra.mxu0 0.0
    %5563 = vmatprep.subr.mxu0 0.0
    %5564 = vmatpush2.msra.mxu0 0.0
    %5565 = vmatprep.subr.mxu0 0.0
    %5566 = vmatpush2.msra.mxu0 0.0
    %5567 = vmatprep.subr.mxu0 0.0
    %5568 = vmatpush2.msra.mxu0 0.0
    %5569 = vmatprep.subr.mxu0 0.0
    %5570 = vmatpush2.msra.mxu0 0.0
    %5571 = vmatprep.subr.mxu0 0.0
    %5572 = vmatpush2.msra.mxu0 0.0
    %5573 = vmatprep.subr.mxu0 0.0
    %5574 = vmatpush2.msra.mxu0 0.0
    %5575 = vmatprep.subr.mxu0 0.0
    %5576 = vmatpush2.msra.mxu0 0.0
    %5577 = vmatprep.subr.mxu0 0.0
    %5578 = vmatpush2.msra.mxu0 0.0
    %5579 = vmatprep.subr.mxu0 0.0
    %5580 = vmatpush2.msra.mxu0 0.0
    %5581 = vmatprep.subr.mxu0 0.0
    %5582 = vmatpush2.msra.mxu0 0.0
    %5583 = vmatprep.subr.mxu0 0.0
    %5584 = vmatpush2.msra.mxu0 0.0
    %5585 = vmatprep.subr.mxu0 0.0
    %5586 = vmatpush2.msra.mxu0 0.0
    %5587 = vmatprep.subr.mxu0 0.0
    %5588 = vmatpush2.msra.mxu0 0.0
    %5589 = vmatprep.mubr.f32.mxu0 0.0
    %5590 = vmatmul.mubr.f32.gmra.mxu0 %v5520
    %v5591 = vpop.f32.mrf.mxu0
    %v5592 = vadd.f32 %v5511, %v5591
    %v5593 = vpop.f32.mrf.mxu0
    %5594 = vmatprep.mubr.f32.mxu0 0.0
    %5595 = vmatmul.mubr.f32.gmra.mxu0 %v5523
    %v5596 = vpop.f32.mrf.mxu0
    %v5597 = vadd.f32 %v5516, %v5596
    %v5598 = vpop.f32.mrf.mxu0
    %5599 = vdwg.mxu0
    %5600 = vrot.lane.b32.xlu0 %v5040, 112
    %v5601 = vpop.permute.xlu0 %5600
    %5602 = vrot.lane.b32.xlu0 %v5041, 112
    %v5603 = vpop.permute.xlu0 %5602
    %5604 = vrot.lane.b32.xlu0 %v5032, 112
    %v5605 = vpop.permute.xlu0 %5604
    %5606 = vrot.lane.b32.xlu0 %v5037, 112
    %v5607 = vpop.permute.xlu0 %5606
    %v5608 = vsel %vm571, %v5601, 0
    %v5610 = vsel %vm571, %v5603, 0
    %v5612 = vsel %vm571, %v5605, 0
    %v5614 = vsel %vm571, %v5607, 0
    %5616 = vmatprep.subr.mxu0 0.0
    %5617 = vmatpush1.xpose.msra.mxu0 0.0
    %5618 = vmatprep.subr.mxu0 0.0
    %5619 = vmatpush1.xpose.msra.mxu0 0.0
    %5620 = vmatprep.subr.mxu0 0.0
    %5621 = vmatpush1.xpose.msra.mxu0 0.0
    %5622 = vmatprep.subr.mxu0 0.0
    %5623 = vmatpush1.xpose.msra.mxu0 0.0
    %5624 = vmatprep.subr.mxu0 0.0
    %5625 = vmatpush1.xpose.msra.mxu0 0.0
    %5626 = vmatprep.subr.mxu0 0.0
    %5627 = vmatpush1.xpose.msra.mxu0 0.0
    %5628 = vmatprep.subr.mxu0 0.0
    %5629 = vmatpush1.xpose.msra.mxu0 0.0
    %5630 = vmatprep.subr.mxu0 0.0
    %5631 = vmatpush1.xpose.msra.mxu0 0.0
    %5632 = vmatprep.subr.mxu0 0.0
    %5633 = vmatpush1.xpose.msra.mxu0 0.0
    %5634 = vmatprep.subr.mxu0 0.0
    %5635 = vmatpush1.xpose.msra.mxu0 0.0
    %5636 = vmatprep.subr.mxu0 0.0
    %5637 = vmatpush1.xpose.msra.mxu0 0.0
    %5638 = vmatprep.subr.mxu0 0.0
    %5639 = vmatpush1.xpose.msra.mxu0 0.0
    %5640 = vmatprep.subr.mxu0 0.0
    %5641 = vmatpush1.xpose.msra.mxu0 0.0
    %5642 = vmatprep.subr.mxu0 0.0
    %5643 = vmatpush1.xpose.msra.mxu0 0.0
    %5644 = vmatprep.subr.mxu0 0.0
    %5645 = vmatpush1.xpose.msra.mxu0 %v5614
    %5646 = vmatprep.subr.mxu0 0.0
    %5647 = vmatpush1.xpose.msra.mxu0 %v5612
    %5648 = vmatprep.subr.mxu0 0.0
    %5649 = vmatpush2.xpose.msra.mxu0 0.0
    %5650 = vmatprep.subr.mxu0 0.0
    %5651 = vmatpush2.xpose.msra.mxu0 0.0
    %5652 = vmatprep.subr.mxu0 0.0
    %5653 = vmatpush2.xpose.msra.mxu0 0.0
    %5654 = vmatprep.subr.mxu0 0.0
    %5655 = vmatpush2.xpose.msra.mxu0 0.0
    %5656 = vmatprep.subr.mxu0 0.0
    %5657 = vmatpush2.xpose.msra.mxu0 0.0
    %5658 = vmatprep.subr.mxu0 0.0
    %5659 = vmatpush2.xpose.msra.mxu0 0.0
    %5660 = vmatprep.subr.mxu0 0.0
    %5661 = vmatpush2.xpose.msra.mxu0 0.0
    %5662 = vmatprep.subr.mxu0 0.0
    %5663 = vmatpush2.xpose.msra.mxu0 0.0
    %5664 = vmatprep.subr.mxu0 0.0
    %5665 = vmatpush2.xpose.msra.mxu0 0.0
    %5666 = vmatprep.subr.mxu0 0.0
    %5667 = vmatpush2.xpose.msra.mxu0 0.0
    %5668 = vmatprep.subr.mxu0 0.0
    %5669 = vmatpush2.xpose.msra.mxu0 0.0
    %5670 = vmatprep.subr.mxu0 0.0
    %5671 = vmatpush2.xpose.msra.mxu0 0.0
    %5672 = vmatprep.subr.mxu0 0.0
    %5673 = vmatpush2.xpose.msra.mxu0 0.0
    %5674 = vmatprep.subr.mxu0 0.0
    %5675 = vmatpush2.xpose.msra.mxu0 0.0
    %5676 = vmatprep.subr.mxu0 0.0
    %5677 = vmatpush2.xpose.msra.mxu0 0.0
    %5678 = vmatprep.subr.mxu0 0.0
    %5679 = vmatpush2.xpose.msra.mxu0 0.0
    %5680 = vmatprep.mubr.f32.mxu0 0.0
    %5681 = vmatmul.mubr.f32.gmra.mxu0 %v5608
    %v5682 = vpop.f32.mrf.mxu0
    %v5683 = vadd.f32 %v461, %v5682
    %v5684 = vpop.f32.mrf.mxu0
    %5685 = vmatprep.mubr.f32.mxu0 0.0
    %5686 = vmatmul.mubr.f32.gmra.mxu0 %v5610
    %v5687 = vpop.f32.mrf.mxu0
    %v5688 = vadd.f32 %v462, %v5687
    %v5689 = vpop.f32.mrf.mxu0
    %5690 = vdwg.mxu0
    %v5691 = vsel %vm657, %v5683, -inf
    %5692 = vmax.xlane.f32.xlu0 %v5691
    %v5693 = vpop.xlane.xlu0 %5692
    %v5694 = vsel %vm657, %v5688, -inf
    %5695 = vmax.xlane.f32.xlu0 %v5694
    %v5696 = vpop.xlane.xlu0 %5695
    %v5697 = vsub.f32 %v5683, %v5693
    %v5698 = vsub.f32 %v5688, %v5696
    %v5699 = vmul.f32 %v5697, 1.442695
    %v5700 = vpow.pop %v5699
    %v5701 = vmul.f32 %v5698, 1.442695
    %v5702 = vpow.pop %v5701
    %v5703 = vsel %vm657, %v5700, 0.0
    %5704 = vadd.xlane.f32.xlu0 %v5703
    %v5705 = vpop.xlane.xlu0 %5704
    %v5706 = vsel %vm657, %v5702, 0.0
    %5707 = vadd.xlane.f32.xlu0 %v5706
    %v5708 = vpop.xlane.xlu0 %5707
    %v5709 = vrcp.pop %v5705
    %v5710 = vrcp.pop %v5708
    %v5711 = vmul.f32 %v5700, %v5709
    %v5712 = vmul.f32 %v5702, %v5710
    %5713 = vrot.lane.b32.xlu0 %v5032, 80
    %v5714 = vpop.permute.xlu0 %5713
    %5715 = vrot.lane.b32.xlu0 %v5037, 80
    %v5716 = vpop.permute.xlu0 %5715
    %v5720 = vsel %vm657, %v5711, 0
    %v5723 = vsel %vm657, %v5712, 0
    %5725 = vmatprep.subr.mxu0 0.0
    %5726 = vmatpush1.msra.mxu0 0.0
    %5727 = vmatprep.subr.mxu0 0.0
    %5728 = vmatpush1.msra.mxu0 0.0
    %5729 = vmatprep.subr.mxu0 0.0
    %5730 = vmatpush1.msra.mxu0 0.0
    %5731 = vmatprep.subr.mxu0 0.0
    %5732 = vmatpush1.msra.mxu0 0.0
    %5733 = vmatprep.subr.mxu0 0.0
    %5734 = vmatpush1.msra.mxu0 0.0
    %5735 = vmatprep.subr.mxu0 0.0
    %5736 = vmatpush1.msra.mxu0 0.0
    %5737 = vmatprep.subr.mxu0 0.0
    %5738 = vmatpush1.msra.mxu0 0.0
    %5739 = vmatprep.subr.mxu0 0.0
    %5740 = vmatpush1.msra.mxu0 0.0
    %5741 = vmatprep.subr.mxu0 0.0
    %5742 = vmatpush1.msra.mxu0 0.0
    %5743 = vmatprep.subr.mxu0 0.0
    %5744 = vmatpush1.msra.mxu0 0.0
    %5745 = vmatprep.subr.mxu0 0.0
    %5746 = vmatpush1.msra.mxu0 0.0
    %5747 = vmatprep.subr.mxu0 0.0
    %5748 = vmatpush1.msra.mxu0 0.0
    %5749 = vmatprep.subr.mxu0 0.0
    %5750 = vmatpush1.msra.mxu0 0.0
    %5751 = vmatprep.subr.mxu0 0.0
    %5752 = vmatpush1.msra.mxu0 0.0
    %5753 = vmatprep.subr.mxu0 0.0
    %5754 = vmatpush1.msra.mxu0 %v5716
    %5755 = vmatprep.subr.mxu0 0.0
    %5756 = vmatpush1.msra.mxu0 %v5714
    %5757 = vmatprep.subr.mxu0 0.0
    %5758 = vmatpush2.msra.mxu0 0.0
    %5759 = vmatprep.subr.mxu0 0.0
    %5760 = vmatpush2.msra.mxu0 0.0
    %5761 = vmatprep.subr.mxu0 0.0
    %5762 = vmatpush2.msra.mxu0 0.0
    %5763 = vmatprep.subr.mxu0 0.0
    %5764 = vmatpush2.msra.mxu0 0.0
    %5765 = vmatprep.subr.mxu0 0.0
    %5766 = vmatpush2.msra.mxu0 0.0
    %5767 = vmatprep.subr.mxu0 0.0
    %5768 = vmatpush2.msra.mxu0 0.0
    %5769 = vmatprep.subr.mxu0 0.0
    %5770 = vmatpush2.msra.mxu0 0.0
    %5771 = vmatprep.subr.mxu0 0.0
    %5772 = vmatpush2.msra.mxu0 0.0
    %5773 = vmatprep.subr.mxu0 0.0
    %5774 = vmatpush2.msra.mxu0 0.0
    %5775 = vmatprep.subr.mxu0 0.0
    %5776 = vmatpush2.msra.mxu0 0.0
    %5777 = vmatprep.subr.mxu0 0.0
    %5778 = vmatpush2.msra.mxu0 0.0
    %5779 = vmatprep.subr.mxu0 0.0
    %5780 = vmatpush2.msra.mxu0 0.0
    %5781 = vmatprep.subr.mxu0 0.0
    %5782 = vmatpush2.msra.mxu0 0.0
    %5783 = vmatprep.subr.mxu0 0.0
    %5784 = vmatpush2.msra.mxu0 0.0
    %5785 = vmatprep.subr.mxu0 0.0
    %5786 = vmatpush2.msra.mxu0 0.0
    %5787 = vmatprep.subr.mxu0 0.0
    %5788 = vmatpush2.msra.mxu0 0.0
    %5789 = vmatprep.mubr.f32.mxu0 0.0
    %5790 = vmatmul.mubr.f32.gmra.mxu0 %v5720
    %v5791 = vpop.f32.mrf.mxu0
    %v5792 = vadd.f32 0.0, %v5791
    %v5793 = vpop.f32.mrf.mxu0
    %5794 = vmatprep.mubr.f32.mxu0 0.0
    %5795 = vmatmul.mubr.f32.gmra.mxu0 %v5723
    %v5796 = vpop.f32.mrf.mxu0
    %v5797 = vadd.f32 0.0, %v5796
    %v5798 = vpop.f32.mrf.mxu0
    %5799 = vdwg.mxu0
    %v5801 = vsel %vm571, %v5792, 0
    %v5804 = vsel %vm571, %v5797, 0
    %5806 = vmatprep.subr.mxu0 0.0
    %5807 = vmatpush1.msra.mxu0 0.0
    %5808 = vmatprep.subr.mxu0 0.0
    %5809 = vmatpush1.msra.mxu0 0.0
    %5810 = vmatprep.subr.mxu0 0.0
    %5811 = vmatpush1.msra.mxu0 0.0
    %5812 = vmatprep.subr.mxu0 0.0
    %5813 = vmatpush1.msra.mxu0 0.0
    %5814 = vmatprep.subr.mxu0 0.0
    %5815 = vmatpush1.msra.mxu0 0.0
    %5816 = vmatprep.subr.mxu0 0.0
    %5817 = vmatpush1.msra.mxu0 0.0
    %5818 = vmatprep.subr.mxu0 0.0
    %5819 = vmatpush1.msra.mxu0 0.0
    %5820 = vmatprep.subr.mxu0 0.0
    %5821 = vmatpush1.msra.mxu0 0.0
    %5822 = vmatprep.subr.mxu0 0.0
    %5823 = vmatpush1.msra.mxu0 0.0
    %5824 = vmatprep.subr.mxu0 0.0
    %5825 = vmatpush1.msra.mxu0 0.0
    %5826 = vmatprep.subr.mxu0 0.0
    %5827 = vmatpush1.msra.mxu0 0.0
    %5828 = vmatprep.subr.mxu0 0.0
    %5829 = vmatpush1.msra.mxu0 0.0
    %5830 = vmatprep.subr.mxu0 0.0
    %5831 = vmatpush1.msra.mxu0 0.0
    %5832 = vmatprep.subr.mxu0 0.0
    %5833 = vmatpush1.msra.mxu0 0.0
    %5834 = vmatprep.subr.mxu0 0.0
    %5835 = vmatpush1.msra.mxu0 0.0
    %5836 = vmatprep.subr.mxu0 0.0
    %5837 = vmatpush1.msra.mxu0 %v4850
    %5838 = vmatprep.subr.mxu0 0.0
    %5839 = vmatpush2.msra.mxu0 0.0
    %5840 = vmatprep.subr.mxu0 0.0
    %5841 = vmatpush2.msra.mxu0 0.0
    %5842 = vmatprep.subr.mxu0 0.0
    %5843 = vmatpush2.msra.mxu0 0.0
    %5844 = vmatprep.subr.mxu0 0.0
    %5845 = vmatpush2.msra.mxu0 0.0
    %5846 = vmatprep.subr.mxu0 0.0
    %5847 = vmatpush2.msra.mxu0 0.0
    %5848 = vmatprep.subr.mxu0 0.0
    %5849 = vmatpush2.msra.mxu0 0.0
    %5850 = vmatprep.subr.mxu0 0.0
    %5851 = vmatpush2.msra.mxu0 0.0
    %5852 = vmatprep.subr.mxu0 0.0
    %5853 = vmatpush2.msra.mxu0 0.0
    %5854 = vmatprep.subr.mxu0 0.0
    %5855 = vmatpush2.msra.mxu0 0.0
    %5856 = vmatprep.subr.mxu0 0.0
    %5857 = vmatpush2.msra.mxu0 0.0
    %5858 = vmatprep.subr.mxu0 0.0
    %5859 = vmatpush2.msra.mxu0 0.0
    %5860 = vmatprep.subr.mxu0 0.0
    %5861 = vmatpush2.msra.mxu0 0.0
    %5862 = vmatprep.subr.mxu0 0.0
    %5863 = vmatpush2.msra.mxu0 0.0
    %5864 = vmatprep.subr.mxu0 0.0
    %5865 = vmatpush2.msra.mxu0 0.0
    %5866 = vmatprep.subr.mxu0 0.0
    %5867 = vmatpush2.msra.mxu0 0.0
    %5868 = vmatprep.subr.mxu0 0.0
    %5869 = vmatpush2.msra.mxu0 0.0
    %5870 = vmatprep.mubr.f32.mxu0 0.0
    %5871 = vmatmul.mubr.f32.gmra.mxu0 %v5801
    %v5872 = vpop.f32.mrf.mxu0
    %v5873 = vadd.f32 0.0, %v5872
    %v5874 = vpop.f32.mrf.mxu0
    %5875 = vmatprep.mubr.f32.mxu0 0.0
    %5876 = vmatmul.mubr.f32.gmra.mxu0 %v5804
    %v5877 = vpop.f32.mrf.mxu0
    %v5878 = vadd.f32 0.0, %v5877
    %v5879 = vpop.f32.mrf.mxu0
    %5880 = vdwg.mxu0
    %v5881 = vadd.f32 %v5592, %v5873
    %v5882 = vadd.f32 %v5597, %v5878
    %5883 = vrot.lane.b32.xlu0 %v5040, 104
    %v5884 = vpop.permute.xlu0 %5883
    %5885 = vrot.lane.b32.xlu0 %v5041, 104
    %v5886 = vpop.permute.xlu0 %5885
    %5887 = vrot.lane.b32.xlu0 %v5032, 104
    %v5888 = vpop.permute.xlu0 %5887
    %5889 = vrot.lane.b32.xlu0 %v5037, 104
    %v5890 = vpop.permute.xlu0 %5889
    %v5891 = vsel %vm571, %v5884, 0
    %v5893 = vsel %vm571, %v5886, 0
    %v5895 = vsel %vm571, %v5888, 0
    %v5897 = vsel %vm571, %v5890, 0
    %5899 = vmatprep.subr.mxu0 0.0
    %5900 = vmatpush1.xpose.msra.mxu0 0.0
    %5901 = vmatprep.subr.mxu0 0.0
    %5902 = vmatpush1.xpose.msra.mxu0 0.0
    %5903 = vmatprep.subr.mxu0 0.0
    %5904 = vmatpush1.xpose.msra.mxu0 0.0
    %5905 = vmatprep.subr.mxu0 0.0
    %5906 = vmatpush1.xpose.msra.mxu0 0.0
    %5907 = vmatprep.subr.mxu0 0.0
    %5908 = vmatpush1.xpose.msra.mxu0 0.0
    %5909 = vmatprep.subr.mxu0 0.0
    %5910 = vmatpush1.xpose.msra.mxu0 0.0
    %5911 = vmatprep.subr.mxu0 0.0
    %5912 = vmatpush1.xpose.msra.mxu0 0.0
    %5913 = vmatprep.subr.mxu0 0.0
    %5914 = vmatpush1.xpose.msra.mxu0 0.0
    %5915 = vmatprep.subr.mxu0 0.0
    %5916 = vmatpush1.xpose.msra.mxu0 0.0
    %5917 = vmatprep.subr.mxu0 0.0
    %5918 = vmatpush1.xpose.msra.mxu0 0.0
    %5919 = vmatprep.subr.mxu0 0.0
    %5920 = vmatpush1.xpose.msra.mxu0 0.0
    %5921 = vmatprep.subr.mxu0 0.0
    %5922 = vmatpush1.xpose.msra.mxu0 0.0
    %5923 = vmatprep.subr.mxu0 0.0
    %5924 = vmatpush1.xpose.msra.mxu0 0.0
    %5925 = vmatprep.subr.mxu0 0.0
    %5926 = vmatpush1.xpose.msra.mxu0 0.0
    %5927 = vmatprep.subr.mxu0 0.0
    %5928 = vmatpush1.xpose.msra.mxu0 %v5897
    %5929 = vmatprep.subr.mxu0 0.0
    %5930 = vmatpush1.xpose.msra.mxu0 %v5895
    %5931 = vmatprep.subr.mxu0 0.0
    %5932 = vmatpush2.xpose.msra.mxu0 0.0
    %5933 = vmatprep.subr.mxu0 0.0
    %5934 = vmatpush2.xpose.msra.mxu0 0.0
    %5935 = vmatprep.subr.mxu0 0.0
    %5936 = vmatpush2.xpose.msra.mxu0 0.0
    %5937 = vmatprep.subr.mxu0 0.0
    %5938 = vmatpush2.xpose.msra.mxu0 0.0
    %5939 = vmatprep.subr.mxu0 0.0
    %5940 = vmatpush2.xpose.msra.mxu0 0.0
    %5941 = vmatprep.subr.mxu0 0.0
    %5942 = vmatpush2.xpose.msra.mxu0 0.0
    %5943 = vmatprep.subr.mxu0 0.0
    %5944 = vmatpush2.xpose.msra.mxu0 0.0
    %5945 = vmatprep.subr.mxu0 0.0
    %5946 = vmatpush2.xpose.msra.mxu0 0.0
    %5947 = vmatprep.subr.mxu0 0.0
    %5948 = vmatpush2.xpose.msra.mxu0 0.0
    %5949 = vmatprep.subr.mxu0 0.0
    %5950 = vmatpush2.xpose.msra.mxu0 0.0
    %5951 = vmatprep.subr.mxu0 0.0
    %5952 = vmatpush2.xpose.msra.mxu0 0.0
    %5953 = vmatprep.subr.mxu0 0.0
    %5954 = vmatpush2.xpose.msra.mxu0 0.0
    %5955 = vmatprep.subr.mxu0 0.0
    %5956 = vmatpush2.xpose.msra.mxu0 0.0
    %5957 = vmatprep.subr.mxu0 0.0
    %5958 = vmatpush2.xpose.msra.mxu0 0.0
    %5959 = vmatprep.subr.mxu0 0.0
    %5960 = vmatpush2.xpose.msra.mxu0 0.0
    %5961 = vmatprep.subr.mxu0 0.0
    %5962 = vmatpush2.xpose.msra.mxu0 0.0
    %5963 = vmatprep.mubr.f32.mxu0 0.0
    %5964 = vmatmul.mubr.f32.gmra.mxu0 %v5891
    %v5965 = vpop.f32.mrf.mxu0
    %v5966 = vadd.f32 %v461, %v5965
    %v5967 = vpop.f32.mrf.mxu0
    %5968 = vmatprep.mubr.f32.mxu0 0.0
    %5969 = vmatmul.mubr.f32.gmra.mxu0 %v5893
    %v5970 = vpop.f32.mrf.mxu0
    %v5971 = vadd.f32 %v462, %v5970
    %v5972 = vpop.f32.mrf.mxu0
    %5973 = vdwg.mxu0
    %v5974 = vsel %vm657, %v5966, -inf
    %5975 = vmax.xlane.f32.xlu0 %v5974
    %v5976 = vpop.xlane.xlu0 %5975
    %v5977 = vsel %vm657, %v5971, -inf
    %5978 = vmax.xlane.f32.xlu0 %v5977
    %v5979 = vpop.xlane.xlu0 %5978
    %v5980 = vsub.f32 %v5966, %v5976
    %v5981 = vsub.f32 %v5971, %v5979
    %v5982 = vmul.f32 %v5980, 1.442695
    %v5983 = vpow.pop %v5982
    %v5984 = vmul.f32 %v5981, 1.442695
    %v5985 = vpow.pop %v5984
    %v5986 = vsel %vm657, %v5983, 0.0
    %5987 = vadd.xlane.f32.xlu0 %v5986
    %v5988 = vpop.xlane.xlu0 %5987
    %v5989 = vsel %vm657, %v5985, 0.0
    %5990 = vadd.xlane.f32.xlu0 %v5989
    %v5991 = vpop.xlane.xlu0 %5990
    %v5992 = vrcp.pop %v5988
    %v5993 = vrcp.pop %v5991
    %v5994 = vmul.f32 %v5983, %v5992
    %v5995 = vmul.f32 %v5985, %v5993
    %5996 = vrot.lane.b32.xlu0 %v5032, 72
    %v5997 = vpop.permute.xlu0 %5996
    %5998 = vrot.lane.b32.xlu0 %v5037, 72
    %v5999 = vpop.permute.xlu0 %5998
    %v6003 = vsel %vm657, %v5994, 0
    %v6006 = vsel %vm657, %v5995, 0
    %6008 = vmatprep.subr.mxu0 0.0
    %6009 = vmatpush1.msra.mxu0 0.0
    %6010 = vmatprep.subr.mxu0 0.0
    %6011 = vmatpush1.msra.mxu0 0.0
    %6012 = vmatprep.subr.mxu0 0.0
    %6013 = vmatpush1.msra.mxu0 0.0
    %6014 = vmatprep.subr.mxu0 0.0
    %6015 = vmatpush1.msra.mxu0 0.0
    %6016 = vmatprep.subr.mxu0 0.0
    %6017 = vmatpush1.msra.mxu0 0.0
    %6018 = vmatprep.subr.mxu0 0.0
    %6019 = vmatpush1.msra.mxu0 0.0
    %6020 = vmatprep.subr.mxu0 0.0
    %6021 = vmatpush1.msra.mxu0 0.0
    %6022 = vmatprep.subr.mxu0 0.0
    %6023 = vmatpush1.msra.mxu0 0.0
    %6024 = vmatprep.subr.mxu0 0.0
    %6025 = vmatpush1.msra.mxu0 0.0
    %6026 = vmatprep.subr.mxu0 0.0
    %6027 = vmatpush1.msra.mxu0 0.0
    %6028 = vmatprep.subr.mxu0 0.0
    %6029 = vmatpush1.msra.mxu0 0.0
    %6030 = vmatprep.subr.mxu0 0.0
    %6031 = vmatpush1.msra.mxu0 0.0
    %6032 = vmatprep.subr.mxu0 0.0
    %6033 = vmatpush1.msra.mxu0 0.0
    %6034 = vmatprep.subr.mxu0 0.0
    %6035 = vmatpush1.msra.mxu0 0.0
    %6036 = vmatprep.subr.mxu0 0.0
    %6037 = vmatpush1.msra.mxu0 %v5999
    %6038 = vmatprep.subr.mxu0 0.0
    %6039 = vmatpush1.msra.mxu0 %v5997
    %6040 = vmatprep.subr.mxu0 0.0
    %6041 = vmatpush2.msra.mxu0 0.0
    %6042 = vmatprep.subr.mxu0 0.0
    %6043 = vmatpush2.msra.mxu0 0.0
    %6044 = vmatprep.subr.mxu0 0.0
    %6045 = vmatpush2.msra.mxu0 0.0
    %6046 = vmatprep.subr.mxu0 0.0
    %6047 = vmatpush2.msra.mxu0 0.0
    %6048 = vmatprep.subr.mxu0 0.0
    %6049 = vmatpush2.msra.mxu0 0.0
    %6050 = vmatprep.subr.mxu0 0.0
    %6051 = vmatpush2.msra.mxu0 0.0
    %6052 = vmatprep.subr.mxu0 0.0
    %6053 = vmatpush2.msra.mxu0 0.0
    %6054 = vmatprep.subr.mxu0 0.0
    %6055 = vmatpush2.msra.mxu0 0.0
    %6056 = vmatprep.subr.mxu0 0.0
    %6057 = vmatpush2.msra.mxu0 0.0
    %6058 = vmatprep.subr.mxu0 0.0
    %6059 = vmatpush2.msra.mxu0 0.0
    %6060 = vmatprep.subr.mxu0 0.0
    %6061 = vmatpush2.msra.mxu0 0.0
    %6062 = vmatprep.subr.mxu0 0.0
    %6063 = vmatpush2.msra.mxu0 0.0
    %6064 = vmatprep.subr.mxu0 0.0
    %6065 = vmatpush2.msra.mxu0 0.0
    %6066 = vmatprep.subr.mxu0 0.0
    %6067 = vmatpush2.msra.mxu0 0.0
    %6068 = vmatprep.subr.mxu0 0.0
    %6069 = vmatpush2.msra.mxu0 0.0
    %6070 = vmatprep.subr.mxu0 0.0
    %6071 = vmatpush2.msra.mxu0 0.0
    %6072 = vmatprep.mubr.f32.mxu0 0.0
    %6073 = vmatmul.mubr.f32.gmra.mxu0 %v6003
    %v6074 = vpop.f32.mrf.mxu0
    %v6075 = vadd.f32 0.0, %v6074
    %v6076 = vpop.f32.mrf.mxu0
    %6077 = vmatprep.mubr.f32.mxu0 0.0
    %6078 = vmatmul.mubr.f32.gmra.mxu0 %v6006
    %v6079 = vpop.f32.mrf.mxu0
    %v6080 = vadd.f32 0.0, %v6079
    %v6081 = vpop.f32.mrf.mxu0
    %6082 = vdwg.mxu0
    %v6084 = vsel %vm571, %v6075, 0
    %v6087 = vsel %vm571, %v6080, 0
    %6089 = vmatprep.subr.mxu0 0.0
    %6090 = vmatpush1.msra.mxu0 0.0
    %6091 = vmatprep.subr.mxu0 0.0
    %6092 = vmatpush1.msra.mxu0 0.0
    %6093 = vmatprep.subr.mxu0 0.0
    %6094 = vmatpush1.msra.mxu0 0.0
    %6095 = vmatprep.subr.mxu0 0.0
    %6096 = vmatpush1.msra.mxu0 0.0
    %6097 = vmatprep.subr.mxu0 0.0
    %6098 = vmatpush1.msra.mxu0 0.0
    %6099 = vmatprep.subr.mxu0 0.0
    %6100 = vmatpush1.msra.mxu0 0.0
    %6101 = vmatprep.subr.mxu0 0.0
    %6102 = vmatpush1.msra.mxu0 0.0
    %6103 = vmatprep.subr.mxu0 0.0
    %6104 = vmatpush1.msra.mxu0 0.0
    %6105 = vmatprep.subr.mxu0 0.0
    %6106 = vmatpush1.msra.mxu0 0.0
    %6107 = vmatprep.subr.mxu0 0.0
    %6108 = vmatpush1.msra.mxu0 0.0
    %6109 = vmatprep.subr.mxu0 0.0
    %6110 = vmatpush1.msra.mxu0 0.0
    %6111 = vmatprep.subr.mxu0 0.0
    %6112 = vmatpush1.msra.mxu0 0.0
    %6113 = vmatprep.subr.mxu0 0.0
    %6114 = vmatpush1.msra.mxu0 0.0
    %6115 = vmatprep.subr.mxu0 0.0
    %6116 = vmatpush1.msra.mxu0 0.0
    %6117 = vmatprep.subr.mxu0 0.0
    %6118 = vmatpush1.msra.mxu0 0.0
    %6119 = vmatprep.subr.mxu0 0.0
    %6120 = vmatpush1.msra.mxu0 %v4851
    %6121 = vmatprep.subr.mxu0 0.0
    %6122 = vmatpush2.msra.mxu0 0.0
    %6123 = vmatprep.subr.mxu0 0.0
    %6124 = vmatpush2.msra.mxu0 0.0
    %6125 = vmatprep.subr.mxu0 0.0
    %6126 = vmatpush2.msra.mxu0 0.0
    %6127 = vmatprep.subr.mxu0 0.0
    %6128 = vmatpush2.msra.mxu0 0.0
    %6129 = vmatprep.subr.mxu0 0.0
    %6130 = vmatpush2.msra.mxu0 0.0
    %6131 = vmatprep.subr.mxu0 0.0
    %6132 = vmatpush2.msra.mxu0 0.0
    %6133 = vmatprep.subr.mxu0 0.0
    %6134 = vmatpush2.msra.mxu0 0.0
    %6135 = vmatprep.subr.mxu0 0.0
    %6136 = vmatpush2.msra.mxu0 0.0
    %6137 = vmatprep.subr.mxu0 0.0
    %6138 = vmatpush2.msra.mxu0 0.0
    %6139 = vmatprep.subr.mxu0 0.0
    %6140 = vmatpush2.msra.mxu0 0.0
    %6141 = vmatprep.subr.mxu0 0.0
    %6142 = vmatpush2.msra.mxu0 0.0
    %6143 = vmatprep.subr.mxu0 0.0
    %6144 = vmatpush2.msra.mxu0 0.0
    %6145 = vmatprep.subr.mxu0 0.0
    %6146 = vmatpush2.msra.mxu0 0.0
    %6147 = vmatprep.subr.mxu0 0.0
    %6148 = vmatpush2.msra.mxu0 0.0
    %6149 = vmatprep.subr.mxu0 0.0
    %6150 = vmatpush2.msra.mxu0 0.0
    %6151 = vmatprep.subr.mxu0 0.0
    %6152 = vmatpush2.msra.mxu0 0.0
    %6153 = vmatprep.mubr.f32.mxu0 0.0
    %6154 = vmatmul.mubr.f32.gmra.mxu0 %v6084
    %v6155 = vpop.f32.mrf.mxu0
    %v6156 = vadd.f32 0.0, %v6155
    %v6157 = vpop.f32.mrf.mxu0
    %6158 = vmatprep.mubr.f32.mxu0 0.0
    %6159 = vmatmul.mubr.f32.gmra.mxu0 %v6087
    %v6160 = vpop.f32.mrf.mxu0
    %v6161 = vadd.f32 0.0, %v6160
    %v6162 = vpop.f32.mrf.mxu0
    %6163 = vdwg.mxu0
    %v6164 = vadd.f32 %v5881, %v6156
    %v6165 = vadd.f32 %v5882, %v6161
    %v6167 = vlaneseq
    %v6168 = vshrl.u32 %v6167, 7
    %v6169 = vsub.s32 0, %v6168
    %v6170 = vrot.slane %v4852, %v6169
    %v6172 = vadd.f32 %v6164, %v6170
    %v6173 = vadd.f32 %v6165, %v6170
    %v6174 = vadd.f32 %v4841, %v6172
    %v6175 = vadd.f32 %v4842, %v6173
    %v6176 = vld [vmem:[#allocation28] sm:$0x1]
    %v6177 = vld [vmem:[#allocation29] sm:$0x1]
    %v6178 = vsel %vm481, %v6174, 0.0
    %6179 = vadd.xlane.f32.xlu0 %v6178
    %v6180 = vpop.xlane.xlu0 %6179
    %v6181 = vsel %vm481, %v6175, 0.0
    %6182 = vadd.xlane.f32.xlu0 %v6181
    %v6183 = vpop.xlane.xlu0 %6182
    %v6184 = vmul.f32 %v6180, %v1713
    %v6185 = vmul.f32 %v6183, %v1713
    %v6186 = vsub.f32 %v6174, %v6184
    %v6187 = vsub.f32 %v6175, %v6185
    %v6188 = vmul.f32 %v6186, %v6186
    %v6189 = vmul.f32 %v6187, %v6187
    %v6190 = vsel %vm481, %v6188, 0.0
    %6191 = vadd.xlane.f32.xlu0 %v6190
    %v6192 = vpop.xlane.xlu0 %6191
    %v6193 = vsel %vm481, %v6189, 0.0
    %6194 = vadd.xlane.f32.xlu0 %v6193
    %v6195 = vpop.xlane.xlu0 %6194
    %v6196 = vmul.f32 %v6192, %v1713
    %v6197 = vmul.f32 %v6195, %v1713
    %v6198 = vadd.f32 %v6196, 1e-05
    %v6199 = vadd.f32 %v6197, 1e-05
    %v6200 = vrsqrt.pop %v6198
    %v6201 = vrsqrt.pop %v6199
    %v6202 = vmul.f32 %v6186, %v6200
    %v6203 = vmul.f32 %v6187, %v6201
    %v6205 = vlaneseq
    %v6206 = vshrl.u32 %v6205, 7
    %v6207 = vsub.s32 0, %v6206
    %v6208 = vrot.slane %v6176, %v6207
    %v6210 = vmul.f32 %v6202, %v6208
    %v6211 = vmul.f32 %v6203, %v6208
    %v6213 = vlaneseq
    %v6214 = vshrl.u32 %v6213, 7
    %v6215 = vsub.s32 0, %v6214
    %v6216 = vrot.slane %v6177, %v6215
    %v6218 = vadd.f32 %v6210, %v6216
    %v6219 = vadd.f32 %v6211, %v6216
    %v6220 = vld [vmem:[#allocation20] sm:$0xff]
    %v6221 = vld [vmem:[#allocation20 + $0x8] sm:$0xff]
    %v6222 = vld [vmem:[#allocation20 + $0x10] sm:$0xff]
    %v6223 = vld [vmem:[#allocation20 + $0x18] sm:$0xff]
    %v6224 = vld [vmem:[#allocation22] sm:$0x1]
    %v6225 = vld [vmem:[%s55] sm:$0xff]
    %v6226 = vld [vmem:[%s55 + $0x8] sm:$0xff]
    %v6227 = vld [vmem:[%s55 + $0x10] sm:$0xff]
    %v6228 = vld [vmem:[%s55 + $0x18] sm:$0xff]
    %v6229 = vld [vmem:[%s55 + $0x20] sm:$0xff]
    %v6230 = vld [vmem:[%s55 + $0x28] sm:$0xff]
    %v6231 = vld [vmem:[%s55 + $0x30] sm:$0xff]
    %v6232 = vld [vmem:[%s55 + $0x38] sm:$0xff]
    %v6233 = vld [vmem:[#allocation23] sm:$0x1]
    %v6235 = vlaneseq
    %v6236 = vshrl.u32 %v6235, 7
    %v6237 = vsub.s32 0, %v6236
    %v6238 = vrot.slane %v6224, %v6237
    %v6241 = vsel %vm481, %v6218, 0
    %v6244 = vsel %vm481, %v6219, 0
    %6246 = vmatprep.subr.mxu0 0.0
    %6247 = vmatpush1.msra.mxu0 0.0
    %6248 = vmatprep.subr.mxu0 0.0
    %6249 = vmatpush1.msra.mxu0 0.0
    %6250 = vmatprep.subr.mxu0 0.0
    %6251 = vmatpush1.msra.mxu0 0.0
    %6252 = vmatprep.subr.mxu0 0.0
    %6253 = vmatpush1.msra.mxu0 0.0
    %6254 = vmatprep.subr.mxu0 0.0
    %6255 = vmatpush1.msra.mxu0 0.0
    %6256 = vmatprep.subr.mxu0 0.0
    %6257 = vmatpush1.msra.mxu0 0.0
    %6258 = vmatprep.subr.mxu0 0.0
    %6259 = vmatpush1.msra.mxu0 0.0
    %6260 = vmatprep.subr.mxu0 0.0
    %6261 = vmatpush1.msra.mxu0 0.0
    %6262 = vmatprep.subr.mxu0 0.0
    %6263 = vmatpush1.msra.mxu0 0.0
    %6264 = vmatprep.subr.mxu0 0.0
    %6265 = vmatpush1.msra.mxu0 0.0
    %6266 = vmatprep.subr.mxu0 0.0
    %6267 = vmatpush1.msra.mxu0 0.0
    %6268 = vmatprep.subr.mxu0 0.0
    %6269 = vmatpush1.msra.mxu0 0.0
    %6270 = vmatprep.subr.mxu0 0.0
    %6271 = vmatpush1.msra.mxu0 %v6223
    %6272 = vmatprep.subr.mxu0 0.0
    %6273 = vmatpush1.msra.mxu0 %v6222
    %6274 = vmatprep.subr.mxu0 0.0
    %6275 = vmatpush1.msra.mxu0 %v6221
    %6276 = vmatprep.subr.mxu0 0.0
    %6277 = vmatpush1.msra.mxu0 %v6220
    %6278 = vmatprep.subr.mxu0 0.0
    %6279 = vmatpush2.msra.mxu0 0.0
    %6280 = vmatprep.subr.mxu0 0.0
    %6281 = vmatpush2.msra.mxu0 0.0
    %6282 = vmatprep.subr.mxu0 0.0
    %6283 = vmatpush2.msra.mxu0 0.0
    %6284 = vmatprep.subr.mxu0 0.0
    %6285 = vmatpush2.msra.mxu0 0.0
    %6286 = vmatprep.subr.mxu0 0.0
    %6287 = vmatpush2.msra.mxu0 0.0
    %6288 = vmatprep.subr.mxu0 0.0
    %6289 = vmatpush2.msra.mxu0 0.0
    %6290 = vmatprep.subr.mxu0 0.0
    %6291 = vmatpush2.msra.mxu0 0.0
    %6292 = vmatprep.subr.mxu0 0.0
    %6293 = vmatpush2.msra.mxu0 0.0
    %6294 = vmatprep.subr.mxu0 0.0
    %6295 = vmatpush2.msra.mxu0 0.0
    %6296 = vmatprep.subr.mxu0 0.0
    %6297 = vmatpush2.msra.mxu0 0.0
    %6298 = vmatprep.subr.mxu0 0.0
    %6299 = vmatpush2.msra.mxu0 0.0
    %6300 = vmatprep.subr.mxu0 0.0
    %6301 = vmatpush2.msra.mxu0 0.0
    %6302 = vmatprep.subr.mxu0 0.0
    %6303 = vmatpush2.msra.mxu0 0.0
    %6304 = vmatprep.subr.mxu0 0.0
    %6305 = vmatpush2.msra.mxu0 0.0
    %6306 = vmatprep.subr.mxu0 0.0
    %6307 = vmatpush2.msra.mxu0 0.0
    %6308 = vmatprep.subr.mxu0 0.0
    %6309 = vmatpush2.msra.mxu0 0.0
    %6310 = vmatprep.mubr.f32.mxu0 0.0
    %6311 = vmatmul.mubr.f32.gmra.mxu0 %v6241
    %v6312 = vpop.f32.mrf.mxu0
    %v6313 = vadd.f32 %v6238, %v6312
    %v6314 = vpop.f32.mrf.mxu0
    %6315 = vmatprep.mubr.f32.mxu0 0.0
    %6316 = vmatmul.mubr.f32.gmra.mxu0 %v6244
    %v6317 = vpop.f32.mrf.mxu0
    %v6318 = vadd.f32 %v6238, %v6317
    %v6319 = vpop.f32.mrf.mxu0
    %6320 = vdwg.mxu0
    %v6321 = vmax.f32 %v6313, 0.0
    %v6322 = vmax.f32 %v6318, 0.0
    %v6324 = vlaneseq
    %v6325 = vshrl.u32 %v6324, 7
    %v6326 = vsub.s32 0, %v6325
    %v6327 = vrot.slane %v6233, %v6326
    %v6330 = vsel %vm1859, %v6321, 0
    %v6333 = vsel %vm1859, %v6322, 0
    %6335 = vmatprep.subr.mxu0 0.0
    %6336 = vmatpush1.msra.mxu0 0.0
    %6337 = vmatprep.subr.mxu0 0.0
    %6338 = vmatpush1.msra.mxu0 0.0
    %6339 = vmatprep.subr.mxu0 0.0
    %6340 = vmatpush1.msra.mxu0 0.0
    %6341 = vmatprep.subr.mxu0 0.0
    %6342 = vmatpush1.msra.mxu0 0.0
    %6343 = vmatprep.subr.mxu0 0.0
    %6344 = vmatpush1.msra.mxu0 0.0
    %6345 = vmatprep.subr.mxu0 0.0
    %6346 = vmatpush1.msra.mxu0 0.0
    %6347 = vmatprep.subr.mxu0 0.0
    %6348 = vmatpush1.msra.mxu0 0.0
    %6349 = vmatprep.subr.mxu0 0.0
    %6350 = vmatpush1.msra.mxu0 0.0
    %6351 = vmatprep.subr.mxu0 0.0
    %6352 = vmatpush1.msra.mxu0 %v6232
    %6353 = vmatprep.subr.mxu0 0.0
    %6354 = vmatpush1.msra.mxu0 %v6231
    %6355 = vmatprep.subr.mxu0 0.0
    %6356 = vmatpush1.msra.mxu0 %v6230
    %6357 = vmatprep.subr.mxu0 0.0
    %6358 = vmatpush1.msra.mxu0 %v6229
    %6359 = vmatprep.subr.mxu0 0.0
    %6360 = vmatpush1.msra.mxu0 %v6228
    %6361 = vmatprep.subr.mxu0 0.0
    %6362 = vmatpush1.msra.mxu0 %v6227
    %6363 = vmatprep.subr.mxu0 0.0
    %6364 = vmatpush1.msra.mxu0 %v6226
    %6365 = vmatprep.subr.mxu0 0.0
    %6366 = vmatpush1.msra.mxu0 %v6225
    %6367 = vmatprep.subr.mxu0 0.0
    %6368 = vmatpush2.msra.mxu0 0.0
    %6369 = vmatprep.subr.mxu0 0.0
    %6370 = vmatpush2.msra.mxu0 0.0
    %6371 = vmatprep.subr.mxu0 0.0
    %6372 = vmatpush2.msra.mxu0 0.0
    %6373 = vmatprep.subr.mxu0 0.0
    %6374 = vmatpush2.msra.mxu0 0.0
    %6375 = vmatprep.subr.mxu0 0.0
    %6376 = vmatpush2.msra.mxu0 0.0
    %6377 = vmatprep.subr.mxu0 0.0
    %6378 = vmatpush2.msra.mxu0 0.0
    %6379 = vmatprep.subr.mxu0 0.0
    %6380 = vmatpush2.msra.mxu0 0.0
    %6381 = vmatprep.subr.mxu0 0.0
    %6382 = vmatpush2.msra.mxu0 0.0
    %6383 = vmatprep.subr.mxu0 0.0
    %6384 = vmatpush2.msra.mxu0 0.0
    %6385 = vmatprep.subr.mxu0 0.0
    %6386 = vmatpush2.msra.mxu0 0.0
    %6387 = vmatprep.subr.mxu0 0.0
    %6388 = vmatpush2.msra.mxu0 0.0
    %6389 = vmatprep.subr.mxu0 0.0
    %6390 = vmatpush2.msra.mxu0 0.0
    %6391 = vmatprep.subr.mxu0 0.0
    %6392 = vmatpush2.msra.mxu0 0.0
    %6393 = vmatprep.subr.mxu0 0.0
    %6394 = vmatpush2.msra.mxu0 0.0
    %6395 = vmatprep.subr.mxu0 0.0
    %6396 = vmatpush2.msra.mxu0 0.0
    %6397 = vmatprep.subr.mxu0 0.0
    %6398 = vmatpush2.msra.mxu0 0.0
    %6399 = vmatprep.mubr.f32.mxu0 0.0
    %6400 = vmatmul.mubr.f32.gmra.mxu0 %v6330
    %v6401 = vpop.f32.mrf.mxu0
    %v6402 = vadd.f32 %v6327, %v6401
    %v6403 = vpop.f32.mrf.mxu0
    %6404 = vmatprep.mubr.f32.mxu0 0.0
    %6405 = vmatmul.mubr.f32.gmra.mxu0 %v6333
    %v6406 = vpop.f32.mrf.mxu0
    %v6407 = vadd.f32 %v6327, %v6406
    %v6408 = vpop.f32.mrf.mxu0
    %6409 = vdwg.mxu0
    %v6410 = vadd.f32 %v6218, %v6402
    %v6411 = vadd.f32 %v6219, %v6407
    %v6412 = vld [vmem:[#allocation31] sm:$0x1]
    %v6413 = vld [vmem:[#allocation32] sm:$0x1]
    %v6414 = vsel %vm481, %v6410, 0.0
    %6415 = vadd.xlane.f32.xlu0 %v6414
    %v6416 = vpop.xlane.xlu0 %6415
    %v6417 = vsel %vm481, %v6411, 0.0
    %6418 = vadd.xlane.f32.xlu0 %v6417
    %v6419 = vpop.xlane.xlu0 %6418
    %v6420 = vmul.f32 %v6416, %v1713
    %v6421 = vmul.f32 %v6419, %v1713
    %v6422 = vsub.f32 %v6410, %v6420
    %v6423 = vsub.f32 %v6411, %v6421
    %v6424 = vmul.f32 %v6422, %v6422
    %v6425 = vmul.f32 %v6423, %v6423
    %v6426 = vsel %vm481, %v6424, 0.0
    %6427 = vadd.xlane.f32.xlu0 %v6426
    %v6428 = vpop.xlane.xlu0 %6427
    %v6429 = vsel %vm481, %v6425, 0.0
    %6430 = vadd.xlane.f32.xlu0 %v6429
    %v6431 = vpop.xlane.xlu0 %6430
    %v6432 = vmul.f32 %v6428, %v1713
    %v6433 = vmul.f32 %v6431, %v1713
    %v6434 = vadd.f32 %v6432, 1e-05
    %v6435 = vadd.f32 %v6433, 1e-05
    %v6436 = vrsqrt.pop %v6434
    %v6437 = vrsqrt.pop %v6435
    %v6438 = vmul.f32 %v6422, %v6436
    %v6439 = vmul.f32 %v6423, %v6437
    %v6441 = vlaneseq
    %v6442 = vshrl.u32 %v6441, 7
    %v6443 = vsub.s32 0, %v6442
    %v6444 = vrot.slane %v6412, %v6443
    %v6446 = vmul.f32 %v6438, %v6444
    %v6447 = vmul.f32 %v6439, %v6444
    %v6449 = vlaneseq
    %v6450 = vshrl.u32 %v6449, 7
    %v6451 = vsub.s32 0, %v6450
    %v6452 = vrot.slane %v6413, %v6451
    %v6454 = vadd.f32 %v6446, %v6452
    %v6455 = vadd.f32 %v6447, %v6452
    %s6456 = scalar_lea.vmem %s35, 32
    %v6457 = vld [vmem:[%s6456] sm:$0xff]
    %v6458 = vld [vmem:[%s6456 + $0x8] sm:$0xff]
    %v6459 = vld [vmem:[%s6456 + $0x10] sm:$0xff]
    %v6460 = vld [vmem:[%s6456 + $0x18] sm:$0xff]
    %s6461 = scalar_lea.vmem [#allocation13], 1
    %v6462 = vld [vmem:[%s6461] sm:$0x1]
    %s6463 = scalar_lea.vmem %s39, 32
    %v6464 = vld [vmem:[%s6463] sm:$0xff]
    %v6465 = vld [vmem:[%s6463 + $0x8] sm:$0xff]
    %v6466 = vld [vmem:[%s6463 + $0x10] sm:$0xff]
    %v6467 = vld [vmem:[%s6463 + $0x18] sm:$0xff]
    %s6468 = scalar_lea.vmem [#allocation14], 1
    %v6469 = vld [vmem:[%s6468] sm:$0x1]
    %v6471 = vlaneseq
    %v6472 = vshrl.u32 %v6471, 7
    %v6473 = vsub.s32 0, %v6472
    %v6474 = vrot.slane %v6462, %v6473
    %v6477 = vsel %vm481, %v6454, 0
    %v6480 = vsel %vm481, %v6455, 0
    %6482 = vmatprep.subr.mxu0 0.0
    %6483 = vmatpush1.msra.mxu0 0.0
    %6484 = vmatprep.subr.mxu0 0.0
    %6485 = vmatpush1.msra.mxu0 0.0
    %6486 = vmatprep.subr.mxu0 0.0
    %6487 = vmatpush1.msra.mxu0 0.0
    %6488 = vmatprep.subr.mxu0 0.0
    %6489 = vmatpush1.msra.mxu0 0.0
    %6490 = vmatprep.subr.mxu0 0.0
    %6491 = vmatpush1.msra.mxu0 0.0
    %6492 = vmatprep.subr.mxu0 0.0
    %6493 = vmatpush1.msra.mxu0 0.0
    %6494 = vmatprep.subr.mxu0 0.0
    %6495 = vmatpush1.msra.mxu0 0.0
    %6496 = vmatprep.subr.mxu0 0.0
    %6497 = vmatpush1.msra.mxu0 0.0
    %6498 = vmatprep.subr.mxu0 0.0
    %6499 = vmatpush1.msra.mxu0 0.0
    %6500 = vmatprep.subr.mxu0 0.0
    %6501 = vmatpush1.msra.mxu0 0.0
    %6502 = vmatprep.subr.mxu0 0.0
    %6503 = vmatpush1.msra.mxu0 0.0
    %6504 = vmatprep.subr.mxu0 0.0
    %6505 = vmatpush1.msra.mxu0 0.0
    %6506 = vmatprep.subr.mxu0 0.0
    %6507 = vmatpush1.msra.mxu0 %v6460
    %6508 = vmatprep.subr.mxu0 0.0
    %6509 = vmatpush1.msra.mxu0 %v6459
    %6510 = vmatprep.subr.mxu0 0.0
    %6511 = vmatpush1.msra.mxu0 %v6458
    %6512 = vmatprep.subr.mxu0 0.0
    %6513 = vmatpush1.msra.mxu0 %v6457
    %6514 = vmatprep.subr.mxu0 0.0
    %6515 = vmatpush2.msra.mxu0 0.0
    %6516 = vmatprep.subr.mxu0 0.0
    %6517 = vmatpush2.msra.mxu0 0.0
    %6518 = vmatprep.subr.mxu0 0.0
    %6519 = vmatpush2.msra.mxu0 0.0
    %6520 = vmatprep.subr.mxu0 0.0
    %6521 = vmatpush2.msra.mxu0 0.0
    %6522 = vmatprep.subr.mxu0 0.0
    %6523 = vmatpush2.msra.mxu0 0.0
    %6524 = vmatprep.subr.mxu0 0.0
    %6525 = vmatpush2.msra.mxu0 0.0
    %6526 = vmatprep.subr.mxu0 0.0
    %6527 = vmatpush2.msra.mxu0 0.0
    %6528 = vmatprep.subr.mxu0 0.0
    %6529 = vmatpush2.msra.mxu0 0.0
    %6530 = vmatprep.subr.mxu0 0.0
    %6531 = vmatpush2.msra.mxu0 0.0
    %6532 = vmatprep.subr.mxu0 0.0
    %6533 = vmatpush2.msra.mxu0 0.0
    %6534 = vmatprep.subr.mxu0 0.0
    %6535 = vmatpush2.msra.mxu0 0.0
    %6536 = vmatprep.subr.mxu0 0.0
    %6537 = vmatpush2.msra.mxu0 0.0
    %6538 = vmatprep.subr.mxu0 0.0
    %6539 = vmatpush2.msra.mxu0 0.0
    %6540 = vmatprep.subr.mxu0 0.0
    %6541 = vmatpush2.msra.mxu0 0.0
    %6542 = vmatprep.subr.mxu0 0.0
    %6543 = vmatpush2.msra.mxu0 0.0
    %6544 = vmatprep.subr.mxu0 0.0
    %6545 = vmatpush2.msra.mxu0 0.0
    %6546 = vmatprep.mubr.f32.mxu0 0.0
    %6547 = vmatmul.mubr.f32.gmra.mxu0 %v6477
    %v6548 = vpop.f32.mrf.mxu0
    %v6549 = vadd.f32 %v6474, %v6548
    %v6550 = vpop.f32.mrf.mxu0
    %6551 = vmatprep.mubr.f32.mxu0 0.0
    %6552 = vmatmul.mubr.f32.gmra.mxu0 %v6480
    %v6553 = vpop.f32.mrf.mxu0
    %v6554 = vadd.f32 %v6474, %v6553
    %v6555 = vpop.f32.mrf.mxu0
    %6556 = vdwg.mxu0
    %v6557 = vmul.f32 %v6549, 0.35355338
    %v6558 = vmul.f32 %v6554, 0.35355338
    %6561 = vrot.lane.b32.xlu0 %v6549, 96
    %v6562 = vpop.permute.xlu0 %6561
    %6563 = vrot.lane.b32.xlu0 %v6554, 96
    %v6564 = vpop.permute.xlu0 %6563
    %v6566 = vsel %vm571, %v6557, 0
    %v6569 = vsel %vm571, %v6558, 0
    %v6571 = vsel %vm571, %v6562, 0
    %v6573 = vsel %vm571, %v6564, 0
    %6575 = vmatprep.subr.mxu0 0.0
    %6576 = vmatpush1.xpose.msra.mxu0 0.0
    %6577 = vmatprep.subr.mxu0 0.0
    %6578 = vmatpush1.xpose.msra.mxu0 0.0
    %6579 = vmatprep.subr.mxu0 0.0
    %6580 = vmatpush1.xpose.msra.mxu0 0.0
    %6581 = vmatprep.subr.mxu0 0.0
    %6582 = vmatpush1.xpose.msra.mxu0 0.0
    %6583 = vmatprep.subr.mxu0 0.0
    %6584 = vmatpush1.xpose.msra.mxu0 0.0
    %6585 = vmatprep.subr.mxu0 0.0
    %6586 = vmatpush1.xpose.msra.mxu0 0.0
    %6587 = vmatprep.subr.mxu0 0.0
    %6588 = vmatpush1.xpose.msra.mxu0 0.0
    %6589 = vmatprep.subr.mxu0 0.0
    %6590 = vmatpush1.xpose.msra.mxu0 0.0
    %6591 = vmatprep.subr.mxu0 0.0
    %6592 = vmatpush1.xpose.msra.mxu0 0.0
    %6593 = vmatprep.subr.mxu0 0.0
    %6594 = vmatpush1.xpose.msra.mxu0 0.0
    %6595 = vmatprep.subr.mxu0 0.0
    %6596 = vmatpush1.xpose.msra.mxu0 0.0
    %6597 = vmatprep.subr.mxu0 0.0
    %6598 = vmatpush1.xpose.msra.mxu0 0.0
    %6599 = vmatprep.subr.mxu0 0.0
    %6600 = vmatpush1.xpose.msra.mxu0 0.0
    %6601 = vmatprep.subr.mxu0 0.0
    %6602 = vmatpush1.xpose.msra.mxu0 0.0
    %6603 = vmatprep.subr.mxu0 0.0
    %6604 = vmatpush1.xpose.msra.mxu0 %v6573
    %6605 = vmatprep.subr.mxu0 0.0
    %6606 = vmatpush1.xpose.msra.mxu0 %v6571
    %6607 = vmatprep.subr.mxu0 0.0
    %6608 = vmatpush2.xpose.msra.mxu0 0.0
    %6609 = vmatprep.subr.mxu0 0.0
    %6610 = vmatpush2.xpose.msra.mxu0 0.0
    %6611 = vmatprep.subr.mxu0 0.0
    %6612 = vmatpush2.xpose.msra.mxu0 0.0
    %6613 = vmatprep.subr.mxu0 0.0
    %6614 = vmatpush2.xpose.msra.mxu0 0.0
    %6615 = vmatprep.subr.mxu0 0.0
    %6616 = vmatpush2.xpose.msra.mxu0 0.0
    %6617 = vmatprep.subr.mxu0 0.0
    %6618 = vmatpush2.xpose.msra.mxu0 0.0
    %6619 = vmatprep.subr.mxu0 0.0
    %6620 = vmatpush2.xpose.msra.mxu0 0.0
    %6621 = vmatprep.subr.mxu0 0.0
    %6622 = vmatpush2.xpose.msra.mxu0 0.0
    %6623 = vmatprep.subr.mxu0 0.0
    %6624 = vmatpush2.xpose.msra.mxu0 0.0
    %6625 = vmatprep.subr.mxu0 0.0
    %6626 = vmatpush2.xpose.msra.mxu0 0.0
    %6627 = vmatprep.subr.mxu0 0.0
    %6628 = vmatpush2.xpose.msra.mxu0 0.0
    %6629 = vmatprep.subr.mxu0 0.0
    %6630 = vmatpush2.xpose.msra.mxu0 0.0
    %6631 = vmatprep.subr.mxu0 0.0
    %6632 = vmatpush2.xpose.msra.mxu0 0.0
    %6633 = vmatprep.subr.mxu0 0.0
    %6634 = vmatpush2.xpose.msra.mxu0 0.0
    %6635 = vmatprep.subr.mxu0 0.0
    %6636 = vmatpush2.xpose.msra.mxu0 0.0
    %6637 = vmatprep.subr.mxu0 0.0
    %6638 = vmatpush2.xpose.msra.mxu0 0.0
    %6639 = vmatprep.mubr.f32.mxu0 0.0
    %6640 = vmatmul.mubr.f32.gmra.mxu0 %v6566
    %v6641 = vpop.f32.mrf.mxu0
    %v6642 = vadd.f32 %v459, %v6641
    %v6643 = vpop.f32.mrf.mxu0
    %6644 = vmatprep.mubr.f32.mxu0 0.0
    %6645 = vmatmul.mubr.f32.gmra.mxu0 %v6569
    %v6646 = vpop.f32.mrf.mxu0
    %v6647 = vadd.f32 %v460, %v6646
    %v6648 = vpop.f32.mrf.mxu0
    %6649 = vdwg.mxu0
    %v6650 = vsel %vm657, %v6642, -inf
    %6651 = vmax.xlane.f32.xlu0 %v6650
    %v6652 = vpop.xlane.xlu0 %6651
    %v6653 = vsel %vm657, %v6647, -inf
    %6654 = vmax.xlane.f32.xlu0 %v6653
    %v6655 = vpop.xlane.xlu0 %6654
    %v6656 = vsub.f32 %v6642, %v6652
    %v6657 = vsub.f32 %v6647, %v6655
    %v6658 = vmul.f32 %v6656, 1.442695
    %v6659 = vpow.pop %v6658
    %v6660 = vmul.f32 %v6657, 1.442695
    %v6661 = vpow.pop %v6660
    %v6662 = vsel %vm657, %v6659, 0.0
    %6663 = vadd.xlane.f32.xlu0 %v6662
    %v6664 = vpop.xlane.xlu0 %6663
    %v6665 = vsel %vm657, %v6661, 0.0
    %6666 = vadd.xlane.f32.xlu0 %v6665
    %v6667 = vpop.xlane.xlu0 %6666
    %v6668 = vrcp.pop %v6664
    %v6669 = vrcp.pop %v6667
    %v6670 = vmul.f32 %v6659, %v6668
    %v6671 = vmul.f32 %v6661, %v6669
    %6672 = vrot.lane.b32.xlu0 %v6549, 64
    %v6673 = vpop.permute.xlu0 %6672
    %6674 = vrot.lane.b32.xlu0 %v6554, 64
    %v6675 = vpop.permute.xlu0 %6674
    %v6679 = vsel %vm657, %v6670, 0
    %v6682 = vsel %vm657, %v6671, 0
    %6684 = vmatprep.subr.mxu0 0.0
    %6685 = vmatpush1.msra.mxu0 0.0
    %6686 = vmatprep.subr.mxu0 0.0
    %6687 = vmatpush1.msra.mxu0 0.0
    %6688 = vmatprep.subr.mxu0 0.0
    %6689 = vmatpush1.msra.mxu0 0.0
    %6690 = vmatprep.subr.mxu0 0.0
    %6691 = vmatpush1.msra.mxu0 0.0
    %6692 = vmatprep.subr.mxu0 0.0
    %6693 = vmatpush1.msra.mxu0 0.0
    %6694 = vmatprep.subr.mxu0 0.0
    %6695 = vmatpush1.msra.mxu0 0.0
    %6696 = vmatprep.subr.mxu0 0.0
    %6697 = vmatpush1.msra.mxu0 0.0
    %6698 = vmatprep.subr.mxu0 0.0
    %6699 = vmatpush1.msra.mxu0 0.0
    %6700 = vmatprep.subr.mxu0 0.0
    %6701 = vmatpush1.msra.mxu0 0.0
    %6702 = vmatprep.subr.mxu0 0.0
    %6703 = vmatpush1.msra.mxu0 0.0
    %6704 = vmatprep.subr.mxu0 0.0
    %6705 = vmatpush1.msra.mxu0 0.0
    %6706 = vmatprep.subr.mxu0 0.0
    %6707 = vmatpush1.msra.mxu0 0.0
    %6708 = vmatprep.subr.mxu0 0.0
    %6709 = vmatpush1.msra.mxu0 0.0
    %6710 = vmatprep.subr.mxu0 0.0
    %6711 = vmatpush1.msra.mxu0 0.0
    %6712 = vmatprep.subr.mxu0 0.0
    %6713 = vmatpush1.msra.mxu0 %v6675
    %6714 = vmatprep.subr.mxu0 0.0
    %6715 = vmatpush1.msra.mxu0 %v6673
    %6716 = vmatprep.subr.mxu0 0.0
    %6717 = vmatpush2.msra.mxu0 0.0
    %6718 = vmatprep.subr.mxu0 0.0
    %6719 = vmatpush2.msra.mxu0 0.0
    %6720 = vmatprep.subr.mxu0 0.0
    %6721 = vmatpush2.msra.mxu0 0.0
    %6722 = vmatprep.subr.mxu0 0.0
    %6723 = vmatpush2.msra.mxu0 0.0
    %6724 = vmatprep.subr.mxu0 0.0
    %6725 = vmatpush2.msra.mxu0 0.0
    %6726 = vmatprep.subr.mxu0 0.0
    %6727 = vmatpush2.msra.mxu0 0.0
    %6728 = vmatprep.subr.mxu0 0.0
    %6729 = vmatpush2.msra.mxu0 0.0
    %6730 = vmatprep.subr.mxu0 0.0
    %6731 = vmatpush2.msra.mxu0 0.0
    %6732 = vmatprep.subr.mxu0 0.0
    %6733 = vmatpush2.msra.mxu0 0.0
    %6734 = vmatprep.subr.mxu0 0.0
    %6735 = vmatpush2.msra.mxu0 0.0
    %6736 = vmatprep.subr.mxu0 0.0
    %6737 = vmatpush2.msra.mxu0 0.0
    %6738 = vmatprep.subr.mxu0 0.0
    %6739 = vmatpush2.msra.mxu0 0.0
    %6740 = vmatprep.subr.mxu0 0.0
    %6741 = vmatpush2.msra.mxu0 0.0
    %6742 = vmatprep.subr.mxu0 0.0
    %6743 = vmatpush2.msra.mxu0 0.0
    %6744 = vmatprep.subr.mxu0 0.0
    %6745 = vmatpush2.msra.mxu0 0.0
    %6746 = vmatprep.subr.mxu0 0.0
    %6747 = vmatpush2.msra.mxu0 0.0
    %6748 = vmatprep.mubr.f32.mxu0 0.0
    %6749 = vmatmul.mubr.f32.gmra.mxu0 %v6679
    %v6750 = vpop.f32.mrf.mxu0
    %v6751 = vadd.f32 0.0, %v6750
    %v6752 = vpop.f32.mrf.mxu0
    %6753 = vmatprep.mubr.f32.mxu0 0.0
    %6754 = vmatmul.mubr.f32.gmra.mxu0 %v6682
    %v6755 = vpop.f32.mrf.mxu0
    %v6756 = vadd.f32 0.0, %v6755
    %v6757 = vpop.f32.mrf.mxu0
    %6758 = vdwg.mxu0
    %6759 = vrot.lane.b32.xlu0 %v6557, 120
    %v6760 = vpop.permute.xlu0 %6759
    %6761 = vrot.lane.b32.xlu0 %v6558, 120
    %v6762 = vpop.permute.xlu0 %6761
    %6763 = vrot.lane.b32.xlu0 %v6549, 88
    %v6764 = vpop.permute.xlu0 %6763
    %6765 = vrot.lane.b32.xlu0 %v6554, 88
    %v6766 = vpop.permute.xlu0 %6765
    %v6767 = vsel %vm571, %v6760, 0
    %v6769 = vsel %vm571, %v6762, 0
    %v6771 = vsel %vm571, %v6764, 0
    %v6773 = vsel %vm571, %v6766, 0
    %6775 = vmatprep.subr.mxu0 0.0
    %6776 = vmatpush1.xpose.msra.mxu0 0.0
    %6777 = vmatprep.subr.mxu0 0.0
    %6778 = vmatpush1.xpose.msra.mxu0 0.0
    %6779 = vmatprep.subr.mxu0 0.0
    %6780 = vmatpush1.xpose.msra.mxu0 0.0
    %6781 = vmatprep.subr.mxu0 0.0
    %6782 = vmatpush1.xpose.msra.mxu0 0.0
    %6783 = vmatprep.subr.mxu0 0.0
    %6784 = vmatpush1.xpose.msra.mxu0 0.0
    %6785 = vmatprep.subr.mxu0 0.0
    %6786 = vmatpush1.xpose.msra.mxu0 0.0
    %6787 = vmatprep.subr.mxu0 0.0
    %6788 = vmatpush1.xpose.msra.mxu0 0.0
    %6789 = vmatprep.subr.mxu0 0.0
    %6790 = vmatpush1.xpose.msra.mxu0 0.0
    %6791 = vmatprep.subr.mxu0 0.0
    %6792 = vmatpush1.xpose.msra.mxu0 0.0
    %6793 = vmatprep.subr.mxu0 0.0
    %6794 = vmatpush1.xpose.msra.mxu0 0.0
    %6795 = vmatprep.subr.mxu0 0.0
    %6796 = vmatpush1.xpose.msra.mxu0 0.0
    %6797 = vmatprep.subr.mxu0 0.0
    %6798 = vmatpush1.xpose.msra.mxu0 0.0
    %6799 = vmatprep.subr.mxu0 0.0
    %6800 = vmatpush1.xpose.msra.mxu0 0.0
    %6801 = vmatprep.subr.mxu0 0.0
    %6802 = vmatpush1.xpose.msra.mxu0 0.0
    %6803 = vmatprep.subr.mxu0 0.0
    %6804 = vmatpush1.xpose.msra.mxu0 %v6773
    %6805 = vmatprep.subr.mxu0 0.0
    %6806 = vmatpush1.xpose.msra.mxu0 %v6771
    %6807 = vmatprep.subr.mxu0 0.0
    %6808 = vmatpush2.xpose.msra.mxu0 0.0
    %6809 = vmatprep.subr.mxu0 0.0
    %6810 = vmatpush2.xpose.msra.mxu0 0.0
    %6811 = vmatprep.subr.mxu0 0.0
    %6812 = vmatpush2.xpose.msra.mxu0 0.0
    %6813 = vmatprep.subr.mxu0 0.0
    %6814 = vmatpush2.xpose.msra.mxu0 0.0
    %6815 = vmatprep.subr.mxu0 0.0
    %6816 = vmatpush2.xpose.msra.mxu0 0.0
    %6817 = vmatprep.subr.mxu0 0.0
    %6818 = vmatpush2.xpose.msra.mxu0 0.0
    %6819 = vmatprep.subr.mxu0 0.0
    %6820 = vmatpush2.xpose.msra.mxu0 0.0
    %6821 = vmatprep.subr.mxu0 0.0
    %6822 = vmatpush2.xpose.msra.mxu0 0.0
    %6823 = vmatprep.subr.mxu0 0.0
    %6824 = vmatpush2.xpose.msra.mxu0 0.0
    %6825 = vmatprep.subr.mxu0 0.0
    %6826 = vmatpush2.xpose.msra.mxu0 0.0
    %6827 = vmatprep.subr.mxu0 0.0
    %6828 = vmatpush2.xpose.msra.mxu0 0.0
    %6829 = vmatprep.subr.mxu0 0.0
    %6830 = vmatpush2.xpose.msra.mxu0 0.0
    %6831 = vmatprep.subr.mxu0 0.0
    %6832 = vmatpush2.xpose.msra.mxu0 0.0
    %6833 = vmatprep.subr.mxu0 0.0
    %6834 = vmatpush2.xpose.msra.mxu0 0.0
    %6835 = vmatprep.subr.mxu0 0.0
    %6836 = vmatpush2.xpose.msra.mxu0 0.0
    %6837 = vmatprep.subr.mxu0 0.0
    %6838 = vmatpush2.xpose.msra.mxu0 0.0
    %6839 = vmatprep.mubr.f32.mxu0 0.0
    %6840 = vmatmul.mubr.f32.gmra.mxu0 %v6767
    %v6841 = vpop.f32.mrf.mxu0
    %v6842 = vadd.f32 %v459, %v6841
    %v6843 = vpop.f32.mrf.mxu0
    %6844 = vmatprep.mubr.f32.mxu0 0.0
    %6845 = vmatmul.mubr.f32.gmra.mxu0 %v6769
    %v6846 = vpop.f32.mrf.mxu0
    %v6847 = vadd.f32 %v460, %v6846
    %v6848 = vpop.f32.mrf.mxu0
    %6849 = vdwg.mxu0
    %v6850 = vsel %vm657, %v6842, -inf
    %6851 = vmax.xlane.f32.xlu0 %v6850
    %v6852 = vpop.xlane.xlu0 %6851
    %v6853 = vsel %vm657, %v6847, -inf
    %6854 = vmax.xlane.f32.xlu0 %v6853
    %v6855 = vpop.xlane.xlu0 %6854
    %v6856 = vsub.f32 %v6842, %v6852
    %v6857 = vsub.f32 %v6847, %v6855
    %v6858 = vmul.f32 %v6856, 1.442695
    %v6859 = vpow.pop %v6858
    %v6860 = vmul.f32 %v6857, 1.442695
    %v6861 = vpow.pop %v6860
    %v6862 = vsel %vm657, %v6859, 0.0
    %6863 = vadd.xlane.f32.xlu0 %v6862
    %v6864 = vpop.xlane.xlu0 %6863
    %v6865 = vsel %vm657, %v6861, 0.0
    %6866 = vadd.xlane.f32.xlu0 %v6865
    %v6867 = vpop.xlane.xlu0 %6866
    %v6868 = vrcp.pop %v6864
    %v6869 = vrcp.pop %v6867
    %v6870 = vmul.f32 %v6859, %v6868
    %v6871 = vmul.f32 %v6861, %v6869
    %6872 = vrot.lane.b32.xlu0 %v6549, 56
    %v6873 = vpop.permute.xlu0 %6872
    %6874 = vrot.lane.b32.xlu0 %v6554, 56
    %v6875 = vpop.permute.xlu0 %6874
    %v6879 = vsel %vm657, %v6870, 0
    %v6882 = vsel %vm657, %v6871, 0
    %6884 = vmatprep.subr.mxu0 0.0
    %6885 = vmatpush1.msra.mxu0 0.0
    %6886 = vmatprep.subr.mxu0 0.0
    %6887 = vmatpush1.msra.mxu0 0.0
    %6888 = vmatprep.subr.mxu0 0.0
    %6889 = vmatpush1.msra.mxu0 0.0
    %6890 = vmatprep.subr.mxu0 0.0
    %6891 = vmatpush1.msra.mxu0 0.0
    %6892 = vmatprep.subr.mxu0 0.0
    %6893 = vmatpush1.msra.mxu0 0.0
    %6894 = vmatprep.subr.mxu0 0.0
    %6895 = vmatpush1.msra.mxu0 0.0
    %6896 = vmatprep.subr.mxu0 0.0
    %6897 = vmatpush1.msra.mxu0 0.0
    %6898 = vmatprep.subr.mxu0 0.0
    %6899 = vmatpush1.msra.mxu0 0.0
    %6900 = vmatprep.subr.mxu0 0.0
    %6901 = vmatpush1.msra.mxu0 0.0
    %6902 = vmatprep.subr.mxu0 0.0
    %6903 = vmatpush1.msra.mxu0 0.0
    %6904 = vmatprep.subr.mxu0 0.0
    %6905 = vmatpush1.msra.mxu0 0.0
    %6906 = vmatprep.subr.mxu0 0.0
    %6907 = vmatpush1.msra.mxu0 0.0
    %6908 = vmatprep.subr.mxu0 0.0
    %6909 = vmatpush1.msra.mxu0 0.0
    %6910 = vmatprep.subr.mxu0 0.0
    %6911 = vmatpush1.msra.mxu0 0.0
    %6912 = vmatprep.subr.mxu0 0.0
    %6913 = vmatpush1.msra.mxu0 %v6875
    %6914 = vmatprep.subr.mxu0 0.0
    %6915 = vmatpush1.msra.mxu0 %v6873
    %6916 = vmatprep.subr.mxu0 0.0
    %6917 = vmatpush2.msra.mxu0 0.0
    %6918 = vmatprep.subr.mxu0 0.0
    %6919 = vmatpush2.msra.mxu0 0.0
    %6920 = vmatprep.subr.mxu0 0.0
    %6921 = vmatpush2.msra.mxu0 0.0
    %6922 = vmatprep.subr.mxu0 0.0
    %6923 = vmatpush2.msra.mxu0 0.0
    %6924 = vmatprep.subr.mxu0 0.0
    %6925 = vmatpush2.msra.mxu0 0.0
    %6926 = vmatprep.subr.mxu0 0.0
    %6927 = vmatpush2.msra.mxu0 0.0
    %6928 = vmatprep.subr.mxu0 0.0
    %6929 = vmatpush2.msra.mxu0 0.0
    %6930 = vmatprep.subr.mxu0 0.0
    %6931 = vmatpush2.msra.mxu0 0.0
    %6932 = vmatprep.subr.mxu0 0.0
    %6933 = vmatpush2.msra.mxu0 0.0
    %6934 = vmatprep.subr.mxu0 0.0
    %6935 = vmatpush2.msra.mxu0 0.0
    %6936 = vmatprep.subr.mxu0 0.0
    %6937 = vmatpush2.msra.mxu0 0.0
    %6938 = vmatprep.subr.mxu0 0.0
    %6939 = vmatpush2.msra.mxu0 0.0
    %6940 = vmatprep.subr.mxu0 0.0
    %6941 = vmatpush2.msra.mxu0 0.0
    %6942 = vmatprep.subr.mxu0 0.0
    %6943 = vmatpush2.msra.mxu0 0.0
    %6944 = vmatprep.subr.mxu0 0.0
    %6945 = vmatpush2.msra.mxu0 0.0
    %6946 = vmatprep.subr.mxu0 0.0
    %6947 = vmatpush2.msra.mxu0 0.0
    %6948 = vmatprep.mubr.f32.mxu0 0.0
    %6949 = vmatmul.mubr.f32.gmra.mxu0 %v6879
    %v6950 = vpop.f32.mrf.mxu0
    %v6951 = vadd.f32 0.0, %v6950
    %v6952 = vpop.f32.mrf.mxu0
    %6953 = vmatprep.mubr.f32.mxu0 0.0
    %6954 = vmatmul.mubr.f32.gmra.mxu0 %v6882
    %v6955 = vpop.f32.mrf.mxu0
    %v6956 = vadd.f32 0.0, %v6955
    %v6957 = vpop.f32.mrf.mxu0
    %6958 = vdwg.mxu0
    %v6960 = vsel %vm571, %v6951, 0
    %v6963 = vsel %vm571, %v6956, 0
    %6965 = vmatprep.subr.mxu0 0.0
    %6966 = vmatpush1.msra.mxu0 0.0
    %6967 = vmatprep.subr.mxu0 0.0
    %6968 = vmatpush1.msra.mxu0 0.0
    %6969 = vmatprep.subr.mxu0 0.0
    %6970 = vmatpush1.msra.mxu0 0.0
    %6971 = vmatprep.subr.mxu0 0.0
    %6972 = vmatpush1.msra.mxu0 0.0
    %6973 = vmatprep.subr.mxu0 0.0
    %6974 = vmatpush1.msra.mxu0 0.0
    %6975 = vmatprep.subr.mxu0 0.0
    %6976 = vmatpush1.msra.mxu0 0.0
    %6977 = vmatprep.subr.mxu0 0.0
    %6978 = vmatpush1.msra.mxu0 0.0
    %6979 = vmatprep.subr.mxu0 0.0
    %6980 = vmatpush1.msra.mxu0 0.0
    %6981 = vmatprep.subr.mxu0 0.0
    %6982 = vmatpush1.msra.mxu0 0.0
    %6983 = vmatprep.subr.mxu0 0.0
    %6984 = vmatpush1.msra.mxu0 0.0
    %6985 = vmatprep.subr.mxu0 0.0
    %6986 = vmatpush1.msra.mxu0 0.0
    %6987 = vmatprep.subr.mxu0 0.0
    %6988 = vmatpush1.msra.mxu0 0.0
    %6989 = vmatprep.subr.mxu0 0.0
    %6990 = vmatpush1.msra.mxu0 0.0
    %6991 = vmatprep.subr.mxu0 0.0
    %6992 = vmatpush1.msra.mxu0 0.0
    %6993 = vmatprep.subr.mxu0 0.0
    %6994 = vmatpush1.msra.mxu0 0.0
    %6995 = vmatprep.subr.mxu0 0.0
    %6996 = vmatpush1.msra.mxu0 %v6465
    %6997 = vmatprep.subr.mxu0 0.0
    %6998 = vmatpush2.msra.mxu0 0.0
    %6999 = vmatprep.subr.mxu0 0.0
    %7000 = vmatpush2.msra.mxu0 0.0
    %7001 = vmatprep.subr.mxu0 0.0
    %7002 = vmatpush2.msra.mxu0 0.0
    %7003 = vmatprep.subr.mxu0 0.0
    %7004 = vmatpush2.msra.mxu0 0.0
    %7005 = vmatprep.subr.mxu0 0.0
    %7006 = vmatpush2.msra.mxu0 0.0
    %7007 = vmatprep.subr.mxu0 0.0
    %7008 = vmatpush2.msra.mxu0 0.0
    %7009 = vmatprep.subr.mxu0 0.0
    %7010 = vmatpush2.msra.mxu0 0.0
    %7011 = vmatprep.subr.mxu0 0.0
    %7012 = vmatpush2.msra.mxu0 0.0
    %7013 = vmatprep.subr.mxu0 0.0
    %7014 = vmatpush2.msra.mxu0 0.0
    %7015 = vmatprep.subr.mxu0 0.0
    %7016 = vmatpush2.msra.mxu0 0.0
    %7017 = vmatprep.subr.mxu0 0.0
    %7018 = vmatpush2.msra.mxu0 0.0
    %7019 = vmatprep.subr.mxu0 0.0
    %7020 = vmatpush2.msra.mxu0 0.0
    %7021 = vmatprep.subr.mxu0 0.0
    %7022 = vmatpush2.msra.mxu0 0.0
    %7023 = vmatprep.subr.mxu0 0.0
    %7024 = vmatpush2.msra.mxu0 0.0
    %7025 = vmatprep.subr.mxu0 0.0
    %7026 = vmatpush2.msra.mxu0 0.0
    %7027 = vmatprep.subr.mxu0 0.0
    %7028 = vmatpush2.msra.mxu0 0.0
    %7029 = vmatprep.mubr.f32.mxu0 0.0
    %7030 = vmatmul.mubr.f32.gmra.mxu0 %v6960
    %v7031 = vpop.f32.mrf.mxu0
    %v7032 = vadd.f32 0.0, %v7031
    %v7033 = vpop.f32.mrf.mxu0
    %7034 = vmatprep.mubr.f32.mxu0 0.0
    %7035 = vmatmul.mubr.f32.gmra.mxu0 %v6963
    %v7036 = vpop.f32.mrf.mxu0
    %v7037 = vadd.f32 0.0, %v7036
    %v7038 = vpop.f32.mrf.mxu0
    %7039 = vdwg.mxu0
    %v7041 = vsel %vm571, %v6751, 0
    %v7044 = vsel %vm571, %v6756, 0
    %7046 = vmatprep.subr.mxu0 0.0
    %7047 = vmatpush1.msra.mxu0 0.0
    %7048 = vmatprep.subr.mxu0 0.0
    %7049 = vmatpush1.msra.mxu0 0.0
    %7050 = vmatprep.subr.mxu0 0.0
    %7051 = vmatpush1.msra.mxu0 0.0
    %7052 = vmatprep.subr.mxu0 0.0
    %7053 = vmatpush1.msra.mxu0 0.0
    %7054 = vmatprep.subr.mxu0 0.0
    %7055 = vmatpush1.msra.mxu0 0.0
    %7056 = vmatprep.subr.mxu0 0.0
    %7057 = vmatpush1.msra.mxu0 0.0
    %7058 = vmatprep.subr.mxu0 0.0
    %7059 = vmatpush1.msra.mxu0 0.0
    %7060 = vmatprep.subr.mxu0 0.0
    %7061 = vmatpush1.msra.mxu0 0.0
    %7062 = vmatprep.subr.mxu0 0.0
    %7063 = vmatpush1.msra.mxu0 0.0
    %7064 = vmatprep.subr.mxu0 0.0
    %7065 = vmatpush1.msra.mxu0 0.0
    %7066 = vmatprep.subr.mxu0 0.0
    %7067 = vmatpush1.msra.mxu0 0.0
    %7068 = vmatprep.subr.mxu0 0.0
    %7069 = vmatpush1.msra.mxu0 0.0
    %7070 = vmatprep.subr.mxu0 0.0
    %7071 = vmatpush1.msra.mxu0 0.0
    %7072 = vmatprep.subr.mxu0 0.0
    %7073 = vmatpush1.msra.mxu0 0.0
    %7074 = vmatprep.subr.mxu0 0.0
    %7075 = vmatpush1.msra.mxu0 0.0
    %7076 = vmatprep.subr.mxu0 0.0
    %7077 = vmatpush1.msra.mxu0 %v6464
    %7078 = vmatprep.subr.mxu0 0.0
    %7079 = vmatpush2.msra.mxu0 0.0
    %7080 = vmatprep.subr.mxu0 0.0
    %7081 = vmatpush2.msra.mxu0 0.0
    %7082 = vmatprep.subr.mxu0 0.0
    %7083 = vmatpush2.msra.mxu0 0.0
    %7084 = vmatprep.subr.mxu0 0.0
    %7085 = vmatpush2.msra.mxu0 0.0
    %7086 = vmatprep.subr.mxu0 0.0
    %7087 = vmatpush2.msra.mxu0 0.0
    %7088 = vmatprep.subr.mxu0 0.0
    %7089 = vmatpush2.msra.mxu0 0.0
    %7090 = vmatprep.subr.mxu0 0.0
    %7091 = vmatpush2.msra.mxu0 0.0
    %7092 = vmatprep.subr.mxu0 0.0
    %7093 = vmatpush2.msra.mxu0 0.0
    %7094 = vmatprep.subr.mxu0 0.0
    %7095 = vmatpush2.msra.mxu0 0.0
    %7096 = vmatprep.subr.mxu0 0.0
    %7097 = vmatpush2.msra.mxu0 0.0
    %7098 = vmatprep.subr.mxu0 0.0
    %7099 = vmatpush2.msra.mxu0 0.0
    %7100 = vmatprep.subr.mxu0 0.0
    %7101 = vmatpush2.msra.mxu0 0.0
    %7102 = vmatprep.subr.mxu0 0.0
    %7103 = vmatpush2.msra.mxu0 0.0
    %7104 = vmatprep.subr.mxu0 0.0
    %7105 = vmatpush2.msra.mxu0 0.0
    %7106 = vmatprep.subr.mxu0 0.0
    %7107 = vmatpush2.msra.mxu0 0.0
    %7108 = vmatprep.subr.mxu0 0.0
    %7109 = vmatpush2.msra.mxu0 0.0
    %7110 = vmatprep.mubr.f32.mxu0 0.0
    %7111 = vmatmul.mubr.f32.gmra.mxu0 %v7041
    %v7112 = vpop.f32.mrf.mxu0
    %v7113 = vadd.f32 %v7032, %v7112
    %v7114 = vpop.f32.mrf.mxu0
    %7115 = vmatprep.mubr.f32.mxu0 0.0
    %7116 = vmatmul.mubr.f32.gmra.mxu0 %v7044
    %v7117 = vpop.f32.mrf.mxu0
    %v7118 = vadd.f32 %v7037, %v7117
    %v7119 = vpop.f32.mrf.mxu0
    %7120 = vdwg.mxu0
    %7121 = vrot.lane.b32.xlu0 %v6557, 112
    %v7122 = vpop.permute.xlu0 %7121
    %7123 = vrot.lane.b32.xlu0 %v6558, 112
    %v7124 = vpop.permute.xlu0 %7123
    %7125 = vrot.lane.b32.xlu0 %v6549, 80
    %v7126 = vpop.permute.xlu0 %7125
    %7127 = vrot.lane.b32.xlu0 %v6554, 80
    %v7128 = vpop.permute.xlu0 %7127
    %v7129 = vsel %vm571, %v7122, 0
    %v7131 = vsel %vm571, %v7124, 0
    %v7133 = vsel %vm571, %v7126, 0
    %v7135 = vsel %vm571, %v7128, 0
    %7137 = vmatprep.subr.mxu0 0.0
    %7138 = vmatpush1.xpose.msra.mxu0 0.0
    %7139 = vmatprep.subr.mxu0 0.0
    %7140 = vmatpush1.xpose.msra.mxu0 0.0
    %7141 = vmatprep.subr.mxu0 0.0
    %7142 = vmatpush1.xpose.msra.mxu0 0.0
    %7143 = vmatprep.subr.mxu0 0.0
    %7144 = vmatpush1.xpose.msra.mxu0 0.0
    %7145 = vmatprep.subr.mxu0 0.0
    %7146 = vmatpush1.xpose.msra.mxu0 0.0
    %7147 = vmatprep.subr.mxu0 0.0
    %7148 = vmatpush1.xpose.msra.mxu0 0.0
    %7149 = vmatprep.subr.mxu0 0.0
    %7150 = vmatpush1.xpose.msra.mxu0 0.0
    %7151 = vmatprep.subr.mxu0 0.0
    %7152 = vmatpush1.xpose.msra.mxu0 0.0
    %7153 = vmatprep.subr.mxu0 0.0
    %7154 = vmatpush1.xpose.msra.mxu0 0.0
    %7155 = vmatprep.subr.mxu0 0.0
    %7156 = vmatpush1.xpose.msra.mxu0 0.0
    %7157 = vmatprep.subr.mxu0 0.0
    %7158 = vmatpush1.xpose.msra.mxu0 0.0
    %7159 = vmatprep.subr.mxu0 0.0
    %7160 = vmatpush1.xpose.msra.mxu0 0.0
    %7161 = vmatprep.subr.mxu0 0.0
    %7162 = vmatpush1.xpose.msra.mxu0 0.0
    %7163 = vmatprep.subr.mxu0 0.0
    %7164 = vmatpush1.xpose.msra.mxu0 0.0
    %7165 = vmatprep.subr.mxu0 0.0
    %7166 = vmatpush1.xpose.msra.mxu0 %v7135
    %7167 = vmatprep.subr.mxu0 0.0
    %7168 = vmatpush1.xpose.msra.mxu0 %v7133
    %7169 = vmatprep.subr.mxu0 0.0
    %7170 = vmatpush2.xpose.msra.mxu0 0.0
    %7171 = vmatprep.subr.mxu0 0.0
    %7172 = vmatpush2.xpose.msra.mxu0 0.0
    %7173 = vmatprep.subr.mxu0 0.0
    %7174 = vmatpush2.xpose.msra.mxu0 0.0
    %7175 = vmatprep.subr.mxu0 0.0
    %7176 = vmatpush2.xpose.msra.mxu0 0.0
    %7177 = vmatprep.subr.mxu0 0.0
    %7178 = vmatpush2.xpose.msra.mxu0 0.0
    %7179 = vmatprep.subr.mxu0 0.0
    %7180 = vmatpush2.xpose.msra.mxu0 0.0
    %7181 = vmatprep.subr.mxu0 0.0
    %7182 = vmatpush2.xpose.msra.mxu0 0.0
    %7183 = vmatprep.subr.mxu0 0.0
    %7184 = vmatpush2.xpose.msra.mxu0 0.0
    %7185 = vmatprep.subr.mxu0 0.0
    %7186 = vmatpush2.xpose.msra.mxu0 0.0
    %7187 = vmatprep.subr.mxu0 0.0
    %7188 = vmatpush2.xpose.msra.mxu0 0.0
    %7189 = vmatprep.subr.mxu0 0.0
    %7190 = vmatpush2.xpose.msra.mxu0 0.0
    %7191 = vmatprep.subr.mxu0 0.0
    %7192 = vmatpush2.xpose.msra.mxu0 0.0
    %7193 = vmatprep.subr.mxu0 0.0
    %7194 = vmatpush2.xpose.msra.mxu0 0.0
    %7195 = vmatprep.subr.mxu0 0.0
    %7196 = vmatpush2.xpose.msra.mxu0 0.0
    %7197 = vmatprep.subr.mxu0 0.0
    %7198 = vmatpush2.xpose.msra.mxu0 0.0
    %7199 = vmatprep.subr.mxu0 0.0
    %7200 = vmatpush2.xpose.msra.mxu0 0.0
    %7201 = vmatprep.mubr.f32.mxu0 0.0
    %7202 = vmatmul.mubr.f32.gmra.mxu0 %v7129
    %v7203 = vpop.f32.mrf.mxu0
    %v7204 = vadd.f32 %v459, %v7203
    %v7205 = vpop.f32.mrf.mxu0
    %7206 = vmatprep.mubr.f32.mxu0 0.0
    %7207 = vmatmul.mubr.f32.gmra.mxu0 %v7131
    %v7208 = vpop.f32.mrf.mxu0
    %v7209 = vadd.f32 %v460, %v7208
    %v7210 = vpop.f32.mrf.mxu0
    %7211 = vdwg.mxu0
    %v7212 = vsel %vm657, %v7204, -inf
    %7213 = vmax.xlane.f32.xlu0 %v7212
    %v7214 = vpop.xlane.xlu0 %7213
    %v7215 = vsel %vm657, %v7209, -inf
    %7216 = vmax.xlane.f32.xlu0 %v7215
    %v7217 = vpop.xlane.xlu0 %7216
    %v7218 = vsub.f32 %v7204, %v7214
    %v7219 = vsub.f32 %v7209, %v7217
    %v7220 = vmul.f32 %v7218, 1.442695
    %v7221 = vpow.pop %v7220
    %v7222 = vmul.f32 %v7219, 1.442695
    %v7223 = vpow.pop %v7222
    %v7224 = vsel %vm657, %v7221, 0.0
    %7225 = vadd.xlane.f32.xlu0 %v7224
    %v7226 = vpop.xlane.xlu0 %7225
    %v7227 = vsel %vm657, %v7223, 0.0
    %7228 = vadd.xlane.f32.xlu0 %v7227
    %v7229 = vpop.xlane.xlu0 %7228
    %v7230 = vrcp.pop %v7226
    %v7231 = vrcp.pop %v7229
    %v7232 = vmul.f32 %v7221, %v7230
    %v7233 = vmul.f32 %v7223, %v7231
    %7234 = vrot.lane.b32.xlu0 %v6549, 48
    %v7235 = vpop.permute.xlu0 %7234
    %7236 = vrot.lane.b32.xlu0 %v6554, 48
    %v7237 = vpop.permute.xlu0 %7236
    %v7241 = vsel %vm657, %v7232, 0
    %v7244 = vsel %vm657, %v7233, 0
    %7246 = vmatprep.subr.mxu0 0.0
    %7247 = vmatpush1.msra.mxu0 0.0
    %7248 = vmatprep.subr.mxu0 0.0
    %7249 = vmatpush1.msra.mxu0 0.0
    %7250 = vmatprep.subr.mxu0 0.0
    %7251 = vmatpush1.msra.mxu0 0.0
    %7252 = vmatprep.subr.mxu0 0.0
    %7253 = vmatpush1.msra.mxu0 0.0
    %7254 = vmatprep.subr.mxu0 0.0
    %7255 = vmatpush1.msra.mxu0 0.0
    %7256 = vmatprep.subr.mxu0 0.0
    %7257 = vmatpush1.msra.mxu0 0.0
    %7258 = vmatprep.subr.mxu0 0.0
    %7259 = vmatpush1.msra.mxu0 0.0
    %7260 = vmatprep.subr.mxu0 0.0
    %7261 = vmatpush1.msra.mxu0 0.0
    %7262 = vmatprep.subr.mxu0 0.0
    %7263 = vmatpush1.msra.mxu0 0.0
    %7264 = vmatprep.subr.mxu0 0.0
    %7265 = vmatpush1.msra.mxu0 0.0
    %7266 = vmatprep.subr.mxu0 0.0
    %7267 = vmatpush1.msra.mxu0 0.0
    %7268 = vmatprep.subr.mxu0 0.0
    %7269 = vmatpush1.msra.mxu0 0.0
    %7270 = vmatprep.subr.mxu0 0.0
    %7271 = vmatpush1.msra.mxu0 0.0
    %7272 = vmatprep.subr.mxu0 0.0
    %7273 = vmatpush1.msra.mxu0 0.0
    %7274 = vmatprep.subr.mxu0 0.0
    %7275 = vmatpush1.msra.mxu0 %v7237
    %7276 = vmatprep.subr.mxu0 0.0
    %7277 = vmatpush1.msra.mxu0 %v7235
    %7278 = vmatprep.subr.mxu0 0.0
    %7279 = vmatpush2.msra.mxu0 0.0
    %7280 = vmatprep.subr.mxu0 0.0
    %7281 = vmatpush2.msra.mxu0 0.0
    %7282 = vmatprep.subr.mxu0 0.0
    %7283 = vmatpush2.msra.mxu0 0.0
    %7284 = vmatprep.subr.mxu0 0.0
    %7285 = vmatpush2.msra.mxu0 0.0
    %7286 = vmatprep.subr.mxu0 0.0
    %7287 = vmatpush2.msra.mxu0 0.0
    %7288 = vmatprep.subr.mxu0 0.0
    %7289 = vmatpush2.msra.mxu0 0.0
    %7290 = vmatprep.subr.mxu0 0.0
    %7291 = vmatpush2.msra.mxu0 0.0
    %7292 = vmatprep.subr.mxu0 0.0
    %7293 = vmatpush2.msra.mxu0 0.0
    %7294 = vmatprep.subr.mxu0 0.0
    %7295 = vmatpush2.msra.mxu0 0.0
    %7296 = vmatprep.subr.mxu0 0.0
    %7297 = vmatpush2.msra.mxu0 0.0
    %7298 = vmatprep.subr.mxu0 0.0
    %7299 = vmatpush2.msra.mxu0 0.0
    %7300 = vmatprep.subr.mxu0 0.0
    %7301 = vmatpush2.msra.mxu0 0.0
    %7302 = vmatprep.subr.mxu0 0.0
    %7303 = vmatpush2.msra.mxu0 0.0
    %7304 = vmatprep.subr.mxu0 0.0
    %7305 = vmatpush2.msra.mxu0 0.0
    %7306 = vmatprep.subr.mxu0 0.0
    %7307 = vmatpush2.msra.mxu0 0.0
    %7308 = vmatprep.subr.mxu0 0.0
    %7309 = vmatpush2.msra.mxu0 0.0
    %7310 = vmatprep.mubr.f32.mxu0 0.0
    %7311 = vmatmul.mubr.f32.gmra.mxu0 %v7241
    %v7312 = vpop.f32.mrf.mxu0
    %v7313 = vadd.f32 0.0, %v7312
    %v7314 = vpop.f32.mrf.mxu0
    %7315 = vmatprep.mubr.f32.mxu0 0.0
    %7316 = vmatmul.mubr.f32.gmra.mxu0 %v7244
    %v7317 = vpop.f32.mrf.mxu0
    %v7318 = vadd.f32 0.0, %v7317
    %v7319 = vpop.f32.mrf.mxu0
    %7320 = vdwg.mxu0
    %v7322 = vsel %vm571, %v7313, 0
    %v7325 = vsel %vm571, %v7318, 0
    %7327 = vmatprep.subr.mxu0 0.0
    %7328 = vmatpush1.msra.mxu0 0.0
    %7329 = vmatprep.subr.mxu0 0.0
    %7330 = vmatpush1.msra.mxu0 0.0
    %7331 = vmatprep.subr.mxu0 0.0
    %7332 = vmatpush1.msra.mxu0 0.0
    %7333 = vmatprep.subr.mxu0 0.0
    %7334 = vmatpush1.msra.mxu0 0.0
    %7335 = vmatprep.subr.mxu0 0.0
    %7336 = vmatpush1.msra.mxu0 0.0
    %7337 = vmatprep.subr.mxu0 0.0
    %7338 = vmatpush1.msra.mxu0 0.0
    %7339 = vmatprep.subr.mxu0 0.0
    %7340 = vmatpush1.msra.mxu0 0.0
    %7341 = vmatprep.subr.mxu0 0.0
    %7342 = vmatpush1.msra.mxu0 0.0
    %7343 = vmatprep.subr.mxu0 0.0
    %7344 = vmatpush1.msra.mxu0 0.0
    %7345 = vmatprep.subr.mxu0 0.0
    %7346 = vmatpush1.msra.mxu0 0.0
    %7347 = vmatprep.subr.mxu0 0.0
    %7348 = vmatpush1.msra.mxu0 0.0
    %7349 = vmatprep.subr.mxu0 0.0
    %7350 = vmatpush1.msra.mxu0 0.0
    %7351 = vmatprep.subr.mxu0 0.0
    %7352 = vmatpush1.msra.mxu0 0.0
    %7353 = vmatprep.subr.mxu0 0.0
    %7354 = vmatpush1.msra.mxu0 0.0
    %7355 = vmatprep.subr.mxu0 0.0
    %7356 = vmatpush1.msra.mxu0 0.0
    %7357 = vmatprep.subr.mxu0 0.0
    %7358 = vmatpush1.msra.mxu0 %v6466
    %7359 = vmatprep.subr.mxu0 0.0
    %7360 = vmatpush2.msra.mxu0 0.0
    %7361 = vmatprep.subr.mxu0 0.0
    %7362 = vmatpush2.msra.mxu0 0.0
    %7363 = vmatprep.subr.mxu0 0.0
    %7364 = vmatpush2.msra.mxu0 0.0
    %7365 = vmatprep.subr.mxu0 0.0
    %7366 = vmatpush2.msra.mxu0 0.0
    %7367 = vmatprep.subr.mxu0 0.0
    %7368 = vmatpush2.msra.mxu0 0.0
    %7369 = vmatprep.subr.mxu0 0.0
    %7370 = vmatpush2.msra.mxu0 0.0
    %7371 = vmatprep.subr.mxu0 0.0
    %7372 = vmatpush2.msra.mxu0 0.0
    %7373 = vmatprep.subr.mxu0 0.0
    %7374 = vmatpush2.msra.mxu0 0.0
    %7375 = vmatprep.subr.mxu0 0.0
    %7376 = vmatpush2.msra.mxu0 0.0
    %7377 = vmatprep.subr.mxu0 0.0
    %7378 = vmatpush2.msra.mxu0 0.0
    %7379 = vmatprep.subr.mxu0 0.0
    %7380 = vmatpush2.msra.mxu0 0.0
    %7381 = vmatprep.subr.mxu0 0.0
    %7382 = vmatpush2.msra.mxu0 0.0
    %7383 = vmatprep.subr.mxu0 0.0
    %7384 = vmatpush2.msra.mxu0 0.0
    %7385 = vmatprep.subr.mxu0 0.0
    %7386 = vmatpush2.msra.mxu0 0.0
    %7387 = vmatprep.subr.mxu0 0.0
    %7388 = vmatpush2.msra.mxu0 0.0
    %7389 = vmatprep.subr.mxu0 0.0
    %7390 = vmatpush2.msra.mxu0 0.0
    %7391 = vmatprep.mubr.f32.mxu0 0.0
    %7392 = vmatmul.mubr.f32.gmra.mxu0 %v7322
    %v7393 = vpop.f32.mrf.mxu0
    %v7394 = vadd.f32 0.0, %v7393
    %v7395 = vpop.f32.mrf.mxu0
    %7396 = vmatprep.mubr.f32.mxu0 0.0
    %7397 = vmatmul.mubr.f32.gmra.mxu0 %v7325
    %v7398 = vpop.f32.mrf.mxu0
    %v7399 = vadd.f32 0.0, %v7398
    %v7400 = vpop.f32.mrf.mxu0
    %7401 = vdwg.mxu0
    %v7402 = vadd.f32 %v7113, %v7394
    %v7403 = vadd.f32 %v7118, %v7399
    %7404 = vrot.lane.b32.xlu0 %v6557, 104
    %v7405 = vpop.permute.xlu0 %7404
    %7406 = vrot.lane.b32.xlu0 %v6558, 104
    %v7407 = vpop.permute.xlu0 %7406
    %7408 = vrot.lane.b32.xlu0 %v6549, 72
    %v7409 = vpop.permute.xlu0 %7408
    %7410 = vrot.lane.b32.xlu0 %v6554, 72
    %v7411 = vpop.permute.xlu0 %7410
    %v7412 = vsel %vm571, %v7405, 0
    %v7414 = vsel %vm571, %v7407, 0
    %v7416 = vsel %vm571, %v7409, 0
    %v7418 = vsel %vm571, %v7411, 0
    %7420 = vmatprep.subr.mxu0 0.0
    %7421 = vmatpush1.xpose.msra.mxu0 0.0
    %7422 = vmatprep.subr.mxu0 0.0
    %7423 = vmatpush1.xpose.msra.mxu0 0.0
    %7424 = vmatprep.subr.mxu0 0.0
    %7425 = vmatpush1.xpose.msra.mxu0 0.0
    %7426 = vmatprep.subr.mxu0 0.0
    %7427 = vmatpush1.xpose.msra.mxu0 0.0
    %7428 = vmatprep.subr.mxu0 0.0
    %7429 = vmatpush1.xpose.msra.mxu0 0.0
    %7430 = vmatprep.subr.mxu0 0.0
    %7431 = vmatpush1.xpose.msra.mxu0 0.0
    %7432 = vmatprep.subr.mxu0 0.0
    %7433 = vmatpush1.xpose.msra.mxu0 0.0
    %7434 = vmatprep.subr.mxu0 0.0
    %7435 = vmatpush1.xpose.msra.mxu0 0.0
    %7436 = vmatprep.subr.mxu0 0.0
    %7437 = vmatpush1.xpose.msra.mxu0 0.0
    %7438 = vmatprep.subr.mxu0 0.0
    %7439 = vmatpush1.xpose.msra.mxu0 0.0
    %7440 = vmatprep.subr.mxu0 0.0
    %7441 = vmatpush1.xpose.msra.mxu0 0.0
    %7442 = vmatprep.subr.mxu0 0.0
    %7443 = vmatpush1.xpose.msra.mxu0 0.0
    %7444 = vmatprep.subr.mxu0 0.0
    %7445 = vmatpush1.xpose.msra.mxu0 0.0
    %7446 = vmatprep.subr.mxu0 0.0
    %7447 = vmatpush1.xpose.msra.mxu0 0.0
    %7448 = vmatprep.subr.mxu0 0.0
    %7449 = vmatpush1.xpose.msra.mxu0 %v7418
    %7450 = vmatprep.subr.mxu0 0.0
    %7451 = vmatpush1.xpose.msra.mxu0 %v7416
    %7452 = vmatprep.subr.mxu0 0.0
    %7453 = vmatpush2.xpose.msra.mxu0 0.0
    %7454 = vmatprep.subr.mxu0 0.0
    %7455 = vmatpush2.xpose.msra.mxu0 0.0
    %7456 = vmatprep.subr.mxu0 0.0
    %7457 = vmatpush2.xpose.msra.mxu0 0.0
    %7458 = vmatprep.subr.mxu0 0.0
    %7459 = vmatpush2.xpose.msra.mxu0 0.0
    %7460 = vmatprep.subr.mxu0 0.0
    %7461 = vmatpush2.xpose.msra.mxu0 0.0
    %7462 = vmatprep.subr.mxu0 0.0
    %7463 = vmatpush2.xpose.msra.mxu0 0.0
    %7464 = vmatprep.subr.mxu0 0.0
    %7465 = vmatpush2.xpose.msra.mxu0 0.0
    %7466 = vmatprep.subr.mxu0 0.0
    %7467 = vmatpush2.xpose.msra.mxu0 0.0
    %7468 = vmatprep.subr.mxu0 0.0
    %7469 = vmatpush2.xpose.msra.mxu0 0.0
    %7470 = vmatprep.subr.mxu0 0.0
    %7471 = vmatpush2.xpose.msra.mxu0 0.0
    %7472 = vmatprep.subr.mxu0 0.0
    %7473 = vmatpush2.xpose.msra.mxu0 0.0
    %7474 = vmatprep.subr.mxu0 0.0
    %7475 = vmatpush2.xpose.msra.mxu0 0.0
    %7476 = vmatprep.subr.mxu0 0.0
    %7477 = vmatpush2.xpose.msra.mxu0 0.0
    %7478 = vmatprep.subr.mxu0 0.0
    %7479 = vmatpush2.xpose.msra.mxu0 0.0
    %7480 = vmatprep.subr.mxu0 0.0
    %7481 = vmatpush2.xpose.msra.mxu0 0.0
    %7482 = vmatprep.subr.mxu0 0.0
    %7483 = vmatpush2.xpose.msra.mxu0 0.0
    %7484 = vmatprep.mubr.f32.mxu0 0.0
    %7485 = vmatmul.mubr.f32.gmra.mxu0 %v7412
    %v7486 = vpop.f32.mrf.mxu0
    %v7487 = vadd.f32 %v459, %v7486
    %v7488 = vpop.f32.mrf.mxu0
    %7489 = vmatprep.mubr.f32.mxu0 0.0
    %7490 = vmatmul.mubr.f32.gmra.mxu0 %v7414
    %v7491 = vpop.f32.mrf.mxu0
    %v7492 = vadd.f32 %v460, %v7491
    %v7493 = vpop.f32.mrf.mxu0
    %7494 = vdwg.mxu0
    %v7495 = vsel %vm657, %v7487, -inf
    %7496 = vmax.xlane.f32.xlu0 %v7495
    %v7497 = vpop.xlane.xlu0 %7496
    %v7498 = vsel %vm657, %v7492, -inf
    %7499 = vmax.xlane.f32.xlu0 %v7498
    %v7500 = vpop.xlane.xlu0 %7499
    %v7501 = vsub.f32 %v7487, %v7497
    %v7502 = vsub.f32 %v7492, %v7500
    %v7503 = vmul.f32 %v7501, 1.442695
    %v7504 = vpow.pop %v7503
    %v7505 = vmul.f32 %v7502, 1.442695
    %v7506 = vpow.pop %v7505
    %v7507 = vsel %vm657, %v7504, 0.0
    %7508 = vadd.xlane.f32.xlu0 %v7507
    %v7509 = vpop.xlane.xlu0 %7508
    %v7510 = vsel %vm657, %v7506, 0.0
    %7511 = vadd.xlane.f32.xlu0 %v7510
    %v7512 = vpop.xlane.xlu0 %7511
    %v7513 = vrcp.pop %v7509
    %v7514 = vrcp.pop %v7512
    %v7515 = vmul.f32 %v7504, %v7513
    %v7516 = vmul.f32 %v7506, %v7514
    %7517 = vrot.lane.b32.xlu0 %v6549, 40
    %v7518 = vpop.permute.xlu0 %7517
    %7519 = vrot.lane.b32.xlu0 %v6554, 40
    %v7520 = vpop.permute.xlu0 %7519
    %v7524 = vsel %vm657, %v7515, 0
    %v7527 = vsel %vm657, %v7516, 0
    %7529 = vmatprep.subr.mxu0 0.0
    %7530 = vmatpush1.msra.mxu0 0.0
    %7531 = vmatprep.subr.mxu0 0.0
    %7532 = vmatpush1.msra.mxu0 0.0
    %7533 = vmatprep.subr.mxu0 0.0
    %7534 = vmatpush1.msra.mxu0 0.0
    %7535 = vmatprep.subr.mxu0 0.0
    %7536 = vmatpush1.msra.mxu0 0.0
    %7537 = vmatprep.subr.mxu0 0.0
    %7538 = vmatpush1.msra.mxu0 0.0
    %7539 = vmatprep.subr.mxu0 0.0
    %7540 = vmatpush1.msra.mxu0 0.0
    %7541 = vmatprep.subr.mxu0 0.0
    %7542 = vmatpush1.msra.mxu0 0.0
    %7543 = vmatprep.subr.mxu0 0.0
    %7544 = vmatpush1.msra.mxu0 0.0
    %7545 = vmatprep.subr.mxu0 0.0
    %7546 = vmatpush1.msra.mxu0 0.0
    %7547 = vmatprep.subr.mxu0 0.0
    %7548 = vmatpush1.msra.mxu0 0.0
    %7549 = vmatprep.subr.mxu0 0.0
    %7550 = vmatpush1.msra.mxu0 0.0
    %7551 = vmatprep.subr.mxu0 0.0
    %7552 = vmatpush1.msra.mxu0 0.0
    %7553 = vmatprep.subr.mxu0 0.0
    %7554 = vmatpush1.msra.mxu0 0.0
    %7555 = vmatprep.subr.mxu0 0.0
    %7556 = vmatpush1.msra.mxu0 0.0
    %7557 = vmatprep.subr.mxu0 0.0
    %7558 = vmatpush1.msra.mxu0 %v7520
    %7559 = vmatprep.subr.mxu0 0.0
    %7560 = vmatpush1.msra.mxu0 %v7518
    %7561 = vmatprep.subr.mxu0 0.0
    %7562 = vmatpush2.msra.mxu0 0.0
    %7563 = vmatprep.subr.mxu0 0.0
    %7564 = vmatpush2.msra.mxu0 0.0
    %7565 = vmatprep.subr.mxu0 0.0
    %7566 = vmatpush2.msra.mxu0 0.0
    %7567 = vmatprep.subr.mxu0 0.0
    %7568 = vmatpush2.msra.mxu0 0.0
    %7569 = vmatprep.subr.mxu0 0.0
    %7570 = vmatpush2.msra.mxu0 0.0
    %7571 = vmatprep.subr.mxu0 0.0
    %7572 = vmatpush2.msra.mxu0 0.0
    %7573 = vmatprep.subr.mxu0 0.0
    %7574 = vmatpush2.msra.mxu0 0.0
    %7575 = vmatprep.subr.mxu0 0.0
    %7576 = vmatpush2.msra.mxu0 0.0
    %7577 = vmatprep.subr.mxu0 0.0
    %7578 = vmatpush2.msra.mxu0 0.0
    %7579 = vmatprep.subr.mxu0 0.0
    %7580 = vmatpush2.msra.mxu0 0.0
    %7581 = vmatprep.subr.mxu0 0.0
    %7582 = vmatpush2.msra.mxu0 0.0
    %7583 = vmatprep.subr.mxu0 0.0
    %7584 = vmatpush2.msra.mxu0 0.0
    %7585 = vmatprep.subr.mxu0 0.0
    %7586 = vmatpush2.msra.mxu0 0.0
    %7587 = vmatprep.subr.mxu0 0.0
    %7588 = vmatpush2.msra.mxu0 0.0
    %7589 = vmatprep.subr.mxu0 0.0
    %7590 = vmatpush2.msra.mxu0 0.0
    %7591 = vmatprep.subr.mxu0 0.0
    %7592 = vmatpush2.msra.mxu0 0.0
    %7593 = vmatprep.mubr.f32.mxu0 0.0
    %7594 = vmatmul.mubr.f32.gmra.mxu0 %v7524
    %v7595 = vpop.f32.mrf.mxu0
    %v7596 = vadd.f32 0.0, %v7595
    %v7597 = vpop.f32.mrf.mxu0
    %7598 = vmatprep.mubr.f32.mxu0 0.0
    %7599 = vmatmul.mubr.f32.gmra.mxu0 %v7527
    %v7600 = vpop.f32.mrf.mxu0
    %v7601 = vadd.f32 0.0, %v7600
    %v7602 = vpop.f32.mrf.mxu0
    %7603 = vdwg.mxu0
    %v7605 = vsel %vm571, %v7596, 0
    %v7608 = vsel %vm571, %v7601, 0
    %7610 = vmatprep.subr.mxu0 0.0
    %7611 = vmatpush1.msra.mxu0 0.0
    %7612 = vmatprep.subr.mxu0 0.0
    %7613 = vmatpush1.msra.mxu0 0.0
    %7614 = vmatprep.subr.mxu0 0.0
    %7615 = vmatpush1.msra.mxu0 0.0
    %7616 = vmatprep.subr.mxu0 0.0
    %7617 = vmatpush1.msra.mxu0 0.0
    %7618 = vmatprep.subr.mxu0 0.0
    %7619 = vmatpush1.msra.mxu0 0.0
    %7620 = vmatprep.subr.mxu0 0.0
    %7621 = vmatpush1.msra.mxu0 0.0
    %7622 = vmatprep.subr.mxu0 0.0
    %7623 = vmatpush1.msra.mxu0 0.0
    %7624 = vmatprep.subr.mxu0 0.0
    %7625 = vmatpush1.msra.mxu0 0.0
    %7626 = vmatprep.subr.mxu0 0.0
    %7627 = vmatpush1.msra.mxu0 0.0
    %7628 = vmatprep.subr.mxu0 0.0
    %7629 = vmatpush1.msra.mxu0 0.0
    %7630 = vmatprep.subr.mxu0 0.0
    %7631 = vmatpush1.msra.mxu0 0.0
    %7632 = vmatprep.subr.mxu0 0.0
    %7633 = vmatpush1.msra.mxu0 0.0
    %7634 = vmatprep.subr.mxu0 0.0
    %7635 = vmatpush1.msra.mxu0 0.0
    %7636 = vmatprep.subr.mxu0 0.0
    %7637 = vmatpush1.msra.mxu0 0.0
    %7638 = vmatprep.subr.mxu0 0.0
    %7639 = vmatpush1.msra.mxu0 0.0
    %7640 = vmatprep.subr.mxu0 0.0
    %7641 = vmatpush1.msra.mxu0 %v6467
    %7642 = vmatprep.subr.mxu0 0.0
    %7643 = vmatpush2.msra.mxu0 0.0
    %7644 = vmatprep.subr.mxu0 0.0
    %7645 = vmatpush2.msra.mxu0 0.0
    %7646 = vmatprep.subr.mxu0 0.0
    %7647 = vmatpush2.msra.mxu0 0.0
    %7648 = vmatprep.subr.mxu0 0.0
    %7649 = vmatpush2.msra.mxu0 0.0
    %7650 = vmatprep.subr.mxu0 0.0
    %7651 = vmatpush2.msra.mxu0 0.0
    %7652 = vmatprep.subr.mxu0 0.0
    %7653 = vmatpush2.msra.mxu0 0.0
    %7654 = vmatprep.subr.mxu0 0.0
    %7655 = vmatpush2.msra.mxu0 0.0
    %7656 = vmatprep.subr.mxu0 0.0
    %7657 = vmatpush2.msra.mxu0 0.0
    %7658 = vmatprep.subr.mxu0 0.0
    %7659 = vmatpush2.msra.mxu0 0.0
    %7660 = vmatprep.subr.mxu0 0.0
    %7661 = vmatpush2.msra.mxu0 0.0
    %7662 = vmatprep.subr.mxu0 0.0
    %7663 = vmatpush2.msra.mxu0 0.0
    %7664 = vmatprep.subr.mxu0 0.0
    %7665 = vmatpush2.msra.mxu0 0.0
    %7666 = vmatprep.subr.mxu0 0.0
    %7667 = vmatpush2.msra.mxu0 0.0
    %7668 = vmatprep.subr.mxu0 0.0
    %7669 = vmatpush2.msra.mxu0 0.0
    %7670 = vmatprep.subr.mxu0 0.0
    %7671 = vmatpush2.msra.mxu0 0.0
    %7672 = vmatprep.subr.mxu0 0.0
    %7673 = vmatpush2.msra.mxu0 0.0
    %7674 = vmatprep.mubr.f32.mxu0 0.0
    %7675 = vmatmul.mubr.f32.gmra.mxu0 %v7605
    %v7676 = vpop.f32.mrf.mxu0
    %v7677 = vadd.f32 0.0, %v7676
    %v7678 = vpop.f32.mrf.mxu0
    %7679 = vmatprep.mubr.f32.mxu0 0.0
    %7680 = vmatmul.mubr.f32.gmra.mxu0 %v7608
    %v7681 = vpop.f32.mrf.mxu0
    %v7682 = vadd.f32 0.0, %v7681
    %v7683 = vpop.f32.mrf.mxu0
    %7684 = vdwg.mxu0
    %v7685 = vadd.f32 %v7402, %v7677
    %v7686 = vadd.f32 %v7403, %v7682
    %v7688 = vlaneseq
    %v7689 = vshrl.u32 %v7688, 7
    %v7690 = vsub.s32 0, %v7689
    %v7691 = vrot.slane %v6469, %v7690
    %v7693 = vadd.f32 %v7685, %v7691
    %v7694 = vadd.f32 %v7686, %v7691
    %v7695 = vadd.f32 %v6454, %v7693
    %v7696 = vadd.f32 %v6455, %v7694
    %s7697 = scalar_lea.vmem [#allocation25], 1
    %v7698 = vld [vmem:[%s7697] sm:$0x1]
    %s7699 = scalar_lea.vmem [#allocation26], 1
    %v7700 = vld [vmem:[%s7699] sm:$0x1]
    %v7701 = vsel %vm481, %v7695, 0.0
    %7702 = vadd.xlane.f32.xlu0 %v7701
    %v7703 = vpop.xlane.xlu0 %7702
    %v7704 = vsel %vm481, %v7696, 0.0
    %7705 = vadd.xlane.f32.xlu0 %v7704
    %v7706 = vpop.xlane.xlu0 %7705
    %v7707 = vmul.f32 %v7703, %v1713
    %v7708 = vmul.f32 %v7706, %v1713
    %v7709 = vsub.f32 %v7695, %v7707
    %v7710 = vsub.f32 %v7696, %v7708
    %v7711 = vmul.f32 %v7709, %v7709
    %v7712 = vmul.f32 %v7710, %v7710
    %v7713 = vsel %vm481, %v7711, 0.0
    %7714 = vadd.xlane.f32.xlu0 %v7713
    %v7715 = vpop.xlane.xlu0 %7714
    %v7716 = vsel %vm481, %v7712, 0.0
    %7717 = vadd.xlane.f32.xlu0 %v7716
    %v7718 = vpop.xlane.xlu0 %7717
    %v7719 = vmul.f32 %v7715, %v1713
    %v7720 = vmul.f32 %v7718, %v1713
    %v7721 = vadd.f32 %v7719, 1e-05
    %v7722 = vadd.f32 %v7720, 1e-05
    %v7723 = vrsqrt.pop %v7721
    %v7724 = vrsqrt.pop %v7722
    %v7725 = vmul.f32 %v7709, %v7723
    %v7726 = vmul.f32 %v7710, %v7724
    %v7728 = vlaneseq
    %v7729 = vshrl.u32 %v7728, 7
    %v7730 = vsub.s32 0, %v7729
    %v7731 = vrot.slane %v7698, %v7730
    %v7733 = vmul.f32 %v7725, %v7731
    %v7734 = vmul.f32 %v7726, %v7731
    %v7736 = vlaneseq
    %v7737 = vshrl.u32 %v7736, 7
    %v7738 = vsub.s32 0, %v7737
    %v7739 = vrot.slane %v7700, %v7738
    %v7741 = vadd.f32 %v7733, %v7739
    %v7742 = vadd.f32 %v7734, %v7739
    %s7743 = scalar_lea.vmem %s43, 32
    %v7744 = vld [vmem:[%s7743] sm:$0xff]
    %v7745 = vld [vmem:[%s7743 + $0x8] sm:$0xff]
    %v7746 = vld [vmem:[%s7743 + $0x10] sm:$0xff]
    %v7747 = vld [vmem:[%s7743 + $0x18] sm:$0xff]
    %s7748 = scalar_lea.vmem [#allocation16], 1
    %v7749 = vld [vmem:[%s7748] sm:$0x1]
    %s7750 = scalar_lea.vmem [#allocation17], 32
    %v7751 = vld [vmem:[%s7750] sm:$0xff]
    %v7752 = vld [vmem:[%s7750 + $0x8] sm:$0xff]
    %v7753 = vld [vmem:[%s7750 + $0x10] sm:$0xff]
    %v7754 = vld [vmem:[%s7750 + $0x18] sm:$0xff]
    %s7755 = scalar_lea.vmem [#allocation19], 1
    %v7756 = vld [vmem:[%s7755] sm:$0x1]
    %v7758 = vlaneseq
    %v7759 = vshrl.u32 %v7758, 7
    %v7760 = vsub.s32 0, %v7759
    %v7761 = vrot.slane %v7749, %v7760
    %v7764 = vsel %vm481, %v7741, 0
    %v7767 = vsel %vm481, %v7742, 0
    %7769 = vmatprep.subr.mxu0 0.0
    %7770 = vmatpush1.msra.mxu0 0.0
    %7771 = vmatprep.subr.mxu0 0.0
    %7772 = vmatpush1.msra.mxu0 0.0
    %7773 = vmatprep.subr.mxu0 0.0
    %7774 = vmatpush1.msra.mxu0 0.0
    %7775 = vmatprep.subr.mxu0 0.0
    %7776 = vmatpush1.msra.mxu0 0.0
    %7777 = vmatprep.subr.mxu0 0.0
    %7778 = vmatpush1.msra.mxu0 0.0
    %7779 = vmatprep.subr.mxu0 0.0
    %7780 = vmatpush1.msra.mxu0 0.0
    %7781 = vmatprep.subr.mxu0 0.0
    %7782 = vmatpush1.msra.mxu0 0.0
    %7783 = vmatprep.subr.mxu0 0.0
    %7784 = vmatpush1.msra.mxu0 0.0
    %7785 = vmatprep.subr.mxu0 0.0
    %7786 = vmatpush1.msra.mxu0 0.0
    %7787 = vmatprep.subr.mxu0 0.0
    %7788 = vmatpush1.msra.mxu0 0.0
    %7789 = vmatprep.subr.mxu0 0.0
    %7790 = vmatpush1.msra.mxu0 0.0
    %7791 = vmatprep.subr.mxu0 0.0
    %7792 = vmatpush1.msra.mxu0 0.0
    %7793 = vmatprep.subr.mxu0 0.0
    %7794 = vmatpush1.msra.mxu0 %v7747
    %7795 = vmatprep.subr.mxu0 0.0
    %7796 = vmatpush1.msra.mxu0 %v7746
    %7797 = vmatprep.subr.mxu0 0.0
    %7798 = vmatpush1.msra.mxu0 %v7745
    %7799 = vmatprep.subr.mxu0 0.0
    %7800 = vmatpush1.msra.mxu0 %v7744
    %7801 = vmatprep.subr.mxu0 0.0
    %7802 = vmatpush2.msra.mxu0 0.0
    %7803 = vmatprep.subr.mxu0 0.0
    %7804 = vmatpush2.msra.mxu0 0.0
    %7805 = vmatprep.subr.mxu0 0.0
    %7806 = vmatpush2.msra.mxu0 0.0
    %7807 = vmatprep.subr.mxu0 0.0
    %7808 = vmatpush2.msra.mxu0 0.0
    %7809 = vmatprep.subr.mxu0 0.0
    %7810 = vmatpush2.msra.mxu0 0.0
    %7811 = vmatprep.subr.mxu0 0.0
    %7812 = vmatpush2.msra.mxu0 0.0
    %7813 = vmatprep.subr.mxu0 0.0
    %7814 = vmatpush2.msra.mxu0 0.0
    %7815 = vmatprep.subr.mxu0 0.0
    %7816 = vmatpush2.msra.mxu0 0.0
    %7817 = vmatprep.subr.mxu0 0.0
    %7818 = vmatpush2.msra.mxu0 0.0
    %7819 = vmatprep.subr.mxu0 0.0
    %7820 = vmatpush2.msra.mxu0 0.0
    %7821 = vmatprep.subr.mxu0 0.0
    %7822 = vmatpush2.msra.mxu0 0.0
    %7823 = vmatprep.subr.mxu0 0.0
    %7824 = vmatpush2.msra.mxu0 0.0
    %7825 = vmatprep.subr.mxu0 0.0
    %7826 = vmatpush2.msra.mxu0 0.0
    %7827 = vmatprep.subr.mxu0 0.0
    %7828 = vmatpush2.msra.mxu0 0.0
    %7829 = vmatprep.subr.mxu0 0.0
    %7830 = vmatpush2.msra.mxu0 0.0
    %7831 = vmatprep.subr.mxu0 0.0
    %7832 = vmatpush2.msra.mxu0 0.0
    %7833 = vmatprep.mubr.f32.mxu0 0.0
    %7834 = vmatmul.mubr.f32.gmra.mxu0 %v7764
    %v7835 = vpop.f32.mrf.mxu0
    %v7836 = vadd.f32 %v7761, %v7835
    %v7837 = vpop.f32.mrf.mxu0
    %7838 = vmatprep.mubr.f32.mxu0 0.0
    %7839 = vmatmul.mubr.f32.gmra.mxu0 %v7767
    %v7840 = vpop.f32.mrf.mxu0
    %v7841 = vadd.f32 %v7761, %v7840
    %v7842 = vpop.f32.mrf.mxu0
    %7843 = vdwg.mxu0
    %7848 = vrot.lane.b32.xlu0 %v7744, 96
    %v7849 = vpop.permute.xlu0 %7848
    %7850 = vrot.lane.b32.xlu0 %v7745, 96
    %v7851 = vpop.permute.xlu0 %7850
    %7852 = vrot.lane.b32.xlu0 %v7746, 96
    %v7853 = vpop.permute.xlu0 %7852
    %7854 = vrot.lane.b32.xlu0 %v7747, 96
    %v7855 = vpop.permute.xlu0 %7854
    %7860 = vrot.lane.b32.xlu0 %v7761, 96
    %v7861 = vpop.permute.xlu0 %7860
    %7863 = vmatprep.subr.mxu0 0.0
    %7864 = vmatpush1.msra.mxu0 0.0
    %7865 = vmatprep.subr.mxu0 0.0
    %7866 = vmatpush1.msra.mxu0 0.0
    %7867 = vmatprep.subr.mxu0 0.0
    %7868 = vmatpush1.msra.mxu0 0.0
    %7869 = vmatprep.subr.mxu0 0.0
    %7870 = vmatpush1.msra.mxu0 0.0
    %7871 = vmatprep.subr.mxu0 0.0
    %7872 = vmatpush1.msra.mxu0 0.0
    %7873 = vmatprep.subr.mxu0 0.0
    %7874 = vmatpush1.msra.mxu0 0.0
    %7875 = vmatprep.subr.mxu0 0.0
    %7876 = vmatpush1.msra.mxu0 0.0
    %7877 = vmatprep.subr.mxu0 0.0
    %7878 = vmatpush1.msra.mxu0 0.0
    %7879 = vmatprep.subr.mxu0 0.0
    %7880 = vmatpush1.msra.mxu0 0.0
    %7881 = vmatprep.subr.mxu0 0.0
    %7882 = vmatpush1.msra.mxu0 0.0
    %7883 = vmatprep.subr.mxu0 0.0
    %7884 = vmatpush1.msra.mxu0 0.0
    %7885 = vmatprep.subr.mxu0 0.0
    %7886 = vmatpush1.msra.mxu0 0.0
    %7887 = vmatprep.subr.mxu0 0.0
    %7888 = vmatpush1.msra.mxu0 %v7855
    %7889 = vmatprep.subr.mxu0 0.0
    %7890 = vmatpush1.msra.mxu0 %v7853
    %7891 = vmatprep.subr.mxu0 0.0
    %7892 = vmatpush1.msra.mxu0 %v7851
    %7893 = vmatprep.subr.mxu0 0.0
    %7894 = vmatpush1.msra.mxu0 %v7849
    %7895 = vmatprep.subr.mxu0 0.0
    %7896 = vmatpush2.msra.mxu0 0.0
    %7897 = vmatprep.subr.mxu0 0.0
    %7898 = vmatpush2.msra.mxu0 0.0
    %7899 = vmatprep.subr.mxu0 0.0
    %7900 = vmatpush2.msra.mxu0 0.0
    %7901 = vmatprep.subr.mxu0 0.0
    %7902 = vmatpush2.msra.mxu0 0.0
    %7903 = vmatprep.subr.mxu0 0.0
    %7904 = vmatpush2.msra.mxu0 0.0
    %7905 = vmatprep.subr.mxu0 0.0
    %7906 = vmatpush2.msra.mxu0 0.0
    %7907 = vmatprep.subr.mxu0 0.0
    %7908 = vmatpush2.msra.mxu0 0.0
    %7909 = vmatprep.subr.mxu0 0.0
    %7910 = vmatpush2.msra.mxu0 0.0
    %7911 = vmatprep.subr.mxu0 0.0
    %7912 = vmatpush2.msra.mxu0 0.0
    %7913 = vmatprep.subr.mxu0 0.0
    %7914 = vmatpush2.msra.mxu0 0.0
    %7915 = vmatprep.subr.mxu0 0.0
    %7916 = vmatpush2.msra.mxu0 0.0
    %7917 = vmatprep.subr.mxu0 0.0
    %7918 = vmatpush2.msra.mxu0 0.0
    %7919 = vmatprep.subr.mxu0 0.0
    %7920 = vmatpush2.msra.mxu0 0.0
    %7921 = vmatprep.subr.mxu0 0.0
    %7922 = vmatpush2.msra.mxu0 0.0
    %7923 = vmatprep.subr.mxu0 0.0
    %7924 = vmatpush2.msra.mxu0 0.0
    %7925 = vmatprep.subr.mxu0 0.0
    %7926 = vmatpush2.msra.mxu0 0.0
    %7927 = vmatprep.mubr.f32.mxu0 0.0
    %7928 = vmatmul.mubr.f32.gmra.mxu0 %v4960
    %v7929 = vpop.f32.mrf.mxu0
    %v7930 = vadd.f32 %v7861, %v7929
    %v7931 = vpop.f32.mrf.mxu0
    %7932 = vmatprep.mubr.f32.mxu0 0.0
    %7933 = vmatmul.mubr.f32.gmra.mxu0 %v4963
    %v7934 = vpop.f32.mrf.mxu0
    %v7935 = vadd.f32 %v7861, %v7934
    %v7936 = vpop.f32.mrf.mxu0
    %7937 = vdwg.mxu0
    %v7938 = vmul.f32 %v7836, 0.35355338
    %v7939 = vmul.f32 %v7841, 0.35355338
    %v7941 = vsel %vm571, %v7938, 0
    %v7944 = vsel %vm571, %v7939, 0
    %v7947 = vsel %vm571, %v7930, 0
    %v7950 = vsel %vm571, %v7935, 0
    %7952 = vmatprep.subr.mxu0 0.0
    %7953 = vmatpush1.xpose.msra.mxu0 0.0
    %7954 = vmatprep.subr.mxu0 0.0
    %7955 = vmatpush1.xpose.msra.mxu0 0.0
    %7956 = vmatprep.subr.mxu0 0.0
    %7957 = vmatpush1.xpose.msra.mxu0 0.0
    %7958 = vmatprep.subr.mxu0 0.0
    %7959 = vmatpush1.xpose.msra.mxu0 0.0
    %7960 = vmatprep.subr.mxu0 0.0
    %7961 = vmatpush1.xpose.msra.mxu0 0.0
    %7962 = vmatprep.subr.mxu0 0.0
    %7963 = vmatpush1.xpose.msra.mxu0 0.0
    %7964 = vmatprep.subr.mxu0 0.0
    %7965 = vmatpush1.xpose.msra.mxu0 0.0
    %7966 = vmatprep.subr.mxu0 0.0
    %7967 = vmatpush1.xpose.msra.mxu0 0.0
    %7968 = vmatprep.subr.mxu0 0.0
    %7969 = vmatpush1.xpose.msra.mxu0 0.0
    %7970 = vmatprep.subr.mxu0 0.0
    %7971 = vmatpush1.xpose.msra.mxu0 0.0
    %7972 = vmatprep.subr.mxu0 0.0
    %7973 = vmatpush1.xpose.msra.mxu0 0.0
    %7974 = vmatprep.subr.mxu0 0.0
    %7975 = vmatpush1.xpose.msra.mxu0 0.0
    %7976 = vmatprep.subr.mxu0 0.0
    %7977 = vmatpush1.xpose.msra.mxu0 0.0
    %7978 = vmatprep.subr.mxu0 0.0
    %7979 = vmatpush1.xpose.msra.mxu0 0.0
    %7980 = vmatprep.subr.mxu0 0.0
    %7981 = vmatpush1.xpose.msra.mxu0 %v7950
    %7982 = vmatprep.subr.mxu0 0.0
    %7983 = vmatpush1.xpose.msra.mxu0 %v7947
    %7984 = vmatprep.subr.mxu0 0.0
    %7985 = vmatpush2.xpose.msra.mxu0 0.0
    %7986 = vmatprep.subr.mxu0 0.0
    %7987 = vmatpush2.xpose.msra.mxu0 0.0
    %7988 = vmatprep.subr.mxu0 0.0
    %7989 = vmatpush2.xpose.msra.mxu0 0.0
    %7990 = vmatprep.subr.mxu0 0.0
    %7991 = vmatpush2.xpose.msra.mxu0 0.0
    %7992 = vmatprep.subr.mxu0 0.0
    %7993 = vmatpush2.xpose.msra.mxu0 0.0
    %7994 = vmatprep.subr.mxu0 0.0
    %7995 = vmatpush2.xpose.msra.mxu0 0.0
    %7996 = vmatprep.subr.mxu0 0.0
    %7997 = vmatpush2.xpose.msra.mxu0 0.0
    %7998 = vmatprep.subr.mxu0 0.0
    %7999 = vmatpush2.xpose.msra.mxu0 0.0
    %8000 = vmatprep.subr.mxu0 0.0
    %8001 = vmatpush2.xpose.msra.mxu0 0.0
    %8002 = vmatprep.subr.mxu0 0.0
    %8003 = vmatpush2.xpose.msra.mxu0 0.0
    %8004 = vmatprep.subr.mxu0 0.0
    %8005 = vmatpush2.xpose.msra.mxu0 0.0
    %8006 = vmatprep.subr.mxu0 0.0
    %8007 = vmatpush2.xpose.msra.mxu0 0.0
    %8008 = vmatprep.subr.mxu0 0.0
    %8009 = vmatpush2.xpose.msra.mxu0 0.0
    %8010 = vmatprep.subr.mxu0 0.0
    %8011 = vmatpush2.xpose.msra.mxu0 0.0
    %8012 = vmatprep.subr.mxu0 0.0
    %8013 = vmatpush2.xpose.msra.mxu0 0.0
    %8014 = vmatprep.subr.mxu0 0.0
    %8015 = vmatpush2.xpose.msra.mxu0 0.0
    %8016 = vmatprep.mubr.f32.mxu0 0.0
    %8017 = vmatmul.mubr.f32.gmra.mxu0 %v7941
    %v8018 = vpop.f32.mrf.mxu0
    %v8019 = vadd.f32 %v461, %v8018
    %v8020 = vpop.f32.mrf.mxu0
    %8021 = vmatprep.mubr.f32.mxu0 0.0
    %8022 = vmatmul.mubr.f32.gmra.mxu0 %v7944
    %v8023 = vpop.f32.mrf.mxu0
    %v8024 = vadd.f32 %v462, %v8023
    %v8025 = vpop.f32.mrf.mxu0
    %8026 = vdwg.mxu0
    %v8027 = vsel %vm657, %v8019, -inf
    %8028 = vmax.xlane.f32.xlu0 %v8027
    %v8029 = vpop.xlane.xlu0 %8028
    %v8030 = vsel %vm657, %v8024, -inf
    %8031 = vmax.xlane.f32.xlu0 %v8030
    %v8032 = vpop.xlane.xlu0 %8031
    %v8033 = vsub.f32 %v8019, %v8029
    %v8034 = vsub.f32 %v8024, %v8032
    %v8035 = vmul.f32 %v8033, 1.442695
    %v8036 = vpow.pop %v8035
    %v8037 = vmul.f32 %v8034, 1.442695
    %v8038 = vpow.pop %v8037
    %v8039 = vsel %vm657, %v8036, 0.0
    %8040 = vadd.xlane.f32.xlu0 %v8039
    %v8041 = vpop.xlane.xlu0 %8040
    %v8042 = vsel %vm657, %v8038, 0.0
    %8043 = vadd.xlane.f32.xlu0 %v8042
    %v8044 = vpop.xlane.xlu0 %8043
    %v8045 = vrcp.pop %v8041
    %v8046 = vrcp.pop %v8044
    %v8047 = vmul.f32 %v8036, %v8045
    %v8048 = vmul.f32 %v8038, %v8046
    %8049 = vrot.lane.b32.xlu0 %v7930, 96
    %v8050 = vpop.permute.xlu0 %8049
    %8051 = vrot.lane.b32.xlu0 %v7935, 96
    %v8052 = vpop.permute.xlu0 %8051
    %v8056 = vsel %vm657, %v8047, 0
    %v8059 = vsel %vm657, %v8048, 0
    %8061 = vmatprep.subr.mxu0 0.0
    %8062 = vmatpush1.msra.mxu0 0.0
    %8063 = vmatprep.subr.mxu0 0.0
    %8064 = vmatpush1.msra.mxu0 0.0
    %8065 = vmatprep.subr.mxu0 0.0
    %8066 = vmatpush1.msra.mxu0 0.0
    %8067 = vmatprep.subr.mxu0 0.0
    %8068 = vmatpush1.msra.mxu0 0.0
    %8069 = vmatprep.subr.mxu0 0.0
    %8070 = vmatpush1.msra.mxu0 0.0
    %8071 = vmatprep.subr.mxu0 0.0
    %8072 = vmatpush1.msra.mxu0 0.0
    %8073 = vmatprep.subr.mxu0 0.0
    %8074 = vmatpush1.msra.mxu0 0.0
    %8075 = vmatprep.subr.mxu0 0.0
    %8076 = vmatpush1.msra.mxu0 0.0
    %8077 = vmatprep.subr.mxu0 0.0
    %8078 = vmatpush1.msra.mxu0 0.0
    %8079 = vmatprep.subr.mxu0 0.0
    %8080 = vmatpush1.msra.mxu0 0.0
    %8081 = vmatprep.subr.mxu0 0.0
    %8082 = vmatpush1.msra.mxu0 0.0
    %8083 = vmatprep.subr.mxu0 0.0
    %8084 = vmatpush1.msra.mxu0 0.0
    %8085 = vmatprep.subr.mxu0 0.0
    %8086 = vmatpush1.msra.mxu0 0.0
    %8087 = vmatprep.subr.mxu0 0.0
    %8088 = vmatpush1.msra.mxu0 0.0
    %8089 = vmatprep.subr.mxu0 0.0
    %8090 = vmatpush1.msra.mxu0 %v8052
    %8091 = vmatprep.subr.mxu0 0.0
    %8092 = vmatpush1.msra.mxu0 %v8050
    %8093 = vmatprep.subr.mxu0 0.0
    %8094 = vmatpush2.msra.mxu0 0.0
    %8095 = vmatprep.subr.mxu0 0.0
    %8096 = vmatpush2.msra.mxu0 0.0
    %8097 = vmatprep.subr.mxu0 0.0
    %8098 = vmatpush2.msra.mxu0 0.0
    %8099 = vmatprep.subr.mxu0 0.0
    %8100 = vmatpush2.msra.mxu0 0.0
    %8101 = vmatprep.subr.mxu0 0.0
    %8102 = vmatpush2.msra.mxu0 0.0
    %8103 = vmatprep.subr.mxu0 0.0
    %8104 = vmatpush2.msra.mxu0 0.0
    %8105 = vmatprep.subr.mxu0 0.0
    %8106 = vmatpush2.msra.mxu0 0.0
    %8107 = vmatprep.subr.mxu0 0.0
    %8108 = vmatpush2.msra.mxu0 0.0
    %8109 = vmatprep.subr.mxu0 0.0
    %8110 = vmatpush2.msra.mxu0 0.0
    %8111 = vmatprep.subr.mxu0 0.0
    %8112 = vmatpush2.msra.mxu0 0.0
    %8113 = vmatprep.subr.mxu0 0.0
    %8114 = vmatpush2.msra.mxu0 0.0
    %8115 = vmatprep.subr.mxu0 0.0
    %8116 = vmatpush2.msra.mxu0 0.0
    %8117 = vmatprep.subr.mxu0 0.0
    %8118 = vmatpush2.msra.mxu0 0.0
    %8119 = vmatprep.subr.mxu0 0.0
    %8120 = vmatpush2.msra.mxu0 0.0
    %8121 = vmatprep.subr.mxu0 0.0
    %8122 = vmatpush2.msra.mxu0 0.0
    %8123 = vmatprep.subr.mxu0 0.0
    %8124 = vmatpush2.msra.mxu0 0.0
    %8125 = vmatprep.mubr.f32.mxu0 0.0
    %8126 = vmatmul.mubr.f32.gmra.mxu0 %v8056
    %v8127 = vpop.f32.mrf.mxu0
    %v8128 = vadd.f32 0.0, %v8127
    %v8129 = vpop.f32.mrf.mxu0
    %8130 = vmatprep.mubr.f32.mxu0 0.0
    %8131 = vmatmul.mubr.f32.gmra.mxu0 %v8059
    %v8132 = vpop.f32.mrf.mxu0
    %v8133 = vadd.f32 0.0, %v8132
    %v8134 = vpop.f32.mrf.mxu0
    %8135 = vdwg.mxu0
    %8136 = vrot.lane.b32.xlu0 %v7938, 120
    %v8137 = vpop.permute.xlu0 %8136
    %8138 = vrot.lane.b32.xlu0 %v7939, 120
    %v8139 = vpop.permute.xlu0 %8138
    %8140 = vrot.lane.b32.xlu0 %v7930, 120
    %v8141 = vpop.permute.xlu0 %8140
    %8142 = vrot.lane.b32.xlu0 %v7935, 120
    %v8143 = vpop.permute.xlu0 %8142
    %v8144 = vsel %vm571, %v8137, 0
    %v8146 = vsel %vm571, %v8139, 0
    %v8148 = vsel %vm571, %v8141, 0
    %v8150 = vsel %vm571, %v8143, 0
    %8152 = vmatprep.subr.mxu0 0.0
    %8153 = vmatpush1.xpose.msra.mxu0 0.0
    %8154 = vmatprep.subr.mxu0 0.0
    %8155 = vmatpush1.xpose.msra.mxu0 0.0
    %8156 = vmatprep.subr.mxu0 0.0
    %8157 = vmatpush1.xpose.msra.mxu0 0.0
    %8158 = vmatprep.subr.mxu0 0.0
    %8159 = vmatpush1.xpose.msra.mxu0 0.0
    %8160 = vmatprep.subr.mxu0 0.0
    %8161 = vmatpush1.xpose.msra.mxu0 0.0
    %8162 = vmatprep.subr.mxu0 0.0
    %8163 = vmatpush1.xpose.msra.mxu0 0.0
    %8164 = vmatprep.subr.mxu0 0.0
    %8165 = vmatpush1.xpose.msra.mxu0 0.0
    %8166 = vmatprep.subr.mxu0 0.0
    %8167 = vmatpush1.xpose.msra.mxu0 0.0
    %8168 = vmatprep.subr.mxu0 0.0
    %8169 = vmatpush1.xpose.msra.mxu0 0.0
    %8170 = vmatprep.subr.mxu0 0.0
    %8171 = vmatpush1.xpose.msra.mxu0 0.0
    %8172 = vmatprep.subr.mxu0 0.0
    %8173 = vmatpush1.xpose.msra.mxu0 0.0
    %8174 = vmatprep.subr.mxu0 0.0
    %8175 = vmatpush1.xpose.msra.mxu0 0.0
    %8176 = vmatprep.subr.mxu0 0.0
    %8177 = vmatpush1.xpose.msra.mxu0 0.0
    %8178 = vmatprep.subr.mxu0 0.0
    %8179 = vmatpush1.xpose.msra.mxu0 0.0
    %8180 = vmatprep.subr.mxu0 0.0
    %8181 = vmatpush1.xpose.msra.mxu0 %v8150
    %8182 = vmatprep.subr.mxu0 0.0
    %8183 = vmatpush1.xpose.msra.mxu0 %v8148
    %8184 = vmatprep.subr.mxu0 0.0
    %8185 = vmatpush2.xpose.msra.mxu0 0.0
    %8186 = vmatprep.subr.mxu0 0.0
    %8187 = vmatpush2.xpose.msra.mxu0 0.0
    %8188 = vmatprep.subr.mxu0 0.0
    %8189 = vmatpush2.xpose.msra.mxu0 0.0
    %8190 = vmatprep.subr.mxu0 0.0
    %8191 = vmatpush2.xpose.msra.mxu0 0.0
    %8192 = vmatprep.subr.mxu0 0.0
    %8193 = vmatpush2.xpose.msra.mxu0 0.0
    %8194 = vmatprep.subr.mxu0 0.0
    %8195 = vmatpush2.xpose.msra.mxu0 0.0
    %8196 = vmatprep.subr.mxu0 0.0
    %8197 = vmatpush2.xpose.msra.mxu0 0.0
    %8198 = vmatprep.subr.mxu0 0.0
    %8199 = vmatpush2.xpose.msra.mxu0 0.0
    %8200 = vmatprep.subr.mxu0 0.0
    %8201 = vmatpush2.xpose.msra.mxu0 0.0
    %8202 = vmatprep.subr.mxu0 0.0
    %8203 = vmatpush2.xpose.msra.mxu0 0.0
    %8204 = vmatprep.subr.mxu0 0.0
    %8205 = vmatpush2.xpose.msra.mxu0 0.0
    %8206 = vmatprep.subr.mxu0 0.0
    %8207 = vmatpush2.xpose.msra.mxu0 0.0
    %8208 = vmatprep.subr.mxu0 0.0
    %8209 = vmatpush2.xpose.msra.mxu0 0.0
    %8210 = vmatprep.subr.mxu0 0.0
    %8211 = vmatpush2.xpose.msra.mxu0 0.0
    %8212 = vmatprep.subr.mxu0 0.0
    %8213 = vmatpush2.xpose.msra.mxu0 0.0
    %8214 = vmatprep.subr.mxu0 0.0
    %8215 = vmatpush2.xpose.msra.mxu0 0.0
    %8216 = vmatprep.mubr.f32.mxu0 0.0
    %8217 = vmatmul.mubr.f32.gmra.mxu0 %v8144
    %v8218 = vpop.f32.mrf.mxu0
    %v8219 = vadd.f32 %v461, %v8218
    %v8220 = vpop.f32.mrf.mxu0
    %8221 = vmatprep.mubr.f32.mxu0 0.0
    %8222 = vmatmul.mubr.f32.gmra.mxu0 %v8146
    %v8223 = vpop.f32.mrf.mxu0
    %v8224 = vadd.f32 %v462, %v8223
    %v8225 = vpop.f32.mrf.mxu0
    %8226 = vdwg.mxu0
    %v8227 = vsel %vm657, %v8219, -inf
    %8228 = vmax.xlane.f32.xlu0 %v8227
    %v8229 = vpop.xlane.xlu0 %8228
    %v8230 = vsel %vm657, %v8224, -inf
    %8231 = vmax.xlane.f32.xlu0 %v8230
    %v8232 = vpop.xlane.xlu0 %8231
    %v8233 = vsub.f32 %v8219, %v8229
    %v8234 = vsub.f32 %v8224, %v8232
    %v8235 = vmul.f32 %v8233, 1.442695
    %v8236 = vpow.pop %v8235
    %v8237 = vmul.f32 %v8234, 1.442695
    %v8238 = vpow.pop %v8237
    %v8239 = vsel %vm657, %v8236, 0.0
    %8240 = vadd.xlane.f32.xlu0 %v8239
    %v8241 = vpop.xlane.xlu0 %8240
    %v8242 = vsel %vm657, %v8238, 0.0
    %8243 = vadd.xlane.f32.xlu0 %v8242
    %v8244 = vpop.xlane.xlu0 %8243
    %v8245 = vrcp.pop %v8241
    %v8246 = vrcp.pop %v8244
    %v8247 = vmul.f32 %v8236, %v8245
    %v8248 = vmul.f32 %v8238, %v8246
    %8249 = vrot.lane.b32.xlu0 %v7930, 88
    %v8250 = vpop.permute.xlu0 %8249
    %8251 = vrot.lane.b32.xlu0 %v7935, 88
    %v8252 = vpop.permute.xlu0 %8251
    %v8256 = vsel %vm657, %v8247, 0
    %v8259 = vsel %vm657, %v8248, 0
    %8261 = vmatprep.subr.mxu0 0.0
    %8262 = vmatpush1.msra.mxu0 0.0
    %8263 = vmatprep.subr.mxu0 0.0
    %8264 = vmatpush1.msra.mxu0 0.0
    %8265 = vmatprep.subr.mxu0 0.0
    %8266 = vmatpush1.msra.mxu0 0.0
    %8267 = vmatprep.subr.mxu0 0.0
    %8268 = vmatpush1.msra.mxu0 0.0
    %8269 = vmatprep.subr.mxu0 0.0
    %8270 = vmatpush1.msra.mxu0 0.0
    %8271 = vmatprep.subr.mxu0 0.0
    %8272 = vmatpush1.msra.mxu0 0.0
    %8273 = vmatprep.subr.mxu0 0.0
    %8274 = vmatpush1.msra.mxu0 0.0
    %8275 = vmatprep.subr.mxu0 0.0
    %8276 = vmatpush1.msra.mxu0 0.0
    %8277 = vmatprep.subr.mxu0 0.0
    %8278 = vmatpush1.msra.mxu0 0.0
    %8279 = vmatprep.subr.mxu0 0.0
    %8280 = vmatpush1.msra.mxu0 0.0
    %8281 = vmatprep.subr.mxu0 0.0
    %8282 = vmatpush1.msra.mxu0 0.0
    %8283 = vmatprep.subr.mxu0 0.0
    %8284 = vmatpush1.msra.mxu0 0.0
    %8285 = vmatprep.subr.mxu0 0.0
    %8286 = vmatpush1.msra.mxu0 0.0
    %8287 = vmatprep.subr.mxu0 0.0
    %8288 = vmatpush1.msra.mxu0 0.0
    %8289 = vmatprep.subr.mxu0 0.0
    %8290 = vmatpush1.msra.mxu0 %v8252
    %8291 = vmatprep.subr.mxu0 0.0
    %8292 = vmatpush1.msra.mxu0 %v8250
    %8293 = vmatprep.subr.mxu0 0.0
    %8294 = vmatpush2.msra.mxu0 0.0
    %8295 = vmatprep.subr.mxu0 0.0
    %8296 = vmatpush2.msra.mxu0 0.0
    %8297 = vmatprep.subr.mxu0 0.0
    %8298 = vmatpush2.msra.mxu0 0.0
    %8299 = vmatprep.subr.mxu0 0.0
    %8300 = vmatpush2.msra.mxu0 0.0
    %8301 = vmatprep.subr.mxu0 0.0
    %8302 = vmatpush2.msra.mxu0 0.0
    %8303 = vmatprep.subr.mxu0 0.0
    %8304 = vmatpush2.msra.mxu0 0.0
    %8305 = vmatprep.subr.mxu0 0.0
    %8306 = vmatpush2.msra.mxu0 0.0
    %8307 = vmatprep.subr.mxu0 0.0
    %8308 = vmatpush2.msra.mxu0 0.0
    %8309 = vmatprep.subr.mxu0 0.0
    %8310 = vmatpush2.msra.mxu0 0.0
    %8311 = vmatprep.subr.mxu0 0.0
    %8312 = vmatpush2.msra.mxu0 0.0
    %8313 = vmatprep.subr.mxu0 0.0
    %8314 = vmatpush2.msra.mxu0 0.0
    %8315 = vmatprep.subr.mxu0 0.0
    %8316 = vmatpush2.msra.mxu0 0.0
    %8317 = vmatprep.subr.mxu0 0.0
    %8318 = vmatpush2.msra.mxu0 0.0
    %8319 = vmatprep.subr.mxu0 0.0
    %8320 = vmatpush2.msra.mxu0 0.0
    %8321 = vmatprep.subr.mxu0 0.0
    %8322 = vmatpush2.msra.mxu0 0.0
    %8323 = vmatprep.subr.mxu0 0.0
    %8324 = vmatpush2.msra.mxu0 0.0
    %8325 = vmatprep.mubr.f32.mxu0 0.0
    %8326 = vmatmul.mubr.f32.gmra.mxu0 %v8256
    %v8327 = vpop.f32.mrf.mxu0
    %v8328 = vadd.f32 0.0, %v8327
    %v8329 = vpop.f32.mrf.mxu0
    %8330 = vmatprep.mubr.f32.mxu0 0.0
    %8331 = vmatmul.mubr.f32.gmra.mxu0 %v8259
    %v8332 = vpop.f32.mrf.mxu0
    %v8333 = vadd.f32 0.0, %v8332
    %v8334 = vpop.f32.mrf.mxu0
    %8335 = vdwg.mxu0
    %v8337 = vsel %vm571, %v8328, 0
    %v8340 = vsel %vm571, %v8333, 0
    %8342 = vmatprep.subr.mxu0 0.0
    %8343 = vmatpush1.msra.mxu0 0.0
    %8344 = vmatprep.subr.mxu0 0.0
    %8345 = vmatpush1.msra.mxu0 0.0
    %8346 = vmatprep.subr.mxu0 0.0
    %8347 = vmatpush1.msra.mxu0 0.0
    %8348 = vmatprep.subr.mxu0 0.0
    %8349 = vmatpush1.msra.mxu0 0.0
    %8350 = vmatprep.subr.mxu0 0.0
    %8351 = vmatpush1.msra.mxu0 0.0
    %8352 = vmatprep.subr.mxu0 0.0
    %8353 = vmatpush1.msra.mxu0 0.0
    %8354 = vmatprep.subr.mxu0 0.0
    %8355 = vmatpush1.msra.mxu0 0.0
    %8356 = vmatprep.subr.mxu0 0.0
    %8357 = vmatpush1.msra.mxu0 0.0
    %8358 = vmatprep.subr.mxu0 0.0
    %8359 = vmatpush1.msra.mxu0 0.0
    %8360 = vmatprep.subr.mxu0 0.0
    %8361 = vmatpush1.msra.mxu0 0.0
    %8362 = vmatprep.subr.mxu0 0.0
    %8363 = vmatpush1.msra.mxu0 0.0
    %8364 = vmatprep.subr.mxu0 0.0
    %8365 = vmatpush1.msra.mxu0 0.0
    %8366 = vmatprep.subr.mxu0 0.0
    %8367 = vmatpush1.msra.mxu0 0.0
    %8368 = vmatprep.subr.mxu0 0.0
    %8369 = vmatpush1.msra.mxu0 0.0
    %8370 = vmatprep.subr.mxu0 0.0
    %8371 = vmatpush1.msra.mxu0 0.0
    %8372 = vmatprep.subr.mxu0 0.0
    %8373 = vmatpush1.msra.mxu0 %v7752
    %8374 = vmatprep.subr.mxu0 0.0
    %8375 = vmatpush2.msra.mxu0 0.0
    %8376 = vmatprep.subr.mxu0 0.0
    %8377 = vmatpush2.msra.mxu0 0.0
    %8378 = vmatprep.subr.mxu0 0.0
    %8379 = vmatpush2.msra.mxu0 0.0
    %8380 = vmatprep.subr.mxu0 0.0
    %8381 = vmatpush2.msra.mxu0 0.0
    %8382 = vmatprep.subr.mxu0 0.0
    %8383 = vmatpush2.msra.mxu0 0.0
    %8384 = vmatprep.subr.mxu0 0.0
    %8385 = vmatpush2.msra.mxu0 0.0
    %8386 = vmatprep.subr.mxu0 0.0
    %8387 = vmatpush2.msra.mxu0 0.0
    %8388 = vmatprep.subr.mxu0 0.0
    %8389 = vmatpush2.msra.mxu0 0.0
    %8390 = vmatprep.subr.mxu0 0.0
    %8391 = vmatpush2.msra.mxu0 0.0
    %8392 = vmatprep.subr.mxu0 0.0
    %8393 = vmatpush2.msra.mxu0 0.0
    %8394 = vmatprep.subr.mxu0 0.0
    %8395 = vmatpush2.msra.mxu0 0.0
    %8396 = vmatprep.subr.mxu0 0.0
    %8397 = vmatpush2.msra.mxu0 0.0
    %8398 = vmatprep.subr.mxu0 0.0
    %8399 = vmatpush2.msra.mxu0 0.0
    %8400 = vmatprep.subr.mxu0 0.0
    %8401 = vmatpush2.msra.mxu0 0.0
    %8402 = vmatprep.subr.mxu0 0.0
    %8403 = vmatpush2.msra.mxu0 0.0
    %8404 = vmatprep.subr.mxu0 0.0
    %8405 = vmatpush2.msra.mxu0 0.0
    %8406 = vmatprep.mubr.f32.mxu0 0.0
    %8407 = vmatmul.mubr.f32.gmra.mxu0 %v8337
    %v8408 = vpop.f32.mrf.mxu0
    %v8409 = vadd.f32 0.0, %v8408
    %v8410 = vpop.f32.mrf.mxu0
    %8411 = vmatprep.mubr.f32.mxu0 0.0
    %8412 = vmatmul.mubr.f32.gmra.mxu0 %v8340
    %v8413 = vpop.f32.mrf.mxu0
    %v8414 = vadd.f32 0.0, %v8413
    %v8415 = vpop.f32.mrf.mxu0
    %8416 = vdwg.mxu0
    %v8418 = vsel %vm571, %v8128, 0
    %v8421 = vsel %vm571, %v8133, 0
    %8423 = vmatprep.subr.mxu0 0.0
    %8424 = vmatpush1.msra.mxu0 0.0
    %8425 = vmatprep.subr.mxu0 0.0
    %8426 = vmatpush1.msra.mxu0 0.0
    %8427 = vmatprep.subr.mxu0 0.0
    %8428 = vmatpush1.msra.mxu0 0.0
    %8429 = vmatprep.subr.mxu0 0.0
    %8430 = vmatpush1.msra.mxu0 0.0
    %8431 = vmatprep.subr.mxu0 0.0
    %8432 = vmatpush1.msra.mxu0 0.0
    %8433 = vmatprep.subr.mxu0 0.0
    %8434 = vmatpush1.msra.mxu0 0.0
    %8435 = vmatprep.subr.mxu0 0.0
    %8436 = vmatpush1.msra.mxu0 0.0
    %8437 = vmatprep.subr.mxu0 0.0
    %8438 = vmatpush1.msra.mxu0 0.0
    %8439 = vmatprep.subr.mxu0 0.0
    %8440 = vmatpush1.msra.mxu0 0.0
    %8441 = vmatprep.subr.mxu0 0.0
    %8442 = vmatpush1.msra.mxu0 0.0
    %8443 = vmatprep.subr.mxu0 0.0
    %8444 = vmatpush1.msra.mxu0 0.0
    %8445 = vmatprep.subr.mxu0 0.0
    %8446 = vmatpush1.msra.mxu0 0.0
    %8447 = vmatprep.subr.mxu0 0.0
    %8448 = vmatpush1.msra.mxu0 0.0
    %8449 = vmatprep.subr.mxu0 0.0
    %8450 = vmatpush1.msra.mxu0 0.0
    %8451 = vmatprep.subr.mxu0 0.0
    %8452 = vmatpush1.msra.mxu0 0.0
    %8453 = vmatprep.subr.mxu0 0.0
    %8454 = vmatpush1.msra.mxu0 %v7751
    %8455 = vmatprep.subr.mxu0 0.0
    %8456 = vmatpush2.msra.mxu0 0.0
    %8457 = vmatprep.subr.mxu0 0.0
    %8458 = vmatpush2.msra.mxu0 0.0
    %8459 = vmatprep.subr.mxu0 0.0
    %8460 = vmatpush2.msra.mxu0 0.0
    %8461 = vmatprep.subr.mxu0 0.0
    %8462 = vmatpush2.msra.mxu0 0.0
    %8463 = vmatprep.subr.mxu0 0.0
    %8464 = vmatpush2.msra.mxu0 0.0
    %8465 = vmatprep.subr.mxu0 0.0
    %8466 = vmatpush2.msra.mxu0 0.0
    %8467 = vmatprep.subr.mxu0 0.0
    %8468 = vmatpush2.msra.mxu0 0.0
    %8469 = vmatprep.subr.mxu0 0.0
    %8470 = vmatpush2.msra.mxu0 0.0
    %8471 = vmatprep.subr.mxu0 0.0
    %8472 = vmatpush2.msra.mxu0 0.0
    %8473 = vmatprep.subr.mxu0 0.0
    %8474 = vmatpush2.msra.mxu0 0.0
    %8475 = vmatprep.subr.mxu0 0.0
    %8476 = vmatpush2.msra.mxu0 0.0
    %8477 = vmatprep.subr.mxu0 0.0
    %8478 = vmatpush2.msra.mxu0 0.0
    %8479 = vmatprep.subr.mxu0 0.0
    %8480 = vmatpush2.msra.mxu0 0.0
    %8481 = vmatprep.subr.mxu0 0.0
    %8482 = vmatpush2.msra.mxu0 0.0
    %8483 = vmatprep.subr.mxu0 0.0
    %8484 = vmatpush2.msra.mxu0 0.0
    %8485 = vmatprep.subr.mxu0 0.0
    %8486 = vmatpush2.msra.mxu0 0.0
    %8487 = vmatprep.mubr.f32.mxu0 0.0
    %8488 = vmatmul.mubr.f32.gmra.mxu0 %v8418
    %v8489 = vpop.f32.mrf.mxu0
    %v8490 = vadd.f32 %v8409, %v8489
    %v8491 = vpop.f32.mrf.mxu0
    %8492 = vmatprep.mubr.f32.mxu0 0.0
    %8493 = vmatmul.mubr.f32.gmra.mxu0 %v8421
    %v8494 = vpop.f32.mrf.mxu0
    %v8495 = vadd.f32 %v8414, %v8494
    %v8496 = vpop.f32.mrf.mxu0
    %8497 = vdwg.mxu0
    %8498 = vrot.lane.b32.xlu0 %v7938, 112
    %v8499 = vpop.permute.xlu0 %8498
    %8500 = vrot.lane.b32.xlu0 %v7939, 112
    %v8501 = vpop.permute.xlu0 %8500
    %8502 = vrot.lane.b32.xlu0 %v7930, 112
    %v8503 = vpop.permute.xlu0 %8502
    %8504 = vrot.lane.b32.xlu0 %v7935, 112
    %v8505 = vpop.permute.xlu0 %8504
    %v8506 = vsel %vm571, %v8499, 0
    %v8508 = vsel %vm571, %v8501, 0
    %v8510 = vsel %vm571, %v8503, 0
    %v8512 = vsel %vm571, %v8505, 0
    %8514 = vmatprep.subr.mxu0 0.0
    %8515 = vmatpush1.xpose.msra.mxu0 0.0
    %8516 = vmatprep.subr.mxu0 0.0
    %8517 = vmatpush1.xpose.msra.mxu0 0.0
    %8518 = vmatprep.subr.mxu0 0.0
    %8519 = vmatpush1.xpose.msra.mxu0 0.0
    %8520 = vmatprep.subr.mxu0 0.0
    %8521 = vmatpush1.xpose.msra.mxu0 0.0
    %8522 = vmatprep.subr.mxu0 0.0
    %8523 = vmatpush1.xpose.msra.mxu0 0.0
    %8524 = vmatprep.subr.mxu0 0.0
    %8525 = vmatpush1.xpose.msra.mxu0 0.0
    %8526 = vmatprep.subr.mxu0 0.0
    %8527 = vmatpush1.xpose.msra.mxu0 0.0
    %8528 = vmatprep.subr.mxu0 0.0
    %8529 = vmatpush1.xpose.msra.mxu0 0.0
    %8530 = vmatprep.subr.mxu0 0.0
    %8531 = vmatpush1.xpose.msra.mxu0 0.0
    %8532 = vmatprep.subr.mxu0 0.0
    %8533 = vmatpush1.xpose.msra.mxu0 0.0
    %8534 = vmatprep.subr.mxu0 0.0
    %8535 = vmatpush1.xpose.msra.mxu0 0.0
    %8536 = vmatprep.subr.mxu0 0.0
    %8537 = vmatpush1.xpose.msra.mxu0 0.0
    %8538 = vmatprep.subr.mxu0 0.0
    %8539 = vmatpush1.xpose.msra.mxu0 0.0
    %8540 = vmatprep.subr.mxu0 0.0
    %8541 = vmatpush1.xpose.msra.mxu0 0.0
    %8542 = vmatprep.subr.mxu0 0.0
    %8543 = vmatpush1.xpose.msra.mxu0 %v8512
    %8544 = vmatprep.subr.mxu0 0.0
    %8545 = vmatpush1.xpose.msra.mxu0 %v8510
    %8546 = vmatprep.subr.mxu0 0.0
    %8547 = vmatpush2.xpose.msra.mxu0 0.0
    %8548 = vmatprep.subr.mxu0 0.0
    %8549 = vmatpush2.xpose.msra.mxu0 0.0
    %8550 = vmatprep.subr.mxu0 0.0
    %8551 = vmatpush2.xpose.msra.mxu0 0.0
    %8552 = vmatprep.subr.mxu0 0.0
    %8553 = vmatpush2.xpose.msra.mxu0 0.0
    %8554 = vmatprep.subr.mxu0 0.0
    %8555 = vmatpush2.xpose.msra.mxu0 0.0
    %8556 = vmatprep.subr.mxu0 0.0
    %8557 = vmatpush2.xpose.msra.mxu0 0.0
    %8558 = vmatprep.subr.mxu0 0.0
    %8559 = vmatpush2.xpose.msra.mxu0 0.0
    %8560 = vmatprep.subr.mxu0 0.0
    %8561 = vmatpush2.xpose.msra.mxu0 0.0
    %8562 = vmatprep.subr.mxu0 0.0
    %8563 = vmatpush2.xpose.msra.mxu0 0.0
    %8564 = vmatprep.subr.mxu0 0.0
    %8565 = vmatpush2.xpose.msra.mxu0 0.0
    %8566 = vmatprep.subr.mxu0 0.0
    %8567 = vmatpush2.xpose.msra.mxu0 0.0
    %8568 = vmatprep.subr.mxu0 0.0
    %8569 = vmatpush2.xpose.msra.mxu0 0.0
    %8570 = vmatprep.subr.mxu0 0.0
    %8571 = vmatpush2.xpose.msra.mxu0 0.0
    %8572 = vmatprep.subr.mxu0 0.0
    %8573 = vmatpush2.xpose.msra.mxu0 0.0
    %8574 = vmatprep.subr.mxu0 0.0
    %8575 = vmatpush2.xpose.msra.mxu0 0.0
    %8576 = vmatprep.subr.mxu0 0.0
    %8577 = vmatpush2.xpose.msra.mxu0 0.0
    %8578 = vmatprep.mubr.f32.mxu0 0.0
    %8579 = vmatmul.mubr.f32.gmra.mxu0 %v8506
    %v8580 = vpop.f32.mrf.mxu0
    %v8581 = vadd.f32 %v461, %v8580
    %v8582 = vpop.f32.mrf.mxu0
    %8583 = vmatprep.mubr.f32.mxu0 0.0
    %8584 = vmatmul.mubr.f32.gmra.mxu0 %v8508
    %v8585 = vpop.f32.mrf.mxu0
    %v8586 = vadd.f32 %v462, %v8585
    %v8587 = vpop.f32.mrf.mxu0
    %8588 = vdwg.mxu0
    %v8589 = vsel %vm657, %v8581, -inf
    %8590 = vmax.xlane.f32.xlu0 %v8589
    %v8591 = vpop.xlane.xlu0 %8590
    %v8592 = vsel %vm657, %v8586, -inf
    %8593 = vmax.xlane.f32.xlu0 %v8592
    %v8594 = vpop.xlane.xlu0 %8593
    %v8595 = vsub.f32 %v8581, %v8591
    %v8596 = vsub.f32 %v8586, %v8594
    %v8597 = vmul.f32 %v8595, 1.442695
    %v8598 = vpow.pop %v8597
    %v8599 = vmul.f32 %v8596, 1.442695
    %v8600 = vpow.pop %v8599
    %v8601 = vsel %vm657, %v8598, 0.0
    %8602 = vadd.xlane.f32.xlu0 %v8601
    %v8603 = vpop.xlane.xlu0 %8602
    %v8604 = vsel %vm657, %v8600, 0.0
    %8605 = vadd.xlane.f32.xlu0 %v8604
    %v8606 = vpop.xlane.xlu0 %8605
    %v8607 = vrcp.pop %v8603
    %v8608 = vrcp.pop %v8606
    %v8609 = vmul.f32 %v8598, %v8607
    %v8610 = vmul.f32 %v8600, %v8608
    %8611 = vrot.lane.b32.xlu0 %v7930, 80
    %v8612 = vpop.permute.xlu0 %8611
    %8613 = vrot.lane.b32.xlu0 %v7935, 80
    %v8614 = vpop.permute.xlu0 %8613
    %v8618 = vsel %vm657, %v8609, 0
    %v8621 = vsel %vm657, %v8610, 0
    %8623 = vmatprep.subr.mxu0 0.0
    %8624 = vmatpush1.msra.mxu0 0.0
    %8625 = vmatprep.subr.mxu0 0.0
    %8626 = vmatpush1.msra.mxu0 0.0
    %8627 = vmatprep.subr.mxu0 0.0
    %8628 = vmatpush1.msra.mxu0 0.0
    %8629 = vmatprep.subr.mxu0 0.0
    %8630 = vmatpush1.msra.mxu0 0.0
    %8631 = vmatprep.subr.mxu0 0.0
    %8632 = vmatpush1.msra.mxu0 0.0
    %8633 = vmatprep.subr.mxu0 0.0
    %8634 = vmatpush1.msra.mxu0 0.0
    %8635 = vmatprep.subr.mxu0 0.0
    %8636 = vmatpush1.msra.mxu0 0.0
    %8637 = vmatprep.subr.mxu0 0.0
    %8638 = vmatpush1.msra.mxu0 0.0
    %8639 = vmatprep.subr.mxu0 0.0
    %8640 = vmatpush1.msra.mxu0 0.0
    %8641 = vmatprep.subr.mxu0 0.0
    %8642 = vmatpush1.msra.mxu0 0.0
    %8643 = vmatprep.subr.mxu0 0.0
    %8644 = vmatpush1.msra.mxu0 0.0
    %8645 = vmatprep.subr.mxu0 0.0
    %8646 = vmatpush1.msra.mxu0 0.0
    %8647 = vmatprep.subr.mxu0 0.0
    %8648 = vmatpush1.msra.mxu0 0.0
    %8649 = vmatprep.subr.mxu0 0.0
    %8650 = vmatpush1.msra.mxu0 0.0
    %8651 = vmatprep.subr.mxu0 0.0
    %8652 = vmatpush1.msra.mxu0 %v8614
    %8653 = vmatprep.subr.mxu0 0.0
    %8654 = vmatpush1.msra.mxu0 %v8612
    %8655 = vmatprep.subr.mxu0 0.0
    %8656 = vmatpush2.msra.mxu0 0.0
    %8657 = vmatprep.subr.mxu0 0.0
    %8658 = vmatpush2.msra.mxu0 0.0
    %8659 = vmatprep.subr.mxu0 0.0
    %8660 = vmatpush2.msra.mxu0 0.0
    %8661 = vmatprep.subr.mxu0 0.0
    %8662 = vmatpush2.msra.mxu0 0.0
    %8663 = vmatprep.subr.mxu0 0.0
    %8664 = vmatpush2.msra.mxu0 0.0
    %8665 = vmatprep.subr.mxu0 0.0
    %8666 = vmatpush2.msra.mxu0 0.0
    %8667 = vmatprep.subr.mxu0 0.0
    %8668 = vmatpush2.msra.mxu0 0.0
    %8669 = vmatprep.subr.mxu0 0.0
    %8670 = vmatpush2.msra.mxu0 0.0
    %8671 = vmatprep.subr.mxu0 0.0
    %8672 = vmatpush2.msra.mxu0 0.0
    %8673 = vmatprep.subr.mxu0 0.0
    %8674 = vmatpush2.msra.mxu0 0.0
    %8675 = vmatprep.subr.mxu0 0.0
    %8676 = vmatpush2.msra.mxu0 0.0
    %8677 = vmatprep.subr.mxu0 0.0
    %8678 = vmatpush2.msra.mxu0 0.0
    %8679 = vmatprep.subr.mxu0 0.0
    %8680 = vmatpush2.msra.mxu0 0.0
    %8681 = vmatprep.subr.mxu0 0.0
    %8682 = vmatpush2.msra.mxu0 0.0
    %8683 = vmatprep.subr.mxu0 0.0
    %8684 = vmatpush2.msra.mxu0 0.0
    %8685 = vmatprep.subr.mxu0 0.0
    %8686 = vmatpush2.msra.mxu0 0.0
    %8687 = vmatprep.mubr.f32.mxu0 0.0
    %8688 = vmatmul.mubr.f32.gmra.mxu0 %v8618
    %v8689 = vpop.f32.mrf.mxu0
    %v8690 = vadd.f32 0.0, %v8689
    %v8691 = vpop.f32.mrf.mxu0
    %8692 = vmatprep.mubr.f32.mxu0 0.0
    %8693 = vmatmul.mubr.f32.gmra.mxu0 %v8621
    %v8694 = vpop.f32.mrf.mxu0
    %v8695 = vadd.f32 0.0, %v8694
    %v8696 = vpop.f32.mrf.mxu0
    %8697 = vdwg.mxu0
    %v8699 = vsel %vm571, %v8690, 0
    %v8702 = vsel %vm571, %v8695, 0
    %8704 = vmatprep.subr.mxu0 0.0
    %8705 = vmatpush1.msra.mxu0 0.0
    %8706 = vmatprep.subr.mxu0 0.0
    %8707 = vmatpush1.msra.mxu0 0.0
    %8708 = vmatprep.subr.mxu0 0.0
    %8709 = vmatpush1.msra.mxu0 0.0
    %8710 = vmatprep.subr.mxu0 0.0
    %8711 = vmatpush1.msra.mxu0 0.0
    %8712 = vmatprep.subr.mxu0 0.0
    %8713 = vmatpush1.msra.mxu0 0.0
    %8714 = vmatprep.subr.mxu0 0.0
    %8715 = vmatpush1.msra.mxu0 0.0
    %8716 = vmatprep.subr.mxu0 0.0
    %8717 = vmatpush1.msra.mxu0 0.0
    %8718 = vmatprep.subr.mxu0 0.0
    %8719 = vmatpush1.msra.mxu0 0.0
    %8720 = vmatprep.subr.mxu0 0.0
    %8721 = vmatpush1.msra.mxu0 0.0
    %8722 = vmatprep.subr.mxu0 0.0
    %8723 = vmatpush1.msra.mxu0 0.0
    %8724 = vmatprep.subr.mxu0 0.0
    %8725 = vmatpush1.msra.mxu0 0.0
    %8726 = vmatprep.subr.mxu0 0.0
    %8727 = vmatpush1.msra.mxu0 0.0
    %8728 = vmatprep.subr.mxu0 0.0
    %8729 = vmatpush1.msra.mxu0 0.0
    %8730 = vmatprep.subr.mxu0 0.0
    %8731 = vmatpush1.msra.mxu0 0.0
    %8732 = vmatprep.subr.mxu0 0.0
    %8733 = vmatpush1.msra.mxu0 0.0
    %8734 = vmatprep.subr.mxu0 0.0
    %8735 = vmatpush1.msra.mxu0 %v7753
    %8736 = vmatprep.subr.mxu0 0.0
    %8737 = vmatpush2.msra.mxu0 0.0
    %8738 = vmatprep.subr.mxu0 0.0
    %8739 = vmatpush2.msra.mxu0 0.0
    %8740 = vmatprep.subr.mxu0 0.0
    %8741 = vmatpush2.msra.mxu0 0.0
    %8742 = vmatprep.subr.mxu0 0.0
    %8743 = vmatpush2.msra.mxu0 0.0
    %8744 = vmatprep.subr.mxu0 0.0
    %8745 = vmatpush2.msra.mxu0 0.0
    %8746 = vmatprep.subr.mxu0 0.0
    %8747 = vmatpush2.msra.mxu0 0.0
    %8748 = vmatprep.subr.mxu0 0.0
    %8749 = vmatpush2.msra.mxu0 0.0
    %8750 = vmatprep.subr.mxu0 0.0
    %8751 = vmatpush2.msra.mxu0 0.0
    %8752 = vmatprep.subr.mxu0 0.0
    %8753 = vmatpush2.msra.mxu0 0.0
    %8754 = vmatprep.subr.mxu0 0.0
    %8755 = vmatpush2.msra.mxu0 0.0
    %8756 = vmatprep.subr.mxu0 0.0
    %8757 = vmatpush2.msra.mxu0 0.0
    %8758 = vmatprep.subr.mxu0 0.0
    %8759 = vmatpush2.msra.mxu0 0.0
    %8760 = vmatprep.subr.mxu0 0.0
    %8761 = vmatpush2.msra.mxu0 0.0
    %8762 = vmatprep.subr.mxu0 0.0
    %8763 = vmatpush2.msra.mxu0 0.0
    %8764 = vmatprep.subr.mxu0 0.0
    %8765 = vmatpush2.msra.mxu0 0.0
    %8766 = vmatprep.subr.mxu0 0.0
    %8767 = vmatpush2.msra.mxu0 0.0
    %8768 = vmatprep.mubr.f32.mxu0 0.0
    %8769 = vmatmul.mubr.f32.gmra.mxu0 %v8699
    %v8770 = vpop.f32.mrf.mxu0
    %v8771 = vadd.f32 0.0, %v8770
    %v8772 = vpop.f32.mrf.mxu0
    %8773 = vmatprep.mubr.f32.mxu0 0.0
    %8774 = vmatmul.mubr.f32.gmra.mxu0 %v8702
    %v8775 = vpop.f32.mrf.mxu0
    %v8776 = vadd.f32 0.0, %v8775
    %v8777 = vpop.f32.mrf.mxu0
    %8778 = vdwg.mxu0
    %v8779 = vadd.f32 %v8490, %v8771
    %v8780 = vadd.f32 %v8495, %v8776
    %8781 = vrot.lane.b32.xlu0 %v7938, 104
    %v8782 = vpop.permute.xlu0 %8781
    %8783 = vrot.lane.b32.xlu0 %v7939, 104
    %v8784 = vpop.permute.xlu0 %8783
    %8785 = vrot.lane.b32.xlu0 %v7930, 104
    %v8786 = vpop.permute.xlu0 %8785
    %8787 = vrot.lane.b32.xlu0 %v7935, 104
    %v8788 = vpop.permute.xlu0 %8787
    %v8789 = vsel %vm571, %v8782, 0
    %v8791 = vsel %vm571, %v8784, 0
    %v8793 = vsel %vm571, %v8786, 0
    %v8795 = vsel %vm571, %v8788, 0
    %8797 = vmatprep.subr.mxu0 0.0
    %8798 = vmatpush1.xpose.msra.mxu0 0.0
    %8799 = vmatprep.subr.mxu0 0.0
    %8800 = vmatpush1.xpose.msra.mxu0 0.0
    %8801 = vmatprep.subr.mxu0 0.0
    %8802 = vmatpush1.xpose.msra.mxu0 0.0
    %8803 = vmatprep.subr.mxu0 0.0
    %8804 = vmatpush1.xpose.msra.mxu0 0.0
    %8805 = vmatprep.subr.mxu0 0.0
    %8806 = vmatpush1.xpose.msra.mxu0 0.0
    %8807 = vmatprep.subr.mxu0 0.0
    %8808 = vmatpush1.xpose.msra.mxu0 0.0
    %8809 = vmatprep.subr.mxu0 0.0
    %8810 = vmatpush1.xpose.msra.mxu0 0.0
    %8811 = vmatprep.subr.mxu0 0.0
    %8812 = vmatpush1.xpose.msra.mxu0 0.0
    %8813 = vmatprep.subr.mxu0 0.0
    %8814 = vmatpush1.xpose.msra.mxu0 0.0
    %8815 = vmatprep.subr.mxu0 0.0
    %8816 = vmatpush1.xpose.msra.mxu0 0.0
    %8817 = vmatprep.subr.mxu0 0.0
    %8818 = vmatpush1.xpose.msra.mxu0 0.0
    %8819 = vmatprep.subr.mxu0 0.0
    %8820 = vmatpush1.xpose.msra.mxu0 0.0
    %8821 = vmatprep.subr.mxu0 0.0
    %8822 = vmatpush1.xpose.msra.mxu0 0.0
    %8823 = vmatprep.subr.mxu0 0.0
    %8824 = vmatpush1.xpose.msra.mxu0 0.0
    %8825 = vmatprep.subr.mxu0 0.0
    %8826 = vmatpush1.xpose.msra.mxu0 %v8795
    %8827 = vmatprep.subr.mxu0 0.0
    %8828 = vmatpush1.xpose.msra.mxu0 %v8793
    %8829 = vmatprep.subr.mxu0 0.0
    %8830 = vmatpush2.xpose.msra.mxu0 0.0
    %8831 = vmatprep.subr.mxu0 0.0
    %8832 = vmatpush2.xpose.msra.mxu0 0.0
    %8833 = vmatprep.subr.mxu0 0.0
    %8834 = vmatpush2.xpose.msra.mxu0 0.0
    %8835 = vmatprep.subr.mxu0 0.0
    %8836 = vmatpush2.xpose.msra.mxu0 0.0
    %8837 = vmatprep.subr.mxu0 0.0
    %8838 = vmatpush2.xpose.msra.mxu0 0.0
    %8839 = vmatprep.subr.mxu0 0.0
    %8840 = vmatpush2.xpose.msra.mxu0 0.0
    %8841 = vmatprep.subr.mxu0 0.0
    %8842 = vmatpush2.xpose.msra.mxu0 0.0
    %8843 = vmatprep.subr.mxu0 0.0
    %8844 = vmatpush2.xpose.msra.mxu0 0.0
    %8845 = vmatprep.subr.mxu0 0.0
    %8846 = vmatpush2.xpose.msra.mxu0 0.0
    %8847 = vmatprep.subr.mxu0 0.0
    %8848 = vmatpush2.xpose.msra.mxu0 0.0
    %8849 = vmatprep.subr.mxu0 0.0
    %8850 = vmatpush2.xpose.msra.mxu0 0.0
    %8851 = vmatprep.subr.mxu0 0.0
    %8852 = vmatpush2.xpose.msra.mxu0 0.0
    %8853 = vmatprep.subr.mxu0 0.0
    %8854 = vmatpush2.xpose.msra.mxu0 0.0
    %8855 = vmatprep.subr.mxu0 0.0
    %8856 = vmatpush2.xpose.msra.mxu0 0.0
    %8857 = vmatprep.subr.mxu0 0.0
    %8858 = vmatpush2.xpose.msra.mxu0 0.0
    %8859 = vmatprep.subr.mxu0 0.0
    %8860 = vmatpush2.xpose.msra.mxu0 0.0
    %8861 = vmatprep.mubr.f32.mxu0 0.0
    %8862 = vmatmul.mubr.f32.gmra.mxu0 %v8789
    %v8863 = vpop.f32.mrf.mxu0
    %v8864 = vadd.f32 %v461, %v8863
    %v8865 = vpop.f32.mrf.mxu0
    %8866 = vmatprep.mubr.f32.mxu0 0.0
    %8867 = vmatmul.mubr.f32.gmra.mxu0 %v8791
    %v8868 = vpop.f32.mrf.mxu0
    %v8869 = vadd.f32 %v462, %v8868
    %v8870 = vpop.f32.mrf.mxu0
    %8871 = vdwg.mxu0
    %v8872 = vsel %vm657, %v8864, -inf
    %8873 = vmax.xlane.f32.xlu0 %v8872
    %v8874 = vpop.xlane.xlu0 %8873
    %v8875 = vsel %vm657, %v8869, -inf
    %8876 = vmax.xlane.f32.xlu0 %v8875
    %v8877 = vpop.xlane.xlu0 %8876
    %v8878 = vsub.f32 %v8864, %v8874
    %v8879 = vsub.f32 %v8869, %v8877
    %v8880 = vmul.f32 %v8878, 1.442695
    %v8881 = vpow.pop %v8880
    %v8882 = vmul.f32 %v8879, 1.442695
    %v8883 = vpow.pop %v8882
    %v8884 = vsel %vm657, %v8881, 0.0
    %8885 = vadd.xlane.f32.xlu0 %v8884
    %v8886 = vpop.xlane.xlu0 %8885
    %v8887 = vsel %vm657, %v8883, 0.0
    %8888 = vadd.xlane.f32.xlu0 %v8887
    %v8889 = vpop.xlane.xlu0 %8888
    %v8890 = vrcp.pop %v8886
    %v8891 = vrcp.pop %v8889
    %v8892 = vmul.f32 %v8881, %v8890
    %v8893 = vmul.f32 %v8883, %v8891
    %8894 = vrot.lane.b32.xlu0 %v7930, 72
    %v8895 = vpop.permute.xlu0 %8894
    %8896 = vrot.lane.b32.xlu0 %v7935, 72
    %v8897 = vpop.permute.xlu0 %8896
    %v8901 = vsel %vm657, %v8892, 0
    %v8904 = vsel %vm657, %v8893, 0
    %8906 = vmatprep.subr.mxu0 0.0
    %8907 = vmatpush1.msra.mxu0 0.0
    %8908 = vmatprep.subr.mxu0 0.0
    %8909 = vmatpush1.msra.mxu0 0.0
    %8910 = vmatprep.subr.mxu0 0.0
    %8911 = vmatpush1.msra.mxu0 0.0
    %8912 = vmatprep.subr.mxu0 0.0
    %8913 = vmatpush1.msra.mxu0 0.0
    %8914 = vmatprep.subr.mxu0 0.0
    %8915 = vmatpush1.msra.mxu0 0.0
    %8916 = vmatprep.subr.mxu0 0.0
    %8917 = vmatpush1.msra.mxu0 0.0
    %8918 = vmatprep.subr.mxu0 0.0
    %8919 = vmatpush1.msra.mxu0 0.0
    %8920 = vmatprep.subr.mxu0 0.0
    %8921 = vmatpush1.msra.mxu0 0.0
    %8922 = vmatprep.subr.mxu0 0.0
    %8923 = vmatpush1.msra.mxu0 0.0
    %8924 = vmatprep.subr.mxu0 0.0
    %8925 = vmatpush1.msra.mxu0 0.0
    %8926 = vmatprep.subr.mxu0 0.0
    %8927 = vmatpush1.msra.mxu0 0.0
    %8928 = vmatprep.subr.mxu0 0.0
    %8929 = vmatpush1.msra.mxu0 0.0
    %8930 = vmatprep.subr.mxu0 0.0
    %8931 = vmatpush1.msra.mxu0 0.0
    %8932 = vmatprep.subr.mxu0 0.0
    %8933 = vmatpush1.msra.mxu0 0.0
    %8934 = vmatprep.subr.mxu0 0.0
    %8935 = vmatpush1.msra.mxu0 %v8897
    %8936 = vmatprep.subr.mxu0 0.0
    %8937 = vmatpush1.msra.mxu0 %v8895
    %8938 = vmatprep.subr.mxu0 0.0
    %8939 = vmatpush2.msra.mxu0 0.0
    %8940 = vmatprep.subr.mxu0 0.0
    %8941 = vmatpush2.msra.mxu0 0.0
    %8942 = vmatprep.subr.mxu0 0.0
    %8943 = vmatpush2.msra.mxu0 0.0
    %8944 = vmatprep.subr.mxu0 0.0
    %8945 = vmatpush2.msra.mxu0 0.0
    %8946 = vmatprep.subr.mxu0 0.0
    %8947 = vmatpush2.msra.mxu0 0.0
    %8948 = vmatprep.subr.mxu0 0.0
    %8949 = vmatpush2.msra.mxu0 0.0
    %8950 = vmatprep.subr.mxu0 0.0
    %8951 = vmatpush2.msra.mxu0 0.0
    %8952 = vmatprep.subr.mxu0 0.0
    %8953 = vmatpush2.msra.mxu0 0.0
    %8954 = vmatprep.subr.mxu0 0.0
    %8955 = vmatpush2.msra.mxu0 0.0
    %8956 = vmatprep.subr.mxu0 0.0
    %8957 = vmatpush2.msra.mxu0 0.0
    %8958 = vmatprep.subr.mxu0 0.0
    %8959 = vmatpush2.msra.mxu0 0.0
    %8960 = vmatprep.subr.mxu0 0.0
    %8961 = vmatpush2.msra.mxu0 0.0
    %8962 = vmatprep.subr.mxu0 0.0
    %8963 = vmatpush2.msra.mxu0 0.0
    %8964 = vmatprep.subr.mxu0 0.0
    %8965 = vmatpush2.msra.mxu0 0.0
    %8966 = vmatprep.subr.mxu0 0.0
    %8967 = vmatpush2.msra.mxu0 0.0
    %8968 = vmatprep.subr.mxu0 0.0
    %8969 = vmatpush2.msra.mxu0 0.0
    %8970 = vmatprep.mubr.f32.mxu0 0.0
    %8971 = vmatmul.mubr.f32.gmra.mxu0 %v8901
    %v8972 = vpop.f32.mrf.mxu0
    %v8973 = vadd.f32 0.0, %v8972
    %v8974 = vpop.f32.mrf.mxu0
    %8975 = vmatprep.mubr.f32.mxu0 0.0
    %8976 = vmatmul.mubr.f32.gmra.mxu0 %v8904
    %v8977 = vpop.f32.mrf.mxu0
    %v8978 = vadd.f32 0.0, %v8977
    %v8979 = vpop.f32.mrf.mxu0
    %8980 = vdwg.mxu0
    %v8982 = vsel %vm571, %v8973, 0
    %v8985 = vsel %vm571, %v8978, 0
    %8987 = vmatprep.subr.mxu0 0.0
    %8988 = vmatpush1.msra.mxu0 0.0
    %8989 = vmatprep.subr.mxu0 0.0
    %8990 = vmatpush1.msra.mxu0 0.0
    %8991 = vmatprep.subr.mxu0 0.0
    %8992 = vmatpush1.msra.mxu0 0.0
    %8993 = vmatprep.subr.mxu0 0.0
    %8994 = vmatpush1.msra.mxu0 0.0
    %8995 = vmatprep.subr.mxu0 0.0
    %8996 = vmatpush1.msra.mxu0 0.0
    %8997 = vmatprep.subr.mxu0 0.0
    %8998 = vmatpush1.msra.mxu0 0.0
    %8999 = vmatprep.subr.mxu0 0.0
    %9000 = vmatpush1.msra.mxu0 0.0
    %9001 = vmatprep.subr.mxu0 0.0
    %9002 = vmatpush1.msra.mxu0 0.0
    %9003 = vmatprep.subr.mxu0 0.0
    %9004 = vmatpush1.msra.mxu0 0.0
    %9005 = vmatprep.subr.mxu0 0.0
    %9006 = vmatpush1.msra.mxu0 0.0
    %9007 = vmatprep.subr.mxu0 0.0
    %9008 = vmatpush1.msra.mxu0 0.0
    %9009 = vmatprep.subr.mxu0 0.0
    %9010 = vmatpush1.msra.mxu0 0.0
    %9011 = vmatprep.subr.mxu0 0.0
    %9012 = vmatpush1.msra.mxu0 0.0
    %9013 = vmatprep.subr.mxu0 0.0
    %9014 = vmatpush1.msra.mxu0 0.0
    %9015 = vmatprep.subr.mxu0 0.0
    %9016 = vmatpush1.msra.mxu0 0.0
    %9017 = vmatprep.subr.mxu0 0.0
    %9018 = vmatpush1.msra.mxu0 %v7754
    %9019 = vmatprep.subr.mxu0 0.0
    %9020 = vmatpush2.msra.mxu0 0.0
    %9021 = vmatprep.subr.mxu0 0.0
    %9022 = vmatpush2.msra.mxu0 0.0
    %9023 = vmatprep.subr.mxu0 0.0
    %9024 = vmatpush2.msra.mxu0 0.0
    %9025 = vmatprep.subr.mxu0 0.0
    %9026 = vmatpush2.msra.mxu0 0.0
    %9027 = vmatprep.subr.mxu0 0.0
    %9028 = vmatpush2.msra.mxu0 0.0
    %9029 = vmatprep.subr.mxu0 0.0
    %9030 = vmatpush2.msra.mxu0 0.0
    %9031 = vmatprep.subr.mxu0 0.0
    %9032 = vmatpush2.msra.mxu0 0.0
    %9033 = vmatprep.subr.mxu0 0.0
    %9034 = vmatpush2.msra.mxu0 0.0
    %9035 = vmatprep.subr.mxu0 0.0
    %9036 = vmatpush2.msra.mxu0 0.0
    %9037 = vmatprep.subr.mxu0 0.0
    %9038 = vmatpush2.msra.mxu0 0.0
    %9039 = vmatprep.subr.mxu0 0.0
    %9040 = vmatpush2.msra.mxu0 0.0
    %9041 = vmatprep.subr.mxu0 0.0
    %9042 = vmatpush2.msra.mxu0 0.0
    %9043 = vmatprep.subr.mxu0 0.0
    %9044 = vmatpush2.msra.mxu0 0.0
    %9045 = vmatprep.subr.mxu0 0.0
    %9046 = vmatpush2.msra.mxu0 0.0
    %9047 = vmatprep.subr.mxu0 0.0
    %9048 = vmatpush2.msra.mxu0 0.0
    %9049 = vmatprep.subr.mxu0 0.0
    %9050 = vmatpush2.msra.mxu0 0.0
    %9051 = vmatprep.mubr.f32.mxu0 0.0
    %9052 = vmatmul.mubr.f32.gmra.mxu0 %v8982
    %v9053 = vpop.f32.mrf.mxu0
    %v9054 = vadd.f32 0.0, %v9053
    %v9055 = vpop.f32.mrf.mxu0
    %9056 = vmatprep.mubr.f32.mxu0 0.0
    %9057 = vmatmul.mubr.f32.gmra.mxu0 %v8985
    %v9058 = vpop.f32.mrf.mxu0
    %v9059 = vadd.f32 0.0, %v9058
    %v9060 = vpop.f32.mrf.mxu0
    %9061 = vdwg.mxu0
    %v9062 = vadd.f32 %v8779, %v9054
    %v9063 = vadd.f32 %v8780, %v9059
    %v9065 = vlaneseq
    %v9066 = vshrl.u32 %v9065, 7
    %v9067 = vsub.s32 0, %v9066
    %v9068 = vrot.slane %v7756, %v9067
    %v9070 = vadd.f32 %v9062, %v9068
    %v9071 = vadd.f32 %v9063, %v9068
    %v9072 = vadd.f32 %v7741, %v9070
    %v9073 = vadd.f32 %v7742, %v9071
    %s9074 = scalar_lea.vmem [#allocation28], 1
    %v9075 = vld [vmem:[%s9074] sm:$0x1]
    %s9076 = scalar_lea.vmem [#allocation29], 1
    %v9077 = vld [vmem:[%s9076] sm:$0x1]
    %v9078 = vsel %vm481, %v9072, 0.0
    %9079 = vadd.xlane.f32.xlu0 %v9078
    %v9080 = vpop.xlane.xlu0 %9079
    %v9081 = vsel %vm481, %v9073, 0.0
    %9082 = vadd.xlane.f32.xlu0 %v9081
    %v9083 = vpop.xlane.xlu0 %9082
    %v9084 = vmul.f32 %v9080, %v1713
    %v9085 = vmul.f32 %v9083, %v1713
    %v9086 = vsub.f32 %v9072, %v9084
    %v9087 = vsub.f32 %v9073, %v9085
    %v9088 = vmul.f32 %v9086, %v9086
    %v9089 = vmul.f32 %v9087, %v9087
    %v9090 = vsel %vm481, %v9088, 0.0
    %9091 = vadd.xlane.f32.xlu0 %v9090
    %v9092 = vpop.xlane.xlu0 %9091
    %v9093 = vsel %vm481, %v9089, 0.0
    %9094 = vadd.xlane.f32.xlu0 %v9093
    %v9095 = vpop.xlane.xlu0 %9094
    %v9096 = vmul.f32 %v9092, %v1713
    %v9097 = vmul.f32 %v9095, %v1713
    %v9098 = vadd.f32 %v9096, 1e-05
    %v9099 = vadd.f32 %v9097, 1e-05
    %v9100 = vrsqrt.pop %v9098
    %v9101 = vrsqrt.pop %v9099
    %v9102 = vmul.f32 %v9086, %v9100
    %v9103 = vmul.f32 %v9087, %v9101
    %v9105 = vlaneseq
    %v9106 = vshrl.u32 %v9105, 7
    %v9107 = vsub.s32 0, %v9106
    %v9108 = vrot.slane %v9075, %v9107
    %v9110 = vmul.f32 %v9102, %v9108
    %v9111 = vmul.f32 %v9103, %v9108
    %v9113 = vlaneseq
    %v9114 = vshrl.u32 %v9113, 7
    %v9115 = vsub.s32 0, %v9114
    %v9116 = vrot.slane %v9077, %v9115
    %v9118 = vadd.f32 %v9110, %v9116
    %v9119 = vadd.f32 %v9111, %v9116
    %s9120 = scalar_lea.vmem [#allocation20], 32
    %v9121 = vld [vmem:[%s9120] sm:$0xff]
    %v9122 = vld [vmem:[%s9120 + $0x8] sm:$0xff]
    %v9123 = vld [vmem:[%s9120 + $0x10] sm:$0xff]
    %v9124 = vld [vmem:[%s9120 + $0x18] sm:$0xff]
    %s9125 = scalar_lea.vmem [#allocation22], 1
    %v9126 = vld [vmem:[%s9125] sm:$0x1]
    %s9127 = scalar_lea.vmem %s55, 64
    %v9128 = vld [vmem:[%s9127] sm:$0xff]
    %v9129 = vld [vmem:[%s9127 + $0x8] sm:$0xff]
    %v9130 = vld [vmem:[%s9127 + $0x10] sm:$0xff]
    %v9131 = vld [vmem:[%s9127 + $0x18] sm:$0xff]
    %v9132 = vld [vmem:[%s9127 + $0x20] sm:$0xff]
    %v9133 = vld [vmem:[%s9127 + $0x28] sm:$0xff]
    %v9134 = vld [vmem:[%s9127 + $0x30] sm:$0xff]
    %v9135 = vld [vmem:[%s9127 + $0x38] sm:$0xff]
    %s9136 = scalar_lea.vmem [#allocation23], 1
    %v9137 = vld [vmem:[%s9136] sm:$0x1]
    %v9139 = vlaneseq
    %v9140 = vshrl.u32 %v9139, 7
    %v9141 = vsub.s32 0, %v9140
    %v9142 = vrot.slane %v9126, %v9141
    %v9145 = vsel %vm481, %v9118, 0
    %v9148 = vsel %vm481, %v9119, 0
    %9150 = vmatprep.subr.mxu0 0.0
    %9151 = vmatpush1.msra.mxu0 0.0
    %9152 = vmatprep.subr.mxu0 0.0
    %9153 = vmatpush1.msra.mxu0 0.0
    %9154 = vmatprep.subr.mxu0 0.0
    %9155 = vmatpush1.msra.mxu0 0.0
    %9156 = vmatprep.subr.mxu0 0.0
    %9157 = vmatpush1.msra.mxu0 0.0
    %9158 = vmatprep.subr.mxu0 0.0
    %9159 = vmatpush1.msra.mxu0 0.0
    %9160 = vmatprep.subr.mxu0 0.0
    %9161 = vmatpush1.msra.mxu0 0.0
    %9162 = vmatprep.subr.mxu0 0.0
    %9163 = vmatpush1.msra.mxu0 0.0
    %9164 = vmatprep.subr.mxu0 0.0
    %9165 = vmatpush1.msra.mxu0 0.0
    %9166 = vmatprep.subr.mxu0 0.0
    %9167 = vmatpush1.msra.mxu0 0.0
    %9168 = vmatprep.subr.mxu0 0.0
    %9169 = vmatpush1.msra.mxu0 0.0
    %9170 = vmatprep.subr.mxu0 0.0
    %9171 = vmatpush1.msra.mxu0 0.0
    %9172 = vmatprep.subr.mxu0 0.0
    %9173 = vmatpush1.msra.mxu0 0.0
    %9174 = vmatprep.subr.mxu0 0.0
    %9175 = vmatpush1.msra.mxu0 %v9124
    %9176 = vmatprep.subr.mxu0 0.0
    %9177 = vmatpush1.msra.mxu0 %v9123
    %9178 = vmatprep.subr.mxu0 0.0
    %9179 = vmatpush1.msra.mxu0 %v9122
    %9180 = vmatprep.subr.mxu0 0.0
    %9181 = vmatpush1.msra.mxu0 %v9121
    %9182 = vmatprep.subr.mxu0 0.0
    %9183 = vmatpush2.msra.mxu0 0.0
    %9184 = vmatprep.subr.mxu0 0.0
    %9185 = vmatpush2.msra.mxu0 0.0
    %9186 = vmatprep.subr.mxu0 0.0
    %9187 = vmatpush2.msra.mxu0 0.0
    %9188 = vmatprep.subr.mxu0 0.0
    %9189 = vmatpush2.msra.mxu0 0.0
    %9190 = vmatprep.subr.mxu0 0.0
    %9191 = vmatpush2.msra.mxu0 0.0
    %9192 = vmatprep.subr.mxu0 0.0
    %9193 = vmatpush2.msra.mxu0 0.0
    %9194 = vmatprep.subr.mxu0 0.0
    %9195 = vmatpush2.msra.mxu0 0.0
    %9196 = vmatprep.subr.mxu0 0.0
    %9197 = vmatpush2.msra.mxu0 0.0
    %9198 = vmatprep.subr.mxu0 0.0
    %9199 = vmatpush2.msra.mxu0 0.0
    %9200 = vmatprep.subr.mxu0 0.0
    %9201 = vmatpush2.msra.mxu0 0.0
    %9202 = vmatprep.subr.mxu0 0.0
    %9203 = vmatpush2.msra.mxu0 0.0
    %9204 = vmatprep.subr.mxu0 0.0
    %9205 = vmatpush2.msra.mxu0 0.0
    %9206 = vmatprep.subr.mxu0 0.0
    %9207 = vmatpush2.msra.mxu0 0.0
    %9208 = vmatprep.subr.mxu0 0.0
    %9209 = vmatpush2.msra.mxu0 0.0
    %9210 = vmatprep.subr.mxu0 0.0
    %9211 = vmatpush2.msra.mxu0 0.0
    %9212 = vmatprep.subr.mxu0 0.0
    %9213 = vmatpush2.msra.mxu0 0.0
    %9214 = vmatprep.mubr.f32.mxu0 0.0
    %9215 = vmatmul.mubr.f32.gmra.mxu0 %v9145
    %v9216 = vpop.f32.mrf.mxu0
    %v9217 = vadd.f32 %v9142, %v9216
    %v9218 = vpop.f32.mrf.mxu0
    %9219 = vmatprep.mubr.f32.mxu0 0.0
    %9220 = vmatmul.mubr.f32.gmra.mxu0 %v9148
    %v9221 = vpop.f32.mrf.mxu0
    %v9222 = vadd.f32 %v9142, %v9221
    %v9223 = vpop.f32.mrf.mxu0
    %9224 = vdwg.mxu0
    %v9225 = vmax.f32 %v9217, 0.0
    %v9226 = vmax.f32 %v9222, 0.0
    %v9228 = vlaneseq
    %v9229 = vshrl.u32 %v9228, 7
    %v9230 = vsub.s32 0, %v9229
    %v9231 = vrot.slane %v9137, %v9230
    %v9234 = vsel %vm1859, %v9225, 0
    %v9237 = vsel %vm1859, %v9226, 0
    %9239 = vmatprep.subr.mxu0 0.0
    %9240 = vmatpush1.msra.mxu0 0.0
    %9241 = vmatprep.subr.mxu0 0.0
    %9242 = vmatpush1.msra.mxu0 0.0
    %9243 = vmatprep.subr.mxu0 0.0
    %9244 = vmatpush1.msra.mxu0 0.0
    %9245 = vmatprep.subr.mxu0 0.0
    %9246 = vmatpush1.msra.mxu0 0.0
    %9247 = vmatprep.subr.mxu0 0.0
    %9248 = vmatpush1.msra.mxu0 0.0
    %9249 = vmatprep.subr.mxu0 0.0
    %9250 = vmatpush1.msra.mxu0 0.0
    %9251 = vmatprep.subr.mxu0 0.0
    %9252 = vmatpush1.msra.mxu0 0.0
    %9253 = vmatprep.subr.mxu0 0.0
    %9254 = vmatpush1.msra.mxu0 0.0
    %9255 = vmatprep.subr.mxu0 0.0
    %9256 = vmatpush1.msra.mxu0 %v9135
    %9257 = vmatprep.subr.mxu0 0.0
    %9258 = vmatpush1.msra.mxu0 %v9134
    %9259 = vmatprep.subr.mxu0 0.0
    %9260 = vmatpush1.msra.mxu0 %v9133
    %9261 = vmatprep.subr.mxu0 0.0
    %9262 = vmatpush1.msra.mxu0 %v9132
    %9263 = vmatprep.subr.mxu0 0.0
    %9264 = vmatpush1.msra.mxu0 %v9131
    %9265 = vmatprep.subr.mxu0 0.0
    %9266 = vmatpush1.msra.mxu0 %v9130
    %9267 = vmatprep.subr.mxu0 0.0
    %9268 = vmatpush1.msra.mxu0 %v9129
    %9269 = vmatprep.subr.mxu0 0.0
    %9270 = vmatpush1.msra.mxu0 %v9128
    %9271 = vmatprep.subr.mxu0 0.0
    %9272 = vmatpush2.msra.mxu0 0.0
    %9273 = vmatprep.subr.mxu0 0.0
    %9274 = vmatpush2.msra.mxu0 0.0
    %9275 = vmatprep.subr.mxu0 0.0
    %9276 = vmatpush2.msra.mxu0 0.0
    %9277 = vmatprep.subr.mxu0 0.0
    %9278 = vmatpush2.msra.mxu0 0.0
    %9279 = vmatprep.subr.mxu0 0.0
    %9280 = vmatpush2.msra.mxu0 0.0
    %9281 = vmatprep.subr.mxu0 0.0
    %9282 = vmatpush2.msra.mxu0 0.0
    %9283 = vmatprep.subr.mxu0 0.0
    %9284 = vmatpush2.msra.mxu0 0.0
    %9285 = vmatprep.subr.mxu0 0.0
    %9286 = vmatpush2.msra.mxu0 0.0
    %9287 = vmatprep.subr.mxu0 0.0
    %9288 = vmatpush2.msra.mxu0 0.0
    %9289 = vmatprep.subr.mxu0 0.0
    %9290 = vmatpush2.msra.mxu0 0.0
    %9291 = vmatprep.subr.mxu0 0.0
    %9292 = vmatpush2.msra.mxu0 0.0
    %9293 = vmatprep.subr.mxu0 0.0
    %9294 = vmatpush2.msra.mxu0 0.0
    %9295 = vmatprep.subr.mxu0 0.0
    %9296 = vmatpush2.msra.mxu0 0.0
    %9297 = vmatprep.subr.mxu0 0.0
    %9298 = vmatpush2.msra.mxu0 0.0
    %9299 = vmatprep.subr.mxu0 0.0
    %9300 = vmatpush2.msra.mxu0 0.0
    %9301 = vmatprep.subr.mxu0 0.0
    %9302 = vmatpush2.msra.mxu0 0.0
    %9303 = vmatprep.mubr.f32.mxu0 0.0
    %9304 = vmatmul.mubr.f32.gmra.mxu0 %v9234
    %v9305 = vpop.f32.mrf.mxu0
    %v9306 = vadd.f32 %v9231, %v9305
    %v9307 = vpop.f32.mrf.mxu0
    %9308 = vmatprep.mubr.f32.mxu0 0.0
    %9309 = vmatmul.mubr.f32.gmra.mxu0 %v9237
    %v9310 = vpop.f32.mrf.mxu0
    %v9311 = vadd.f32 %v9231, %v9310
    %v9312 = vpop.f32.mrf.mxu0
    %9313 = vdwg.mxu0
    %v9314 = vadd.f32 %v9118, %v9306
    %v9315 = vadd.f32 %v9119, %v9311
    %s9316 = scalar_lea.vmem [#allocation31], 1
    %v9317 = vld [vmem:[%s9316] sm:$0x1]
    %s9318 = scalar_lea.vmem [#allocation32], 1
    %v9319 = vld [vmem:[%s9318] sm:$0x1]
    %v9320 = vsel %vm481, %v9314, 0.0
    %9321 = vadd.xlane.f32.xlu0 %v9320
    %v9322 = vpop.xlane.xlu0 %9321
    %v9323 = vsel %vm481, %v9315, 0.0
    %9324 = vadd.xlane.f32.xlu0 %v9323
    %v9325 = vpop.xlane.xlu0 %9324
    %v9326 = vmul.f32 %v9322, %v1713
    %v9327 = vmul.f32 %v9325, %v1713
    %v9328 = vsub.f32 %v9314, %v9326
    %v9329 = vsub.f32 %v9315, %v9327
    %v9330 = vmul.f32 %v9328, %v9328
    %v9331 = vmul.f32 %v9329, %v9329
    %v9332 = vsel %vm481, %v9330, 0.0
    %9333 = vadd.xlane.f32.xlu0 %v9332
    %v9334 = vpop.xlane.xlu0 %9333
    %v9335 = vsel %vm481, %v9331, 0.0
    %9336 = vadd.xlane.f32.xlu0 %v9335
    %v9337 = vpop.xlane.xlu0 %9336
    %v9338 = vmul.f32 %v9334, %v1713
    %v9339 = vmul.f32 %v9337, %v1713
    %v9340 = vadd.f32 %v9338, 1e-05
    %v9341 = vadd.f32 %v9339, 1e-05
    %v9342 = vrsqrt.pop %v9340
    %v9343 = vrsqrt.pop %v9341
    %v9344 = vmul.f32 %v9328, %v9342
    %v9345 = vmul.f32 %v9329, %v9343
    %v9347 = vlaneseq
    %v9348 = vshrl.u32 %v9347, 7
    %v9349 = vsub.s32 0, %v9348
    %v9350 = vrot.slane %v9317, %v9349
    %v9352 = vmul.f32 %v9344, %v9350
    %v9353 = vmul.f32 %v9345, %v9350
    %v9355 = vlaneseq
    %v9356 = vshrl.u32 %v9355, 7
    %v9357 = vsub.s32 0, %v9356
    %v9358 = vrot.slane %v9319, %v9357
    %v9360 = vadd.f32 %v9352, %v9358
    %v9361 = vadd.f32 %v9353, %v9358
    %v9362 = vld [vmem:[#allocation34] sm:$0x1]
    %v9363 = vld [vmem:[#allocation35] sm:$0x1]
    %v9364 = vsel %vm481, %v9360, 0.0
    %9365 = vadd.xlane.f32.xlu0 %v9364
    %v9366 = vpop.xlane.xlu0 %9365
    %v9367 = vsel %vm481, %v9361, 0.0
    %9368 = vadd.xlane.f32.xlu0 %v9367
    %v9369 = vpop.xlane.xlu0 %9368
    %v9370 = vmul.f32 %v9366, %v1713
    %v9371 = vmul.f32 %v9369, %v1713
    %v9372 = vsub.f32 %v9360, %v9370
    %v9373 = vsub.f32 %v9361, %v9371
    %v9374 = vmul.f32 %v9372, %v9372
    %v9375 = vmul.f32 %v9373, %v9373
    %v9376 = vsel %vm481, %v9374, 0.0
    %9377 = vadd.xlane.f32.xlu0 %v9376
    %v9378 = vpop.xlane.xlu0 %9377
    %v9379 = vsel %vm481, %v9375, 0.0
    %9380 = vadd.xlane.f32.xlu0 %v9379
    %v9381 = vpop.xlane.xlu0 %9380
    %v9382 = vmul.f32 %v9378, %v1713
    %v9383 = vmul.f32 %v9381, %v1713
    %v9384 = vadd.f32 %v9382, 1e-05
    %v9385 = vadd.f32 %v9383, 1e-05
    %v9386 = vrsqrt.pop %v9384
    %v9387 = vrsqrt.pop %v9385
    %v9388 = vmul.f32 %v9372, %v9386
    %v9389 = vmul.f32 %v9373, %v9387
    %v9391 = vlaneseq
    %v9392 = vshrl.u32 %v9391, 7
    %v9393 = vsub.s32 0, %v9392
    %v9394 = vrot.slane %v9362, %v9393
    %v9396 = vmul.f32 %v9388, %v9394
    %v9397 = vmul.f32 %v9389, %v9394
    %v9399 = vlaneseq
    %v9400 = vshrl.u32 %v9399, 7
    %v9401 = vsub.s32 0, %v9400
    %v9402 = vrot.slane %v9363, %v9401
    %v9404 = vadd.f32 %v9396, %v9402
    %v9405 = vadd.f32 %v9397, %v9402
    %9406 = vst.msk [vmem:[#allocation37] sm:$0xff] %vm481, %v9404
    %9407 = vst.msk [vmem:[#allocation37 + $0x8] sm:$0xff] %vm481, %v9405
    // Predicated region
    $region246: #{transformer_forward.1} parent=1 // pred_check
      _
    $region247: #{transformer_forward.1} parent=1 // pred_check_branch
      %9409 = sbr.rel (0) target = $region249
    $region248: #{transformer_forward.1} parent=1 // pred_region
      %s9411 = ssub.s32 256, 256
      %9412 = vsyncadd [#allocation4], %s9411
      %s9413 = sshll.u32 [#allocation37], 4
      %s9414 = int_to_ptr.vmem [resolvable:$true] %s9413
      %9419 = dma.vmem_to_hbm [thread:$0]  %s9414, 256, %s79, [#allocation4], 128, 128, 8
    $region249: #{transformer_forward.1} parent=1 // pred_fallthru
      _
    // Predicated region
    $region250: #{transformer_forward.1} parent=1 // pred_check
      _
    $region251: #{transformer_forward.1} parent=1 // pred_check_branch
      %9421 = sbr.rel (0) target = $region253
    $region252: #{transformer_forward.1} parent=1 // pred_region
      %9422 = dma.done [#allocation4], 256
    $region253: #{transformer_forward.1} parent=1 // pred_fallthru
      _
    %9423 = vsyncpa [#allocation3], 1
    %9424 = vsyncpa [#allocation6], 1
    %9425 = vsyncpa [#allocation9], 1
    %9426 = vsyncpa [#allocation12], 1
    %9427 = vsyncpa [#allocation15], 1
    %9428 = vsyncpa [#allocation18], 1
    %9429 = vsyncpa [#allocation21], 1
    %9430 = vsyncpa [#allocation24], 1
    %9431 = vsyncpa [#allocation27], 1
    %9432 = vsyncpa [#allocation30], 1
    %9433 = vsyncpa [#allocation33], 1
    %9434 = vsyncpa [#allocation36], 1
    %9435 = vsyncpa [#allocation4], 1

</llo_original>
